<compile_context>
chip_gen: v6e
topology: v6e:2x2x1
jax: 0.10.0
libtpu: 0.0.40
codegen_flags: <defaults>
</compile_context>

<pallas_src>
import numpy as np

import jax
import jax.numpy as jnp
from jax.experimental import pallas as pl
from jax.experimental.pallas import tpu as pltpu


def _round_up(x, m):
    return (x + m - 1) // m * m


# -----------------------------------------------------------------------------
# The single fused whole-network kernel (one grid step == one image).
# -----------------------------------------------------------------------------
def _mynet_kernel(a1_ref,
                  w1_ref, b1_ref,
                  w21_ref, b21_ref, w22_ref, b22_ref,
                  w31_ref, b31_ref, w32_ref, b32_ref, w33_ref, b33_ref,
                  w41_ref, b41_ref, w42_ref, b42_ref, w43_ref, b43_ref,
                  wl_ref, bl_ref,
                  fc1w_ref, fc1b_ref, fc2w_ref, fc2b_ref,
                  p8_ref, p4_ref, p2_ref, s8_ref, s4_ref,
                  out_ref):
    bf16 = jnp.bfloat16

    def mm(a, b):
        # bf16 operands, fp32 accumulation on the MXU.
        return jnp.dot(a.astype(bf16), b.astype(bf16),
                       preferred_element_type=jnp.float32)

    def conv(a, w_ref, b_ref):
        # Folded conv + BatchNorm + ReLU epilogue.
        return jnp.maximum(mm(a, w_ref[...]) + b_ref[...], 0.0)

    def conv3x3(x, w_ref, b_ref, p_ref):
        # In-kernel im2col: 9 permutation matmuls (zero rows implement the
        # spatial zero padding), lane-concat, one fused matmul epilogue.
        taps = [mm(p_ref[t], x) for t in range(9)]
        return conv(jnp.concatenate(taps, axis=1), w_ref, b_ref)

    def max_pool2x2(x, s_ref):
        # out = elementwise max over the 4 (row, col) phases, each phase being
        # an exact 0/1 selection matmul.
        y = mm(s_ref[0], x)
        for t in range(1, 4):
            y = jnp.maximum(y, mm(s_ref[t], x))
        return y

    # --- stage 1: conv1 (host im2col, stride 2) + conv2_1 + conv2_2 + pool ---
    x = conv(a1_ref[...], w1_ref, b1_ref)            # (64, 128)  8x8
    x = conv3x3(x, w21_ref, b21_ref, p8_ref)         # (64, 128)
    x = conv3x3(x, w22_ref, b22_ref, p8_ref)         # (64, 128)
    x2 = max_pool2x2(x, s8_ref)                      # (16, 128)  4x4  (= x_2)

    # --- stage 2 --------------------------------------------------------------
    x = conv(x2, w31_ref, b31_ref)                   # (16, 128)
    x = conv3x3(x, w32_ref, b32_ref, p4_ref)         # (16, 128)
    x = conv(x, w33_ref, b33_ref)                    # (16, 128)
    x3 = max_pool2x2(x, s4_ref)                      # (4, 128)   2x2  (= x_3)

    # --- stage 3 --------------------------------------------------------------
    x = conv(x3, w41_ref, b41_ref)                   # (4, 256)
    x = conv3x3(x, w42_ref, b42_ref, p2_ref)         # (4, 256)
    x = conv(x, w43_ref, b43_ref)                    # (4, 256)

    # --- pools down to 1x1 (global spatial max per image) + channel concat ----
    g2 = jnp.max(x2, axis=0, keepdims=True)          # max_pool(x_2, 4) -> (1, 128)
    g3 = jnp.max(x3, axis=0, keepdims=True)          # max_pool(x_3, 2) -> (1, 128)
    g4 = jnp.max(x, axis=0, keepdims=True)           # max_pool(x,   2) -> (1, 256)
    feat = jnp.concatenate([g2, g3, g4], axis=1)     # (1, 512)  [64|64 zero|128|256]

    # Expand to 8 rows (row 0 carries the image) so the tail and the output
    # store stay (8,128)-tile friendly; rows 1..7 are dead, dropped by host.
    row = jax.lax.broadcasted_iota(jnp.int32, (8, 1), 0)
    feat8 = jnp.where(row == 0,
                      jnp.broadcast_to(feat, (8, feat.shape[1])), 0.0)

    # --- last_conv + avgpool(1x1 == identity) + fc1 + ReLU + fc2 --------------
    y = conv(feat8, wl_ref, bl_ref)                               # (8, 512)
    h = jnp.maximum(mm(y, fc1w_ref[...]) + fc1b_ref[...], 0.0)    # (8, 128)
    out_ref[...] = mm(h, fc2w_ref[...]) + fc2b_ref[...]           # (8, 128) f32


# -----------------------------------------------------------------------------
# Architecture-constant gather / pooling tables (built once on host, 0/1 bf16).
# -----------------------------------------------------------------------------
def _perm_mats(H, W):
    """(9, H*W, H*W): P[t] @ x gathers tap t=(di*3+dj) of a 3x3/stride1/pad1
    conv on a row-major flattened (H, W, C) image; zero rows == zero padding."""
    M = H * W
    p = np.zeros((9, M, M), np.float32)
    for di in range(3):
        for dj in range(3):
            t = di * 3 + dj
            for i in range(H):
                for j in range(W):
                    ii, jj = i + di - 1, j + dj - 1
                    if 0 <= ii < H and 0 <= jj < W:
                        p[t, i * W + j, ii * W + jj] = 1.0
    return p


def _pool_mats(H, W):
    """(4, (H//2)*(W//2), H*W): 0/1 selection matrices for 2x2 max pooling."""
    Ho, Wo = H // 2, W // 2
    s = np.zeros((4, Ho * Wo, H * W), np.float32)
    for a in range(2):
        for b in range(2):
            t = 2 * a + b
            for i in range(Ho):
                for j in range(Wo):
                    s[t, i * Wo + j, (2 * i + a) * W + (2 * j + b)] = 1.0
    return s


# -----------------------------------------------------------------------------
# Static layer configuration and one-time weight preparation
# -----------------------------------------------------------------------------
_CONV_CFG = {
    # name: (bn_name, kh, kw, cin_segments ((real, padded), ...), cout_pad)
    "conv1":     ("bn1",     3, 3, ((3, 3),),                           128),
    "conv2_1":   ("bn2_1",   3, 3, ((64, 128),),                        128),
    "conv2_2":   ("bn2_2",   3, 3, ((64, 128),),                        128),
    "conv3_1":   ("bn3_1",   1, 1, ((64, 128),),                        128),
    "conv3_2":   ("bn3_2",   3, 3, ((128, 128),),                       128),
    "conv3_3":   ("bn3_3",   1, 1, ((128, 128),),                       128),
    "conv4_1":   ("bn4_1",   1, 1, ((128, 128),),                       256),
    "conv4_2":   ("bn4_2",   3, 3, ((256, 256),),                       256),
    "conv4_3":   ("bn4_3",   1, 1, ((256, 256),),                       256),
    "last_conv": ("last_bn", 1, 1, ((64, 128), (128, 128), (256, 256)), 512),
}

_CONV_ORDER = ["conv1", "conv2_1", "conv2_2", "conv3_1", "conv3_2", "conv3_3",
               "conv4_1", "conv4_2", "conv4_3", "last_conv"]


def _prep_conv(conv, bn, cin_segments, cout_pad):
    w = conv["w"]                          # (Cout, Cin, kh, kw) PyTorch layout
    cout, cin, kh, kw = w.shape
    scale = bn["gamma"] / jnp.sqrt(bn["var"] + bn["eps"])
    shift = bn["beta"] - bn["mean"] * scale + scale * conv["b"]

    # Fold BN scale into the weight columns; (kh, kw, Cin, Cout).
    w_f = jnp.transpose(w * scale[:, None, None, None], (2, 3, 1, 0))

    parts, off = [], 0
    for real, padded in cin_segments:
        seg = w_f[:, :, off:off + real, :]
        parts.append(jnp.pad(seg, ((0, 0), (0, 0), (0, padded - real), (0, 0))))
        off += real
    assert off == cin
    w_cat = jnp.concatenate(parts, axis=2)             # (kh, kw, cin_pad, Cout)
    cin_pad = w_cat.shape[2]
    w_cat = jnp.pad(w_cat, ((0, 0), (0, 0), (0, 0), (0, cout_pad - cout)))
    wm = w_cat.reshape(kh * kw * cin_pad, cout_pad)
    Kp = _round_up(wm.shape[0], 128)
    if Kp != wm.shape[0]:
        wm = jnp.pad(wm, ((0, Kp - wm.shape[0]), (0, 0)))
    b = jnp.pad(shift, (0, cout_pad - cout)).reshape(1, cout_pad)
    return {"w": wm.astype(jnp.bfloat16), "b": b.astype(jnp.float32)}


def prepare_params(params):
    prep = {}
    for name, (bn_name, _, _, segs, cout_pad) in _CONV_CFG.items():
        prep[name] = _prep_conv(params[name], params[bn_name], segs, cout_pad)

    w1, b1 = params["fc1"]["w"], params["fc1"]["b"]   # (512, 100), (100,)
    w2, b2 = params["fc2"]["w"], params["fc2"]["b"]   # (100, nc), (nc,)
    hid_p = _round_up(w1.shape[1], 128)
    out_p = _round_up(w2.shape[1], 128)
    prep["fc1_w"] = jnp.pad(w1, ((0, 0), (0, hid_p - w1.shape[1]))).astype(jnp.bfloat16)
    prep["fc1_b"] = jnp.pad(b1, (0, hid_p - b1.shape[0])).reshape(1, hid_p).astype(jnp.float32)
    prep["fc2_w"] = jnp.pad(w2, ((0, hid_p - w2.shape[0]),
                                 (0, out_p - w2.shape[1]))).astype(jnp.bfloat16)
    prep["fc2_b"] = jnp.pad(b2, (0, out_p - b2.shape[0])).reshape(1, out_p).astype(jnp.float32)

    # In-kernel gather / pooling tables (exact 0/1 selections).
    prep["p8"] = jnp.asarray(_perm_mats(8, 8), jnp.bfloat16)   # (9, 64, 64)
    prep["p4"] = jnp.asarray(_perm_mats(4, 4), jnp.bfloat16)   # (9, 16, 16)
    prep["p2"] = jnp.asarray(_perm_mats(2, 2), jnp.bfloat16)   # (9, 4, 4)
    prep["s8"] = jnp.asarray(_pool_mats(8, 8), jnp.bfloat16)   # (4, 16, 64)
    prep["s4"] = jnp.asarray(_pool_mats(4, 4), jnp.bfloat16)   # (4, 4, 16)
    return prep


# -----------------------------------------------------------------------------
# Parameters (deterministic, mirrors MyNet._initialize_weights)
# -----------------------------------------------------------------------------
def init_params(key, num_classes=4):
    def conv_init(k, cout, cin, kh, kw):
        std = (2.0 / (cout * kh * kw)) ** 0.5  # kaiming normal, fan_out, relu
        w = std * jax.random.normal(k, (cout, cin, kh, kw), jnp.float32)
        return {"w": w, "b": jnp.zeros((cout,), jnp.float32)}

    def bn_init(c):
        return {"gamma": jnp.ones((c,), jnp.float32),
                "beta": jnp.zeros((c,), jnp.float32),
                "mean": jnp.zeros((c,), jnp.float32),
                "var": jnp.ones((c,), jnp.float32),
                "eps": jnp.float32(1e-5)}

    conv_shapes = {
        "conv1": (64, 3, 3, 3),
        "conv2_1": (64, 64, 3, 3), "conv2_2": (64, 64, 3, 3),
        "conv3_1": (128, 64, 1, 1), "conv3_2": (128, 128, 3, 3),
        "conv3_3": (128, 128, 1, 1),
        "conv4_1": (256, 128, 1, 1), "conv4_2": (256, 256, 3, 3),
        "conv4_3": (256, 256, 1, 1),
        "last_conv": (512, 64 + 128 + 256, 1, 1),
    }
    keys = jax.random.split(key, len(conv_shapes) + 2)
    params = {}
    for i, (name, shp) in enumerate(conv_shapes.items()):
        params[name] = conv_init(keys[i], *shp)
        bn_name = "last_bn" if name == "last_conv" else "bn" + name[4:]
        params[bn_name] = bn_init(shp[0])

    # Linear: weight ~ N(0, 0.01), bias = 0.  Stored transposed: (in, out).
    params["fc1"] = {
        "w": 0.01 * jax.random.normal(keys[-2], (512, 100), jnp.float32),
        "b": jnp.zeros((100,), jnp.float32)}
    params["fc2"] = {
        "w": 0.01 * jax.random.normal(keys[-1], (100, num_classes), jnp.float32),
        "b": jnp.zeros((num_classes,), jnp.float32)}
    return params


# -----------------------------------------------------------------------------
# Forward pass: one fused pallas_call for the whole network
# -----------------------------------------------------------------------------
def forward(prep, x_nchw, *, num_classes=4):
    N, C, H, W = x_nchw.shape
    assert (C, H, W) == (3, 16, 16), "fused kernel is specialized to 3x16x16 input"
    # TODO(synk): other input sizes need re-derived gather/pool tables and a
    # non-global final-pool path; max_pool floor behaviour also differs then.

    # NCHW -> NHWC + stride-2 3x3 im2col for conv1 (tiny one-fusion host glue;
    # every interior-layer gather / pool happens inside the fused kernel).
    x = jnp.transpose(x_nchw, (0, 2, 3, 1)).astype(jnp.bfloat16)
    xp = jnp.pad(x, ((0, 0), (1, 1), (1, 1), (0, 0)))
    cols = [xp[:, di:di + 16:2, dj:dj + 16:2, :]
            for di in range(3) for dj in range(3)]
    a1 = jnp.concatenate(cols, axis=-1).reshape(N * 64, 27)
    a1 = jnp.pad(a1, ((0, 0), (0, 128 - 27))).astype(jnp.bfloat16)

    consts = []
    for name in _CONV_ORDER:
        consts += [prep[name]["w"], prep[name]["b"]]
    consts += [prep["fc1_w"], prep["fc1_b"], prep["fc2_w"], prep["fc2_b"],
               prep["p8"], prep["p4"], prep["p2"], prep["s8"], prep["s4"]]

    def _const_spec(arr):
        if arr.ndim == 2:
            return pl.BlockSpec(arr.shape, lambda b: (0, 0))
        return pl.BlockSpec(arr.shape, lambda b: (0, 0, 0))

    out = pl.pallas_call(
        _mynet_kernel,
        out_shape=jax.ShapeDtypeStruct((N * 8, 128), jnp.float32),
        grid_spec=pltpu.PrefetchScalarGridSpec(
            num_scalar_prefetch=0,
            grid=(N,),                           # one image per step; weights
            in_specs=[pl.BlockSpec((64, 128), lambda b: (b, 0))]   # stay resident
                     + [_const_spec(c) for c in consts],
            out_specs=pl.BlockSpec((8, 128), lambda b: (b, 0)),
        ),
        compiler_params=pltpu.CompilerParams(
            dimension_semantics=("parallel",)),  # batch splits across v7x's 2 TCs
    )(a1, *consts)

    # Row 0 of each image's (8, 128) output block holds the logits.
    return out.reshape(N, 8, 128)[:, 0, :num_classes]


if __name__ == "__main__":
    key = jax.random.PRNGKey(0)
    k_params, k_x = jax.random.split(key)

    params = init_params(k_params, num_classes=4)
    prep = jax.block_until_ready(prepare_params(params))  # one-time fold/pad/cast

    x = jax.random.normal(k_x, (2, 3, 16, 16), jnp.float32)  # NCHW like PyTorch

    fwd = jax.jit(forward, static_argnames=("num_classes",))
    out = jax.block_until_ready(fwd(prep, x, num_classes=4))

    assert out.shape == (2, 4), out.shape
    assert jnp.all(jnp.isfinite(out))
    print("KERNEL_OK")
</pallas_src>

<mosaic_0001>
module attributes {stable_mosaic.version = 11 : i64} {
  func.func @_mynet_kernel(%arg0: i32, %arg1: memref<64x128xbf16, #tpu.memory_space<vmem>>, %arg2: memref<128x128xbf16, #tpu.memory_space<vmem>>, %arg3: memref<1x128xf32, #tpu.memory_space<vmem>>, %arg4: memref<1152x128xbf16, #tpu.memory_space<vmem>>, %arg5: memref<1x128xf32, #tpu.memory_space<vmem>>, %arg6: memref<1152x128xbf16, #tpu.memory_space<vmem>>, %arg7: memref<1x128xf32, #tpu.memory_space<vmem>>, %arg8: memref<128x128xbf16, #tpu.memory_space<vmem>>, %arg9: memref<1x128xf32, #tpu.memory_space<vmem>>, %arg10: memref<1152x128xbf16, #tpu.memory_space<vmem>>, %arg11: memref<1x128xf32, #tpu.memory_space<vmem>>, %arg12: memref<128x128xbf16, #tpu.memory_space<vmem>>, %arg13: memref<1x128xf32, #tpu.memory_space<vmem>>, %arg14: memref<128x256xbf16, #tpu.memory_space<vmem>>, %arg15: memref<1x256xf32, #tpu.memory_space<vmem>>, %arg16: memref<2304x256xbf16, #tpu.memory_space<vmem>>, %arg17: memref<1x256xf32, #tpu.memory_space<vmem>>, %arg18: memref<256x256xbf16, #tpu.memory_space<vmem>>, %arg19: memref<1x256xf32, #tpu.memory_space<vmem>>, %arg20: memref<512x512xbf16, #tpu.memory_space<vmem>>, %arg21: memref<1x512xf32, #tpu.memory_space<vmem>>, %arg22: memref<512x128xbf16, #tpu.memory_space<vmem>>, %arg23: memref<1x128xf32, #tpu.memory_space<vmem>>, %arg24: memref<128x128xbf16, #tpu.memory_space<vmem>>, %arg25: memref<1x128xf32, #tpu.memory_space<vmem>>, %arg26: memref<9x64x64xbf16, #tpu.memory_space<vmem>>, %arg27: memref<9x16x16xbf16, #tpu.memory_space<vmem>>, %arg28: memref<9x4x4xbf16, #tpu.memory_space<vmem>>, %arg29: memref<4x16x64xbf16, #tpu.memory_space<vmem>>, %arg30: memref<4x4x16xbf16, #tpu.memory_space<vmem>>, %arg31: memref<8x128xf32, #tpu.memory_space<vmem>>) attributes {dimension_semantics = [#tpu.dimension_semantics<parallel>], iteration_bounds = array<i64: 2>, scalar_prefetch = 0 : i64, scratch_operands = 0 : i64, tpu.core_type = #tpu.core_type<tc>, window_params = [{transform_indices = @transform_0, window_bounds = array<i64: 64, 128>}, {pipeline_mode = #tpu.pipeline_mode<synchronous>, transform_indices = @transform_1, window_bounds = array<i64: 128, 128>}, {pipeline_mode = #tpu.pipeline_mode<synchronous>, transform_indices = @transform_2, window_bounds = array<i64: 1, 128>}, {pipeline_mode = #tpu.pipeline_mode<synchronous>, transform_indices = @transform_3, window_bounds = array<i64: 1152, 128>}, {pipeline_mode = #tpu.pipeline_mode<synchronous>, transform_indices = @transform_4, window_bounds = array<i64: 1, 128>}, {pipeline_mode = #tpu.pipeline_mode<synchronous>, transform_indices = @transform_5, window_bounds = array<i64: 1152, 128>}, {pipeline_mode = #tpu.pipeline_mode<synchronous>, transform_indices = @transform_6, window_bounds = array<i64: 1, 128>}, {pipeline_mode = #tpu.pipeline_mode<synchronous>, transform_indices = @transform_7, window_bounds = array<i64: 128, 128>}, {pipeline_mode = #tpu.pipeline_mode<synchronous>, transform_indices = @transform_8, window_bounds = array<i64: 1, 128>}, {pipeline_mode = #tpu.pipeline_mode<synchronous>, transform_indices = @transform_9, window_bounds = array<i64: 1152, 128>}, {pipeline_mode = #tpu.pipeline_mode<synchronous>, transform_indices = @transform_10, window_bounds = array<i64: 1, 128>}, {pipeline_mode = #tpu.pipeline_mode<synchronous>, transform_indices = @transform_11, window_bounds = array<i64: 128, 128>}, {pipeline_mode = #tpu.pipeline_mode<synchronous>, transform_indices = @transform_12, window_bounds = array<i64: 1, 128>}, {pipeline_mode = #tpu.pipeline_mode<synchronous>, transform_indices = @transform_13, window_bounds = array<i64: 128, 256>}, {pipeline_mode = #tpu.pipeline_mode<synchronous>, transform_indices = @transform_14, window_bounds = array<i64: 1, 256>}, {pipeline_mode = #tpu.pipeline_mode<synchronous>, transform_indices = @transform_15, window_bounds = array<i64: 2304, 256>}, {pipeline_mode = #tpu.pipeline_mode<synchronous>, transform_indices = @transform_16, window_bounds = array<i64: 1, 256>}, {pipeline_mode = #tpu.pipeline_mode<synchronous>, transform_indices = @transform_17, window_bounds = array<i64: 256, 256>}, {pipeline_mode = #tpu.pipeline_mode<synchronous>, transform_indices = @transform_18, window_bounds = array<i64: 1, 256>}, {pipeline_mode = #tpu.pipeline_mode<synchronous>, transform_indices = @transform_19, window_bounds = array<i64: 512, 512>}, {pipeline_mode = #tpu.pipeline_mode<synchronous>, transform_indices = @transform_20, window_bounds = array<i64: 1, 512>}, {pipeline_mode = #tpu.pipeline_mode<synchronous>, transform_indices = @transform_21, window_bounds = array<i64: 512, 128>}, {pipeline_mode = #tpu.pipeline_mode<synchronous>, transform_indices = @transform_22, window_bounds = array<i64: 1, 128>}, {pipeline_mode = #tpu.pipeline_mode<synchronous>, transform_indices = @transform_23, window_bounds = array<i64: 128, 128>}, {pipeline_mode = #tpu.pipeline_mode<synchronous>, transform_indices = @transform_24, window_bounds = array<i64: 1, 128>}, {pipeline_mode = #tpu.pipeline_mode<synchronous>, transform_indices = @transform_25, window_bounds = array<i64: 9, 64, 64>}, {pipeline_mode = #tpu.pipeline_mode<synchronous>, transform_indices = @transform_26, window_bounds = array<i64: 9, 16, 16>}, {pipeline_mode = #tpu.pipeline_mode<synchronous>, transform_indices = @transform_27, window_bounds = array<i64: 9, 4, 4>}, {pipeline_mode = #tpu.pipeline_mode<synchronous>, transform_indices = @transform_28, window_bounds = array<i64: 4, 16, 64>}, {pipeline_mode = #tpu.pipeline_mode<synchronous>, transform_indices = @transform_29, window_bounds = array<i64: 4, 4, 16>}, {transform_indices = @transform_30, window_bounds = array<i64: 8, 128>}]} {
    %c0 = arith.constant 0 : index
    %c0_0 = arith.constant 0 : index
    %0 = vector.load %arg1[%c0, %c0_0] : memref<64x128xbf16, #tpu.memory_space<vmem>>, vector<64x128xbf16>
    %c0_1 = arith.constant 0 : index
    %c0_2 = arith.constant 0 : index
    %1 = vector.load %arg2[%c0_1, %c0_2] : memref<128x128xbf16, #tpu.memory_space<vmem>>, vector<128x128xbf16>
    %cst = arith.constant dense<0.000000e+00> : vector<64x128xf32>
    %2 = tpu.matmul %0, %1, %cst {dimension_numbers = #tpu.dot_dimension_numbers<[1], [0], [0], [1], [0, 0, 1, 1], [], []>} : vector<64x128xbf16>, vector<128x128xbf16>, vector<64x128xf32> -> vector<64x128xf32>
    %c0_3 = arith.constant 0 : index
    %c0_4 = arith.constant 0 : index
    %3 = vector.load %arg3[%c0_3, %c0_4] : memref<1x128xf32, #tpu.memory_space<vmem>>, vector<1x128xf32>
    %4 = vector.broadcast %3 : vector<1x128xf32> to vector<64x128xf32>
    %5 = arith.addf %2, %4 : vector<64x128xf32>
    %cst_5 = arith.constant 0.000000e+00 : f32
    %6 = vector.broadcast %cst_5 : f32 to vector<64x128xf32>
    %7 = arith.maximumf %5, %6 : vector<64x128xf32>
    %c0_6 = arith.constant 0 : index
    %c0_7 = arith.constant 0 : index
    %c0_8 = arith.constant 0 : index
    %8 = vector.load %arg26[%c0_6, %c0_7, %c0_8] : memref<9x64x64xbf16, #tpu.memory_space<vmem>>, vector<1x64x64xbf16>
    %9 = vector.shape_cast %8 : vector<1x64x64xbf16> to vector<64x64xbf16>
    %10 = arith.truncf %7 : vector<64x128xf32> to vector<64x128xbf16>
    %cst_9 = arith.constant dense<0.000000e+00> : vector<64x128xf32>
    %11 = tpu.matmul %9, %10, %cst_9 {dimension_numbers = #tpu.dot_dimension_numbers<[1], [0], [0], [1], [0, 0, 1, 1], [], []>} : vector<64x64xbf16>, vector<64x128xbf16>, vector<64x128xf32> -> vector<64x128xf32>
    %c1 = arith.constant 1 : index
    %c0_10 = arith.constant 0 : index
    %c0_11 = arith.constant 0 : index
    %12 = vector.load %arg26[%c1, %c0_10, %c0_11] : memref<9x64x64xbf16, #tpu.memory_space<vmem>>, vector<1x64x64xbf16>
    %13 = vector.shape_cast %12 : vector<1x64x64xbf16> to vector<64x64xbf16>
    %14 = arith.truncf %7 : vector<64x128xf32> to vector<64x128xbf16>
    %cst_12 = arith.constant dense<0.000000e+00> : vector<64x128xf32>
    %15 = tpu.matmul %13, %14, %cst_12 {dimension_numbers = #tpu.dot_dimension_numbers<[1], [0], [0], [1], [0, 0, 1, 1], [], []>} : vector<64x64xbf16>, vector<64x128xbf16>, vector<64x128xf32> -> vector<64x128xf32>
    %c2 = arith.constant 2 : index
    %c0_13 = arith.constant 0 : index
    %c0_14 = arith.constant 0 : index
    %16 = vector.load %arg26[%c2, %c0_13, %c0_14] : memref<9x64x64xbf16, #tpu.memory_space<vmem>>, vector<1x64x64xbf16>
    %17 = vector.shape_cast %16 : vector<1x64x64xbf16> to vector<64x64xbf16>
    %18 = arith.truncf %7 : vector<64x128xf32> to vector<64x128xbf16>
    %cst_15 = arith.constant dense<0.000000e+00> : vector<64x128xf32>
    %19 = tpu.matmul %17, %18, %cst_15 {dimension_numbers = #tpu.dot_dimension_numbers<[1], [0], [0], [1], [0, 0, 1, 1], [], []>} : vector<64x64xbf16>, vector<64x128xbf16>, vector<64x128xf32> -> vector<64x128xf32>
    %c3 = arith.constant 3 : index
    %c0_16 = arith.constant 0 : index
    %c0_17 = arith.constant 0 : index
    %20 = vector.load %arg26[%c3, %c0_16, %c0_17] : memref<9x64x64xbf16, #tpu.memory_space<vmem>>, vector<1x64x64xbf16>
    %21 = vector.shape_cast %20 : vector<1x64x64xbf16> to vector<64x64xbf16>
    %22 = arith.truncf %7 : vector<64x128xf32> to vector<64x128xbf16>
    %cst_18 = arith.constant dense<0.000000e+00> : vector<64x128xf32>
    %23 = tpu.matmul %21, %22, %cst_18 {dimension_numbers = #tpu.dot_dimension_numbers<[1], [0], [0], [1], [0, 0, 1, 1], [], []>} : vector<64x64xbf16>, vector<64x128xbf16>, vector<64x128xf32> -> vector<64x128xf32>
    %c4 = arith.constant 4 : index
    %c0_19 = arith.constant 0 : index
    %c0_20 = arith.constant 0 : index
    %24 = vector.load %arg26[%c4, %c0_19, %c0_20] : memref<9x64x64xbf16, #tpu.memory_space<vmem>>, vector<1x64x64xbf16>
    %25 = vector.shape_cast %24 : vector<1x64x64xbf16> to vector<64x64xbf16>
    %26 = arith.truncf %7 : vector<64x128xf32> to vector<64x128xbf16>
    %cst_21 = arith.constant dense<0.000000e+00> : vector<64x128xf32>
    %27 = tpu.matmul %25, %26, %cst_21 {dimension_numbers = #tpu.dot_dimension_numbers<[1], [0], [0], [1], [0, 0, 1, 1], [], []>} : vector<64x64xbf16>, vector<64x128xbf16>, vector<64x128xf32> -> vector<64x128xf32>
    %c5 = arith.constant 5 : index
    %c0_22 = arith.constant 0 : index
    %c0_23 = arith.constant 0 : index
    %28 = vector.load %arg26[%c5, %c0_22, %c0_23] : memref<9x64x64xbf16, #tpu.memory_space<vmem>>, vector<1x64x64xbf16>
    %29 = vector.shape_cast %28 : vector<1x64x64xbf16> to vector<64x64xbf16>
    %30 = arith.truncf %7 : vector<64x128xf32> to vector<64x128xbf16>
    %cst_24 = arith.constant dense<0.000000e+00> : vector<64x128xf32>
    %31 = tpu.matmul %29, %30, %cst_24 {dimension_numbers = #tpu.dot_dimension_numbers<[1], [0], [0], [1], [0, 0, 1, 1], [], []>} : vector<64x64xbf16>, vector<64x128xbf16>, vector<64x128xf32> -> vector<64x128xf32>
    %c6 = arith.constant 6 : index
    %c0_25 = arith.constant 0 : index
    %c0_26 = arith.constant 0 : index
    %32 = vector.load %arg26[%c6, %c0_25, %c0_26] : memref<9x64x64xbf16, #tpu.memory_space<vmem>>, vector<1x64x64xbf16>
    %33 = vector.shape_cast %32 : vector<1x64x64xbf16> to vector<64x64xbf16>
    %34 = arith.truncf %7 : vector<64x128xf32> to vector<64x128xbf16>
    %cst_27 = arith.constant dense<0.000000e+00> : vector<64x128xf32>
    %35 = tpu.matmul %33, %34, %cst_27 {dimension_numbers = #tpu.dot_dimension_numbers<[1], [0], [0], [1], [0, 0, 1, 1], [], []>} : vector<64x64xbf16>, vector<64x128xbf16>, vector<64x128xf32> -> vector<64x128xf32>
    %c7 = arith.constant 7 : index
    %c0_28 = arith.constant 0 : index
    %c0_29 = arith.constant 0 : index
    %36 = vector.load %arg26[%c7, %c0_28, %c0_29] : memref<9x64x64xbf16, #tpu.memory_space<vmem>>, vector<1x64x64xbf16>
    %37 = vector.shape_cast %36 : vector<1x64x64xbf16> to vector<64x64xbf16>
    %38 = arith.truncf %7 : vector<64x128xf32> to vector<64x128xbf16>
    %cst_30 = arith.constant dense<0.000000e+00> : vector<64x128xf32>
    %39 = tpu.matmul %37, %38, %cst_30 {dimension_numbers = #tpu.dot_dimension_numbers<[1], [0], [0], [1], [0, 0, 1, 1], [], []>} : vector<64x64xbf16>, vector<64x128xbf16>, vector<64x128xf32> -> vector<64x128xf32>
    %c8 = arith.constant 8 : index
    %c0_31 = arith.constant 0 : index
    %c0_32 = arith.constant 0 : index
    %40 = vector.load %arg26[%c8, %c0_31, %c0_32] : memref<9x64x64xbf16, #tpu.memory_space<vmem>>, vector<1x64x64xbf16>
    %41 = vector.shape_cast %40 : vector<1x64x64xbf16> to vector<64x64xbf16>
    %42 = arith.truncf %7 : vector<64x128xf32> to vector<64x128xbf16>
    %cst_33 = arith.constant dense<0.000000e+00> : vector<64x128xf32>
    %43 = tpu.matmul %41, %42, %cst_33 {dimension_numbers = #tpu.dot_dimension_numbers<[1], [0], [0], [1], [0, 0, 1, 1], [], []>} : vector<64x64xbf16>, vector<64x128xbf16>, vector<64x128xf32> -> vector<64x128xf32>
    %44 = tpu.concatenate %11, %15, %19, %23, %27, %31, %35, %39, %43 in 1 : vector<64x128xf32>, vector<64x128xf32>, vector<64x128xf32>, vector<64x128xf32>, vector<64x128xf32>, vector<64x128xf32>, vector<64x128xf32>, vector<64x128xf32>, vector<64x128xf32> -> vector<64x1152xf32>
    %c0_34 = arith.constant 0 : index
    %c0_35 = arith.constant 0 : index
    %45 = vector.load %arg4[%c0_34, %c0_35] : memref<1152x128xbf16, #tpu.memory_space<vmem>>, vector<1152x128xbf16>
    %46 = arith.truncf %44 : vector<64x1152xf32> to vector<64x1152xbf16>
    %cst_36 = arith.constant dense<0.000000e+00> : vector<64x128xf32>
    %47 = tpu.matmul %46, %45, %cst_36 {dimension_numbers = #tpu.dot_dimension_numbers<[1], [0], [0], [1], [0, 0, 1, 1], [], []>} : vector<64x1152xbf16>, vector<1152x128xbf16>, vector<64x128xf32> -> vector<64x128xf32>
    %c0_37 = arith.constant 0 : index
    %c0_38 = arith.constant 0 : index
    %48 = vector.load %arg5[%c0_37, %c0_38] : memref<1x128xf32, #tpu.memory_space<vmem>>, vector<1x128xf32>
    %49 = vector.broadcast %48 : vector<1x128xf32> to vector<64x128xf32>
    %50 = arith.addf %47, %49 : vector<64x128xf32>
    %cst_39 = arith.constant 0.000000e+00 : f32
    %51 = vector.broadcast %cst_39 : f32 to vector<64x128xf32>
    %52 = arith.maximumf %50, %51 : vector<64x128xf32>
    %c0_40 = arith.constant 0 : index
    %c0_41 = arith.constant 0 : index
    %c0_42 = arith.constant 0 : index
    %53 = vector.load %arg26[%c0_40, %c0_41, %c0_42] : memref<9x64x64xbf16, #tpu.memory_space<vmem>>, vector<1x64x64xbf16>
    %54 = vector.shape_cast %53 : vector<1x64x64xbf16> to vector<64x64xbf16>
    %55 = arith.truncf %52 : vector<64x128xf32> to vector<64x128xbf16>
    %cst_43 = arith.constant dense<0.000000e+00> : vector<64x128xf32>
    %56 = tpu.matmul %54, %55, %cst_43 {dimension_numbers = #tpu.dot_dimension_numbers<[1], [0], [0], [1], [0, 0, 1, 1], [], []>} : vector<64x64xbf16>, vector<64x128xbf16>, vector<64x128xf32> -> vector<64x128xf32>
    %c1_44 = arith.constant 1 : index
    %c0_45 = arith.constant 0 : index
    %c0_46 = arith.constant 0 : index
    %57 = vector.load %arg26[%c1_44, %c0_45, %c0_46] : memref<9x64x64xbf16, #tpu.memory_space<vmem>>, vector<1x64x64xbf16>
    %58 = vector.shape_cast %57 : vector<1x64x64xbf16> to vector<64x64xbf16>
    %59 = arith.truncf %52 : vector<64x128xf32> to vector<64x128xbf16>
    %cst_47 = arith.constant dense<0.000000e+00> : vector<64x128xf32>
    %60 = tpu.matmul %58, %59, %cst_47 {dimension_numbers = #tpu.dot_dimension_numbers<[1], [0], [0], [1], [0, 0, 1, 1], [], []>} : vector<64x64xbf16>, vector<64x128xbf16>, vector<64x128xf32> -> vector<64x128xf32>
    %c2_48 = arith.constant 2 : index
    %c0_49 = arith.constant 0 : index
    %c0_50 = arith.constant 0 : index
    %61 = vector.load %arg26[%c2_48, %c0_49, %c0_50] : memref<9x64x64xbf16, #tpu.memory_space<vmem>>, vector<1x64x64xbf16>
    %62 = vector.shape_cast %61 : vector<1x64x64xbf16> to vector<64x64xbf16>
    %63 = arith.truncf %52 : vector<64x128xf32> to vector<64x128xbf16>
    %cst_51 = arith.constant dense<0.000000e+00> : vector<64x128xf32>
    %64 = tpu.matmul %62, %63, %cst_51 {dimension_numbers = #tpu.dot_dimension_numbers<[1], [0], [0], [1], [0, 0, 1, 1], [], []>} : vector<64x64xbf16>, vector<64x128xbf16>, vector<64x128xf32> -> vector<64x128xf32>
    %c3_52 = arith.constant 3 : index
    %c0_53 = arith.constant 0 : index
    %c0_54 = arith.constant 0 : index
    %65 = vector.load %arg26[%c3_52, %c0_53, %c0_54] : memref<9x64x64xbf16, #tpu.memory_space<vmem>>, vector<1x64x64xbf16>
    %66 = vector.shape_cast %65 : vector<1x64x64xbf16> to vector<64x64xbf16>
    %67 = arith.truncf %52 : vector<64x128xf32> to vector<64x128xbf16>
    %cst_55 = arith.constant dense<0.000000e+00> : vector<64x128xf32>
    %68 = tpu.matmul %66, %67, %cst_55 {dimension_numbers = #tpu.dot_dimension_numbers<[1], [0], [0], [1], [0, 0, 1, 1], [], []>} : vector<64x64xbf16>, vector<64x128xbf16>, vector<64x128xf32> -> vector<64x128xf32>
    %c4_56 = arith.constant 4 : index
    %c0_57 = arith.constant 0 : index
    %c0_58 = arith.constant 0 : index
    %69 = vector.load %arg26[%c4_56, %c0_57, %c0_58] : memref<9x64x64xbf16, #tpu.memory_space<vmem>>, vector<1x64x64xbf16>
    %70 = vector.shape_cast %69 : vector<1x64x64xbf16> to vector<64x64xbf16>
    %71 = arith.truncf %52 : vector<64x128xf32> to vector<64x128xbf16>
    %cst_59 = arith.constant dense<0.000000e+00> : vector<64x128xf32>
    %72 = tpu.matmul %70, %71, %cst_59 {dimension_numbers = #tpu.dot_dimension_numbers<[1], [0], [0], [1], [0, 0, 1, 1], [], []>} : vector<64x64xbf16>, vector<64x128xbf16>, vector<64x128xf32> -> vector<64x128xf32>
    %c5_60 = arith.constant 5 : index
    %c0_61 = arith.constant 0 : index
    %c0_62 = arith.constant 0 : index
    %73 = vector.load %arg26[%c5_60, %c0_61, %c0_62] : memref<9x64x64xbf16, #tpu.memory_space<vmem>>, vector<1x64x64xbf16>
    %74 = vector.shape_cast %73 : vector<1x64x64xbf16> to vector<64x64xbf16>
    %75 = arith.truncf %52 : vector<64x128xf32> to vector<64x128xbf16>
    %cst_63 = arith.constant dense<0.000000e+00> : vector<64x128xf32>
    %76 = tpu.matmul %74, %75, %cst_63 {dimension_numbers = #tpu.dot_dimension_numbers<[1], [0], [0], [1], [0, 0, 1, 1], [], []>} : vector<64x64xbf16>, vector<64x128xbf16>, vector<64x128xf32> -> vector<64x128xf32>
    %c6_64 = arith.constant 6 : index
    %c0_65 = arith.constant 0 : index
    %c0_66 = arith.constant 0 : index
    %77 = vector.load %arg26[%c6_64, %c0_65, %c0_66] : memref<9x64x64xbf16, #tpu.memory_space<vmem>>, vector<1x64x64xbf16>
    %78 = vector.shape_cast %77 : vector<1x64x64xbf16> to vector<64x64xbf16>
    %79 = arith.truncf %52 : vector<64x128xf32> to vector<64x128xbf16>
    %cst_67 = arith.constant dense<0.000000e+00> : vector<64x128xf32>
    %80 = tpu.matmul %78, %79, %cst_67 {dimension_numbers = #tpu.dot_dimension_numbers<[1], [0], [0], [1], [0, 0, 1, 1], [], []>} : vector<64x64xbf16>, vector<64x128xbf16>, vector<64x128xf32> -> vector<64x128xf32>
    %c7_68 = arith.constant 7 : index
    %c0_69 = arith.constant 0 : index
    %c0_70 = arith.constant 0 : index
    %81 = vector.load %arg26[%c7_68, %c0_69, %c0_70] : memref<9x64x64xbf16, #tpu.memory_space<vmem>>, vector<1x64x64xbf16>
    %82 = vector.shape_cast %81 : vector<1x64x64xbf16> to vector<64x64xbf16>
    %83 = arith.truncf %52 : vector<64x128xf32> to vector<64x128xbf16>
    %cst_71 = arith.constant dense<0.000000e+00> : vector<64x128xf32>
    %84 = tpu.matmul %82, %83, %cst_71 {dimension_numbers = #tpu.dot_dimension_numbers<[1], [0], [0], [1], [0, 0, 1, 1], [], []>} : vector<64x64xbf16>, vector<64x128xbf16>, vector<64x128xf32> -> vector<64x128xf32>
    %c8_72 = arith.constant 8 : index
    %c0_73 = arith.constant 0 : index
    %c0_74 = arith.constant 0 : index
    %85 = vector.load %arg26[%c8_72, %c0_73, %c0_74] : memref<9x64x64xbf16, #tpu.memory_space<vmem>>, vector<1x64x64xbf16>
    %86 = vector.shape_cast %85 : vector<1x64x64xbf16> to vector<64x64xbf16>
    %87 = arith.truncf %52 : vector<64x128xf32> to vector<64x128xbf16>
    %cst_75 = arith.constant dense<0.000000e+00> : vector<64x128xf32>
    %88 = tpu.matmul %86, %87, %cst_75 {dimension_numbers = #tpu.dot_dimension_numbers<[1], [0], [0], [1], [0, 0, 1, 1], [], []>} : vector<64x64xbf16>, vector<64x128xbf16>, vector<64x128xf32> -> vector<64x128xf32>
    %89 = tpu.concatenate %56, %60, %64, %68, %72, %76, %80, %84, %88 in 1 : vector<64x128xf32>, vector<64x128xf32>, vector<64x128xf32>, vector<64x128xf32>, vector<64x128xf32>, vector<64x128xf32>, vector<64x128xf32>, vector<64x128xf32>, vector<64x128xf32> -> vector<64x1152xf32>
    %c0_76 = arith.constant 0 : index
    %c0_77 = arith.constant 0 : index
    %90 = vector.load %arg6[%c0_76, %c0_77] : memref<1152x128xbf16, #tpu.memory_space<vmem>>, vector<1152x128xbf16>
    %91 = arith.truncf %89 : vector<64x1152xf32> to vector<64x1152xbf16>
    %cst_78 = arith.constant dense<0.000000e+00> : vector<64x128xf32>
    %92 = tpu.matmul %91, %90, %cst_78 {dimension_numbers = #tpu.dot_dimension_numbers<[1], [0], [0], [1], [0, 0, 1, 1], [], []>} : vector<64x1152xbf16>, vector<1152x128xbf16>, vector<64x128xf32> -> vector<64x128xf32>
    %c0_79 = arith.constant 0 : index
    %c0_80 = arith.constant 0 : index
    %93 = vector.load %arg7[%c0_79, %c0_80] : memref<1x128xf32, #tpu.memory_space<vmem>>, vector<1x128xf32>
    %94 = vector.broadcast %93 : vector<1x128xf32> to vector<64x128xf32>
    %95 = arith.addf %92, %94 : vector<64x128xf32>
    %cst_81 = arith.constant 0.000000e+00 : f32
    %96 = vector.broadcast %cst_81 : f32 to vector<64x128xf32>
    %97 = arith.maximumf %95, %96 : vector<64x128xf32>
    %c0_82 = arith.constant 0 : index
    %c0_83 = arith.constant 0 : index
    %c0_84 = arith.constant 0 : index
    %98 = vector.load %arg29[%c0_82, %c0_83, %c0_84] : memref<4x16x64xbf16, #tpu.memory_space<vmem>>, vector<1x16x64xbf16>
    %99 = vector.shape_cast %98 : vector<1x16x64xbf16> to vector<16x64xbf16>
    %100 = arith.truncf %97 : vector<64x128xf32> to vector<64x128xbf16>
    %cst_85 = arith.constant dense<0.000000e+00> : vector<16x128xf32>
    %101 = tpu.matmul %99, %100, %cst_85 {dimension_numbers = #tpu.dot_dimension_numbers<[1], [0], [0], [1], [0, 0, 1, 1], [], []>} : vector<16x64xbf16>, vector<64x128xbf16>, vector<16x128xf32> -> vector<16x128xf32>
    %c1_86 = arith.constant 1 : index
    %c0_87 = arith.constant 0 : index
    %c0_88 = arith.constant 0 : index
    %102 = vector.load %arg29[%c1_86, %c0_87, %c0_88] : memref<4x16x64xbf16, #tpu.memory_space<vmem>>, vector<1x16x64xbf16>
    %103 = vector.shape_cast %102 : vector<1x16x64xbf16> to vector<16x64xbf16>
    %104 = arith.truncf %97 : vector<64x128xf32> to vector<64x128xbf16>
    %cst_89 = arith.constant dense<0.000000e+00> : vector<16x128xf32>
    %105 = tpu.matmul %103, %104, %cst_89 {dimension_numbers = #tpu.dot_dimension_numbers<[1], [0], [0], [1], [0, 0, 1, 1], [], []>} : vector<16x64xbf16>, vector<64x128xbf16>, vector<16x128xf32> -> vector<16x128xf32>
    %106 = arith.maximumf %101, %105 : vector<16x128xf32>
    %c2_90 = arith.constant 2 : index
    %c0_91 = arith.constant 0 : index
    %c0_92 = arith.constant 0 : index
    %107 = vector.load %arg29[%c2_90, %c0_91, %c0_92] : memref<4x16x64xbf16, #tpu.memory_space<vmem>>, vector<1x16x64xbf16>
    %108 = vector.shape_cast %107 : vector<1x16x64xbf16> to vector<16x64xbf16>
    %109 = arith.truncf %97 : vector<64x128xf32> to vector<64x128xbf16>
    %cst_93 = arith.constant dense<0.000000e+00> : vector<16x128xf32>
    %110 = tpu.matmul %108, %109, %cst_93 {dimension_numbers = #tpu.dot_dimension_numbers<[1], [0], [0], [1], [0, 0, 1, 1], [], []>} : vector<16x64xbf16>, vector<64x128xbf16>, vector<16x128xf32> -> vector<16x128xf32>
    %111 = arith.maximumf %106, %110 : vector<16x128xf32>
    %c3_94 = arith.constant 3 : index
    %c0_95 = arith.constant 0 : index
    %c0_96 = arith.constant 0 : index
    %112 = vector.load %arg29[%c3_94, %c0_95, %c0_96] : memref<4x16x64xbf16, #tpu.memory_space<vmem>>, vector<1x16x64xbf16>
    %113 = vector.shape_cast %112 : vector<1x16x64xbf16> to vector<16x64xbf16>
    %114 = arith.truncf %97 : vector<64x128xf32> to vector<64x128xbf16>
    %cst_97 = arith.constant dense<0.000000e+00> : vector<16x128xf32>
    %115 = tpu.matmul %113, %114, %cst_97 {dimension_numbers = #tpu.dot_dimension_numbers<[1], [0], [0], [1], [0, 0, 1, 1], [], []>} : vector<16x64xbf16>, vector<64x128xbf16>, vector<16x128xf32> -> vector<16x128xf32>
    %116 = arith.maximumf %111, %115 : vector<16x128xf32>
    %c0_98 = arith.constant 0 : index
    %c0_99 = arith.constant 0 : index
    %117 = vector.load %arg8[%c0_98, %c0_99] : memref<128x128xbf16, #tpu.memory_space<vmem>>, vector<128x128xbf16>
    %118 = arith.truncf %116 : vector<16x128xf32> to vector<16x128xbf16>
    %cst_100 = arith.constant dense<0.000000e+00> : vector<16x128xf32>
    %119 = tpu.matmul %118, %117, %cst_100 {dimension_numbers = #tpu.dot_dimension_numbers<[1], [0], [0], [1], [0, 0, 1, 1], [], []>} : vector<16x128xbf16>, vector<128x128xbf16>, vector<16x128xf32> -> vector<16x128xf32>
    %c0_101 = arith.constant 0 : index
    %c0_102 = arith.constant 0 : index
    %120 = vector.load %arg9[%c0_101, %c0_102] : memref<1x128xf32, #tpu.memory_space<vmem>>, vector<1x128xf32>
    %121 = vector.broadcast %120 : vector<1x128xf32> to vector<16x128xf32>
    %122 = arith.addf %119, %121 : vector<16x128xf32>
    %cst_103 = arith.constant 0.000000e+00 : f32
    %123 = vector.broadcast %cst_103 : f32 to vector<16x128xf32>
    %124 = arith.maximumf %122, %123 : vector<16x128xf32>
    %c0_104 = arith.constant 0 : index
    %c0_105 = arith.constant 0 : index
    %c0_106 = arith.constant 0 : index
    %125 = vector.load %arg27[%c0_104, %c0_105, %c0_106] : memref<9x16x16xbf16, #tpu.memory_space<vmem>>, vector<1x16x16xbf16>
    %126 = vector.shape_cast %125 : vector<1x16x16xbf16> to vector<16x16xbf16>
    %127 = arith.truncf %124 : vector<16x128xf32> to vector<16x128xbf16>
    %cst_107 = arith.constant dense<0.000000e+00> : vector<16x128xf32>
    %128 = tpu.matmul %126, %127, %cst_107 {dimension_numbers = #tpu.dot_dimension_numbers<[1], [0], [0], [1], [0, 0, 1, 1], [], []>} : vector<16x16xbf16>, vector<16x128xbf16>, vector<16x128xf32> -> vector<16x128xf32>
    %c1_108 = arith.constant 1 : index
    %c0_109 = arith.constant 0 : index
    %c0_110 = arith.constant 0 : index
    %129 = vector.load %arg27[%c1_108, %c0_109, %c0_110] : memref<9x16x16xbf16, #tpu.memory_space<vmem>>, vector<1x16x16xbf16>
    %130 = vector.shape_cast %129 : vector<1x16x16xbf16> to vector<16x16xbf16>
    %131 = arith.truncf %124 : vector<16x128xf32> to vector<16x128xbf16>
    %cst_111 = arith.constant dense<0.000000e+00> : vector<16x128xf32>
    %132 = tpu.matmul %130, %131, %cst_111 {dimension_numbers = #tpu.dot_dimension_numbers<[1], [0], [0], [1], [0, 0, 1, 1], [], []>} : vector<16x16xbf16>, vector<16x128xbf16>, vector<16x128xf32> -> vector<16x128xf32>
    %c2_112 = arith.constant 2 : index
    %c0_113 = arith.constant 0 : index
    %c0_114 = arith.constant 0 : index
    %133 = vector.load %arg27[%c2_112, %c0_113, %c0_114] : memref<9x16x16xbf16, #tpu.memory_space<vmem>>, vector<1x16x16xbf16>
    %134 = vector.shape_cast %133 : vector<1x16x16xbf16> to vector<16x16xbf16>
    %135 = arith.truncf %124 : vector<16x128xf32> to vector<16x128xbf16>
    %cst_115 = arith.constant dense<0.000000e+00> : vector<16x128xf32>
    %136 = tpu.matmul %134, %135, %cst_115 {dimension_numbers = #tpu.dot_dimension_numbers<[1], [0], [0], [1], [0, 0, 1, 1], [], []>} : vector<16x16xbf16>, vector<16x128xbf16>, vector<16x128xf32> -> vector<16x128xf32>
    %c3_116 = arith.constant 3 : index
    %c0_117 = arith.constant 0 : index
    %c0_118 = arith.constant 0 : index
    %137 = vector.load %arg27[%c3_116, %c0_117, %c0_118] : memref<9x16x16xbf16, #tpu.memory_space<vmem>>, vector<1x16x16xbf16>
    %138 = vector.shape_cast %137 : vector<1x16x16xbf16> to vector<16x16xbf16>
    %139 = arith.truncf %124 : vector<16x128xf32> to vector<16x128xbf16>
    %cst_119 = arith.constant dense<0.000000e+00> : vector<16x128xf32>
    %140 = tpu.matmul %138, %139, %cst_119 {dimension_numbers = #tpu.dot_dimension_numbers<[1], [0], [0], [1], [0, 0, 1, 1], [], []>} : vector<16x16xbf16>, vector<16x128xbf16>, vector<16x128xf32> -> vector<16x128xf32>
    %c4_120 = arith.constant 4 : index
    %c0_121 = arith.constant 0 : index
    %c0_122 = arith.constant 0 : index
    %141 = vector.load %arg27[%c4_120, %c0_121, %c0_122] : memref<9x16x16xbf16, #tpu.memory_space<vmem>>, vector<1x16x16xbf16>
    %142 = vector.shape_cast %141 : vector<1x16x16xbf16> to vector<16x16xbf16>
    %143 = arith.truncf %124 : vector<16x128xf32> to vector<16x128xbf16>
    %cst_123 = arith.constant dense<0.000000e+00> : vector<16x128xf32>
    %144 = tpu.matmul %142, %143, %cst_123 {dimension_numbers = #tpu.dot_dimension_numbers<[1], [0], [0], [1], [0, 0, 1, 1], [], []>} : vector<16x16xbf16>, vector<16x128xbf16>, vector<16x128xf32> -> vector<16x128xf32>
    %c5_124 = arith.constant 5 : index
    %c0_125 = arith.constant 0 : index
    %c0_126 = arith.constant 0 : index
    %145 = vector.load %arg27[%c5_124, %c0_125, %c0_126] : memref<9x16x16xbf16, #tpu.memory_space<vmem>>, vector<1x16x16xbf16>
    %146 = vector.shape_cast %145 : vector<1x16x16xbf16> to vector<16x16xbf16>
    %147 = arith.truncf %124 : vector<16x128xf32> to vector<16x128xbf16>
    %cst_127 = arith.constant dense<0.000000e+00> : vector<16x128xf32>
    %148 = tpu.matmul %146, %147, %cst_127 {dimension_numbers = #tpu.dot_dimension_numbers<[1], [0], [0], [1], [0, 0, 1, 1], [], []>} : vector<16x16xbf16>, vector<16x128xbf16>, vector<16x128xf32> -> vector<16x128xf32>
    %c6_128 = arith.constant 6 : index
    %c0_129 = arith.constant 0 : index
    %c0_130 = arith.constant 0 : index
    %149 = vector.load %arg27[%c6_128, %c0_129, %c0_130] : memref<9x16x16xbf16, #tpu.memory_space<vmem>>, vector<1x16x16xbf16>
    %150 = vector.shape_cast %149 : vector<1x16x16xbf16> to vector<16x16xbf16>
    %151 = arith.truncf %124 : vector<16x128xf32> to vector<16x128xbf16>
    %cst_131 = arith.constant dense<0.000000e+00> : vector<16x128xf32>
    %152 = tpu.matmul %150, %151, %cst_131 {dimension_numbers = #tpu.dot_dimension_numbers<[1], [0], [0], [1], [0, 0, 1, 1], [], []>} : vector<16x16xbf16>, vector<16x128xbf16>, vector<16x128xf32> -> vector<16x128xf32>
    %c7_132 = arith.constant 7 : index
    %c0_133 = arith.constant 0 : index
    %c0_134 = arith.constant 0 : index
    %153 = vector.load %arg27[%c7_132, %c0_133, %c0_134] : memref<9x16x16xbf16, #tpu.memory_space<vmem>>, vector<1x16x16xbf16>
    %154 = vector.shape_cast %153 : vector<1x16x16xbf16> to vector<16x16xbf16>
    %155 = arith.truncf %124 : vector<16x128xf32> to vector<16x128xbf16>
    %cst_135 = arith.constant dense<0.000000e+00> : vector<16x128xf32>
    %156 = tpu.matmul %154, %155, %cst_135 {dimension_numbers = #tpu.dot_dimension_numbers<[1], [0], [0], [1], [0, 0, 1, 1], [], []>} : vector<16x16xbf16>, vector<16x128xbf16>, vector<16x128xf32> -> vector<16x128xf32>
    %c8_136 = arith.constant 8 : index
    %c0_137 = arith.constant 0 : index
    %c0_138 = arith.constant 0 : index
    %157 = vector.load %arg27[%c8_136, %c0_137, %c0_138] : memref<9x16x16xbf16, #tpu.memory_space<vmem>>, vector<1x16x16xbf16>
    %158 = vector.shape_cast %157 : vector<1x16x16xbf16> to vector<16x16xbf16>
    %159 = arith.truncf %124 : vector<16x128xf32> to vector<16x128xbf16>
    %cst_139 = arith.constant dense<0.000000e+00> : vector<16x128xf32>
    %160 = tpu.matmul %158, %159, %cst_139 {dimension_numbers = #tpu.dot_dimension_numbers<[1], [0], [0], [1], [0, 0, 1, 1], [], []>} : vector<16x16xbf16>, vector<16x128xbf16>, vector<16x128xf32> -> vector<16x128xf32>
    %161 = tpu.concatenate %128, %132, %136, %140, %144, %148, %152, %156, %160 in 1 : vector<16x128xf32>, vector<16x128xf32>, vector<16x128xf32>, vector<16x128xf32>, vector<16x128xf32>, vector<16x128xf32>, vector<16x128xf32>, vector<16x128xf32>, vector<16x128xf32> -> vector<16x1152xf32>
    %c0_140 = arith.constant 0 : index
    %c0_141 = arith.constant 0 : index
    %162 = vector.load %arg10[%c0_140, %c0_141] : memref<1152x128xbf16, #tpu.memory_space<vmem>>, vector<1152x128xbf16>
    %163 = arith.truncf %161 : vector<16x1152xf32> to vector<16x1152xbf16>
    %cst_142 = arith.constant dense<0.000000e+00> : vector<16x128xf32>
    %164 = tpu.matmul %163, %162, %cst_142 {dimension_numbers = #tpu.dot_dimension_numbers<[1], [0], [0], [1], [0, 0, 1, 1], [], []>} : vector<16x1152xbf16>, vector<1152x128xbf16>, vector<16x128xf32> -> vector<16x128xf32>
    %c0_143 = arith.constant 0 : index
    %c0_144 = arith.constant 0 : index
    %165 = vector.load %arg11[%c0_143, %c0_144] : memref<1x128xf32, #tpu.memory_space<vmem>>, vector<1x128xf32>
    %166 = vector.broadcast %165 : vector<1x128xf32> to vector<16x128xf32>
    %167 = arith.addf %164, %166 : vector<16x128xf32>
    %cst_145 = arith.constant 0.000000e+00 : f32
    %168 = vector.broadcast %cst_145 : f32 to vector<16x128xf32>
    %169 = arith.maximumf %167, %168 : vector<16x128xf32>
    %c0_146 = arith.constant 0 : index
    %c0_147 = arith.constant 0 : index
    %170 = vector.load %arg12[%c0_146, %c0_147] : memref<128x128xbf16, #tpu.memory_space<vmem>>, vector<128x128xbf16>
    %171 = arith.truncf %169 : vector<16x128xf32> to vector<16x128xbf16>
    %cst_148 = arith.constant dense<0.000000e+00> : vector<16x128xf32>
    %172 = tpu.matmul %171, %170, %cst_148 {dimension_numbers = #tpu.dot_dimension_numbers<[1], [0], [0], [1], [0, 0, 1, 1], [], []>} : vector<16x128xbf16>, vector<128x128xbf16>, vector<16x128xf32> -> vector<16x128xf32>
    %c0_149 = arith.constant 0 : index
    %c0_150 = arith.constant 0 : index
    %173 = vector.load %arg13[%c0_149, %c0_150] : memref<1x128xf32, #tpu.memory_space<vmem>>, vector<1x128xf32>
    %174 = vector.broadcast %173 : vector<1x128xf32> to vector<16x128xf32>
    %175 = arith.addf %172, %174 : vector<16x128xf32>
    %cst_151 = arith.constant 0.000000e+00 : f32
    %176 = vector.broadcast %cst_151 : f32 to vector<16x128xf32>
    %177 = arith.maximumf %175, %176 : vector<16x128xf32>
    %c0_152 = arith.constant 0 : index
    %c0_153 = arith.constant 0 : index
    %c0_154 = arith.constant 0 : index
    %178 = vector.load %arg30[%c0_152, %c0_153, %c0_154] : memref<4x4x16xbf16, #tpu.memory_space<vmem>>, vector<1x4x16xbf16>
    %179 = vector.shape_cast %178 : vector<1x4x16xbf16> to vector<4x16xbf16>
    %180 = arith.truncf %177 : vector<16x128xf32> to vector<16x128xbf16>
    %cst_155 = arith.constant dense<0.000000e+00> : vector<4x128xf32>
    %181 = tpu.matmul %179, %180, %cst_155 {dimension_numbers = #tpu.dot_dimension_numbers<[1], [0], [0], [1], [0, 0, 1, 1], [], []>} : vector<4x16xbf16>, vector<16x128xbf16>, vector<4x128xf32> -> vector<4x128xf32>
    %c1_156 = arith.constant 1 : index
    %c0_157 = arith.constant 0 : index
    %c0_158 = arith.constant 0 : index
    %182 = vector.load %arg30[%c1_156, %c0_157, %c0_158] : memref<4x4x16xbf16, #tpu.memory_space<vmem>>, vector<1x4x16xbf16>
    %183 = vector.shape_cast %182 : vector<1x4x16xbf16> to vector<4x16xbf16>
    %184 = arith.truncf %177 : vector<16x128xf32> to vector<16x128xbf16>
    %cst_159 = arith.constant dense<0.000000e+00> : vector<4x128xf32>
    %185 = tpu.matmul %183, %184, %cst_159 {dimension_numbers = #tpu.dot_dimension_numbers<[1], [0], [0], [1], [0, 0, 1, 1], [], []>} : vector<4x16xbf16>, vector<16x128xbf16>, vector<4x128xf32> -> vector<4x128xf32>
    %186 = arith.maximumf %181, %185 : vector<4x128xf32>
    %c2_160 = arith.constant 2 : index
    %c0_161 = arith.constant 0 : index
    %c0_162 = arith.constant 0 : index
    %187 = vector.load %arg30[%c2_160, %c0_161, %c0_162] : memref<4x4x16xbf16, #tpu.memory_space<vmem>>, vector<1x4x16xbf16>
    %188 = vector.shape_cast %187 : vector<1x4x16xbf16> to vector<4x16xbf16>
    %189 = arith.truncf %177 : vector<16x128xf32> to vector<16x128xbf16>
    %cst_163 = arith.constant dense<0.000000e+00> : vector<4x128xf32>
    %190 = tpu.matmul %188, %189, %cst_163 {dimension_numbers = #tpu.dot_dimension_numbers<[1], [0], [0], [1], [0, 0, 1, 1], [], []>} : vector<4x16xbf16>, vector<16x128xbf16>, vector<4x128xf32> -> vector<4x128xf32>
    %191 = arith.maximumf %186, %190 : vector<4x128xf32>
    %c3_164 = arith.constant 3 : index
    %c0_165 = arith.constant 0 : index
    %c0_166 = arith.constant 0 : index
    %192 = vector.load %arg30[%c3_164, %c0_165, %c0_166] : memref<4x4x16xbf16, #tpu.memory_space<vmem>>, vector<1x4x16xbf16>
    %193 = vector.shape_cast %192 : vector<1x4x16xbf16> to vector<4x16xbf16>
    %194 = arith.truncf %177 : vector<16x128xf32> to vector<16x128xbf16>
    %cst_167 = arith.constant dense<0.000000e+00> : vector<4x128xf32>
    %195 = tpu.matmul %193, %194, %cst_167 {dimension_numbers = #tpu.dot_dimension_numbers<[1], [0], [0], [1], [0, 0, 1, 1], [], []>} : vector<4x16xbf16>, vector<16x128xbf16>, vector<4x128xf32> -> vector<4x128xf32>
    %196 = arith.maximumf %191, %195 : vector<4x128xf32>
    %c0_168 = arith.constant 0 : index
    %c0_169 = arith.constant 0 : index
    %197 = vector.load %arg14[%c0_168, %c0_169] : memref<128x256xbf16, #tpu.memory_space<vmem>>, vector<128x256xbf16>
    %198 = arith.truncf %196 : vector<4x128xf32> to vector<4x128xbf16>
    %cst_170 = arith.constant dense<0.000000e+00> : vector<4x256xf32>
    %199 = tpu.matmul %198, %197, %cst_170 {dimension_numbers = #tpu.dot_dimension_numbers<[1], [0], [0], [1], [0, 0, 1, 1], [], []>} : vector<4x128xbf16>, vector<128x256xbf16>, vector<4x256xf32> -> vector<4x256xf32>
    %c0_171 = arith.constant 0 : index
    %c0_172 = arith.constant 0 : index
    %200 = vector.load %arg15[%c0_171, %c0_172] : memref<1x256xf32, #tpu.memory_space<vmem>>, vector<1x256xf32>
    %201 = vector.broadcast %200 : vector<1x256xf32> to vector<4x256xf32>
    %202 = arith.addf %199, %201 : vector<4x256xf32>
    %cst_173 = arith.constant 0.000000e+00 : f32
    %203 = vector.broadcast %cst_173 : f32 to vector<4x256xf32>
    %204 = arith.maximumf %202, %203 : vector<4x256xf32>
    %c0_174 = arith.constant 0 : index
    %c0_175 = arith.constant 0 : index
    %c0_176 = arith.constant 0 : index
    %205 = vector.load %arg28[%c0_174, %c0_175, %c0_176] : memref<9x4x4xbf16, #tpu.memory_space<vmem>>, vector<1x4x4xbf16>
    %206 = vector.shape_cast %205 : vector<1x4x4xbf16> to vector<4x4xbf16>
    %207 = arith.truncf %204 : vector<4x256xf32> to vector<4x256xbf16>
    %cst_177 = arith.constant dense<0.000000e+00> : vector<4x256xf32>
    %208 = tpu.matmul %206, %207, %cst_177 {dimension_numbers = #tpu.dot_dimension_numbers<[1], [0], [0], [1], [0, 0, 1, 1], [], []>} : vector<4x4xbf16>, vector<4x256xbf16>, vector<4x256xf32> -> vector<4x256xf32>
    %c1_178 = arith.constant 1 : index
    %c0_179 = arith.constant 0 : index
    %c0_180 = arith.constant 0 : index
    %209 = vector.load %arg28[%c1_178, %c0_179, %c0_180] : memref<9x4x4xbf16, #tpu.memory_space<vmem>>, vector<1x4x4xbf16>
    %210 = vector.shape_cast %209 : vector<1x4x4xbf16> to vector<4x4xbf16>
    %211 = arith.truncf %204 : vector<4x256xf32> to vector<4x256xbf16>
    %cst_181 = arith.constant dense<0.000000e+00> : vector<4x256xf32>
    %212 = tpu.matmul %210, %211, %cst_181 {dimension_numbers = #tpu.dot_dimension_numbers<[1], [0], [0], [1], [0, 0, 1, 1], [], []>} : vector<4x4xbf16>, vector<4x256xbf16>, vector<4x256xf32> -> vector<4x256xf32>
    %c2_182 = arith.constant 2 : index
    %c0_183 = arith.constant 0 : index
    %c0_184 = arith.constant 0 : index
    %213 = vector.load %arg28[%c2_182, %c0_183, %c0_184] : memref<9x4x4xbf16, #tpu.memory_space<vmem>>, vector<1x4x4xbf16>
    %214 = vector.shape_cast %213 : vector<1x4x4xbf16> to vector<4x4xbf16>
    %215 = arith.truncf %204 : vector<4x256xf32> to vector<4x256xbf16>
    %cst_185 = arith.constant dense<0.000000e+00> : vector<4x256xf32>
    %216 = tpu.matmul %214, %215, %cst_185 {dimension_numbers = #tpu.dot_dimension_numbers<[1], [0], [0], [1], [0, 0, 1, 1], [], []>} : vector<4x4xbf16>, vector<4x256xbf16>, vector<4x256xf32> -> vector<4x256xf32>
    %c3_186 = arith.constant 3 : index
    %c0_187 = arith.constant 0 : index
    %c0_188 = arith.constant 0 : index
    %217 = vector.load %arg28[%c3_186, %c0_187, %c0_188] : memref<9x4x4xbf16, #tpu.memory_space<vmem>>, vector<1x4x4xbf16>
    %218 = vector.shape_cast %217 : vector<1x4x4xbf16> to vector<4x4xbf16>
    %219 = arith.truncf %204 : vector<4x256xf32> to vector<4x256xbf16>
    %cst_189 = arith.constant dense<0.000000e+00> : vector<4x256xf32>
    %220 = tpu.matmul %218, %219, %cst_189 {dimension_numbers = #tpu.dot_dimension_numbers<[1], [0], [0], [1], [0, 0, 1, 1], [], []>} : vector<4x4xbf16>, vector<4x256xbf16>, vector<4x256xf32> -> vector<4x256xf32>
    %c4_190 = arith.constant 4 : index
    %c0_191 = arith.constant 0 : index
    %c0_192 = arith.constant 0 : index
    %221 = vector.load %arg28[%c4_190, %c0_191, %c0_192] : memref<9x4x4xbf16, #tpu.memory_space<vmem>>, vector<1x4x4xbf16>
    %222 = vector.shape_cast %221 : vector<1x4x4xbf16> to vector<4x4xbf16>
    %223 = arith.truncf %204 : vector<4x256xf32> to vector<4x256xbf16>
    %cst_193 = arith.constant dense<0.000000e+00> : vector<4x256xf32>
    %224 = tpu.matmul %222, %223, %cst_193 {dimension_numbers = #tpu.dot_dimension_numbers<[1], [0], [0], [1], [0, 0, 1, 1], [], []>} : vector<4x4xbf16>, vector<4x256xbf16>, vector<4x256xf32> -> vector<4x256xf32>
    %c5_194 = arith.constant 5 : index
    %c0_195 = arith.constant 0 : index
    %c0_196 = arith.constant 0 : index
    %225 = vector.load %arg28[%c5_194, %c0_195, %c0_196] : memref<9x4x4xbf16, #tpu.memory_space<vmem>>, vector<1x4x4xbf16>
    %226 = vector.shape_cast %225 : vector<1x4x4xbf16> to vector<4x4xbf16>
    %227 = arith.truncf %204 : vector<4x256xf32> to vector<4x256xbf16>
    %cst_197 = arith.constant dense<0.000000e+00> : vector<4x256xf32>
    %228 = tpu.matmul %226, %227, %cst_197 {dimension_numbers = #tpu.dot_dimension_numbers<[1], [0], [0], [1], [0, 0, 1, 1], [], []>} : vector<4x4xbf16>, vector<4x256xbf16>, vector<4x256xf32> -> vector<4x256xf32>
    %c6_198 = arith.constant 6 : index
    %c0_199 = arith.constant 0 : index
    %c0_200 = arith.constant 0 : index
    %229 = vector.load %arg28[%c6_198, %c0_199, %c0_200] : memref<9x4x4xbf16, #tpu.memory_space<vmem>>, vector<1x4x4xbf16>
    %230 = vector.shape_cast %229 : vector<1x4x4xbf16> to vector<4x4xbf16>
    %231 = arith.truncf %204 : vector<4x256xf32> to vector<4x256xbf16>
    %cst_201 = arith.constant dense<0.000000e+00> : vector<4x256xf32>
    %232 = tpu.matmul %230, %231, %cst_201 {dimension_numbers = #tpu.dot_dimension_numbers<[1], [0], [0], [1], [0, 0, 1, 1], [], []>} : vector<4x4xbf16>, vector<4x256xbf16>, vector<4x256xf32> -> vector<4x256xf32>
    %c7_202 = arith.constant 7 : index
    %c0_203 = arith.constant 0 : index
    %c0_204 = arith.constant 0 : index
    %233 = vector.load %arg28[%c7_202, %c0_203, %c0_204] : memref<9x4x4xbf16, #tpu.memory_space<vmem>>, vector<1x4x4xbf16>
    %234 = vector.shape_cast %233 : vector<1x4x4xbf16> to vector<4x4xbf16>
    %235 = arith.truncf %204 : vector<4x256xf32> to vector<4x256xbf16>
    %cst_205 = arith.constant dense<0.000000e+00> : vector<4x256xf32>
    %236 = tpu.matmul %234, %235, %cst_205 {dimension_numbers = #tpu.dot_dimension_numbers<[1], [0], [0], [1], [0, 0, 1, 1], [], []>} : vector<4x4xbf16>, vector<4x256xbf16>, vector<4x256xf32> -> vector<4x256xf32>
    %c8_206 = arith.constant 8 : index
    %c0_207 = arith.constant 0 : index
    %c0_208 = arith.constant 0 : index
    %237 = vector.load %arg28[%c8_206, %c0_207, %c0_208] : memref<9x4x4xbf16, #tpu.memory_space<vmem>>, vector<1x4x4xbf16>
    %238 = vector.shape_cast %237 : vector<1x4x4xbf16> to vector<4x4xbf16>
    %239 = arith.truncf %204 : vector<4x256xf32> to vector<4x256xbf16>
    %cst_209 = arith.constant dense<0.000000e+00> : vector<4x256xf32>
    %240 = tpu.matmul %238, %239, %cst_209 {dimension_numbers = #tpu.dot_dimension_numbers<[1], [0], [0], [1], [0, 0, 1, 1], [], []>} : vector<4x4xbf16>, vector<4x256xbf16>, vector<4x256xf32> -> vector<4x256xf32>
    %241 = tpu.concatenate %208, %212, %216, %220, %224, %228, %232, %236, %240 in 1 : vector<4x256xf32>, vector<4x256xf32>, vector<4x256xf32>, vector<4x256xf32>, vector<4x256xf32>, vector<4x256xf32>, vector<4x256xf32>, vector<4x256xf32>, vector<4x256xf32> -> vector<4x2304xf32>
    %c0_210 = arith.constant 0 : index
    %c0_211 = arith.constant 0 : index
    %242 = vector.load %arg16[%c0_210, %c0_211] : memref<2304x256xbf16, #tpu.memory_space<vmem>>, vector<2304x256xbf16>
    %243 = arith.truncf %241 : vector<4x2304xf32> to vector<4x2304xbf16>
    %cst_212 = arith.constant dense<0.000000e+00> : vector<4x256xf32>
    %244 = tpu.matmul %243, %242, %cst_212 {dimension_numbers = #tpu.dot_dimension_numbers<[1], [0], [0], [1], [0, 0, 1, 1], [], []>} : vector<4x2304xbf16>, vector<2304x256xbf16>, vector<4x256xf32> -> vector<4x256xf32>
    %c0_213 = arith.constant 0 : index
    %c0_214 = arith.constant 0 : index
    %245 = vector.load %arg17[%c0_213, %c0_214] : memref<1x256xf32, #tpu.memory_space<vmem>>, vector<1x256xf32>
    %246 = vector.broadcast %245 : vector<1x256xf32> to vector<4x256xf32>
    %247 = arith.addf %244, %246 : vector<4x256xf32>
    %cst_215 = arith.constant 0.000000e+00 : f32
    %248 = vector.broadcast %cst_215 : f32 to vector<4x256xf32>
    %249 = arith.maximumf %247, %248 : vector<4x256xf32>
    %c0_216 = arith.constant 0 : index
    %c0_217 = arith.constant 0 : index
    %250 = vector.load %arg18[%c0_216, %c0_217] : memref<256x256xbf16, #tpu.memory_space<vmem>>, vector<256x256xbf16>
    %251 = arith.truncf %249 : vector<4x256xf32> to vector<4x256xbf16>
    %cst_218 = arith.constant dense<0.000000e+00> : vector<4x256xf32>
    %252 = tpu.matmul %251, %250, %cst_218 {dimension_numbers = #tpu.dot_dimension_numbers<[1], [0], [0], [1], [0, 0, 1, 1], [], []>} : vector<4x256xbf16>, vector<256x256xbf16>, vector<4x256xf32> -> vector<4x256xf32>
    %c0_219 = arith.constant 0 : index
    %c0_220 = arith.constant 0 : index
    %253 = vector.load %arg19[%c0_219, %c0_220] : memref<1x256xf32, #tpu.memory_space<vmem>>, vector<1x256xf32>
    %254 = vector.broadcast %253 : vector<1x256xf32> to vector<4x256xf32>
    %255 = arith.addf %252, %254 : vector<4x256xf32>
    %cst_221 = arith.constant 0.000000e+00 : f32
    %256 = vector.broadcast %cst_221 : f32 to vector<4x256xf32>
    %257 = arith.maximumf %255, %256 : vector<4x256xf32>
    %cst_222 = arith.constant dense<0xFF800000> : vector<128xf32>
    %258 = vector.multi_reduction <maximumf>, %116, %cst_222 [0] : vector<16x128xf32> to vector<128xf32>
    %259 = vector.shape_cast %258 : vector<128xf32> to vector<1x128xf32>
    %cst_223 = arith.constant dense<0xFF800000> : vector<128xf32>
    %260 = vector.multi_reduction <maximumf>, %196, %cst_223 [0] : vector<4x128xf32> to vector<128xf32>
    %261 = vector.shape_cast %260 : vector<128xf32> to vector<1x128xf32>
    %cst_224 = arith.constant dense<0xFF800000> : vector<256xf32>
    %262 = vector.multi_reduction <maximumf>, %257, %cst_224 [0] : vector<4x256xf32> to vector<256xf32>
    %263 = vector.shape_cast %262 : vector<256xf32> to vector<1x256xf32>
    %264 = tpu.concatenate %259, %261, %263 in 1 : vector<1x128xf32>, vector<1x128xf32>, vector<1x256xf32> -> vector<1x512xf32>
    %265 = tpu.iota {dimensions = array<i32: 0>} : vector<8x1xi32>
    %c0_i32 = arith.constant 0 : i32
    %266 = vector.broadcast %c0_i32 : i32 to vector<8x1xi32>
    %267 = arith.cmpi eq, %265, %266 : vector<8x1xi32>
    %268 = vector.shape_cast %264 : vector<1x512xf32> to vector<1x512xf32>
    %269 = vector.broadcast %268 : vector<1x512xf32> to vector<8x512xf32>
    %cst_225 = arith.constant 0.000000e+00 : f32
    %270 = vector.shape_cast %267 : vector<8x1xi1> to vector<8x1xi1>
    %271 = vector.broadcast %270 : vector<8x1xi1> to vector<8x512xi1>
    %272 = vector.broadcast %cst_225 : f32 to vector<8x512xf32>
    %273 = arith.select %271, %269, %272 : vector<8x512xi1>, vector<8x512xf32>
    %c0_226 = arith.constant 0 : index
    %c0_227 = arith.constant 0 : index
    %274 = vector.load %arg20[%c0_226, %c0_227] : memref<512x512xbf16, #tpu.memory_space<vmem>>, vector<512x512xbf16>
    %275 = arith.truncf %273 : vector<8x512xf32> to vector<8x512xbf16>
    %cst_228 = arith.constant dense<0.000000e+00> : vector<8x512xf32>
    %276 = tpu.matmul %275, %274, %cst_228 {dimension_numbers = #tpu.dot_dimension_numbers<[1], [0], [0], [1], [0, 0, 1, 1], [], []>} : vector<8x512xbf16>, vector<512x512xbf16>, vector<8x512xf32> -> vector<8x512xf32>
    %c0_229 = arith.constant 0 : index
    %c0_230 = arith.constant 0 : index
    %277 = vector.load %arg21[%c0_229, %c0_230] : memref<1x512xf32, #tpu.memory_space<vmem>>, vector<1x512xf32>
    %278 = vector.broadcast %277 : vector<1x512xf32> to vector<8x512xf32>
    %279 = arith.addf %276, %278 : vector<8x512xf32>
    %cst_231 = arith.constant 0.000000e+00 : f32
    %280 = vector.broadcast %cst_231 : f32 to vector<8x512xf32>
    %281 = arith.maximumf %279, %280 : vector<8x512xf32>
    %c0_232 = arith.constant 0 : index
    %c0_233 = arith.constant 0 : index
    %282 = vector.load %arg22[%c0_232, %c0_233] : memref<512x128xbf16, #tpu.memory_space<vmem>>, vector<512x128xbf16>
    %283 = arith.truncf %281 : vector<8x512xf32> to vector<8x512xbf16>
    %cst_234 = arith.constant dense<0.000000e+00> : vector<8x128xf32>
    %284 = tpu.matmul %283, %282, %cst_234 {dimension_numbers = #tpu.dot_dimension_numbers<[1], [0], [0], [1], [0, 0, 1, 1], [], []>} : vector<8x512xbf16>, vector<512x128xbf16>, vector<8x128xf32> -> vector<8x128xf32>
    %c0_235 = arith.constant 0 : index
    %c0_236 = arith.constant 0 : index
    %285 = vector.load %arg23[%c0_235, %c0_236] : memref<1x128xf32, #tpu.memory_space<vmem>>, vector<1x128xf32>
    %286 = vector.broadcast %285 : vector<1x128xf32> to vector<8x128xf32>
    %287 = arith.addf %284, %286 : vector<8x128xf32>
    %cst_237 = arith.constant 0.000000e+00 : f32
    %288 = vector.broadcast %cst_237 : f32 to vector<8x128xf32>
    %289 = arith.maximumf %287, %288 : vector<8x128xf32>
    %c0_238 = arith.constant 0 : index
    %c0_239 = arith.constant 0 : index
    %290 = vector.load %arg24[%c0_238, %c0_239] : memref<128x128xbf16, #tpu.memory_space<vmem>>, vector<128x128xbf16>
    %291 = arith.truncf %289 : vector<8x128xf32> to vector<8x128xbf16>
    %cst_240 = arith.constant dense<0.000000e+00> : vector<8x128xf32>
    %292 = tpu.matmul %291, %290, %cst_240 {dimension_numbers = #tpu.dot_dimension_numbers<[1], [0], [0], [1], [0, 0, 1, 1], [], []>} : vector<8x128xbf16>, vector<128x128xbf16>, vector<8x128xf32> -> vector<8x128xf32>
    %c0_241 = arith.constant 0 : index
    %c0_242 = arith.constant 0 : index
    %293 = vector.load %arg25[%c0_241, %c0_242] : memref<1x128xf32, #tpu.memory_space<vmem>>, vector<1x128xf32>
    %294 = vector.broadcast %293 : vector<1x128xf32> to vector<8x128xf32>
    %295 = arith.addf %292, %294 : vector<8x128xf32>
    %c0_243 = arith.constant 0 : index
    %c0_244 = arith.constant 0 : index
    %296 = vector.load %arg31[%c0_243, %c0_244] : memref<8x128xf32, #tpu.memory_space<vmem>>, vector<8x128xf32>
    tpu.vector_store %arg31[%c0_243, %c0_244], %295 {strides = array<i32>} : memref<8x128xf32, #tpu.memory_space<vmem>>, vector<8x128xf32>,
    return
  }
  func.func @transform_0(%arg0: i32) -> (i32, i32) {
    %c0_i32 = arith.constant 0 : i32
    %c0_i32_0 = arith.constant 0 : i32
    return %arg0, %c0_i32 : i32, i32
  }
  func.func @transform_1(%arg0: i32) -> (i32, i32) {
    %c0_i32 = arith.constant 0 : i32
    %c0_i32_0 = arith.constant 0 : i32
    %c0_i32_1 = arith.constant 0 : i32
    return %c0_i32, %c0_i32_0 : i32, i32
  }
  func.func @transform_2(%arg0: i32) -> (i32, i32) {
    %c0_i32 = arith.constant 0 : i32
    %c0_i32_0 = arith.constant 0 : i32
    %c0_i32_1 = arith.constant 0 : i32
    return %c0_i32, %c0_i32_0 : i32, i32
  }
  func.func @transform_3(%arg0: i32) -> (i32, i32) {
    %c0_i32 = arith.constant 0 : i32
    %c0_i32_0 = arith.constant 0 : i32
    %c0_i32_1 = arith.constant 0 : i32
    return %c0_i32, %c0_i32_0 : i32, i32
  }
  func.func @transform_4(%arg0: i32) -> (i32, i32) {
    %c0_i32 = arith.constant 0 : i32
    %c0_i32_0 = arith.constant 0 : i32
    %c0_i32_1 = arith.constant 0 : i32
    return %c0_i32, %c0_i32_0 : i32, i32
  }
  func.func @transform_5(%arg0: i32) -> (i32, i32) {
    %c0_i32 = arith.constant 0 : i32
    %c0_i32_0 = arith.constant 0 : i32
    %c0_i32_1 = arith.constant 0 : i32
    return %c0_i32, %c0_i32_0 : i32, i32
  }
  func.func @transform_6(%arg0: i32) -> (i32, i32) {
    %c0_i32 = arith.constant 0 : i32
    %c0_i32_0 = arith.constant 0 : i32
    %c0_i32_1 = arith.constant 0 : i32
    return %c0_i32, %c0_i32_0 : i32, i32
  }
  func.func @transform_7(%arg0: i32) -> (i32, i32) {
    %c0_i32 = arith.constant 0 : i32
    %c0_i32_0 = arith.constant 0 : i32
    %c0_i32_1 = arith.constant 0 : i32
    return %c0_i32, %c0_i32_0 : i32, i32
  }
  func.func @transform_8(%arg0: i32) -> (i32, i32) {
    %c0_i32 = arith.constant 0 : i32
    %c0_i32_0 = arith.constant 0 : i32
    %c0_i32_1 = arith.constant 0 : i32
    return %c0_i32, %c0_i32_0 : i32, i32
  }
  func.func @transform_9(%arg0: i32) -> (i32, i32) {
    %c0_i32 = arith.constant 0 : i32
    %c0_i32_0 = arith.constant 0 : i32
    %c0_i32_1 = arith.constant 0 : i32
    return %c0_i32, %c0_i32_0 : i32, i32
  }
  func.func @transform_10(%arg0: i32) -> (i32, i32) {
    %c0_i32 = arith.constant 0 : i32
    %c0_i32_0 = arith.constant 0 : i32
    %c0_i32_1 = arith.constant 0 : i32
    return %c0_i32, %c0_i32_0 : i32, i32
  }
  func.func @transform_11(%arg0: i32) -> (i32, i32) {
    %c0_i32 = arith.constant 0 : i32
    %c0_i32_0 = arith.constant 0 : i32
    %c0_i32_1 = arith.constant 0 : i32
    return %c0_i32, %c0_i32_0 : i32, i32
  }
  func.func @transform_12(%arg0: i32) -> (i32, i32) {
    %c0_i32 = arith.constant 0 : i32
    %c0_i32_0 = arith.constant 0 : i32
    %c0_i32_1 = arith.constant 0 : i32
    return %c0_i32, %c0_i32_0 : i32, i32
  }
  func.func @transform_13(%arg0: i32) -> (i32, i32) {
    %c0_i32 = arith.constant 0 : i32
    %c0_i32_0 = arith.constant 0 : i32
    %c0_i32_1 = arith.constant 0 : i32
    return %c0_i32, %c0_i32_0 : i32, i32
  }
  func.func @transform_14(%arg0: i32) -> (i32, i32) {
    %c0_i32 = arith.constant 0 : i32
    %c0_i32_0 = arith.constant 0 : i32
    %c0_i32_1 = arith.constant 0 : i32
    return %c0_i32, %c0_i32_0 : i32, i32
  }
  func.func @transform_15(%arg0: i32) -> (i32, i32) {
    %c0_i32 = arith.constant 0 : i32
    %c0_i32_0 = arith.constant 0 : i32
    %c0_i32_1 = arith.constant 0 : i32
    return %c0_i32, %c0_i32_0 : i32, i32
  }
  func.func @transform_16(%arg0: i32) -> (i32, i32) {
    %c0_i32 = arith.constant 0 : i32
    %c0_i32_0 = arith.constant 0 : i32
    %c0_i32_1 = arith.constant 0 : i32
    return %c0_i32, %c0_i32_0 : i32, i32
  }
  func.func @transform_17(%arg0: i32) -> (i32, i32) {
    %c0_i32 = arith.constant 0 : i32
    %c0_i32_0 = arith.constant 0 : i32
    %c0_i32_1 = arith.constant 0 : i32
    return %c0_i32, %c0_i32_0 : i32, i32
  }
  func.func @transform_18(%arg0: i32) -> (i32, i32) {
    %c0_i32 = arith.constant 0 : i32
    %c0_i32_0 = arith.constant 0 : i32
    %c0_i32_1 = arith.constant 0 : i32
    return %c0_i32, %c0_i32_0 : i32, i32
  }
  func.func @transform_19(%arg0: i32) -> (i32, i32) {
    %c0_i32 = arith.constant 0 : i32
    %c0_i32_0 = arith.constant 0 : i32
    %c0_i32_1 = arith.constant 0 : i32
    return %c0_i32, %c0_i32_0 : i32, i32
  }
  func.func @transform_20(%arg0: i32) -> (i32, i32) {
    %c0_i32 = arith.constant 0 : i32
    %c0_i32_0 = arith.constant 0 : i32
    %c0_i32_1 = arith.constant 0 : i32
    return %c0_i32, %c0_i32_0 : i32, i32
  }
  func.func @transform_21(%arg0: i32) -> (i32, i32) {
    %c0_i32 = arith.constant 0 : i32
    %c0_i32_0 = arith.constant 0 : i32
    %c0_i32_1 = arith.constant 0 : i32
    return %c0_i32, %c0_i32_0 : i32, i32
  }
  func.func @transform_22(%arg0: i32) -> (i32, i32) {
    %c0_i32 = arith.constant 0 : i32
    %c0_i32_0 = arith.constant 0 : i32
    %c0_i32_1 = arith.constant 0 : i32
    return %c0_i32, %c0_i32_0 : i32, i32
  }
  func.func @transform_23(%arg0: i32) -> (i32, i32) {
    %c0_i32 = arith.constant 0 : i32
    %c0_i32_0 = arith.constant 0 : i32
    %c0_i32_1 = arith.constant 0 : i32
    return %c0_i32, %c0_i32_0 : i32, i32
  }
  func.func @transform_24(%arg0: i32) -> (i32, i32) {
    %c0_i32 = arith.constant 0 : i32
    %c0_i32_0 = arith.constant 0 : i32
    %c0_i32_1 = arith.constant 0 : i32
    return %c0_i32, %c0_i32_0 : i32, i32
  }
  func.func @transform_25(%arg0: i32) -> (i32, i32, i32) {
    %c0_i32 = arith.constant 0 : i32
    %c0_i32_0 = arith.constant 0 : i32
    %c0_i32_1 = arith.constant 0 : i32
    %c0_i32_2 = arith.constant 0 : i32
    return %c0_i32, %c0_i32_0, %c0_i32_1 : i32, i32, i32
  }
  func.func @transform_26(%arg0: i32) -> (i32, i32, i32) {
    %c0_i32 = arith.constant 0 : i32
    %c0_i32_0 = arith.constant 0 : i32
    %c0_i32_1 = arith.constant 0 : i32
    %c0_i32_2 = arith.constant 0 : i32
    return %c0_i32, %c0_i32_0, %c0_i32_1 : i32, i32, i32
  }
  func.func @transform_27(%arg0: i32) -> (i32, i32, i32) {
    %c0_i32 = arith.constant 0 : i32
    %c0_i32_0 = arith.constant 0 : i32
    %c0_i32_1 = arith.constant 0 : i32
    %c0_i32_2 = arith.constant 0 : i32
    return %c0_i32, %c0_i32_0, %c0_i32_1 : i32, i32, i32
  }
  func.func @transform_28(%arg0: i32) -> (i32, i32, i32) {
    %c0_i32 = arith.constant 0 : i32
    %c0_i32_0 = arith.constant 0 : i32
    %c0_i32_1 = arith.constant 0 : i32
    %c0_i32_2 = arith.constant 0 : i32
    return %c0_i32, %c0_i32_0, %c0_i32_1 : i32, i32, i32
  }
  func.func @transform_29(%arg0: i32) -> (i32, i32, i32) {
    %c0_i32 = arith.constant 0 : i32
    %c0_i32_0 = arith.constant 0 : i32
    %c0_i32_1 = arith.constant 0 : i32
    %c0_i32_2 = arith.constant 0 : i32
    return %c0_i32, %c0_i32_0, %c0_i32_1 : i32, i32, i32
  }
  func.func @transform_30(%arg0: i32) -> (i32, i32) {
    %c0_i32 = arith.constant 0 : i32
    %c0_i32_0 = arith.constant 0 : i32
    return %arg0, %c0_i32 : i32, i32
  }
}

</mosaic_0001>

<llo_original>
// kernel: forward.1
$region0: #{forward.1}
  #allocation0 [shape = 'u32[]', space=smem, size = 0x4, offset = 0x4, fixed_abs, tag = 'smem constant byte address 0x4 - core index']
  #allocation1 [shape = 'u32[144,128]{1,0:T(1,128)}', space=vmem, size = 0x12000, scoped, tag = 'internal scratch']
  %s0 = inlined_call_operand.smem [shape: u32[31], index: -1, kind: input, shape index: {}]
  %s1 = sld [smem:[%s0]]
  %s2 = scalar_lea.smem %s0, 1
  %s3 = sld [smem:[%s2]]
  %s4 = scalar_lea.smem %s0, 2
  %s5 = sld [smem:[%s4]]
  %s6 = scalar_lea.smem %s0, 3
  %s7 = sld [smem:[%s6]]
  %s8 = scalar_lea.smem %s0, 4
  %s9 = sld [smem:[%s8]]
  %s10 = scalar_lea.smem %s0, 5
  %s11 = sld [smem:[%s10]]
  %s12 = scalar_lea.smem %s0, 6
  %s13 = sld [smem:[%s12]]
  %s14 = scalar_lea.smem %s0, 7
  %s15 = sld [smem:[%s14]]
  %s16 = scalar_lea.smem %s0, 8
  %s17 = sld [smem:[%s16]]
  %s18 = scalar_lea.smem %s0, 9
  %s19 = sld [smem:[%s18]]
  %s20 = scalar_lea.smem %s0, 10
  %s21 = sld [smem:[%s20]]
  %s22 = scalar_lea.smem %s0, 11
  %s23 = sld [smem:[%s22]]
  %s24 = scalar_lea.smem %s0, 12
  %s25 = sld [smem:[%s24]]
  %s26 = scalar_lea.smem %s0, 13
  %s27 = sld [smem:[%s26]]
  %s28 = scalar_lea.smem %s0, 14
  %s29 = sld [smem:[%s28]]
  %s30 = scalar_lea.smem %s0, 15
  %s31 = sld [smem:[%s30]]
  %s32 = scalar_lea.smem %s0, 16
  %s33 = sld [smem:[%s32]]
  %s34 = scalar_lea.smem %s0, 17
  %s35 = sld [smem:[%s34]]
  %s36 = scalar_lea.smem %s0, 18
  %s37 = sld [smem:[%s36]]
  %s38 = scalar_lea.smem %s0, 19
  %s39 = sld [smem:[%s38]]
  %s40 = scalar_lea.smem %s0, 20
  %s41 = sld [smem:[%s40]]
  %s42 = scalar_lea.smem %s0, 21
  %s43 = sld [smem:[%s42]]
  %s44 = scalar_lea.smem %s0, 22
  %s45 = sld [smem:[%s44]]
  %s46 = scalar_lea.smem %s0, 23
  %s47 = sld [smem:[%s46]]
  %s48 = scalar_lea.smem %s0, 24
  %s49 = sld [smem:[%s48]]
  %s50 = scalar_lea.smem %s0, 25
  %s51 = sld [smem:[%s50]]
  %s52 = scalar_lea.smem %s0, 26
  %s53 = sld [smem:[%s52]]
  %s54 = scalar_lea.smem %s0, 27
  %s55 = sld [smem:[%s54]]
  %s56 = scalar_lea.smem %s0, 28
  %s57 = sld [smem:[%s56]]
  %s58 = scalar_lea.smem %s0, 29
  %s59 = sld [smem:[%s58]]
  %s60 = scalar_lea.smem %s0, 30
  %s61 = sld [smem:[%s60]]
  %s62 = sld [smem:[#allocation0]]
  $region225: #{forward.1} parent=0
    _
  %s64 = ssub.s32 1, %s62
  %s65 = scalar_select 0, %s64, %s62
  $region1: #{forward.1} parent=0
    #allocation2 [shape = 'u8[32768]{0}', space=vmem, size = 0x8000, scoped, tag = 'input window, operand 1, single buffered']
    #allocation3 [shape = 's32[2]{0}', space=sflag, size = 0x8, scoped, tag = 'scoped memory for forward.1']
    #allocation4 [shape = 'u8[294912]{0}', space=vmem, size = 0x48000, scoped, tag = 'input window, operand 3, single buffered']
    #allocation5 [shape = 's32[1]{0}', space=sflag, size = 0x4, scoped, tag = 'scoped memory for forward.1']
    #allocation6 [shape = 'u8[294912]{0}', space=vmem, size = 0x48000, scoped, tag = 'input window, operand 5, single buffered']
    #allocation7 [shape = 'u8[32768]{0}', space=vmem, size = 0x8000, scoped, tag = 'input window, operand 7, single buffered']
    #allocation8 [shape = 's32[1]{0}', space=sflag, size = 0x4, scoped, tag = 'scoped memory for forward.1']
    #allocation9 [shape = 'u8[294912]{0}', space=vmem, size = 0x48000, scoped, tag = 'input window, operand 9, single buffered']
    #allocation10 [shape = 'u8[32768]{0}', space=vmem, size = 0x8000, scoped, tag = 'input window, operand 11, single buffered']
    #allocation11 [shape = 's32[1]{0}', space=sflag, size = 0x4, scoped, tag = 'scoped memory for forward.1']
    #allocation12 [shape = 'u8[65536]{0}', space=vmem, size = 0x10000, scoped, tag = 'input window, operand 13, single buffered']
    #allocation13 [shape = 'u8[131072]{0}', space=vmem, size = 0x20000, scoped, tag = 'input window, operand 17, single buffered']
    #allocation14 [shape = 's32[1]{0}', space=sflag, size = 0x4, scoped, tag = 'scoped memory for forward.1']
    #allocation15 [shape = 'u8[524288]{0}', space=vmem, size = 0x80000, scoped, tag = 'input window, operand 19, single buffered']
    #allocation16 [shape = 'u8[2048]{0}', space=vmem, size = 0x800, scoped, tag = 'input window, operand 20, single buffered']
    #allocation17 [shape = 's32[1]{0}', space=sflag, size = 0x4, scoped, tag = 'scoped memory for forward.1']
    #allocation18 [shape = 'u8[131072]{0}', space=vmem, size = 0x20000, scoped, tag = 'input window, operand 21, single buffered']
    #allocation19 [shape = 'u8[512]{0}', space=vmem, size = 0x400, scoped, tag = 'input window, operand 22, single buffered']
    #allocation20 [shape = 's32[1]{0}', space=sflag, size = 0x4, scoped, tag = 'scoped memory for forward.1']
    #allocation21 [shape = 'u8[32768]{0}', space=vmem, size = 0x8000, scoped, tag = 'input window, operand 23, single buffered']
    #allocation22 [shape = 'u8[512]{0}', space=vmem, size = 0x400, scoped, tag = 'input window, operand 24, single buffered']
    #allocation23 [shape = 's32[1]{0}', space=sflag, size = 0x4, scoped, tag = 'scoped memory for forward.1']
    #allocation24 [shape = 'u8[147456]{0}', space=vmem, size = 0x24000, scoped, tag = 'input window, operand 25, single buffered']
    #allocation25 [shape = 'u8[36864]{0}', space=vmem, size = 0x9000, scoped, tag = 'input window, operand 26, single buffered']
    #allocation26 [shape = 's32[1]{0}', space=sflag, size = 0x4, scoped, tag = 'scoped memory for forward.1']
    #allocation27 [shape = 'u8[16384]{0}', space=vmem, size = 0x4000, scoped, tag = 'input window, operand 28, single buffered']
    #allocation28 [shape = 'u8[4096]{0}', space=vmem, size = 0x1000, scoped, tag = 'input window, operand 29, single buffered']
    #allocation29 [shape = 's32[1]{0}', space=sflag, size = 0x4, scoped, tag = 'scoped memory for forward.1']
    %66 = vsyncpa [#allocation3], 0
    %67 = vsyncpa [#allocation5], 0
    %68 = vsyncpa [#allocation8], 0
    %69 = vsyncpa [#allocation11], 0
    %70 = vsyncpa [#allocation14], 0
    %71 = vsyncpa [#allocation17], 0
    %72 = vsyncpa [#allocation20], 0
    %73 = vsyncpa [#allocation23], 0
    %74 = vsyncpa [#allocation26], 0
    %75 = vsyncpa [#allocation29], 0
    loop: start=0, step=1, limit=4
    $region2: #{forward.1} parent=1 // loop_pre_header
      _
    $region3: #{forward.1} parent=1 // loop_header
      %s77 = sphi 0, %s81
      %p78 = scmp.ge.s32.totalorder %s77, 4
      %s87 = sphi 0, %s89
      %s90 = sphi 0, %s87
      %s91 = sphi 0, %s90
      %s107 = sphi 0, %s91
      %s111 = sphi 0, %s111
      %s113 = sphi 0, %s111
      %s114 = sphi 0, %s113
      %s128 = sphi 0, %s114
      %s132 = sphi 0, %s132
      %s134 = sphi 0, %s132
      %s135 = sphi 0, %s134
      %s149 = sphi 0, %s135
      %s153 = sphi 0, %s153
      %s155 = sphi 0, %s153
      %s156 = sphi 0, %s155
      %s170 = sphi 0, %s156
      %s174 = sphi 0, %s174
      %s176 = sphi 0, %s174
      %s177 = sphi 0, %s176
      %s191 = sphi 0, %s177
      %s195 = sphi 0, %s195
      %s197 = sphi 0, %s195
      %s198 = sphi 0, %s197
      %s212 = sphi 0, %s198
      %s216 = sphi 0, %s216
      %s218 = sphi 0, %s216
      %s219 = sphi 0, %s218
      %s233 = sphi 0, %s219
      %s237 = sphi 0, %s237
      %s239 = sphi 0, %s237
      %s240 = sphi 0, %s239
      %s254 = sphi 0, %s240
      %s258 = sphi 0, %s258
      %s260 = sphi 0, %s258
      %s261 = sphi 0, %s260
      %s275 = sphi 0, %s261
      %s279 = sphi 0, %s279
      %s281 = sphi 0, %s279
      %s282 = sphi 0, %s281
      %s296 = sphi 0, %s282
      %s300 = sphi 0, %s300
      %s302 = sphi 0, %s300
      %s303 = sphi 0, %s302
      %s317 = sphi 0, %s303
      %s321 = sphi 0, %s321
      %s323 = sphi 0, %s321
      %s324 = sphi 0, %s323
      %s338 = sphi 0, %s324
      %s342 = sphi 0, %s342
      %s344 = sphi 0, %s342
      %s345 = sphi 0, %s344
      %s359 = sphi 0, %s345
      %s363 = sphi 0, %s363
      %s365 = sphi 0, %s363
      %s366 = sphi 0, %s365
      %s380 = sphi 0, %s366
      %s384 = sphi 0, %s384
      %s386 = sphi 0, %s384
      %s387 = sphi 0, %s386
      %s401 = sphi 0, %s387
      %s405 = sphi 0, %s405
      %s407 = sphi 0, %s405
      %s408 = sphi 0, %s407
      %s422 = sphi 0, %s408
      %s426 = sphi 0, %s426
      %s428 = sphi 0, %s426
      %s429 = sphi 0, %s428
      %s443 = sphi 0, %s429
      %s447 = sphi 0, %s447
      %s449 = sphi 0, %s447
      %s450 = sphi 0, %s449
      %s464 = sphi 0, %s450
      %s468 = sphi 0, %s468
      %s470 = sphi 0, %s468
      %s471 = sphi 0, %s470
      %s485 = sphi 0, %s471
      %s489 = sphi 0, %s489
      %s491 = sphi 0, %s489
      %s492 = sphi 0, %s491
      %s506 = sphi 0, %s492
      %s510 = sphi 0, %s510
      %s512 = sphi 0, %s510
      %s513 = sphi 0, %s512
      %s527 = sphi 0, %s513
      %s531 = sphi 0, %s531
      %s533 = sphi 0, %s531
      %s534 = sphi 0, %s533
      %s548 = sphi 0, %s534
      %s552 = sphi 0, %s552
      %s554 = sphi 0, %s552
      %s555 = sphi 0, %s554
      %s569 = sphi 0, %s555
      %s573 = sphi 0, %s573
      %s575 = sphi 0, %s573
      %s576 = sphi 0, %s575
      %s590 = sphi 0, %s576
      %s594 = sphi 0, %s594
      %s596 = sphi 0, %s594
      %s597 = sphi 0, %s596
      %s611 = sphi 0, %s597
      %s615 = sphi 0, %s615
      %s617 = sphi 0, %s615
      %s618 = sphi 0, %s617
      %s632 = sphi 0, %s618
      %s636 = sphi 0, %s636
      %s638 = sphi 0, %s636
      %s639 = sphi 0, %s638
      %s653 = sphi 0, %s639
      %s657 = sphi 0, %s657
      %s659 = sphi 0, %s657
      %s660 = sphi 0, %s659
      %s674 = sphi 0, %s660
      %s678 = sphi 0, %s678
      %s680 = sphi 0, %s678
      %s681 = sphi 0, %s680
      %s695 = sphi 0, %s681
      %s699 = sphi 0, %s699
      %s701 = sphi 0, %s699
      %s702 = sphi 0, %s701
      %s716 = sphi 0, %s702
      %s722 = sphi 0, %s724
      %s725 = sphi 0, %s722
      %s726 = sphi 0, %s725
      %s742 = sphi 0, %s726
    $region4: #{forward.1} parent=1 // loop_header_branch
      %80 = sbr.rel (%p78) target = $region8
    $region5: #{forward.1} parent=1 // loop_body
      %s82 = ssub.s32 %s77, 1
      %s83 = ssub.s32 %s77, 2
      %s84 = sadd.s32 %s77, 1
      %s85 = ssub.s32 %s77, %s84
      %p86 = scmp.eq.s32.totalorder %s85, 0
      %s88 = sadd.s32 %s87, 1
      %s89 = scalar_select %p86, %s87, %s88
      %p92 = pneg %p86
      %p93 = scmp.eq.s32.totalorder %s77, 1
      %p94 = por %p92, %p93
      %p95 = scmp.ne.s32.totalorder %s87, %s90
      %p96 = scmp.eq.s32.totalorder %s77, 0
      %p97 = por %p95, %p96
      %p98 = scmp.ne.s32.totalorder %s87, %s90
      %p99 = scmp.eq.s32.totalorder %s82, 1
      %p100 = por %p98, %p99
      %p101 = scmp.ne.s32.totalorder %s90, %s91
      %p102 = scmp.eq.s32.totalorder %s82, 0
      %p103 = por %p101, %p102
      %p104 = scmp.ne.s32.totalorder %s90, %s91
      %p105 = scmp.eq.s32.totalorder %s83, 1
      %p106 = por %p104, %p105
      %p108 = scmp.ne.s32.totalorder %s91, %s107
      %p109 = scmp.eq.s32.totalorder %s83, 0
      %p110 = por %p108, %p109
      %s112 = sadd.s32 %s111, 1
      %p115 = scmp.eq.s32.totalorder %s77, 1
      %p116 = scmp.ne.s32.totalorder %s111, %s113
      %p117 = scmp.eq.s32.totalorder %s77, 0
      %p118 = por %p116, %p117
      %p119 = scmp.ne.s32.totalorder %s111, %s113
      %p120 = scmp.eq.s32.totalorder %s82, 1
      %p121 = por %p119, %p120
      %p122 = scmp.ne.s32.totalorder %s113, %s114
      %p123 = scmp.eq.s32.totalorder %s82, 0
      %p124 = por %p122, %p123
      %p125 = scmp.ne.s32.totalorder %s113, %s114
      %p126 = scmp.eq.s32.totalorder %s83, 1
      %p127 = por %p125, %p126
      %p129 = scmp.ne.s32.totalorder %s114, %s128
      %p130 = scmp.eq.s32.totalorder %s83, 0
      %p131 = por %p129, %p130
      %s133 = sadd.s32 %s132, 1
      %p136 = scmp.eq.s32.totalorder %s77, 1
      %p137 = scmp.ne.s32.totalorder %s132, %s134
      %p138 = scmp.eq.s32.totalorder %s77, 0
      %p139 = por %p137, %p138
      %p140 = scmp.ne.s32.totalorder %s132, %s134
      %p141 = scmp.eq.s32.totalorder %s82, 1
      %p142 = por %p140, %p141
      %p143 = scmp.ne.s32.totalorder %s134, %s135
      %p144 = scmp.eq.s32.totalorder %s82, 0
      %p145 = por %p143, %p144
      %p146 = scmp.ne.s32.totalorder %s134, %s135
      %p147 = scmp.eq.s32.totalorder %s83, 1
      %p148 = por %p146, %p147
      %p150 = scmp.ne.s32.totalorder %s135, %s149
      %p151 = scmp.eq.s32.totalorder %s83, 0
      %p152 = por %p150, %p151
      %s154 = sadd.s32 %s153, 1
      %p157 = scmp.eq.s32.totalorder %s77, 1
      %p158 = scmp.ne.s32.totalorder %s153, %s155
      %p159 = scmp.eq.s32.totalorder %s77, 0
      %p160 = por %p158, %p159
      %p161 = scmp.ne.s32.totalorder %s153, %s155
      %p162 = scmp.eq.s32.totalorder %s82, 1
      %p163 = por %p161, %p162
      %p164 = scmp.ne.s32.totalorder %s155, %s156
      %p165 = scmp.eq.s32.totalorder %s82, 0
      %p166 = por %p164, %p165
      %p167 = scmp.ne.s32.totalorder %s155, %s156
      %p168 = scmp.eq.s32.totalorder %s83, 1
      %p169 = por %p167, %p168
      %p171 = scmp.ne.s32.totalorder %s156, %s170
      %p172 = scmp.eq.s32.totalorder %s83, 0
      %p173 = por %p171, %p172
      %s175 = sadd.s32 %s174, 1
      %p178 = scmp.eq.s32.totalorder %s77, 1
      %p179 = scmp.ne.s32.totalorder %s174, %s176
      %p180 = scmp.eq.s32.totalorder %s77, 0
      %p181 = por %p179, %p180
      %p182 = scmp.ne.s32.totalorder %s174, %s176
      %p183 = scmp.eq.s32.totalorder %s82, 1
      %p184 = por %p182, %p183
      %p185 = scmp.ne.s32.totalorder %s176, %s177
      %p186 = scmp.eq.s32.totalorder %s82, 0
      %p187 = por %p185, %p186
      %p188 = scmp.ne.s32.totalorder %s176, %s177
      %p189 = scmp.eq.s32.totalorder %s83, 1
      %p190 = por %p188, %p189
      %p192 = scmp.ne.s32.totalorder %s177, %s191
      %p193 = scmp.eq.s32.totalorder %s83, 0
      %p194 = por %p192, %p193
      %s196 = sadd.s32 %s195, 1
      %p199 = scmp.eq.s32.totalorder %s77, 1
      %p200 = scmp.ne.s32.totalorder %s195, %s197
      %p201 = scmp.eq.s32.totalorder %s77, 0
      %p202 = por %p200, %p201
      %p203 = scmp.ne.s32.totalorder %s195, %s197
      %p204 = scmp.eq.s32.totalorder %s82, 1
      %p205 = por %p203, %p204
      %p206 = scmp.ne.s32.totalorder %s197, %s198
      %p207 = scmp.eq.s32.totalorder %s82, 0
      %p208 = por %p206, %p207
      %p209 = scmp.ne.s32.totalorder %s197, %s198
      %p210 = scmp.eq.s32.totalorder %s83, 1
      %p211 = por %p209, %p210
      %p213 = scmp.ne.s32.totalorder %s198, %s212
      %p214 = scmp.eq.s32.totalorder %s83, 0
      %p215 = por %p213, %p214
      %s217 = sadd.s32 %s216, 1
      %p220 = scmp.eq.s32.totalorder %s77, 1
      %p221 = scmp.ne.s32.totalorder %s216, %s218
      %p222 = scmp.eq.s32.totalorder %s77, 0
      %p223 = por %p221, %p222
      %p224 = scmp.ne.s32.totalorder %s216, %s218
      %p225 = scmp.eq.s32.totalorder %s82, 1
      %p226 = por %p224, %p225
      %p227 = scmp.ne.s32.totalorder %s218, %s219
      %p228 = scmp.eq.s32.totalorder %s82, 0
      %p229 = por %p227, %p228
      %p230 = scmp.ne.s32.totalorder %s218, %s219
      %p231 = scmp.eq.s32.totalorder %s83, 1
      %p232 = por %p230, %p231
      %p234 = scmp.ne.s32.totalorder %s219, %s233
      %p235 = scmp.eq.s32.totalorder %s83, 0
      %p236 = por %p234, %p235
      %s238 = sadd.s32 %s237, 1
      %p241 = scmp.eq.s32.totalorder %s77, 1
      %p242 = scmp.ne.s32.totalorder %s237, %s239
      %p243 = scmp.eq.s32.totalorder %s77, 0
      %p244 = por %p242, %p243
      %p245 = scmp.ne.s32.totalorder %s237, %s239
      %p246 = scmp.eq.s32.totalorder %s82, 1
      %p247 = por %p245, %p246
      %p248 = scmp.ne.s32.totalorder %s239, %s240
      %p249 = scmp.eq.s32.totalorder %s82, 0
      %p250 = por %p248, %p249
      %p251 = scmp.ne.s32.totalorder %s239, %s240
      %p252 = scmp.eq.s32.totalorder %s83, 1
      %p253 = por %p251, %p252
      %p255 = scmp.ne.s32.totalorder %s240, %s254
      %p256 = scmp.eq.s32.totalorder %s83, 0
      %p257 = por %p255, %p256
      %s259 = sadd.s32 %s258, 1
      %p262 = scmp.eq.s32.totalorder %s77, 1
      %p263 = scmp.ne.s32.totalorder %s258, %s260
      %p264 = scmp.eq.s32.totalorder %s77, 0
      %p265 = por %p263, %p264
      %p266 = scmp.ne.s32.totalorder %s258, %s260
      %p267 = scmp.eq.s32.totalorder %s82, 1
      %p268 = por %p266, %p267
      %p269 = scmp.ne.s32.totalorder %s260, %s261
      %p270 = scmp.eq.s32.totalorder %s82, 0
      %p271 = por %p269, %p270
      %p272 = scmp.ne.s32.totalorder %s260, %s261
      %p273 = scmp.eq.s32.totalorder %s83, 1
      %p274 = por %p272, %p273
      %p276 = scmp.ne.s32.totalorder %s261, %s275
      %p277 = scmp.eq.s32.totalorder %s83, 0
      %p278 = por %p276, %p277
      %s280 = sadd.s32 %s279, 1
      %p283 = scmp.eq.s32.totalorder %s77, 1
      %p284 = scmp.ne.s32.totalorder %s279, %s281
      %p285 = scmp.eq.s32.totalorder %s77, 0
      %p286 = por %p284, %p285
      %p287 = scmp.ne.s32.totalorder %s279, %s281
      %p288 = scmp.eq.s32.totalorder %s82, 1
      %p289 = por %p287, %p288
      %p290 = scmp.ne.s32.totalorder %s281, %s282
      %p291 = scmp.eq.s32.totalorder %s82, 0
      %p292 = por %p290, %p291
      %p293 = scmp.ne.s32.totalorder %s281, %s282
      %p294 = scmp.eq.s32.totalorder %s83, 1
      %p295 = por %p293, %p294
      %p297 = scmp.ne.s32.totalorder %s282, %s296
      %p298 = scmp.eq.s32.totalorder %s83, 0
      %p299 = por %p297, %p298
      %s301 = sadd.s32 %s300, 1
      %p304 = scmp.eq.s32.totalorder %s77, 1
      %p305 = scmp.ne.s32.totalorder %s300, %s302
      %p306 = scmp.eq.s32.totalorder %s77, 0
      %p307 = por %p305, %p306
      %p308 = scmp.ne.s32.totalorder %s300, %s302
      %p309 = scmp.eq.s32.totalorder %s82, 1
      %p310 = por %p308, %p309
      %p311 = scmp.ne.s32.totalorder %s302, %s303
      %p312 = scmp.eq.s32.totalorder %s82, 0
      %p313 = por %p311, %p312
      %p314 = scmp.ne.s32.totalorder %s302, %s303
      %p315 = scmp.eq.s32.totalorder %s83, 1
      %p316 = por %p314, %p315
      %p318 = scmp.ne.s32.totalorder %s303, %s317
      %p319 = scmp.eq.s32.totalorder %s83, 0
      %p320 = por %p318, %p319
      %s322 = sadd.s32 %s321, 1
      %p325 = scmp.eq.s32.totalorder %s77, 1
      %p326 = scmp.ne.s32.totalorder %s321, %s323
      %p327 = scmp.eq.s32.totalorder %s77, 0
      %p328 = por %p326, %p327
      %p329 = scmp.ne.s32.totalorder %s321, %s323
      %p330 = scmp.eq.s32.totalorder %s82, 1
      %p331 = por %p329, %p330
      %p332 = scmp.ne.s32.totalorder %s323, %s324
      %p333 = scmp.eq.s32.totalorder %s82, 0
      %p334 = por %p332, %p333
      %p335 = scmp.ne.s32.totalorder %s323, %s324
      %p336 = scmp.eq.s32.totalorder %s83, 1
      %p337 = por %p335, %p336
      %p339 = scmp.ne.s32.totalorder %s324, %s338
      %p340 = scmp.eq.s32.totalorder %s83, 0
      %p341 = por %p339, %p340
      %s343 = sadd.s32 %s342, 1
      %p346 = scmp.eq.s32.totalorder %s77, 1
      %p347 = scmp.ne.s32.totalorder %s342, %s344
      %p348 = scmp.eq.s32.totalorder %s77, 0
      %p349 = por %p347, %p348
      %p350 = scmp.ne.s32.totalorder %s342, %s344
      %p351 = scmp.eq.s32.totalorder %s82, 1
      %p352 = por %p350, %p351
      %p353 = scmp.ne.s32.totalorder %s344, %s345
      %p354 = scmp.eq.s32.totalorder %s82, 0
      %p355 = por %p353, %p354
      %p356 = scmp.ne.s32.totalorder %s344, %s345
      %p357 = scmp.eq.s32.totalorder %s83, 1
      %p358 = por %p356, %p357
      %p360 = scmp.ne.s32.totalorder %s345, %s359
      %p361 = scmp.eq.s32.totalorder %s83, 0
      %p362 = por %p360, %p361
      %s364 = sadd.s32 %s363, 1
      %p367 = scmp.eq.s32.totalorder %s77, 1
      %p368 = scmp.ne.s32.totalorder %s363, %s365
      %p369 = scmp.eq.s32.totalorder %s77, 0
      %p370 = por %p368, %p369
      %p371 = scmp.ne.s32.totalorder %s363, %s365
      %p372 = scmp.eq.s32.totalorder %s82, 1
      %p373 = por %p371, %p372
      %p374 = scmp.ne.s32.totalorder %s365, %s366
      %p375 = scmp.eq.s32.totalorder %s82, 0
      %p376 = por %p374, %p375
      %p377 = scmp.ne.s32.totalorder %s365, %s366
      %p378 = scmp.eq.s32.totalorder %s83, 1
      %p379 = por %p377, %p378
      %p381 = scmp.ne.s32.totalorder %s366, %s380
      %p382 = scmp.eq.s32.totalorder %s83, 0
      %p383 = por %p381, %p382
      %s385 = sadd.s32 %s384, 1
      %p388 = scmp.eq.s32.totalorder %s77, 1
      %p389 = scmp.ne.s32.totalorder %s384, %s386
      %p390 = scmp.eq.s32.totalorder %s77, 0
      %p391 = por %p389, %p390
      %p392 = scmp.ne.s32.totalorder %s384, %s386
      %p393 = scmp.eq.s32.totalorder %s82, 1
      %p394 = por %p392, %p393
      %p395 = scmp.ne.s32.totalorder %s386, %s387
      %p396 = scmp.eq.s32.totalorder %s82, 0
      %p397 = por %p395, %p396
      %p398 = scmp.ne.s32.totalorder %s386, %s387
      %p399 = scmp.eq.s32.totalorder %s83, 1
      %p400 = por %p398, %p399
      %p402 = scmp.ne.s32.totalorder %s387, %s401
      %p403 = scmp.eq.s32.totalorder %s83, 0
      %p404 = por %p402, %p403
      %s406 = sadd.s32 %s405, 1
      %p409 = scmp.eq.s32.totalorder %s77, 1
      %p410 = scmp.ne.s32.totalorder %s405, %s407
      %p411 = scmp.eq.s32.totalorder %s77, 0
      %p412 = por %p410, %p411
      %p413 = scmp.ne.s32.totalorder %s405, %s407
      %p414 = scmp.eq.s32.totalorder %s82, 1
      %p415 = por %p413, %p414
      %p416 = scmp.ne.s32.totalorder %s407, %s408
      %p417 = scmp.eq.s32.totalorder %s82, 0
      %p418 = por %p416, %p417
      %p419 = scmp.ne.s32.totalorder %s407, %s408
      %p420 = scmp.eq.s32.totalorder %s83, 1
      %p421 = por %p419, %p420
      %p423 = scmp.ne.s32.totalorder %s408, %s422
      %p424 = scmp.eq.s32.totalorder %s83, 0
      %p425 = por %p423, %p424
      %s427 = sadd.s32 %s426, 1
      %p430 = scmp.eq.s32.totalorder %s77, 1
      %p431 = scmp.ne.s32.totalorder %s426, %s428
      %p432 = scmp.eq.s32.totalorder %s77, 0
      %p433 = por %p431, %p432
      %p434 = scmp.ne.s32.totalorder %s426, %s428
      %p435 = scmp.eq.s32.totalorder %s82, 1
      %p436 = por %p434, %p435
      %p437 = scmp.ne.s32.totalorder %s428, %s429
      %p438 = scmp.eq.s32.totalorder %s82, 0
      %p439 = por %p437, %p438
      %p440 = scmp.ne.s32.totalorder %s428, %s429
      %p441 = scmp.eq.s32.totalorder %s83, 1
      %p442 = por %p440, %p441
      %p444 = scmp.ne.s32.totalorder %s429, %s443
      %p445 = scmp.eq.s32.totalorder %s83, 0
      %p446 = por %p444, %p445
      %s448 = sadd.s32 %s447, 1
      %p451 = scmp.eq.s32.totalorder %s77, 1
      %p452 = scmp.ne.s32.totalorder %s447, %s449
      %p453 = scmp.eq.s32.totalorder %s77, 0
      %p454 = por %p452, %p453
      %p455 = scmp.ne.s32.totalorder %s447, %s449
      %p456 = scmp.eq.s32.totalorder %s82, 1
      %p457 = por %p455, %p456
      %p458 = scmp.ne.s32.totalorder %s449, %s450
      %p459 = scmp.eq.s32.totalorder %s82, 0
      %p460 = por %p458, %p459
      %p461 = scmp.ne.s32.totalorder %s449, %s450
      %p462 = scmp.eq.s32.totalorder %s83, 1
      %p463 = por %p461, %p462
      %p465 = scmp.ne.s32.totalorder %s450, %s464
      %p466 = scmp.eq.s32.totalorder %s83, 0
      %p467 = por %p465, %p466
      %s469 = sadd.s32 %s468, 1
      %p472 = scmp.eq.s32.totalorder %s77, 1
      %p473 = scmp.ne.s32.totalorder %s468, %s470
      %p474 = scmp.eq.s32.totalorder %s77, 0
      %p475 = por %p473, %p474
      %p476 = scmp.ne.s32.totalorder %s468, %s470
      %p477 = scmp.eq.s32.totalorder %s82, 1
      %p478 = por %p476, %p477
      %p479 = scmp.ne.s32.totalorder %s470, %s471
      %p480 = scmp.eq.s32.totalorder %s82, 0
      %p481 = por %p479, %p480
      %p482 = scmp.ne.s32.totalorder %s470, %s471
      %p483 = scmp.eq.s32.totalorder %s83, 1
      %p484 = por %p482, %p483
      %p486 = scmp.ne.s32.totalorder %s471, %s485
      %p487 = scmp.eq.s32.totalorder %s83, 0
      %p488 = por %p486, %p487
      %s490 = sadd.s32 %s489, 1
      %p493 = scmp.eq.s32.totalorder %s77, 1
      %p494 = scmp.ne.s32.totalorder %s489, %s491
      %p495 = scmp.eq.s32.totalorder %s77, 0
      %p496 = por %p494, %p495
      %p497 = scmp.ne.s32.totalorder %s489, %s491
      %p498 = scmp.eq.s32.totalorder %s82, 1
      %p499 = por %p497, %p498
      %p500 = scmp.ne.s32.totalorder %s491, %s492
      %p501 = scmp.eq.s32.totalorder %s82, 0
      %p502 = por %p500, %p501
      %p503 = scmp.ne.s32.totalorder %s491, %s492
      %p504 = scmp.eq.s32.totalorder %s83, 1
      %p505 = por %p503, %p504
      %p507 = scmp.ne.s32.totalorder %s492, %s506
      %p508 = scmp.eq.s32.totalorder %s83, 0
      %p509 = por %p507, %p508
      %s511 = sadd.s32 %s510, 1
      %p514 = scmp.eq.s32.totalorder %s77, 1
      %p515 = scmp.ne.s32.totalorder %s510, %s512
      %p516 = scmp.eq.s32.totalorder %s77, 0
      %p517 = por %p515, %p516
      %p518 = scmp.ne.s32.totalorder %s510, %s512
      %p519 = scmp.eq.s32.totalorder %s82, 1
      %p520 = por %p518, %p519
      %p521 = scmp.ne.s32.totalorder %s512, %s513
      %p522 = scmp.eq.s32.totalorder %s82, 0
      %p523 = por %p521, %p522
      %p524 = scmp.ne.s32.totalorder %s512, %s513
      %p525 = scmp.eq.s32.totalorder %s83, 1
      %p526 = por %p524, %p525
      %p528 = scmp.ne.s32.totalorder %s513, %s527
      %p529 = scmp.eq.s32.totalorder %s83, 0
      %p530 = por %p528, %p529
      %s532 = sadd.s32 %s531, 1
      %p535 = scmp.eq.s32.totalorder %s77, 1
      %p536 = scmp.ne.s32.totalorder %s531, %s533
      %p537 = scmp.eq.s32.totalorder %s77, 0
      %p538 = por %p536, %p537
      %p539 = scmp.ne.s32.totalorder %s531, %s533
      %p540 = scmp.eq.s32.totalorder %s82, 1
      %p541 = por %p539, %p540
      %p542 = scmp.ne.s32.totalorder %s533, %s534
      %p543 = scmp.eq.s32.totalorder %s82, 0
      %p544 = por %p542, %p543
      %p545 = scmp.ne.s32.totalorder %s533, %s534
      %p546 = scmp.eq.s32.totalorder %s83, 1
      %p547 = por %p545, %p546
      %p549 = scmp.ne.s32.totalorder %s534, %s548
      %p550 = scmp.eq.s32.totalorder %s83, 0
      %p551 = por %p549, %p550
      %s553 = sadd.s32 %s552, 1
      %p556 = scmp.eq.s32.totalorder %s77, 1
      %p557 = scmp.ne.s32.totalorder %s552, %s554
      %p558 = scmp.eq.s32.totalorder %s77, 0
      %p559 = por %p557, %p558
      %p560 = scmp.ne.s32.totalorder %s552, %s554
      %p561 = scmp.eq.s32.totalorder %s82, 1
      %p562 = por %p560, %p561
      %p563 = scmp.ne.s32.totalorder %s554, %s555
      %p564 = scmp.eq.s32.totalorder %s82, 0
      %p565 = por %p563, %p564
      %p566 = scmp.ne.s32.totalorder %s554, %s555
      %p567 = scmp.eq.s32.totalorder %s83, 1
      %p568 = por %p566, %p567
      %p570 = scmp.ne.s32.totalorder %s555, %s569
      %p571 = scmp.eq.s32.totalorder %s83, 0
      %p572 = por %p570, %p571
      %s574 = sadd.s32 %s573, 1
      %p577 = scmp.eq.s32.totalorder %s77, 1
      %p578 = scmp.ne.s32.totalorder %s573, %s575
      %p579 = scmp.eq.s32.totalorder %s77, 0
      %p580 = por %p578, %p579
      %p581 = scmp.ne.s32.totalorder %s573, %s575
      %p582 = scmp.eq.s32.totalorder %s82, 1
      %p583 = por %p581, %p582
      %p584 = scmp.ne.s32.totalorder %s575, %s576
      %p585 = scmp.eq.s32.totalorder %s82, 0
      %p586 = por %p584, %p585
      %p587 = scmp.ne.s32.totalorder %s575, %s576
      %p588 = scmp.eq.s32.totalorder %s83, 1
      %p589 = por %p587, %p588
      %p591 = scmp.ne.s32.totalorder %s576, %s590
      %p592 = scmp.eq.s32.totalorder %s83, 0
      %p593 = por %p591, %p592
      %s595 = sadd.s32 %s594, 1
      %p598 = scmp.eq.s32.totalorder %s77, 1
      %p599 = scmp.ne.s32.totalorder %s594, %s596
      %p600 = scmp.eq.s32.totalorder %s77, 0
      %p601 = por %p599, %p600
      %p602 = scmp.ne.s32.totalorder %s594, %s596
      %p603 = scmp.eq.s32.totalorder %s82, 1
      %p604 = por %p602, %p603
      %p605 = scmp.ne.s32.totalorder %s596, %s597
      %p606 = scmp.eq.s32.totalorder %s82, 0
      %p607 = por %p605, %p606
      %p608 = scmp.ne.s32.totalorder %s596, %s597
      %p609 = scmp.eq.s32.totalorder %s83, 1
      %p610 = por %p608, %p609
      %p612 = scmp.ne.s32.totalorder %s597, %s611
      %p613 = scmp.eq.s32.totalorder %s83, 0
      %p614 = por %p612, %p613
      %s616 = sadd.s32 %s615, 1
      %p619 = scmp.eq.s32.totalorder %s77, 1
      %p620 = scmp.ne.s32.totalorder %s615, %s617
      %p621 = scmp.eq.s32.totalorder %s77, 0
      %p622 = por %p620, %p621
      %p623 = scmp.ne.s32.totalorder %s615, %s617
      %p624 = scmp.eq.s32.totalorder %s82, 1
      %p625 = por %p623, %p624
      %p626 = scmp.ne.s32.totalorder %s617, %s618
      %p627 = scmp.eq.s32.totalorder %s82, 0
      %p628 = por %p626, %p627
      %p629 = scmp.ne.s32.totalorder %s617, %s618
      %p630 = scmp.eq.s32.totalorder %s83, 1
      %p631 = por %p629, %p630
      %p633 = scmp.ne.s32.totalorder %s618, %s632
      %p634 = scmp.eq.s32.totalorder %s83, 0
      %p635 = por %p633, %p634
      %s637 = sadd.s32 %s636, 1
      %p640 = scmp.eq.s32.totalorder %s77, 1
      %p641 = scmp.ne.s32.totalorder %s636, %s638
      %p642 = scmp.eq.s32.totalorder %s77, 0
      %p643 = por %p641, %p642
      %p644 = scmp.ne.s32.totalorder %s636, %s638
      %p645 = scmp.eq.s32.totalorder %s82, 1
      %p646 = por %p644, %p645
      %p647 = scmp.ne.s32.totalorder %s638, %s639
      %p648 = scmp.eq.s32.totalorder %s82, 0
      %p649 = por %p647, %p648
      %p650 = scmp.ne.s32.totalorder %s638, %s639
      %p651 = scmp.eq.s32.totalorder %s83, 1
      %p652 = por %p650, %p651
      %p654 = scmp.ne.s32.totalorder %s639, %s653
      %p655 = scmp.eq.s32.totalorder %s83, 0
      %p656 = por %p654, %p655
      %s658 = sadd.s32 %s657, 1
      %p661 = scmp.eq.s32.totalorder %s77, 1
      %p662 = scmp.ne.s32.totalorder %s657, %s659
      %p663 = scmp.eq.s32.totalorder %s77, 0
      %p664 = por %p662, %p663
      %p665 = scmp.ne.s32.totalorder %s657, %s659
      %p666 = scmp.eq.s32.totalorder %s82, 1
      %p667 = por %p665, %p666
      %p668 = scmp.ne.s32.totalorder %s659, %s660
      %p669 = scmp.eq.s32.totalorder %s82, 0
      %p670 = por %p668, %p669
      %p671 = scmp.ne.s32.totalorder %s659, %s660
      %p672 = scmp.eq.s32.totalorder %s83, 1
      %p673 = por %p671, %p672
      %p675 = scmp.ne.s32.totalorder %s660, %s674
      %p676 = scmp.eq.s32.totalorder %s83, 0
      %p677 = por %p675, %p676
      %s679 = sadd.s32 %s678, 1
      %p682 = scmp.eq.s32.totalorder %s77, 1
      %p683 = scmp.ne.s32.totalorder %s678, %s680
      %p684 = scmp.eq.s32.totalorder %s77, 0
      %p685 = por %p683, %p684
      %p686 = scmp.ne.s32.totalorder %s678, %s680
      %p687 = scmp.eq.s32.totalorder %s82, 1
      %p688 = por %p686, %p687
      %p689 = scmp.ne.s32.totalorder %s680, %s681
      %p690 = scmp.eq.s32.totalorder %s82, 0
      %p691 = por %p689, %p690
      %p692 = scmp.ne.s32.totalorder %s680, %s681
      %p693 = scmp.eq.s32.totalorder %s83, 1
      %p694 = por %p692, %p693
      %p696 = scmp.ne.s32.totalorder %s681, %s695
      %p697 = scmp.eq.s32.totalorder %s83, 0
      %p698 = por %p696, %p697
      %s700 = sadd.s32 %s699, 1
      %p703 = scmp.eq.s32.totalorder %s77, 1
      %p704 = scmp.ne.s32.totalorder %s699, %s701
      %p705 = scmp.eq.s32.totalorder %s77, 0
      %p706 = por %p704, %p705
      %p707 = scmp.ne.s32.totalorder %s699, %s701
      %p708 = scmp.eq.s32.totalorder %s82, 1
      %p709 = por %p707, %p708
      %p710 = scmp.ne.s32.totalorder %s701, %s702
      %p711 = scmp.eq.s32.totalorder %s82, 0
      %p712 = por %p710, %p711
      %p713 = scmp.ne.s32.totalorder %s701, %s702
      %p714 = scmp.eq.s32.totalorder %s83, 1
      %p715 = por %p713, %p714
      %p717 = scmp.ne.s32.totalorder %s702, %s716
      %p718 = scmp.eq.s32.totalorder %s83, 0
      %p719 = por %p717, %p718
      %s720 = ssub.s32 %s77, %s84
      %p721 = scmp.eq.s32.totalorder %s720, 0
      %s723 = sadd.s32 %s722, 1
      %s724 = scalar_select %p721, %s722, %s723
      %p727 = pneg %p721
      %p728 = scmp.eq.s32.totalorder %s77, 1
      %p729 = por %p727, %p728
      %p730 = scmp.ne.s32.totalorder %s722, %s725
      %p731 = scmp.eq.s32.totalorder %s77, 0
      %p732 = por %p730, %p731
      %p733 = scmp.ne.s32.totalorder %s722, %s725
      %p734 = scmp.eq.s32.totalorder %s82, 1
      %p735 = por %p733, %p734
      %p736 = scmp.ne.s32.totalorder %s725, %s726
      %p737 = scmp.eq.s32.totalorder %s82, 0
      %p738 = por %p736, %p737
      %p739 = scmp.ne.s32.totalorder %s725, %s726
      %p740 = scmp.eq.s32.totalorder %s83, 1
      %p741 = por %p739, %p740
      %p743 = scmp.ne.s32.totalorder %s726, %s742
      %p744 = scmp.eq.s32.totalorder %s83, 0
      %p745 = por %p743, %p744
      %p746 = scmp.le.s32.totalorder 1, %s77
      %p747 = scmp.lt.s32.totalorder %s77, 3
      %p748 = pnand %p746, %p747
      %p749 = pneg %p748
      // Predicated region
      $region9: #{forward.1} parent=5 // pred_check
        _
      $region10: #{forward.1} parent=5 // pred_check_branch
        %751 = sbr.rel (%p748) target = $region12
      $region11: #{forward.1} parent=5 // pred_region
        %s752 = ssub.s32 %s77, 1
        // Predicated region
        $region13: #{forward.1} parent=11 // pred_check
          %p753 = pneg %p124
        $region14: #{forward.1} parent=11 // pred_check_branch
          %755 = sbr.rel (%p753) target = $region16
        $region15: #{forward.1} parent=11 // pred_region
          %s757 = ssub.s32 1024, 1024
          %758 = vsyncadd [#allocation3], %s757
          %s759 = sshll.u32 [#allocation2], 4
          %s760 = int_to_ptr.vmem [resolvable:$true] %s759
          %765 = dma.hbm_to_vmem [thread:$0]  %s3, 1024, %s760, [#allocation3], 64, 64, 4
        $region16: #{forward.1} parent=11 // pred_fallthru
          _
        // Predicated region
        $region17: #{forward.1} parent=11 // pred_check
          %p766 = pneg %p145
        $region18: #{forward.1} parent=11 // pred_check_branch
          %768 = sbr.rel (%p766) target = $region20
        $region19: #{forward.1} parent=11 // pred_region
          _
        $region20: #{forward.1} parent=11 // pred_fallthru
          _
        // Predicated region
        $region21: #{forward.1} parent=11 // pred_check
          %p769 = pneg %p166
        $region22: #{forward.1} parent=11 // pred_check_branch
          %771 = sbr.rel (%p769) target = $region24
        $region23: #{forward.1} parent=11 // pred_region
          %s773 = ssub.s32 9216, 9216
          %774 = vsyncadd [#allocation5], %s773
          %s775 = sshll.u32 [#allocation4], 4
          %s776 = int_to_ptr.vmem [resolvable:$true] %s775
          %781 = dma.hbm_to_vmem [thread:$0]  %s7, 9216, %s776, [#allocation5], 64, 64, 4
        $region24: #{forward.1} parent=11 // pred_fallthru
          _
        // Predicated region
        $region25: #{forward.1} parent=11 // pred_check
          %p782 = pneg %p187
        $region26: #{forward.1} parent=11 // pred_check_branch
          %784 = sbr.rel (%p782) target = $region28
        $region27: #{forward.1} parent=11 // pred_region
          _
        $region28: #{forward.1} parent=11 // pred_fallthru
          _
        // Predicated region
        $region29: #{forward.1} parent=11 // pred_check
          %p785 = pneg %p208
        $region30: #{forward.1} parent=11 // pred_check_branch
          %787 = sbr.rel (%p785) target = $region32
        $region31: #{forward.1} parent=11 // pred_region
          %s789 = ssub.s32 9216, 9216
          %790 = vsyncadd [#allocation5], %s789
          %s791 = sshll.u32 [#allocation6], 4
          %s792 = int_to_ptr.vmem [resolvable:$true] %s791
          %797 = dma.hbm_to_vmem [thread:$0]  %s11, 9216, %s792, [#allocation5], 64, 64, 4
        $region32: #{forward.1} parent=11 // pred_fallthru
          _
        // Predicated region
        $region33: #{forward.1} parent=11 // pred_check
          %p798 = pneg %p229
        $region34: #{forward.1} parent=11 // pred_check_branch
          %800 = sbr.rel (%p798) target = $region36
        $region35: #{forward.1} parent=11 // pred_region
          _
        $region36: #{forward.1} parent=11 // pred_fallthru
          _
        // Predicated region
        $region37: #{forward.1} parent=11 // pred_check
          %p801 = pneg %p250
        $region38: #{forward.1} parent=11 // pred_check_branch
          %803 = sbr.rel (%p801) target = $region40
        $region39: #{forward.1} parent=11 // pred_region
          %s805 = ssub.s32 1024, 1024
          %806 = vsyncadd [#allocation8], %s805
          %s807 = sshll.u32 [#allocation7], 4
          %s808 = int_to_ptr.vmem [resolvable:$true] %s807
          %813 = dma.hbm_to_vmem [thread:$0]  %s15, 1024, %s808, [#allocation8], 64, 64, 4
        $region40: #{forward.1} parent=11 // pred_fallthru
          _
        // Predicated region
        $region41: #{forward.1} parent=11 // pred_check
          %p814 = pneg %p271
        $region42: #{forward.1} parent=11 // pred_check_branch
          %816 = sbr.rel (%p814) target = $region44
        $region43: #{forward.1} parent=11 // pred_region
          _
        $region44: #{forward.1} parent=11 // pred_fallthru
          _
        // Predicated region
        $region45: #{forward.1} parent=11 // pred_check
          %p817 = pneg %p292
        $region46: #{forward.1} parent=11 // pred_check_branch
          %819 = sbr.rel (%p817) target = $region48
        $region47: #{forward.1} parent=11 // pred_region
          %s821 = ssub.s32 9216, 9216
          %822 = vsyncadd [#allocation8], %s821
          %s823 = sshll.u32 [#allocation9], 4
          %s824 = int_to_ptr.vmem [resolvable:$true] %s823
          %829 = dma.hbm_to_vmem [thread:$0]  %s19, 9216, %s824, [#allocation8], 64, 64, 4
        $region48: #{forward.1} parent=11 // pred_fallthru
          _
        // Predicated region
        $region49: #{forward.1} parent=11 // pred_check
          %p830 = pneg %p313
        $region50: #{forward.1} parent=11 // pred_check_branch
          %832 = sbr.rel (%p830) target = $region52
        $region51: #{forward.1} parent=11 // pred_region
          _
        $region52: #{forward.1} parent=11 // pred_fallthru
          _
        // Predicated region
        $region53: #{forward.1} parent=11 // pred_check
          %p833 = pneg %p334
        $region54: #{forward.1} parent=11 // pred_check_branch
          %835 = sbr.rel (%p833) target = $region56
        $region55: #{forward.1} parent=11 // pred_region
          %s837 = ssub.s32 1024, 1024
          %838 = vsyncadd [#allocation11], %s837
          %s839 = sshll.u32 [#allocation10], 4
          %s840 = int_to_ptr.vmem [resolvable:$true] %s839
          %845 = dma.hbm_to_vmem [thread:$0]  %s23, 1024, %s840, [#allocation11], 64, 64, 4
        $region56: #{forward.1} parent=11 // pred_fallthru
          _
        // Predicated region
        $region57: #{forward.1} parent=11 // pred_check
          %p846 = pneg %p355
        $region58: #{forward.1} parent=11 // pred_check_branch
          %848 = sbr.rel (%p846) target = $region60
        $region59: #{forward.1} parent=11 // pred_region
          _
        $region60: #{forward.1} parent=11 // pred_fallthru
          _
        // Predicated region
        $region61: #{forward.1} parent=11 // pred_check
          %p849 = pneg %p376
        $region62: #{forward.1} parent=11 // pred_check_branch
          %851 = sbr.rel (%p849) target = $region64
        $region63: #{forward.1} parent=11 // pred_region
          %s853 = ssub.s32 2048, 2048
          %854 = vsyncadd [#allocation11], %s853
          %s855 = sshll.u32 [#allocation12], 4
          %s856 = int_to_ptr.vmem [resolvable:$true] %s855
          %861 = dma.hbm_to_vmem [thread:$0]  %s27, 2048, %s856, [#allocation11], 128, 128, 8
        $region64: #{forward.1} parent=11 // pred_fallthru
          _
        // Predicated region
        $region65: #{forward.1} parent=11 // pred_check
          %p862 = pneg %p397
        $region66: #{forward.1} parent=11 // pred_check_branch
          %864 = sbr.rel (%p862) target = $region68
        $region67: #{forward.1} parent=11 // pred_region
          _
        $region68: #{forward.1} parent=11 // pred_fallthru
          _
        // Predicated region
        $region69: #{forward.1} parent=11 // pred_check
          %p865 = pneg %p418
        $region70: #{forward.1} parent=11 // pred_check_branch
          %867 = sbr.rel (%p865) target = $region72
        $region71: #{forward.1} parent=11 // pred_region
          _
        $region72: #{forward.1} parent=11 // pred_fallthru
          _
        // Predicated region
        $region73: #{forward.1} parent=11 // pred_check
          %p868 = pneg %p439
        $region74: #{forward.1} parent=11 // pred_check_branch
          %870 = sbr.rel (%p868) target = $region76
        $region75: #{forward.1} parent=11 // pred_region
          _
        $region76: #{forward.1} parent=11 // pred_fallthru
          _
        // Predicated region
        $region77: #{forward.1} parent=11 // pred_check
          %p871 = pneg %p460
        $region78: #{forward.1} parent=11 // pred_check_branch
          %873 = sbr.rel (%p871) target = $region80
        $region79: #{forward.1} parent=11 // pred_region
          %s875 = ssub.s32 4096, 4096
          %876 = vsyncadd [#allocation14], %s875
          %s877 = sshll.u32 [#allocation13], 4
          %s878 = int_to_ptr.vmem [resolvable:$true] %s877
          %883 = dma.hbm_to_vmem [thread:$0]  %s35, 4096, %s878, [#allocation14], 128, 128, 8
        $region80: #{forward.1} parent=11 // pred_fallthru
          _
        // Predicated region
        $region81: #{forward.1} parent=11 // pred_check
          %p884 = pneg %p481
        $region82: #{forward.1} parent=11 // pred_check_branch
          %886 = sbr.rel (%p884) target = $region84
        $region83: #{forward.1} parent=11 // pred_region
          _
        $region84: #{forward.1} parent=11 // pred_fallthru
          _
        // Predicated region
        $region85: #{forward.1} parent=11 // pred_check
          %p887 = pneg %p502
        $region86: #{forward.1} parent=11 // pred_check_branch
          %889 = sbr.rel (%p887) target = $region88
        $region87: #{forward.1} parent=11 // pred_region
          %s891 = ssub.s32 16384, 16384
          %892 = vsyncadd [#allocation14], %s891
          %s893 = sshll.u32 [#allocation15], 4
          %s894 = int_to_ptr.vmem [resolvable:$true] %s893
          %899 = dma.hbm_to_vmem [thread:$0]  %s39, 16384, %s894, [#allocation14], 256, 256, 16
        $region88: #{forward.1} parent=11 // pred_fallthru
          _
        // Predicated region
        $region89: #{forward.1} parent=11 // pred_check
          %p900 = pneg %p523
        $region90: #{forward.1} parent=11 // pred_check_branch
          %902 = sbr.rel (%p900) target = $region92
        $region91: #{forward.1} parent=11 // pred_region
          %s904 = ssub.s32 64, 64
          %905 = vsyncadd [#allocation17], %s904
          %s907 = sshll.u32 [#allocation16], 4
          %s908 = int_to_ptr.vmem [resolvable:$true] %s907
          %910 = dma.hbm_to_vmem [thread:$0]  %s41, 64, %s908, [#allocation17]
        $region92: #{forward.1} parent=11 // pred_fallthru
          _
        // Predicated region
        $region93: #{forward.1} parent=11 // pred_check
          %p911 = pneg %p544
        $region94: #{forward.1} parent=11 // pred_check_branch
          %913 = sbr.rel (%p911) target = $region96
        $region95: #{forward.1} parent=11 // pred_region
          %s915 = ssub.s32 4096, 4096
          %916 = vsyncadd [#allocation17], %s915
          %s917 = sshll.u32 [#allocation18], 4
          %s918 = int_to_ptr.vmem [resolvable:$true] %s917
          %923 = dma.hbm_to_vmem [thread:$0]  %s43, 4096, %s918, [#allocation17], 64, 64, 4
        $region96: #{forward.1} parent=11 // pred_fallthru
          _
        // Predicated region
        $region97: #{forward.1} parent=11 // pred_check
          %p924 = pneg %p565
        $region98: #{forward.1} parent=11 // pred_check_branch
          %926 = sbr.rel (%p924) target = $region100
        $region99: #{forward.1} parent=11 // pred_region
          %s928 = ssub.s32 16, 16
          %929 = vsyncadd [#allocation20], %s928
          %s931 = sshll.u32 [#allocation19], 4
          %s932 = int_to_ptr.vmem [resolvable:$true] %s931
          %934 = dma.hbm_to_vmem [thread:$0]  %s45, 16, %s932, [#allocation20]
        $region100: #{forward.1} parent=11 // pred_fallthru
          _
        // Predicated region
        $region101: #{forward.1} parent=11 // pred_check
          %p935 = pneg %p586
        $region102: #{forward.1} parent=11 // pred_check_branch
          %937 = sbr.rel (%p935) target = $region104
        $region103: #{forward.1} parent=11 // pred_region
          %s939 = ssub.s32 1024, 1024
          %940 = vsyncadd [#allocation20], %s939
          %s941 = sshll.u32 [#allocation21], 4
          %s942 = int_to_ptr.vmem [resolvable:$true] %s941
          %947 = dma.hbm_to_vmem [thread:$0]  %s47, 1024, %s942, [#allocation20], 64, 64, 4
        $region104: #{forward.1} parent=11 // pred_fallthru
          _
        // Predicated region
        $region105: #{forward.1} parent=11 // pred_check
          %p948 = pneg %p607
        $region106: #{forward.1} parent=11 // pred_check_branch
          %950 = sbr.rel (%p948) target = $region108
        $region107: #{forward.1} parent=11 // pred_region
          %s952 = ssub.s32 16, 16
          %953 = vsyncadd [#allocation23], %s952
          %s955 = sshll.u32 [#allocation22], 4
          %s956 = int_to_ptr.vmem [resolvable:$true] %s955
          %958 = dma.hbm_to_vmem [thread:$0]  %s49, 16, %s956, [#allocation23]
        $region108: #{forward.1} parent=11 // pred_fallthru
          _
        // Predicated region
        $region109: #{forward.1} parent=11 // pred_check
          %p959 = pneg %p628
        $region110: #{forward.1} parent=11 // pred_check_branch
          %961 = sbr.rel (%p959) target = $region112
        $region111: #{forward.1} parent=11 // pred_region
          %s963 = ssub.s32 4608, 4608
          %964 = vsyncadd [#allocation23], %s963
          %s965 = sshll.u32 [#allocation24], 4
          %s966 = int_to_ptr.vmem [resolvable:$true] %s965
          %971 = dma.hbm_to_vmem [thread:$0]  %s51, 4608, %s966, [#allocation23], 64, 64, 4
        $region112: #{forward.1} parent=11 // pred_fallthru
          _
        // Predicated region
        $region113: #{forward.1} parent=11 // pred_check
          %p972 = pneg %p649
        $region114: #{forward.1} parent=11 // pred_check_branch
          %974 = sbr.rel (%p972) target = $region116
        $region115: #{forward.1} parent=11 // pred_region
          %s976 = ssub.s32 1152, 1152
          %977 = vsyncadd [#allocation26], %s976
          %s978 = sshll.u32 [#allocation25], 4
          %s979 = int_to_ptr.vmem [resolvable:$true] %s978
          %984 = dma.hbm_to_vmem [thread:$0]  %s53, 1152, %s979, [#allocation26], 64, 64, 4
        $region116: #{forward.1} parent=11 // pred_fallthru
          _
        // Predicated region
        $region117: #{forward.1} parent=11 // pred_check
          %p985 = pneg %p670
        $region118: #{forward.1} parent=11 // pred_check_branch
          %987 = sbr.rel (%p985) target = $region120
        $region119: #{forward.1} parent=11 // pred_region
          _
        $region120: #{forward.1} parent=11 // pred_fallthru
          _
        // Predicated region
        $region121: #{forward.1} parent=11 // pred_check
          %p988 = pneg %p691
        $region122: #{forward.1} parent=11 // pred_check_branch
          %990 = sbr.rel (%p988) target = $region124
        $region123: #{forward.1} parent=11 // pred_region
          %s992 = ssub.s32 512, 512
          %993 = vsyncadd [#allocation26], %s992
          %s994 = sshll.u32 [#allocation27], 4
          %s995 = int_to_ptr.vmem [resolvable:$true] %s994
          %1000 = dma.hbm_to_vmem [thread:$0]  %s57, 512, %s995, [#allocation26], 64, 64, 4
        $region124: #{forward.1} parent=11 // pred_fallthru
          _
        // Predicated region
        $region125: #{forward.1} parent=11 // pred_check
          %p1001 = pneg %p712
        $region126: #{forward.1} parent=11 // pred_check_branch
          %1003 = sbr.rel (%p1001) target = $region128
        $region127: #{forward.1} parent=11 // pred_region
          %s1005 = ssub.s32 128, 128
          %1006 = vsyncadd [#allocation29], %s1005
          %s1007 = sshll.u32 [#allocation28], 4
          %s1008 = int_to_ptr.vmem [resolvable:$true] %s1007
          %1013 = dma.hbm_to_vmem [thread:$0]  %s59, 128, %s1008, [#allocation29], 32, 32, 2
        $region128: #{forward.1} parent=11 // pred_fallthru
          _
      $region12: #{forward.1} parent=5 // pred_fallthru
        _
      %p1014 = scmp.lt.s32.totalorder %s77, 2
      // Predicated region
      $region129: #{forward.1} parent=5 // pred_check
        %p1015 = pneg %p1014
      $region130: #{forward.1} parent=5 // pred_check_branch
        %1017 = sbr.rel (%p1015) target = $region132
      $region131: #{forward.1} parent=5 // pred_region
        // Predicated region
        $region133: #{forward.1} parent=131 // pred_check
          %p1018 = pneg %p97
        $region134: #{forward.1} parent=131 // pred_check_branch
          %1020 = sbr.rel (%p1018) target = $region136
        $region135: #{forward.1} parent=131 // pred_region
          %s1021 = smul.u32 8, %s77
          %p1022 = scmp.lt.s32.totalorder %s1021, 15
          %s1023 = scalar_select %p1022, %s1021, 15
          %s1024 = smul.addr %s1023, 4
          %s1025 = scalar_lea.vmem %s1, %s1024
          %s1026 = smul.u32 8, %s77
        $region136: #{forward.1} parent=131 // pred_fallthru
          _
      $region132: #{forward.1} parent=5 // pred_fallthru
        _
      %p1027 = scmp.le.s32.totalorder 1, %s77
      %p1028 = scmp.lt.s32.totalorder %s77, 3
      %p1029 = pnand %p1027, %p1028
      %p1030 = pneg %p1029
      // Predicated region
      $region137: #{forward.1} parent=5 // pred_check
        _
      $region138: #{forward.1} parent=5 // pred_check_branch
        %1032 = sbr.rel (%p1029) target = $region140
      $region139: #{forward.1} parent=5 // pred_region
        %s1033 = ssub.s32 %s77, 1
        // Predicated region
        $region141: #{forward.1} parent=139 // pred_check
          %p1034 = pneg %p124
        $region142: #{forward.1} parent=139 // pred_check_branch
          %1036 = sbr.rel (%p1034) target = $region144
        $region143: #{forward.1} parent=139 // pred_region
          %1037 = dma.done [#allocation3], 1024
        $region144: #{forward.1} parent=139 // pred_fallthru
          _
        // Predicated region
        $region145: #{forward.1} parent=139 // pred_check
          %p1038 = pneg %p166
        $region146: #{forward.1} parent=139 // pred_check_branch
          %1040 = sbr.rel (%p1038) target = $region148
        $region147: #{forward.1} parent=139 // pred_region
          %1041 = dma.done [#allocation5], 9216
        $region148: #{forward.1} parent=139 // pred_fallthru
          _
        // Predicated region
        $region149: #{forward.1} parent=139 // pred_check
          %p1042 = pneg %p208
        $region150: #{forward.1} parent=139 // pred_check_branch
          %1044 = sbr.rel (%p1042) target = $region152
        $region151: #{forward.1} parent=139 // pred_region
          %1045 = dma.done [#allocation5], 9216
        $region152: #{forward.1} parent=139 // pred_fallthru
          _
        // Predicated region
        $region153: #{forward.1} parent=139 // pred_check
          %p1046 = pneg %p250
        $region154: #{forward.1} parent=139 // pred_check_branch
          %1048 = sbr.rel (%p1046) target = $region156
        $region155: #{forward.1} parent=139 // pred_region
          %1049 = dma.done [#allocation8], 1024
        $region156: #{forward.1} parent=139 // pred_fallthru
          _
        // Predicated region
        $region157: #{forward.1} parent=139 // pred_check
          %p1050 = pneg %p292
        $region158: #{forward.1} parent=139 // pred_check_branch
          %1052 = sbr.rel (%p1050) target = $region160
        $region159: #{forward.1} parent=139 // pred_region
          %1053 = dma.done [#allocation8], 9216
        $region160: #{forward.1} parent=139 // pred_fallthru
          _
        // Predicated region
        $region161: #{forward.1} parent=139 // pred_check
          %p1054 = pneg %p334
        $region162: #{forward.1} parent=139 // pred_check_branch
          %1056 = sbr.rel (%p1054) target = $region164
        $region163: #{forward.1} parent=139 // pred_region
          %1057 = dma.done [#allocation11], 1024
        $region164: #{forward.1} parent=139 // pred_fallthru
          _
        // Predicated region
        $region165: #{forward.1} parent=139 // pred_check
          %p1058 = pneg %p376
        $region166: #{forward.1} parent=139 // pred_check_branch
          %1060 = sbr.rel (%p1058) target = $region168
        $region167: #{forward.1} parent=139 // pred_region
          %1061 = dma.done [#allocation11], 2048
        $region168: #{forward.1} parent=139 // pred_fallthru
          _
        // Predicated region
        $region169: #{forward.1} parent=139 // pred_check
          %p1062 = pneg %p460
        $region170: #{forward.1} parent=139 // pred_check_branch
          %1064 = sbr.rel (%p1062) target = $region172
        $region171: #{forward.1} parent=139 // pred_region
          %1065 = dma.done [#allocation14], 4096
        $region172: #{forward.1} parent=139 // pred_fallthru
          _
        // Predicated region
        $region173: #{forward.1} parent=139 // pred_check
          %p1066 = pneg %p502
        $region174: #{forward.1} parent=139 // pred_check_branch
          %1068 = sbr.rel (%p1066) target = $region176
        $region175: #{forward.1} parent=139 // pred_region
          %1069 = dma.done [#allocation14], 16384
        $region176: #{forward.1} parent=139 // pred_fallthru
          _
        // Predicated region
        $region177: #{forward.1} parent=139 // pred_check
          %p1070 = pneg %p523
        $region178: #{forward.1} parent=139 // pred_check_branch
          %1072 = sbr.rel (%p1070) target = $region180
        $region179: #{forward.1} parent=139 // pred_region
          %1073 = dma.done [#allocation17], 64
        $region180: #{forward.1} parent=139 // pred_fallthru
          _
        // Predicated region
        $region181: #{forward.1} parent=139 // pred_check
          %p1074 = pneg %p544
        $region182: #{forward.1} parent=139 // pred_check_branch
          %1076 = sbr.rel (%p1074) target = $region184
        $region183: #{forward.1} parent=139 // pred_region
          %1077 = dma.done [#allocation17], 4096
        $region184: #{forward.1} parent=139 // pred_fallthru
          _
        // Predicated region
        $region185: #{forward.1} parent=139 // pred_check
          %p1078 = pneg %p565
        $region186: #{forward.1} parent=139 // pred_check_branch
          %1080 = sbr.rel (%p1078) target = $region188
        $region187: #{forward.1} parent=139 // pred_region
          %1081 = dma.done [#allocation20], 16
        $region188: #{forward.1} parent=139 // pred_fallthru
          _
        // Predicated region
        $region189: #{forward.1} parent=139 // pred_check
          %p1082 = pneg %p586
        $region190: #{forward.1} parent=139 // pred_check_branch
          %1084 = sbr.rel (%p1082) target = $region192
        $region191: #{forward.1} parent=139 // pred_region
          %1085 = dma.done [#allocation20], 1024
        $region192: #{forward.1} parent=139 // pred_fallthru
          _
        // Predicated region
        $region193: #{forward.1} parent=139 // pred_check
          %p1086 = pneg %p607
        $region194: #{forward.1} parent=139 // pred_check_branch
          %1088 = sbr.rel (%p1086) target = $region196
        $region195: #{forward.1} parent=139 // pred_region
          %1089 = dma.done [#allocation23], 16
        $region196: #{forward.1} parent=139 // pred_fallthru
          _
        // Predicated region
        $region197: #{forward.1} parent=139 // pred_check
          %p1090 = pneg %p628
        $region198: #{forward.1} parent=139 // pred_check_branch
          %1092 = sbr.rel (%p1090) target = $region200
        $region199: #{forward.1} parent=139 // pred_region
          %1093 = dma.done [#allocation23], 4608
        $region200: #{forward.1} parent=139 // pred_fallthru
          _
        // Predicated region
        $region201: #{forward.1} parent=139 // pred_check
          %p1094 = pneg %p649
        $region202: #{forward.1} parent=139 // pred_check_branch
          %1096 = sbr.rel (%p1094) target = $region204
        $region203: #{forward.1} parent=139 // pred_region
          %1097 = dma.done [#allocation26], 1152
        $region204: #{forward.1} parent=139 // pred_fallthru
          _
        // Predicated region
        $region205: #{forward.1} parent=139 // pred_check
          %p1098 = pneg %p691
        $region206: #{forward.1} parent=139 // pred_check_branch
          %1100 = sbr.rel (%p1098) target = $region208
        $region207: #{forward.1} parent=139 // pred_region
          %1101 = dma.done [#allocation26], 512
        $region208: #{forward.1} parent=139 // pred_fallthru
          _
        // Predicated region
        $region209: #{forward.1} parent=139 // pred_check
          %p1102 = pneg %p712
        $region210: #{forward.1} parent=139 // pred_check_branch
          %1104 = sbr.rel (%p1102) target = $region212
        $region211: #{forward.1} parent=139 // pred_region
          %1105 = dma.done [#allocation29], 128
        $region212: #{forward.1} parent=139 // pred_fallthru
          _
        %s1106 = smul.u32 8, %s82
        %p1107 = scmp.lt.s32.totalorder %s1106, 15
        %s1108 = scalar_select %p1107, %s1106, 15
        %s1109 = smul.addr %s1108, 4
        %s1110 = scalar_lea.vmem %s1, %s1109
        %p1111 = pneg %p103
        %p1112 = pneg %p100
        %p1113 = pneg %p124
        %p1114 = pneg %p121
        %p1115 = pneg %p145
        %p1116 = pneg %p142
        %p1117 = pneg %p166
        %p1118 = pneg %p163
        %p1119 = pneg %p187
        %p1120 = pneg %p184
        %p1121 = pneg %p208
        %p1122 = pneg %p205
        %p1123 = pneg %p229
        %p1124 = pneg %p226
        %p1125 = pneg %p250
        %p1126 = pneg %p247
        %p1127 = pneg %p271
        %p1128 = pneg %p268
        %p1129 = pneg %p292
        %p1130 = pneg %p289
        %p1131 = pneg %p313
        %p1132 = pneg %p310
        %p1133 = pneg %p334
        %p1134 = pneg %p331
        %p1135 = pneg %p355
        %p1136 = pneg %p352
        %p1137 = pneg %p376
        %p1138 = pneg %p373
        %p1139 = pneg %p397
        %p1140 = pneg %p394
        %p1141 = pneg %p418
        %p1142 = pneg %p415
        %p1143 = pneg %p439
        %p1144 = pneg %p436
        %p1145 = pneg %p460
        %p1146 = pneg %p457
        %p1147 = pneg %p481
        %p1148 = pneg %p478
        %p1149 = pneg %p502
        %p1150 = pneg %p499
        %p1151 = pneg %p523
        %p1152 = pneg %p520
        %p1153 = pneg %p544
        %p1154 = pneg %p541
        %p1155 = pneg %p565
        %p1156 = pneg %p562
        %p1157 = pneg %p586
        %p1158 = pneg %p583
        %p1159 = pneg %p607
        %p1160 = pneg %p604
        %p1161 = pneg %p628
        %p1162 = pneg %p625
        %p1163 = pneg %p649
        %p1164 = pneg %p646
        %p1165 = pneg %p670
        %p1166 = pneg %p667
        %p1167 = pneg %p691
        %p1168 = pneg %p688
        %p1169 = pneg %p712
        %p1170 = pneg %p709
        %p1171 = pneg %p738
        %p1172 = pneg %p735
        %p1173 = scmp.lt.s32.totalorder %s82, 1
        %s1174 = scalar_select %p1173, %s82, 1
        %s1175 = smul.addr %s1174, 8
        %s1176 = scalar_lea.vmem %s61, %s1175
        %s1177 = smul.u32 8, %s82
        %p1178 = scmp.lt.s32.totalorder %s1177, 15
        %s1179 = scalar_select %p1178, %s1177, 15
        %s1180 = smul.addr %s1179, 4
        %s1181 = scalar_lea.vmem %s1, %s1180
        %s1182 = smul.u32 8, %s82
        %p1183 = scmp.lt.s32.totalorder %s82, 1
        %s1184 = scalar_select %p1183, %s82, 1
        %s1185 = smul.addr %s1184, 8
        %s1186 = scalar_lea.vmem %s61, %s1185
        %v1188 = vld [vmem:[%s1181] sm:$0xf]
        %v1189 = vld [vmem:[%s1181 + $0x4] sm:$0xf]
        %v1190 = vld [vmem:[%s1181 + $0x8] sm:$0xf]
        %v1191 = vld [vmem:[%s1181 + $0xc] sm:$0xf]
        %v1192 = vld [vmem:[%s1181 + $0x10] sm:$0xf]
        %v1193 = vld [vmem:[%s1181 + $0x14] sm:$0xf]
        %v1194 = vld [vmem:[%s1181 + $0x18] sm:$0xf]
        %v1195 = vld [vmem:[%s1181 + $0x1c] sm:$0xf]
        %v1196 = vld [vmem:[#allocation2] sm:$0xf]
        %v1197 = vld [vmem:[#allocation2 + $0x4] sm:$0xf]
        %v1198 = vld [vmem:[#allocation2 + $0x8] sm:$0xf]
        %v1199 = vld [vmem:[#allocation2 + $0xc] sm:$0xf]
        %v1200 = vld [vmem:[#allocation2 + $0x10] sm:$0xf]
        %v1201 = vld [vmem:[#allocation2 + $0x14] sm:$0xf]
        %v1202 = vld [vmem:[#allocation2 + $0x18] sm:$0xf]
        %v1203 = vld [vmem:[#allocation2 + $0x1c] sm:$0xf]
        %v1204 = vld [vmem:[#allocation2 + $0x20] sm:$0xf]
        %v1205 = vld [vmem:[#allocation2 + $0x24] sm:$0xf]
        %v1206 = vld [vmem:[#allocation2 + $0x28] sm:$0xf]
        %v1207 = vld [vmem:[#allocation2 + $0x2c] sm:$0xf]
        %v1208 = vld [vmem:[#allocation2 + $0x30] sm:$0xf]
        %v1209 = vld [vmem:[#allocation2 + $0x34] sm:$0xf]
        %v1210 = vld [vmem:[#allocation2 + $0x38] sm:$0xf]
        %v1211 = vld [vmem:[#allocation2 + $0x3c] sm:$0xf]
        %v1212 = vld [vmem:[%s5] sm:$0x1]
        %v1214 = vlaneseq
        %v1215 = vshrl.u32 %v1214, 7
        %v1216 = vsub.s32 0, %v1215
        %v1217 = vrot.slane %v1212, %v1216
        %v1227 = vunpack.c.l.b16 %v1188
        %v1228 = vunpack.c.l.b16 %v1189
        %v1229 = vunpack.c.l.b16 %v1190
        %v1230 = vunpack.c.l.b16 %v1191
        %v1231 = vunpack.c.l.b16 %v1192
        %v1232 = vunpack.c.l.b16 %v1193
        %v1233 = vunpack.c.l.b16 %v1194
        %v1234 = vunpack.c.l.b16 %v1195
        %v1235 = vpack.c.b16 %v1228, %v1227
        %v1236 = vpack.c.b16 %v1230, %v1229
        %v1237 = vpack.c.b16 %v1232, %v1231
        %v1238 = vpack.c.b16 %v1234, %v1233
        %v1259 = vunpack.c.l.b16 %v1196
        %v1260 = vunpack.c.l.b16 %v1197
        %v1261 = vunpack.c.l.b16 %v1198
        %v1262 = vunpack.c.l.b16 %v1199
        %v1263 = vunpack.c.l.b16 %v1200
        %v1264 = vunpack.c.l.b16 %v1201
        %v1265 = vunpack.c.l.b16 %v1202
        %v1266 = vunpack.c.l.b16 %v1203
        %v1267 = vunpack.c.l.b16 %v1204
        %v1268 = vunpack.c.l.b16 %v1205
        %v1269 = vunpack.c.l.b16 %v1206
        %v1270 = vunpack.c.l.b16 %v1207
        %v1271 = vunpack.c.l.b16 %v1208
        %v1272 = vunpack.c.l.b16 %v1209
        %v1273 = vunpack.c.l.b16 %v1210
        %v1274 = vunpack.c.l.b16 %v1211
        %v1275 = vpack.c.b16 %v1260, %v1259
        %v1276 = vpack.c.b16 %v1262, %v1261
        %v1277 = vpack.c.b16 %v1264, %v1263
        %v1278 = vpack.c.b16 %v1266, %v1265
        %v1279 = vpack.c.b16 %v1268, %v1267
        %v1280 = vpack.c.b16 %v1270, %v1269
        %v1281 = vpack.c.b16 %v1272, %v1271
        %v1282 = vpack.c.b16 %v1274, %v1273
        %1291 = vmatprep.subr.bf16.mxu0 0
        %1292 = vmatpush1.bf16.msra.mxu0 %v1282
        %1293 = vmatprep.subr.bf16.mxu0 0
        %1294 = vmatpush1.bf16.msra.mxu0 %v1281
        %1295 = vmatprep.subr.bf16.mxu0 0
        %1296 = vmatpush1.bf16.msra.mxu0 %v1280
        %1297 = vmatprep.subr.bf16.mxu0 0
        %1298 = vmatpush1.bf16.msra.mxu0 %v1279
        %1299 = vmatprep.subr.bf16.mxu0 0
        %1300 = vmatpush1.bf16.msra.mxu0 %v1278
        %1301 = vmatprep.subr.bf16.mxu0 0
        %1302 = vmatpush1.bf16.msra.mxu0 %v1277
        %1303 = vmatprep.subr.bf16.mxu0 0
        %1304 = vmatpush1.bf16.msra.mxu0 %v1276
        %1305 = vmatprep.subr.bf16.mxu0 0
        %1306 = vmatpush1.bf16.msra.mxu0 %v1275
        %1307 = vmatprep.subr.bf16.mxu0 0
        %1308 = vmatpush2.bf16.msra.mxu0 0
        %1309 = vmatprep.subr.bf16.mxu0 0
        %1310 = vmatpush2.bf16.msra.mxu0 0
        %1311 = vmatprep.subr.bf16.mxu0 0
        %1312 = vmatpush2.bf16.msra.mxu0 0
        %1313 = vmatprep.subr.bf16.mxu0 0
        %1314 = vmatpush2.bf16.msra.mxu0 0
        %1315 = vmatprep.subr.bf16.mxu0 0
        %1316 = vmatpush2.bf16.msra.mxu0 0
        %1317 = vmatprep.subr.bf16.mxu0 0
        %1318 = vmatpush2.bf16.msra.mxu0 0
        %1319 = vmatprep.subr.bf16.mxu0 0
        %1320 = vmatpush2.bf16.msra.mxu0 0
        %1321 = vmatprep.subr.bf16.mxu0 0
        %1322 = vmatpush2.bf16.msra.mxu0 0
        %1323 = vmatprep.mubr.bf16.mxu0 0
        %1324 = vmatmul.mubr.bf16.gmra.mxu0 %v1235
        %v1325 = vpop.f32.mrf.mxu0
        %v1326 = vadd.f32 %v1217, %v1325
        %v1327 = vpop.f32.mrf.mxu0
        %v1328 = vpop.f32.mrf.mxu0
        %v1329 = vadd.f32 %v1217, %v1328
        %v1330 = vpop.f32.mrf.mxu0
        %1331 = vmatprep.mubr.bf16.mxu0 0
        %1332 = vmatmul.mubr.bf16.gmra.mxu0 %v1236
        %v1333 = vpop.f32.mrf.mxu0
        %v1334 = vadd.f32 %v1217, %v1333
        %v1335 = vpop.f32.mrf.mxu0
        %v1336 = vpop.f32.mrf.mxu0
        %v1337 = vadd.f32 %v1217, %v1336
        %v1338 = vpop.f32.mrf.mxu0
        %1339 = vmatprep.mubr.bf16.mxu0 0
        %1340 = vmatmul.mubr.bf16.gmra.mxu0 %v1237
        %v1341 = vpop.f32.mrf.mxu0
        %v1342 = vadd.f32 %v1217, %v1341
        %v1343 = vpop.f32.mrf.mxu0
        %v1344 = vpop.f32.mrf.mxu0
        %v1345 = vadd.f32 %v1217, %v1344
        %v1346 = vpop.f32.mrf.mxu0
        %1347 = vmatprep.mubr.bf16.mxu0 0
        %1348 = vmatmul.mubr.bf16.gmra.mxu0 %v1238
        %v1349 = vpop.f32.mrf.mxu0
        %v1350 = vadd.f32 %v1217, %v1349
        %v1351 = vpop.f32.mrf.mxu0
        %v1352 = vpop.f32.mrf.mxu0
        %v1353 = vadd.f32 %v1217, %v1352
        %v1354 = vpop.f32.mrf.mxu0
        %1355 = vdwg.mxu0
        %v1356 = vmax.f32 %v1326, 0.0
        %v1357 = vmax.f32 %v1329, 0.0
        %v1358 = vmax.f32 %v1334, 0.0
        %v1359 = vmax.f32 %v1337, 0.0
        %v1360 = vmax.f32 %v1342, 0.0
        %v1361 = vmax.f32 %v1345, 0.0
        %v1362 = vmax.f32 %v1350, 0.0
        %v1363 = vmax.f32 %v1353, 0.0
        %v1364 = vld [vmem:[#allocation24] sm:$0xf]
        %v1365 = vld [vmem:[#allocation24 + $0x4] sm:$0xf]
        %v1366 = vld [vmem:[#allocation24 + $0x8] sm:$0xf]
        %v1367 = vld [vmem:[#allocation24 + $0xc] sm:$0xf]
        %v1368 = vld [vmem:[#allocation24 + $0x10] sm:$0xf]
        %v1369 = vld [vmem:[#allocation24 + $0x14] sm:$0xf]
        %v1370 = vld [vmem:[#allocation24 + $0x18] sm:$0xf]
        %v1371 = vld [vmem:[#allocation24 + $0x1c] sm:$0xf]
        %v1372 = vpack.c.bf16 %v1357, %v1356
        %v1373 = vpack.c.bf16 %v1359, %v1358
        %v1374 = vpack.c.bf16 %v1361, %v1360
        %v1375 = vpack.c.bf16 %v1363, %v1362
        %v1384 = vunpack.c.l.b16 %v1364
        %v1385 = vunpack.c.l.b16 %v1365
        %v1386 = vunpack.c.l.b16 %v1366
        %v1387 = vunpack.c.l.b16 %v1367
        %v1388 = vunpack.c.l.b16 %v1368
        %v1389 = vunpack.c.l.b16 %v1369
        %v1390 = vunpack.c.l.b16 %v1370
        %v1391 = vunpack.c.l.b16 %v1371
        %v1392 = vpack.c.b16 %v1385, %v1384
        %v1393 = vpack.c.b16 %v1387, %v1386
        %v1394 = vpack.c.b16 %v1389, %v1388
        %v1395 = vpack.c.b16 %v1391, %v1390
        %vm1396 = vcmask 523264
        %v1398 = vsel %vm1396, %v1392, 0
        %v1401 = vsel %vm1396, %v1393, 0
        %v1404 = vsel %vm1396, %v1394, 0
        %v1407 = vsel %vm1396, %v1395, 0
        %1409 = vmatprep.subr.bf16.mxu0 0
        %1410 = vmatpush1.bf16.msra.mxu0 0
        %1411 = vmatprep.subr.bf16.mxu0 0
        %1412 = vmatpush1.bf16.msra.mxu0 0
        %1413 = vmatprep.subr.bf16.mxu0 0
        %1414 = vmatpush1.bf16.msra.mxu0 0
        %1415 = vmatprep.subr.bf16.mxu0 0
        %1416 = vmatpush1.bf16.msra.mxu0 0
        %1417 = vmatprep.subr.bf16.mxu0 0
        %1418 = vmatpush1.bf16.msra.mxu0 %v1375
        %1419 = vmatprep.subr.bf16.mxu0 0
        %1420 = vmatpush1.bf16.msra.mxu0 %v1374
        %1421 = vmatprep.subr.bf16.mxu0 0
        %1422 = vmatpush1.bf16.msra.mxu0 %v1373
        %1423 = vmatprep.subr.bf16.mxu0 0
        %1424 = vmatpush1.bf16.msra.mxu0 %v1372
        %1425 = vmatprep.subr.bf16.mxu0 0
        %1426 = vmatpush2.bf16.msra.mxu0 0
        %1427 = vmatprep.subr.bf16.mxu0 0
        %1428 = vmatpush2.bf16.msra.mxu0 0
        %1429 = vmatprep.subr.bf16.mxu0 0
        %1430 = vmatpush2.bf16.msra.mxu0 0
        %1431 = vmatprep.subr.bf16.mxu0 0
        %1432 = vmatpush2.bf16.msra.mxu0 0
        %1433 = vmatprep.subr.bf16.mxu0 0
        %1434 = vmatpush2.bf16.msra.mxu0 0
        %1435 = vmatprep.subr.bf16.mxu0 0
        %1436 = vmatpush2.bf16.msra.mxu0 0
        %1437 = vmatprep.subr.bf16.mxu0 0
        %1438 = vmatpush2.bf16.msra.mxu0 0
        %1439 = vmatprep.subr.bf16.mxu0 0
        %1440 = vmatpush2.bf16.msra.mxu0 0
        %1441 = vmatprep.mubr.bf16.mxu0 0
        %1442 = vmatmul.mubr.bf16.gmra.mxu0 %v1398
        %v1443 = vpop.f32.mrf.mxu0
        %v1444 = vadd.f32 0.0, %v1443
        %v1445 = vpop.f32.mrf.mxu0
        %v1446 = vpop.f32.mrf.mxu0
        %v1447 = vadd.f32 0.0, %v1446
        %v1448 = vpop.f32.mrf.mxu0
        %1449 = vmatprep.mubr.bf16.mxu0 0
        %1450 = vmatmul.mubr.bf16.gmra.mxu0 %v1401
        %v1451 = vpop.f32.mrf.mxu0
        %v1452 = vadd.f32 0.0, %v1451
        %v1453 = vpop.f32.mrf.mxu0
        %v1454 = vpop.f32.mrf.mxu0
        %v1455 = vadd.f32 0.0, %v1454
        %v1456 = vpop.f32.mrf.mxu0
        %1457 = vmatprep.mubr.bf16.mxu0 0
        %1458 = vmatmul.mubr.bf16.gmra.mxu0 %v1404
        %v1459 = vpop.f32.mrf.mxu0
        %v1460 = vadd.f32 0.0, %v1459
        %v1461 = vpop.f32.mrf.mxu0
        %v1462 = vpop.f32.mrf.mxu0
        %v1463 = vadd.f32 0.0, %v1462
        %v1464 = vpop.f32.mrf.mxu0
        %1465 = vmatprep.mubr.bf16.mxu0 0
        %1466 = vmatmul.mubr.bf16.gmra.mxu0 %v1407
        %v1467 = vpop.f32.mrf.mxu0
        %v1468 = vadd.f32 0.0, %v1467
        %v1469 = vpop.f32.mrf.mxu0
        %v1470 = vpop.f32.mrf.mxu0
        %v1471 = vadd.f32 0.0, %v1470
        %v1472 = vpop.f32.mrf.mxu0
        %1473 = vdwg.mxu0
        %s1474 = scalar_lea.vmem [#allocation24], 32
        %v1475 = vld [vmem:[%s1474] sm:$0xf]
        %v1476 = vld [vmem:[%s1474 + $0x4] sm:$0xf]
        %v1477 = vld [vmem:[%s1474 + $0x8] sm:$0xf]
        %v1478 = vld [vmem:[%s1474 + $0xc] sm:$0xf]
        %v1479 = vld [vmem:[%s1474 + $0x10] sm:$0xf]
        %v1480 = vld [vmem:[%s1474 + $0x14] sm:$0xf]
        %v1481 = vld [vmem:[%s1474 + $0x18] sm:$0xf]
        %v1482 = vld [vmem:[%s1474 + $0x1c] sm:$0xf]
        %v1491 = vunpack.c.l.b16 %v1475
        %v1492 = vunpack.c.l.b16 %v1476
        %v1493 = vunpack.c.l.b16 %v1477
        %v1494 = vunpack.c.l.b16 %v1478
        %v1495 = vunpack.c.l.b16 %v1479
        %v1496 = vunpack.c.l.b16 %v1480
        %v1497 = vunpack.c.l.b16 %v1481
        %v1498 = vunpack.c.l.b16 %v1482
        %v1499 = vpack.c.b16 %v1492, %v1491
        %v1500 = vpack.c.b16 %v1494, %v1493
        %v1501 = vpack.c.b16 %v1496, %v1495
        %v1502 = vpack.c.b16 %v1498, %v1497
        %v1504 = vsel %vm1396, %v1499, 0
        %v1507 = vsel %vm1396, %v1500, 0
        %v1510 = vsel %vm1396, %v1501, 0
        %v1513 = vsel %vm1396, %v1502, 0
        %1515 = vmatprep.subr.bf16.mxu0 0
        %1516 = vmatpush1.bf16.msra.mxu0 0
        %1517 = vmatprep.subr.bf16.mxu0 0
        %1518 = vmatpush1.bf16.msra.mxu0 0
        %1519 = vmatprep.subr.bf16.mxu0 0
        %1520 = vmatpush1.bf16.msra.mxu0 0
        %1521 = vmatprep.subr.bf16.mxu0 0
        %1522 = vmatpush1.bf16.msra.mxu0 0
        %1523 = vmatprep.subr.bf16.mxu0 0
        %1524 = vmatpush1.bf16.msra.mxu0 %v1375
        %1525 = vmatprep.subr.bf16.mxu0 0
        %1526 = vmatpush1.bf16.msra.mxu0 %v1374
        %1527 = vmatprep.subr.bf16.mxu0 0
        %1528 = vmatpush1.bf16.msra.mxu0 %v1373
        %1529 = vmatprep.subr.bf16.mxu0 0
        %1530 = vmatpush1.bf16.msra.mxu0 %v1372
        %1531 = vmatprep.subr.bf16.mxu0 0
        %1532 = vmatpush2.bf16.msra.mxu0 0
        %1533 = vmatprep.subr.bf16.mxu0 0
        %1534 = vmatpush2.bf16.msra.mxu0 0
        %1535 = vmatprep.subr.bf16.mxu0 0
        %1536 = vmatpush2.bf16.msra.mxu0 0
        %1537 = vmatprep.subr.bf16.mxu0 0
        %1538 = vmatpush2.bf16.msra.mxu0 0
        %1539 = vmatprep.subr.bf16.mxu0 0
        %1540 = vmatpush2.bf16.msra.mxu0 0
        %1541 = vmatprep.subr.bf16.mxu0 0
        %1542 = vmatpush2.bf16.msra.mxu0 0
        %1543 = vmatprep.subr.bf16.mxu0 0
        %1544 = vmatpush2.bf16.msra.mxu0 0
        %1545 = vmatprep.subr.bf16.mxu0 0
        %1546 = vmatpush2.bf16.msra.mxu0 0
        %1547 = vmatprep.mubr.bf16.mxu0 0
        %1548 = vmatmul.mubr.bf16.gmra.mxu0 %v1504
        %v1549 = vpop.f32.mrf.mxu0
        %v1550 = vadd.f32 0.0, %v1549
        %v1551 = vpop.f32.mrf.mxu0
        %v1552 = vpop.f32.mrf.mxu0
        %v1553 = vadd.f32 0.0, %v1552
        %v1554 = vpop.f32.mrf.mxu0
        %1555 = vmatprep.mubr.bf16.mxu0 0
        %1556 = vmatmul.mubr.bf16.gmra.mxu0 %v1507
        %v1557 = vpop.f32.mrf.mxu0
        %v1558 = vadd.f32 0.0, %v1557
        %v1559 = vpop.f32.mrf.mxu0
        %v1560 = vpop.f32.mrf.mxu0
        %v1561 = vadd.f32 0.0, %v1560
        %v1562 = vpop.f32.mrf.mxu0
        %1563 = vmatprep.mubr.bf16.mxu0 0
        %1564 = vmatmul.mubr.bf16.gmra.mxu0 %v1510
        %v1565 = vpop.f32.mrf.mxu0
        %v1566 = vadd.f32 0.0, %v1565
        %v1567 = vpop.f32.mrf.mxu0
        %v1568 = vpop.f32.mrf.mxu0
        %v1569 = vadd.f32 0.0, %v1568
        %v1570 = vpop.f32.mrf.mxu0
        %1571 = vmatprep.mubr.bf16.mxu0 0
        %1572 = vmatmul.mubr.bf16.gmra.mxu0 %v1513
        %v1573 = vpop.f32.mrf.mxu0
        %v1574 = vadd.f32 0.0, %v1573
        %v1575 = vpop.f32.mrf.mxu0
        %v1576 = vpop.f32.mrf.mxu0
        %v1577 = vadd.f32 0.0, %v1576
        %v1578 = vpop.f32.mrf.mxu0
        %1579 = vdwg.mxu0
        %s1580 = scalar_lea.vmem [#allocation24], 64
        %v1581 = vld [vmem:[%s1580] sm:$0xf]
        %v1582 = vld [vmem:[%s1580 + $0x4] sm:$0xf]
        %v1583 = vld [vmem:[%s1580 + $0x8] sm:$0xf]
        %v1584 = vld [vmem:[%s1580 + $0xc] sm:$0xf]
        %v1585 = vld [vmem:[%s1580 + $0x10] sm:$0xf]
        %v1586 = vld [vmem:[%s1580 + $0x14] sm:$0xf]
        %v1587 = vld [vmem:[%s1580 + $0x18] sm:$0xf]
        %v1588 = vld [vmem:[%s1580 + $0x1c] sm:$0xf]
        %v1597 = vunpack.c.l.b16 %v1581
        %v1598 = vunpack.c.l.b16 %v1582
        %v1599 = vunpack.c.l.b16 %v1583
        %v1600 = vunpack.c.l.b16 %v1584
        %v1601 = vunpack.c.l.b16 %v1585
        %v1602 = vunpack.c.l.b16 %v1586
        %v1603 = vunpack.c.l.b16 %v1587
        %v1604 = vunpack.c.l.b16 %v1588
        %v1605 = vpack.c.b16 %v1598, %v1597
        %v1606 = vpack.c.b16 %v1600, %v1599
        %v1607 = vpack.c.b16 %v1602, %v1601
        %v1608 = vpack.c.b16 %v1604, %v1603
        %v1610 = vsel %vm1396, %v1605, 0
        %v1613 = vsel %vm1396, %v1606, 0
        %v1616 = vsel %vm1396, %v1607, 0
        %v1619 = vsel %vm1396, %v1608, 0
        %1621 = vmatprep.subr.bf16.mxu0 0
        %1622 = vmatpush1.bf16.msra.mxu0 0
        %1623 = vmatprep.subr.bf16.mxu0 0
        %1624 = vmatpush1.bf16.msra.mxu0 0
        %1625 = vmatprep.subr.bf16.mxu0 0
        %1626 = vmatpush1.bf16.msra.mxu0 0
        %1627 = vmatprep.subr.bf16.mxu0 0
        %1628 = vmatpush1.bf16.msra.mxu0 0
        %1629 = vmatprep.subr.bf16.mxu0 0
        %1630 = vmatpush1.bf16.msra.mxu0 %v1375
        %1631 = vmatprep.subr.bf16.mxu0 0
        %1632 = vmatpush1.bf16.msra.mxu0 %v1374
        %1633 = vmatprep.subr.bf16.mxu0 0
        %1634 = vmatpush1.bf16.msra.mxu0 %v1373
        %1635 = vmatprep.subr.bf16.mxu0 0
        %1636 = vmatpush1.bf16.msra.mxu0 %v1372
        %1637 = vmatprep.subr.bf16.mxu0 0
        %1638 = vmatpush2.bf16.msra.mxu0 0
        %1639 = vmatprep.subr.bf16.mxu0 0
        %1640 = vmatpush2.bf16.msra.mxu0 0
        %1641 = vmatprep.subr.bf16.mxu0 0
        %1642 = vmatpush2.bf16.msra.mxu0 0
        %1643 = vmatprep.subr.bf16.mxu0 0
        %1644 = vmatpush2.bf16.msra.mxu0 0
        %1645 = vmatprep.subr.bf16.mxu0 0
        %1646 = vmatpush2.bf16.msra.mxu0 0
        %1647 = vmatprep.subr.bf16.mxu0 0
        %1648 = vmatpush2.bf16.msra.mxu0 0
        %1649 = vmatprep.subr.bf16.mxu0 0
        %1650 = vmatpush2.bf16.msra.mxu0 0
        %1651 = vmatprep.subr.bf16.mxu0 0
        %1652 = vmatpush2.bf16.msra.mxu0 0
        %1653 = vmatprep.mubr.bf16.mxu0 0
        %1654 = vmatmul.mubr.bf16.gmra.mxu0 %v1610
        %v1655 = vpop.f32.mrf.mxu0
        %v1656 = vadd.f32 0.0, %v1655
        %v1657 = vpop.f32.mrf.mxu0
        %v1658 = vpop.f32.mrf.mxu0
        %v1659 = vadd.f32 0.0, %v1658
        %v1660 = vpop.f32.mrf.mxu0
        %1661 = vmatprep.mubr.bf16.mxu0 0
        %1662 = vmatmul.mubr.bf16.gmra.mxu0 %v1613
        %v1663 = vpop.f32.mrf.mxu0
        %v1664 = vadd.f32 0.0, %v1663
        %v1665 = vpop.f32.mrf.mxu0
        %v1666 = vpop.f32.mrf.mxu0
        %v1667 = vadd.f32 0.0, %v1666
        %v1668 = vpop.f32.mrf.mxu0
        %1669 = vmatprep.mubr.bf16.mxu0 0
        %1670 = vmatmul.mubr.bf16.gmra.mxu0 %v1616
        %v1671 = vpop.f32.mrf.mxu0
        %v1672 = vadd.f32 0.0, %v1671
        %v1673 = vpop.f32.mrf.mxu0
        %v1674 = vpop.f32.mrf.mxu0
        %v1675 = vadd.f32 0.0, %v1674
        %v1676 = vpop.f32.mrf.mxu0
        %1677 = vmatprep.mubr.bf16.mxu0 0
        %1678 = vmatmul.mubr.bf16.gmra.mxu0 %v1619
        %v1679 = vpop.f32.mrf.mxu0
        %v1680 = vadd.f32 0.0, %v1679
        %v1681 = vpop.f32.mrf.mxu0
        %v1682 = vpop.f32.mrf.mxu0
        %v1683 = vadd.f32 0.0, %v1682
        %v1684 = vpop.f32.mrf.mxu0
        %1685 = vdwg.mxu0
        %s1686 = scalar_lea.vmem [#allocation24], 96
        %v1687 = vld [vmem:[%s1686] sm:$0xf]
        %v1688 = vld [vmem:[%s1686 + $0x4] sm:$0xf]
        %v1689 = vld [vmem:[%s1686 + $0x8] sm:$0xf]
        %v1690 = vld [vmem:[%s1686 + $0xc] sm:$0xf]
        %v1691 = vld [vmem:[%s1686 + $0x10] sm:$0xf]
        %v1692 = vld [vmem:[%s1686 + $0x14] sm:$0xf]
        %v1693 = vld [vmem:[%s1686 + $0x18] sm:$0xf]
        %v1694 = vld [vmem:[%s1686 + $0x1c] sm:$0xf]
        %v1703 = vunpack.c.l.b16 %v1687
        %v1704 = vunpack.c.l.b16 %v1688
        %v1705 = vunpack.c.l.b16 %v1689
        %v1706 = vunpack.c.l.b16 %v1690
        %v1707 = vunpack.c.l.b16 %v1691
        %v1708 = vunpack.c.l.b16 %v1692
        %v1709 = vunpack.c.l.b16 %v1693
        %v1710 = vunpack.c.l.b16 %v1694
        %v1711 = vpack.c.b16 %v1704, %v1703
        %v1712 = vpack.c.b16 %v1706, %v1705
        %v1713 = vpack.c.b16 %v1708, %v1707
        %v1714 = vpack.c.b16 %v1710, %v1709
        %v1716 = vsel %vm1396, %v1711, 0
        %v1719 = vsel %vm1396, %v1712, 0
        %v1722 = vsel %vm1396, %v1713, 0
        %v1725 = vsel %vm1396, %v1714, 0
        %1727 = vmatprep.subr.bf16.mxu0 0
        %1728 = vmatpush1.bf16.msra.mxu0 0
        %1729 = vmatprep.subr.bf16.mxu0 0
        %1730 = vmatpush1.bf16.msra.mxu0 0
        %1731 = vmatprep.subr.bf16.mxu0 0
        %1732 = vmatpush1.bf16.msra.mxu0 0
        %1733 = vmatprep.subr.bf16.mxu0 0
        %1734 = vmatpush1.bf16.msra.mxu0 0
        %1735 = vmatprep.subr.bf16.mxu0 0
        %1736 = vmatpush1.bf16.msra.mxu0 %v1375
        %1737 = vmatprep.subr.bf16.mxu0 0
        %1738 = vmatpush1.bf16.msra.mxu0 %v1374
        %1739 = vmatprep.subr.bf16.mxu0 0
        %1740 = vmatpush1.bf16.msra.mxu0 %v1373
        %1741 = vmatprep.subr.bf16.mxu0 0
        %1742 = vmatpush1.bf16.msra.mxu0 %v1372
        %1743 = vmatprep.subr.bf16.mxu0 0
        %1744 = vmatpush2.bf16.msra.mxu0 0
        %1745 = vmatprep.subr.bf16.mxu0 0
        %1746 = vmatpush2.bf16.msra.mxu0 0
        %1747 = vmatprep.subr.bf16.mxu0 0
        %1748 = vmatpush2.bf16.msra.mxu0 0
        %1749 = vmatprep.subr.bf16.mxu0 0
        %1750 = vmatpush2.bf16.msra.mxu0 0
        %1751 = vmatprep.subr.bf16.mxu0 0
        %1752 = vmatpush2.bf16.msra.mxu0 0
        %1753 = vmatprep.subr.bf16.mxu0 0
        %1754 = vmatpush2.bf16.msra.mxu0 0
        %1755 = vmatprep.subr.bf16.mxu0 0
        %1756 = vmatpush2.bf16.msra.mxu0 0
        %1757 = vmatprep.subr.bf16.mxu0 0
        %1758 = vmatpush2.bf16.msra.mxu0 0
        %1759 = vmatprep.mubr.bf16.mxu0 0
        %1760 = vmatmul.mubr.bf16.gmra.mxu0 %v1716
        %v1761 = vpop.f32.mrf.mxu0
        %v1762 = vadd.f32 0.0, %v1761
        %v1763 = vpop.f32.mrf.mxu0
        %v1764 = vpop.f32.mrf.mxu0
        %v1765 = vadd.f32 0.0, %v1764
        %v1766 = vpop.f32.mrf.mxu0
        %1767 = vmatprep.mubr.bf16.mxu0 0
        %1768 = vmatmul.mubr.bf16.gmra.mxu0 %v1719
        %v1769 = vpop.f32.mrf.mxu0
        %v1770 = vadd.f32 0.0, %v1769
        %v1771 = vpop.f32.mrf.mxu0
        %v1772 = vpop.f32.mrf.mxu0
        %v1773 = vadd.f32 0.0, %v1772
        %v1774 = vpop.f32.mrf.mxu0
        %1775 = vmatprep.mubr.bf16.mxu0 0
        %1776 = vmatmul.mubr.bf16.gmra.mxu0 %v1722
        %v1777 = vpop.f32.mrf.mxu0
        %v1778 = vadd.f32 0.0, %v1777
        %v1779 = vpop.f32.mrf.mxu0
        %v1780 = vpop.f32.mrf.mxu0
        %v1781 = vadd.f32 0.0, %v1780
        %v1782 = vpop.f32.mrf.mxu0
        %1783 = vmatprep.mubr.bf16.mxu0 0
        %1784 = vmatmul.mubr.bf16.gmra.mxu0 %v1725
        %v1785 = vpop.f32.mrf.mxu0
        %v1786 = vadd.f32 0.0, %v1785
        %v1787 = vpop.f32.mrf.mxu0
        %v1788 = vpop.f32.mrf.mxu0
        %v1789 = vadd.f32 0.0, %v1788
        %v1790 = vpop.f32.mrf.mxu0
        %1791 = vdwg.mxu0
        %s1792 = scalar_lea.vmem [#allocation24], 128
        %v1793 = vld [vmem:[%s1792] sm:$0xf]
        %v1794 = vld [vmem:[%s1792 + $0x4] sm:$0xf]
        %v1795 = vld [vmem:[%s1792 + $0x8] sm:$0xf]
        %v1796 = vld [vmem:[%s1792 + $0xc] sm:$0xf]
        %v1797 = vld [vmem:[%s1792 + $0x10] sm:$0xf]
        %v1798 = vld [vmem:[%s1792 + $0x14] sm:$0xf]
        %v1799 = vld [vmem:[%s1792 + $0x18] sm:$0xf]
        %v1800 = vld [vmem:[%s1792 + $0x1c] sm:$0xf]
        %v1809 = vunpack.c.l.b16 %v1793
        %v1810 = vunpack.c.l.b16 %v1794
        %v1811 = vunpack.c.l.b16 %v1795
        %v1812 = vunpack.c.l.b16 %v1796
        %v1813 = vunpack.c.l.b16 %v1797
        %v1814 = vunpack.c.l.b16 %v1798
        %v1815 = vunpack.c.l.b16 %v1799
        %v1816 = vunpack.c.l.b16 %v1800
        %v1817 = vpack.c.b16 %v1810, %v1809
        %v1818 = vpack.c.b16 %v1812, %v1811
        %v1819 = vpack.c.b16 %v1814, %v1813
        %v1820 = vpack.c.b16 %v1816, %v1815
        %v1822 = vsel %vm1396, %v1817, 0
        %v1825 = vsel %vm1396, %v1818, 0
        %v1828 = vsel %vm1396, %v1819, 0
        %v1831 = vsel %vm1396, %v1820, 0
        %1833 = vmatprep.subr.bf16.mxu0 0
        %1834 = vmatpush1.bf16.msra.mxu0 0
        %1835 = vmatprep.subr.bf16.mxu0 0
        %1836 = vmatpush1.bf16.msra.mxu0 0
        %1837 = vmatprep.subr.bf16.mxu0 0
        %1838 = vmatpush1.bf16.msra.mxu0 0
        %1839 = vmatprep.subr.bf16.mxu0 0
        %1840 = vmatpush1.bf16.msra.mxu0 0
        %1841 = vmatprep.subr.bf16.mxu0 0
        %1842 = vmatpush1.bf16.msra.mxu0 %v1375
        %1843 = vmatprep.subr.bf16.mxu0 0
        %1844 = vmatpush1.bf16.msra.mxu0 %v1374
        %1845 = vmatprep.subr.bf16.mxu0 0
        %1846 = vmatpush1.bf16.msra.mxu0 %v1373
        %1847 = vmatprep.subr.bf16.mxu0 0
        %1848 = vmatpush1.bf16.msra.mxu0 %v1372
        %1849 = vmatprep.subr.bf16.mxu0 0
        %1850 = vmatpush2.bf16.msra.mxu0 0
        %1851 = vmatprep.subr.bf16.mxu0 0
        %1852 = vmatpush2.bf16.msra.mxu0 0
        %1853 = vmatprep.subr.bf16.mxu0 0
        %1854 = vmatpush2.bf16.msra.mxu0 0
        %1855 = vmatprep.subr.bf16.mxu0 0
        %1856 = vmatpush2.bf16.msra.mxu0 0
        %1857 = vmatprep.subr.bf16.mxu0 0
        %1858 = vmatpush2.bf16.msra.mxu0 0
        %1859 = vmatprep.subr.bf16.mxu0 0
        %1860 = vmatpush2.bf16.msra.mxu0 0
        %1861 = vmatprep.subr.bf16.mxu0 0
        %1862 = vmatpush2.bf16.msra.mxu0 0
        %1863 = vmatprep.subr.bf16.mxu0 0
        %1864 = vmatpush2.bf16.msra.mxu0 0
        %1865 = vmatprep.mubr.bf16.mxu0 0
        %1866 = vmatmul.mubr.bf16.gmra.mxu0 %v1822
        %v1867 = vpop.f32.mrf.mxu0
        %v1868 = vadd.f32 0.0, %v1867
        %v1869 = vpop.f32.mrf.mxu0
        %v1870 = vpop.f32.mrf.mxu0
        %v1871 = vadd.f32 0.0, %v1870
        %v1872 = vpop.f32.mrf.mxu0
        %1873 = vmatprep.mubr.bf16.mxu0 0
        %1874 = vmatmul.mubr.bf16.gmra.mxu0 %v1825
        %v1875 = vpop.f32.mrf.mxu0
        %v1876 = vadd.f32 0.0, %v1875
        %v1877 = vpop.f32.mrf.mxu0
        %v1878 = vpop.f32.mrf.mxu0
        %v1879 = vadd.f32 0.0, %v1878
        %v1880 = vpop.f32.mrf.mxu0
        %1881 = vmatprep.mubr.bf16.mxu0 0
        %1882 = vmatmul.mubr.bf16.gmra.mxu0 %v1828
        %v1883 = vpop.f32.mrf.mxu0
        %v1884 = vadd.f32 0.0, %v1883
        %v1885 = vpop.f32.mrf.mxu0
        %v1886 = vpop.f32.mrf.mxu0
        %v1887 = vadd.f32 0.0, %v1886
        %v1888 = vpop.f32.mrf.mxu0
        %1889 = vmatprep.mubr.bf16.mxu0 0
        %1890 = vmatmul.mubr.bf16.gmra.mxu0 %v1831
        %v1891 = vpop.f32.mrf.mxu0
        %v1892 = vadd.f32 0.0, %v1891
        %v1893 = vpop.f32.mrf.mxu0
        %v1894 = vpop.f32.mrf.mxu0
        %v1895 = vadd.f32 0.0, %v1894
        %v1896 = vpop.f32.mrf.mxu0
        %1897 = vdwg.mxu0
        %s1898 = scalar_lea.vmem [#allocation24], 160
        %v1899 = vld [vmem:[%s1898] sm:$0xf]
        %v1900 = vld [vmem:[%s1898 + $0x4] sm:$0xf]
        %v1901 = vld [vmem:[%s1898 + $0x8] sm:$0xf]
        %v1902 = vld [vmem:[%s1898 + $0xc] sm:$0xf]
        %v1903 = vld [vmem:[%s1898 + $0x10] sm:$0xf]
        %v1904 = vld [vmem:[%s1898 + $0x14] sm:$0xf]
        %v1905 = vld [vmem:[%s1898 + $0x18] sm:$0xf]
        %v1906 = vld [vmem:[%s1898 + $0x1c] sm:$0xf]
        %v1915 = vunpack.c.l.b16 %v1899
        %v1916 = vunpack.c.l.b16 %v1900
        %v1917 = vunpack.c.l.b16 %v1901
        %v1918 = vunpack.c.l.b16 %v1902
        %v1919 = vunpack.c.l.b16 %v1903
        %v1920 = vunpack.c.l.b16 %v1904
        %v1921 = vunpack.c.l.b16 %v1905
        %v1922 = vunpack.c.l.b16 %v1906
        %v1923 = vpack.c.b16 %v1916, %v1915
        %v1924 = vpack.c.b16 %v1918, %v1917
        %v1925 = vpack.c.b16 %v1920, %v1919
        %v1926 = vpack.c.b16 %v1922, %v1921
        %v1928 = vsel %vm1396, %v1923, 0
        %v1931 = vsel %vm1396, %v1924, 0
        %v1934 = vsel %vm1396, %v1925, 0
        %v1937 = vsel %vm1396, %v1926, 0
        %1939 = vmatprep.subr.bf16.mxu0 0
        %1940 = vmatpush1.bf16.msra.mxu0 0
        %1941 = vmatprep.subr.bf16.mxu0 0
        %1942 = vmatpush1.bf16.msra.mxu0 0
        %1943 = vmatprep.subr.bf16.mxu0 0
        %1944 = vmatpush1.bf16.msra.mxu0 0
        %1945 = vmatprep.subr.bf16.mxu0 0
        %1946 = vmatpush1.bf16.msra.mxu0 0
        %1947 = vmatprep.subr.bf16.mxu0 0
        %1948 = vmatpush1.bf16.msra.mxu0 %v1375
        %1949 = vmatprep.subr.bf16.mxu0 0
        %1950 = vmatpush1.bf16.msra.mxu0 %v1374
        %1951 = vmatprep.subr.bf16.mxu0 0
        %1952 = vmatpush1.bf16.msra.mxu0 %v1373
        %1953 = vmatprep.subr.bf16.mxu0 0
        %1954 = vmatpush1.bf16.msra.mxu0 %v1372
        %1955 = vmatprep.subr.bf16.mxu0 0
        %1956 = vmatpush2.bf16.msra.mxu0 0
        %1957 = vmatprep.subr.bf16.mxu0 0
        %1958 = vmatpush2.bf16.msra.mxu0 0
        %1959 = vmatprep.subr.bf16.mxu0 0
        %1960 = vmatpush2.bf16.msra.mxu0 0
        %1961 = vmatprep.subr.bf16.mxu0 0
        %1962 = vmatpush2.bf16.msra.mxu0 0
        %1963 = vmatprep.subr.bf16.mxu0 0
        %1964 = vmatpush2.bf16.msra.mxu0 0
        %1965 = vmatprep.subr.bf16.mxu0 0
        %1966 = vmatpush2.bf16.msra.mxu0 0
        %1967 = vmatprep.subr.bf16.mxu0 0
        %1968 = vmatpush2.bf16.msra.mxu0 0
        %1969 = vmatprep.subr.bf16.mxu0 0
        %1970 = vmatpush2.bf16.msra.mxu0 0
        %1971 = vmatprep.mubr.bf16.mxu0 0
        %1972 = vmatmul.mubr.bf16.gmra.mxu0 %v1928
        %v1973 = vpop.f32.mrf.mxu0
        %v1974 = vadd.f32 0.0, %v1973
        %v1975 = vpop.f32.mrf.mxu0
        %v1976 = vpop.f32.mrf.mxu0
        %v1977 = vadd.f32 0.0, %v1976
        %v1978 = vpop.f32.mrf.mxu0
        %1979 = vmatprep.mubr.bf16.mxu0 0
        %1980 = vmatmul.mubr.bf16.gmra.mxu0 %v1931
        %v1981 = vpop.f32.mrf.mxu0
        %v1982 = vadd.f32 0.0, %v1981
        %v1983 = vpop.f32.mrf.mxu0
        %v1984 = vpop.f32.mrf.mxu0
        %v1985 = vadd.f32 0.0, %v1984
        %v1986 = vpop.f32.mrf.mxu0
        %1987 = vmatprep.mubr.bf16.mxu0 0
        %1988 = vmatmul.mubr.bf16.gmra.mxu0 %v1934
        %v1989 = vpop.f32.mrf.mxu0
        %v1990 = vadd.f32 0.0, %v1989
        %v1991 = vpop.f32.mrf.mxu0
        %v1992 = vpop.f32.mrf.mxu0
        %v1993 = vadd.f32 0.0, %v1992
        %v1994 = vpop.f32.mrf.mxu0
        %1995 = vmatprep.mubr.bf16.mxu0 0
        %1996 = vmatmul.mubr.bf16.gmra.mxu0 %v1937
        %v1997 = vpop.f32.mrf.mxu0
        %v1998 = vadd.f32 0.0, %v1997
        %v1999 = vpop.f32.mrf.mxu0
        %v2000 = vpop.f32.mrf.mxu0
        %v2001 = vadd.f32 0.0, %v2000
        %v2002 = vpop.f32.mrf.mxu0
        %2003 = vdwg.mxu0
        %s2004 = scalar_lea.vmem [#allocation24], 192
        %v2005 = vld [vmem:[%s2004] sm:$0xf]
        %v2006 = vld [vmem:[%s2004 + $0x4] sm:$0xf]
        %v2007 = vld [vmem:[%s2004 + $0x8] sm:$0xf]
        %v2008 = vld [vmem:[%s2004 + $0xc] sm:$0xf]
        %v2009 = vld [vmem:[%s2004 + $0x10] sm:$0xf]
        %v2010 = vld [vmem:[%s2004 + $0x14] sm:$0xf]
        %v2011 = vld [vmem:[%s2004 + $0x18] sm:$0xf]
        %v2012 = vld [vmem:[%s2004 + $0x1c] sm:$0xf]
        %v2021 = vunpack.c.l.b16 %v2005
        %v2022 = vunpack.c.l.b16 %v2006
        %v2023 = vunpack.c.l.b16 %v2007
        %v2024 = vunpack.c.l.b16 %v2008
        %v2025 = vunpack.c.l.b16 %v2009
        %v2026 = vunpack.c.l.b16 %v2010
        %v2027 = vunpack.c.l.b16 %v2011
        %v2028 = vunpack.c.l.b16 %v2012
        %v2029 = vpack.c.b16 %v2022, %v2021
        %v2030 = vpack.c.b16 %v2024, %v2023
        %v2031 = vpack.c.b16 %v2026, %v2025
        %v2032 = vpack.c.b16 %v2028, %v2027
        %v2034 = vsel %vm1396, %v2029, 0
        %v2037 = vsel %vm1396, %v2030, 0
        %v2040 = vsel %vm1396, %v2031, 0
        %v2043 = vsel %vm1396, %v2032, 0
        %2045 = vmatprep.subr.bf16.mxu0 0
        %2046 = vmatpush1.bf16.msra.mxu0 0
        %2047 = vmatprep.subr.bf16.mxu0 0
        %2048 = vmatpush1.bf16.msra.mxu0 0
        %2049 = vmatprep.subr.bf16.mxu0 0
        %2050 = vmatpush1.bf16.msra.mxu0 0
        %2051 = vmatprep.subr.bf16.mxu0 0
        %2052 = vmatpush1.bf16.msra.mxu0 0
        %2053 = vmatprep.subr.bf16.mxu0 0
        %2054 = vmatpush1.bf16.msra.mxu0 %v1375
        %2055 = vmatprep.subr.bf16.mxu0 0
        %2056 = vmatpush1.bf16.msra.mxu0 %v1374
        %2057 = vmatprep.subr.bf16.mxu0 0
        %2058 = vmatpush1.bf16.msra.mxu0 %v1373
        %2059 = vmatprep.subr.bf16.mxu0 0
        %2060 = vmatpush1.bf16.msra.mxu0 %v1372
        %2061 = vmatprep.subr.bf16.mxu0 0
        %2062 = vmatpush2.bf16.msra.mxu0 0
        %2063 = vmatprep.subr.bf16.mxu0 0
        %2064 = vmatpush2.bf16.msra.mxu0 0
        %2065 = vmatprep.subr.bf16.mxu0 0
        %2066 = vmatpush2.bf16.msra.mxu0 0
        %2067 = vmatprep.subr.bf16.mxu0 0
        %2068 = vmatpush2.bf16.msra.mxu0 0
        %2069 = vmatprep.subr.bf16.mxu0 0
        %2070 = vmatpush2.bf16.msra.mxu0 0
        %2071 = vmatprep.subr.bf16.mxu0 0
        %2072 = vmatpush2.bf16.msra.mxu0 0
        %2073 = vmatprep.subr.bf16.mxu0 0
        %2074 = vmatpush2.bf16.msra.mxu0 0
        %2075 = vmatprep.subr.bf16.mxu0 0
        %2076 = vmatpush2.bf16.msra.mxu0 0
        %2077 = vmatprep.mubr.bf16.mxu0 0
        %2078 = vmatmul.mubr.bf16.gmra.mxu0 %v2034
        %v2079 = vpop.f32.mrf.mxu0
        %v2080 = vadd.f32 0.0, %v2079
        %v2081 = vpop.f32.mrf.mxu0
        %v2082 = vpop.f32.mrf.mxu0
        %v2083 = vadd.f32 0.0, %v2082
        %v2084 = vpop.f32.mrf.mxu0
        %2085 = vmatprep.mubr.bf16.mxu0 0
        %2086 = vmatmul.mubr.bf16.gmra.mxu0 %v2037
        %v2087 = vpop.f32.mrf.mxu0
        %v2088 = vadd.f32 0.0, %v2087
        %v2089 = vpop.f32.mrf.mxu0
        %v2090 = vpop.f32.mrf.mxu0
        %v2091 = vadd.f32 0.0, %v2090
        %v2092 = vpop.f32.mrf.mxu0
        %2093 = vmatprep.mubr.bf16.mxu0 0
        %2094 = vmatmul.mubr.bf16.gmra.mxu0 %v2040
        %v2095 = vpop.f32.mrf.mxu0
        %v2096 = vadd.f32 0.0, %v2095
        %v2097 = vpop.f32.mrf.mxu0
        %v2098 = vpop.f32.mrf.mxu0
        %v2099 = vadd.f32 0.0, %v2098
        %v2100 = vpop.f32.mrf.mxu0
        %2101 = vmatprep.mubr.bf16.mxu0 0
        %2102 = vmatmul.mubr.bf16.gmra.mxu0 %v2043
        %v2103 = vpop.f32.mrf.mxu0
        %v2104 = vadd.f32 0.0, %v2103
        %v2105 = vpop.f32.mrf.mxu0
        %v2106 = vpop.f32.mrf.mxu0
        %v2107 = vadd.f32 0.0, %v2106
        %v2108 = vpop.f32.mrf.mxu0
        %2109 = vdwg.mxu0
        %s2110 = scalar_lea.vmem [#allocation24], 224
        %v2111 = vld [vmem:[%s2110] sm:$0xf]
        %v2112 = vld [vmem:[%s2110 + $0x4] sm:$0xf]
        %v2113 = vld [vmem:[%s2110 + $0x8] sm:$0xf]
        %v2114 = vld [vmem:[%s2110 + $0xc] sm:$0xf]
        %v2115 = vld [vmem:[%s2110 + $0x10] sm:$0xf]
        %v2116 = vld [vmem:[%s2110 + $0x14] sm:$0xf]
        %v2117 = vld [vmem:[%s2110 + $0x18] sm:$0xf]
        %v2118 = vld [vmem:[%s2110 + $0x1c] sm:$0xf]
        %v2127 = vunpack.c.l.b16 %v2111
        %v2128 = vunpack.c.l.b16 %v2112
        %v2129 = vunpack.c.l.b16 %v2113
        %v2130 = vunpack.c.l.b16 %v2114
        %v2131 = vunpack.c.l.b16 %v2115
        %v2132 = vunpack.c.l.b16 %v2116
        %v2133 = vunpack.c.l.b16 %v2117
        %v2134 = vunpack.c.l.b16 %v2118
        %v2135 = vpack.c.b16 %v2128, %v2127
        %v2136 = vpack.c.b16 %v2130, %v2129
        %v2137 = vpack.c.b16 %v2132, %v2131
        %v2138 = vpack.c.b16 %v2134, %v2133
        %v2140 = vsel %vm1396, %v2135, 0
        %v2143 = vsel %vm1396, %v2136, 0
        %v2146 = vsel %vm1396, %v2137, 0
        %v2149 = vsel %vm1396, %v2138, 0
        %2151 = vmatprep.subr.bf16.mxu0 0
        %2152 = vmatpush1.bf16.msra.mxu0 0
        %2153 = vmatprep.subr.bf16.mxu0 0
        %2154 = vmatpush1.bf16.msra.mxu0 0
        %2155 = vmatprep.subr.bf16.mxu0 0
        %2156 = vmatpush1.bf16.msra.mxu0 0
        %2157 = vmatprep.subr.bf16.mxu0 0
        %2158 = vmatpush1.bf16.msra.mxu0 0
        %2159 = vmatprep.subr.bf16.mxu0 0
        %2160 = vmatpush1.bf16.msra.mxu0 %v1375
        %2161 = vmatprep.subr.bf16.mxu0 0
        %2162 = vmatpush1.bf16.msra.mxu0 %v1374
        %2163 = vmatprep.subr.bf16.mxu0 0
        %2164 = vmatpush1.bf16.msra.mxu0 %v1373
        %2165 = vmatprep.subr.bf16.mxu0 0
        %2166 = vmatpush1.bf16.msra.mxu0 %v1372
        %2167 = vmatprep.subr.bf16.mxu0 0
        %2168 = vmatpush2.bf16.msra.mxu0 0
        %2169 = vmatprep.subr.bf16.mxu0 0
        %2170 = vmatpush2.bf16.msra.mxu0 0
        %2171 = vmatprep.subr.bf16.mxu0 0
        %2172 = vmatpush2.bf16.msra.mxu0 0
        %2173 = vmatprep.subr.bf16.mxu0 0
        %2174 = vmatpush2.bf16.msra.mxu0 0
        %2175 = vmatprep.subr.bf16.mxu0 0
        %2176 = vmatpush2.bf16.msra.mxu0 0
        %2177 = vmatprep.subr.bf16.mxu0 0
        %2178 = vmatpush2.bf16.msra.mxu0 0
        %2179 = vmatprep.subr.bf16.mxu0 0
        %2180 = vmatpush2.bf16.msra.mxu0 0
        %2181 = vmatprep.subr.bf16.mxu0 0
        %2182 = vmatpush2.bf16.msra.mxu0 0
        %2183 = vmatprep.mubr.bf16.mxu0 0
        %2184 = vmatmul.mubr.bf16.gmra.mxu0 %v2140
        %v2185 = vpop.f32.mrf.mxu0
        %v2186 = vadd.f32 0.0, %v2185
        %v2187 = vpop.f32.mrf.mxu0
        %v2188 = vpop.f32.mrf.mxu0
        %v2189 = vadd.f32 0.0, %v2188
        %v2190 = vpop.f32.mrf.mxu0
        %2191 = vmatprep.mubr.bf16.mxu0 0
        %2192 = vmatmul.mubr.bf16.gmra.mxu0 %v2143
        %v2193 = vpop.f32.mrf.mxu0
        %v2194 = vadd.f32 0.0, %v2193
        %v2195 = vpop.f32.mrf.mxu0
        %v2196 = vpop.f32.mrf.mxu0
        %v2197 = vadd.f32 0.0, %v2196
        %v2198 = vpop.f32.mrf.mxu0
        %2199 = vmatprep.mubr.bf16.mxu0 0
        %2200 = vmatmul.mubr.bf16.gmra.mxu0 %v2146
        %v2201 = vpop.f32.mrf.mxu0
        %v2202 = vadd.f32 0.0, %v2201
        %v2203 = vpop.f32.mrf.mxu0
        %v2204 = vpop.f32.mrf.mxu0
        %v2205 = vadd.f32 0.0, %v2204
        %v2206 = vpop.f32.mrf.mxu0
        %2207 = vmatprep.mubr.bf16.mxu0 0
        %2208 = vmatmul.mubr.bf16.gmra.mxu0 %v2149
        %v2209 = vpop.f32.mrf.mxu0
        %v2210 = vadd.f32 0.0, %v2209
        %v2211 = vpop.f32.mrf.mxu0
        %v2212 = vpop.f32.mrf.mxu0
        %v2213 = vadd.f32 0.0, %v2212
        %v2214 = vpop.f32.mrf.mxu0
        %2215 = vdwg.mxu0
        %s2216 = scalar_lea.vmem [#allocation24], 256
        %v2217 = vld [vmem:[%s2216] sm:$0xf]
        %v2218 = vld [vmem:[%s2216 + $0x4] sm:$0xf]
        %v2219 = vld [vmem:[%s2216 + $0x8] sm:$0xf]
        %v2220 = vld [vmem:[%s2216 + $0xc] sm:$0xf]
        %v2221 = vld [vmem:[%s2216 + $0x10] sm:$0xf]
        %v2222 = vld [vmem:[%s2216 + $0x14] sm:$0xf]
        %v2223 = vld [vmem:[%s2216 + $0x18] sm:$0xf]
        %v2224 = vld [vmem:[%s2216 + $0x1c] sm:$0xf]
        %v2233 = vunpack.c.l.b16 %v2217
        %v2234 = vunpack.c.l.b16 %v2218
        %v2235 = vunpack.c.l.b16 %v2219
        %v2236 = vunpack.c.l.b16 %v2220
        %v2237 = vunpack.c.l.b16 %v2221
        %v2238 = vunpack.c.l.b16 %v2222
        %v2239 = vunpack.c.l.b16 %v2223
        %v2240 = vunpack.c.l.b16 %v2224
        %v2241 = vpack.c.b16 %v2234, %v2233
        %v2242 = vpack.c.b16 %v2236, %v2235
        %v2243 = vpack.c.b16 %v2238, %v2237
        %v2244 = vpack.c.b16 %v2240, %v2239
        %v2246 = vsel %vm1396, %v2241, 0
        %v2249 = vsel %vm1396, %v2242, 0
        %v2252 = vsel %vm1396, %v2243, 0
        %v2255 = vsel %vm1396, %v2244, 0
        %2257 = vmatprep.subr.bf16.mxu0 0
        %2258 = vmatpush1.bf16.msra.mxu0 0
        %2259 = vmatprep.subr.bf16.mxu0 0
        %2260 = vmatpush1.bf16.msra.mxu0 0
        %2261 = vmatprep.subr.bf16.mxu0 0
        %2262 = vmatpush1.bf16.msra.mxu0 0
        %2263 = vmatprep.subr.bf16.mxu0 0
        %2264 = vmatpush1.bf16.msra.mxu0 0
        %2265 = vmatprep.subr.bf16.mxu0 0
        %2266 = vmatpush1.bf16.msra.mxu0 %v1375
        %2267 = vmatprep.subr.bf16.mxu0 0
        %2268 = vmatpush1.bf16.msra.mxu0 %v1374
        %2269 = vmatprep.subr.bf16.mxu0 0
        %2270 = vmatpush1.bf16.msra.mxu0 %v1373
        %2271 = vmatprep.subr.bf16.mxu0 0
        %2272 = vmatpush1.bf16.msra.mxu0 %v1372
        %2273 = vmatprep.subr.bf16.mxu0 0
        %2274 = vmatpush2.bf16.msra.mxu0 0
        %2275 = vmatprep.subr.bf16.mxu0 0
        %2276 = vmatpush2.bf16.msra.mxu0 0
        %2277 = vmatprep.subr.bf16.mxu0 0
        %2278 = vmatpush2.bf16.msra.mxu0 0
        %2279 = vmatprep.subr.bf16.mxu0 0
        %2280 = vmatpush2.bf16.msra.mxu0 0
        %2281 = vmatprep.subr.bf16.mxu0 0
        %2282 = vmatpush2.bf16.msra.mxu0 0
        %2283 = vmatprep.subr.bf16.mxu0 0
        %2284 = vmatpush2.bf16.msra.mxu0 0
        %2285 = vmatprep.subr.bf16.mxu0 0
        %2286 = vmatpush2.bf16.msra.mxu0 0
        %2287 = vmatprep.subr.bf16.mxu0 0
        %2288 = vmatpush2.bf16.msra.mxu0 0
        %2289 = vmatprep.mubr.bf16.mxu0 0
        %2290 = vmatmul.mubr.bf16.gmra.mxu0 %v2246
        %v2291 = vpop.f32.mrf.mxu0
        %v2292 = vadd.f32 0.0, %v2291
        %v2293 = vpop.f32.mrf.mxu0
        %v2294 = vpop.f32.mrf.mxu0
        %v2295 = vadd.f32 0.0, %v2294
        %v2296 = vpop.f32.mrf.mxu0
        %2297 = vmatprep.mubr.bf16.mxu0 0
        %2298 = vmatmul.mubr.bf16.gmra.mxu0 %v2249
        %v2299 = vpop.f32.mrf.mxu0
        %v2300 = vadd.f32 0.0, %v2299
        %v2301 = vpop.f32.mrf.mxu0
        %v2302 = vpop.f32.mrf.mxu0
        %v2303 = vadd.f32 0.0, %v2302
        %v2304 = vpop.f32.mrf.mxu0
        %2305 = vmatprep.mubr.bf16.mxu0 0
        %2306 = vmatmul.mubr.bf16.gmra.mxu0 %v2252
        %v2307 = vpop.f32.mrf.mxu0
        %v2308 = vadd.f32 0.0, %v2307
        %v2309 = vpop.f32.mrf.mxu0
        %v2310 = vpop.f32.mrf.mxu0
        %v2311 = vadd.f32 0.0, %v2310
        %v2312 = vpop.f32.mrf.mxu0
        %2313 = vmatprep.mubr.bf16.mxu0 0
        %2314 = vmatmul.mubr.bf16.gmra.mxu0 %v2255
        %v2315 = vpop.f32.mrf.mxu0
        %v2316 = vadd.f32 0.0, %v2315
        %v2317 = vpop.f32.mrf.mxu0
        %v2318 = vpop.f32.mrf.mxu0
        %v2319 = vadd.f32 0.0, %v2318
        %v2320 = vpop.f32.mrf.mxu0
        %2321 = vdwg.mxu0
        %v2322 = vld [vmem:[#allocation4] sm:$0xf]
        %v2323 = vld [vmem:[#allocation4 + $0x4] sm:$0xf]
        %v2324 = vld [vmem:[#allocation4 + $0x8] sm:$0xf]
        %v2325 = vld [vmem:[#allocation4 + $0xc] sm:$0xf]
        %v2326 = vld [vmem:[#allocation4 + $0x10] sm:$0xf]
        %v2327 = vld [vmem:[#allocation4 + $0x14] sm:$0xf]
        %v2328 = vld [vmem:[#allocation4 + $0x18] sm:$0xf]
        %v2329 = vld [vmem:[#allocation4 + $0x1c] sm:$0xf]
        %v2330 = vld [vmem:[#allocation4 + $0x20] sm:$0xf]
        %v2331 = vld [vmem:[#allocation4 + $0x24] sm:$0xf]
        %v2332 = vld [vmem:[#allocation4 + $0x28] sm:$0xf]
        %v2333 = vld [vmem:[#allocation4 + $0x2c] sm:$0xf]
        %v2334 = vld [vmem:[#allocation4 + $0x30] sm:$0xf]
        %v2335 = vld [vmem:[#allocation4 + $0x34] sm:$0xf]
        %v2336 = vld [vmem:[#allocation4 + $0x38] sm:$0xf]
        %v2337 = vld [vmem:[#allocation4 + $0x3c] sm:$0xf]
        %v2338 = vld [vmem:[#allocation4 + $0x40] sm:$0xf]
        %v2339 = vld [vmem:[#allocation4 + $0x44] sm:$0xf]
        %v2340 = vld [vmem:[#allocation4 + $0x48] sm:$0xf]
        %v2341 = vld [vmem:[#allocation4 + $0x4c] sm:$0xf]
        %v2342 = vld [vmem:[#allocation4 + $0x50] sm:$0xf]
        %v2343 = vld [vmem:[#allocation4 + $0x54] sm:$0xf]
        %v2344 = vld [vmem:[#allocation4 + $0x58] sm:$0xf]
        %v2345 = vld [vmem:[#allocation4 + $0x5c] sm:$0xf]
        %v2346 = vld [vmem:[#allocation4 + $0x60] sm:$0xf]
        %v2347 = vld [vmem:[#allocation4 + $0x64] sm:$0xf]
        %v2348 = vld [vmem:[#allocation4 + $0x68] sm:$0xf]
        %v2349 = vld [vmem:[#allocation4 + $0x6c] sm:$0xf]
        %v2350 = vld [vmem:[#allocation4 + $0x70] sm:$0xf]
        %v2351 = vld [vmem:[#allocation4 + $0x74] sm:$0xf]
        %v2352 = vld [vmem:[#allocation4 + $0x78] sm:$0xf]
        %v2353 = vld [vmem:[#allocation4 + $0x7c] sm:$0xf]
        %v2354 = vld [vmem:[#allocation4 + $0x80] sm:$0xf]
        %v2355 = vld [vmem:[#allocation4 + $0x84] sm:$0xf]
        %v2356 = vld [vmem:[#allocation4 + $0x88] sm:$0xf]
        %v2357 = vld [vmem:[#allocation4 + $0x8c] sm:$0xf]
        %v2358 = vld [vmem:[#allocation4 + $0x90] sm:$0xf]
        %v2359 = vld [vmem:[#allocation4 + $0x94] sm:$0xf]
        %v2360 = vld [vmem:[#allocation4 + $0x98] sm:$0xf]
        %v2361 = vld [vmem:[#allocation4 + $0x9c] sm:$0xf]
        %v2362 = vld [vmem:[#allocation4 + $0xa0] sm:$0xf]
        %v2363 = vld [vmem:[#allocation4 + $0xa4] sm:$0xf]
        %v2364 = vld [vmem:[#allocation4 + $0xa8] sm:$0xf]
        %v2365 = vld [vmem:[#allocation4 + $0xac] sm:$0xf]
        %v2366 = vld [vmem:[#allocation4 + $0xb0] sm:$0xf]
        %v2367 = vld [vmem:[#allocation4 + $0xb4] sm:$0xf]
        %v2368 = vld [vmem:[#allocation4 + $0xb8] sm:$0xf]
        %v2369 = vld [vmem:[#allocation4 + $0xbc] sm:$0xf]
        %v2370 = vld [vmem:[#allocation4 + $0xc0] sm:$0xf]
        %v2371 = vld [vmem:[#allocation4 + $0xc4] sm:$0xf]
        %v2372 = vld [vmem:[#allocation4 + $0xc8] sm:$0xf]
        %v2373 = vld [vmem:[#allocation4 + $0xcc] sm:$0xf]
        %v2374 = vld [vmem:[#allocation4 + $0xd0] sm:$0xf]
        %v2375 = vld [vmem:[#allocation4 + $0xd4] sm:$0xf]
        %v2376 = vld [vmem:[#allocation4 + $0xd8] sm:$0xf]
        %v2377 = vld [vmem:[#allocation4 + $0xdc] sm:$0xf]
        %v2378 = vld [vmem:[#allocation4 + $0xe0] sm:$0xf]
        %v2379 = vld [vmem:[#allocation4 + $0xe4] sm:$0xf]
        %v2380 = vld [vmem:[#allocation4 + $0xe8] sm:$0xf]
        %v2381 = vld [vmem:[#allocation4 + $0xec] sm:$0xf]
        %v2382 = vld [vmem:[#allocation4 + $0xf0] sm:$0xf]
        %v2383 = vld [vmem:[#allocation4 + $0xf4] sm:$0xf]
        %v2384 = vld [vmem:[#allocation4 + $0xf8] sm:$0xf]
        %v2385 = vld [vmem:[#allocation4 + $0xfc] sm:$0xf]
        %v2386 = vld [vmem:[#allocation4 + $0x100] sm:$0xf]
        %v2387 = vld [vmem:[#allocation4 + $0x104] sm:$0xf]
        %v2388 = vld [vmem:[#allocation4 + $0x108] sm:$0xf]
        %v2389 = vld [vmem:[#allocation4 + $0x10c] sm:$0xf]
        %v2390 = vld [vmem:[#allocation4 + $0x110] sm:$0xf]
        %v2391 = vld [vmem:[#allocation4 + $0x114] sm:$0xf]
        %v2392 = vld [vmem:[#allocation4 + $0x118] sm:$0xf]
        %v2393 = vld [vmem:[#allocation4 + $0x11c] sm:$0xf]
        %v2394 = vld [vmem:[#allocation4 + $0x120] sm:$0xf]
        %v2395 = vld [vmem:[#allocation4 + $0x124] sm:$0xf]
        %v2396 = vld [vmem:[#allocation4 + $0x128] sm:$0xf]
        %v2397 = vld [vmem:[#allocation4 + $0x12c] sm:$0xf]
        %v2398 = vld [vmem:[#allocation4 + $0x130] sm:$0xf]
        %v2399 = vld [vmem:[#allocation4 + $0x134] sm:$0xf]
        %v2400 = vld [vmem:[#allocation4 + $0x138] sm:$0xf]
        %v2401 = vld [vmem:[#allocation4 + $0x13c] sm:$0xf]
        %v2402 = vld [vmem:[#allocation4 + $0x140] sm:$0xf]
        %v2403 = vld [vmem:[#allocation4 + $0x144] sm:$0xf]
        %v2404 = vld [vmem:[#allocation4 + $0x148] sm:$0xf]
        %v2405 = vld [vmem:[#allocation4 + $0x14c] sm:$0xf]
        %v2406 = vld [vmem:[#allocation4 + $0x150] sm:$0xf]
        %v2407 = vld [vmem:[#allocation4 + $0x154] sm:$0xf]
        %v2408 = vld [vmem:[#allocation4 + $0x158] sm:$0xf]
        %v2409 = vld [vmem:[#allocation4 + $0x15c] sm:$0xf]
        %v2410 = vld [vmem:[#allocation4 + $0x160] sm:$0xf]
        %v2411 = vld [vmem:[#allocation4 + $0x164] sm:$0xf]
        %v2412 = vld [vmem:[#allocation4 + $0x168] sm:$0xf]
        %v2413 = vld [vmem:[#allocation4 + $0x16c] sm:$0xf]
        %v2414 = vld [vmem:[#allocation4 + $0x170] sm:$0xf]
        %v2415 = vld [vmem:[#allocation4 + $0x174] sm:$0xf]
        %v2416 = vld [vmem:[#allocation4 + $0x178] sm:$0xf]
        %v2417 = vld [vmem:[#allocation4 + $0x17c] sm:$0xf]
        %v2418 = vld [vmem:[#allocation4 + $0x180] sm:$0xf]
        %v2419 = vld [vmem:[#allocation4 + $0x184] sm:$0xf]
        %v2420 = vld [vmem:[#allocation4 + $0x188] sm:$0xf]
        %v2421 = vld [vmem:[#allocation4 + $0x18c] sm:$0xf]
        %v2422 = vld [vmem:[#allocation4 + $0x190] sm:$0xf]
        %v2423 = vld [vmem:[#allocation4 + $0x194] sm:$0xf]
        %v2424 = vld [vmem:[#allocation4 + $0x198] sm:$0xf]
        %v2425 = vld [vmem:[#allocation4 + $0x19c] sm:$0xf]
        %v2426 = vld [vmem:[#allocation4 + $0x1a0] sm:$0xf]
        %v2427 = vld [vmem:[#allocation4 + $0x1a4] sm:$0xf]
        %v2428 = vld [vmem:[#allocation4 + $0x1a8] sm:$0xf]
        %v2429 = vld [vmem:[#allocation4 + $0x1ac] sm:$0xf]
        %v2430 = vld [vmem:[#allocation4 + $0x1b0] sm:$0xf]
        %v2431 = vld [vmem:[#allocation4 + $0x1b4] sm:$0xf]
        %v2432 = vld [vmem:[#allocation4 + $0x1b8] sm:$0xf]
        %v2433 = vld [vmem:[#allocation4 + $0x1bc] sm:$0xf]
        %v2434 = vld [vmem:[#allocation4 + $0x1c0] sm:$0xf]
        %v2435 = vld [vmem:[#allocation4 + $0x1c4] sm:$0xf]
        %v2436 = vld [vmem:[#allocation4 + $0x1c8] sm:$0xf]
        %v2437 = vld [vmem:[#allocation4 + $0x1cc] sm:$0xf]
        %v2438 = vld [vmem:[#allocation4 + $0x1d0] sm:$0xf]
        %v2439 = vld [vmem:[#allocation4 + $0x1d4] sm:$0xf]
        %v2440 = vld [vmem:[#allocation4 + $0x1d8] sm:$0xf]
        %v2441 = vld [vmem:[#allocation4 + $0x1dc] sm:$0xf]
        %v2442 = vld [vmem:[#allocation4 + $0x1e0] sm:$0xf]
        %v2443 = vld [vmem:[#allocation4 + $0x1e4] sm:$0xf]
        %v2444 = vld [vmem:[#allocation4 + $0x1e8] sm:$0xf]
        %v2445 = vld [vmem:[#allocation4 + $0x1ec] sm:$0xf]
        %v2446 = vld [vmem:[#allocation4 + $0x1f0] sm:$0xf]
        %v2447 = vld [vmem:[#allocation4 + $0x1f4] sm:$0xf]
        %v2448 = vld [vmem:[#allocation4 + $0x1f8] sm:$0xf]
        %v2449 = vld [vmem:[#allocation4 + $0x1fc] sm:$0xf]
        %v2450 = vld [vmem:[#allocation4 + $0x200] sm:$0xf]
        %v2451 = vld [vmem:[#allocation4 + $0x204] sm:$0xf]
        %v2452 = vld [vmem:[#allocation4 + $0x208] sm:$0xf]
        %v2453 = vld [vmem:[#allocation4 + $0x20c] sm:$0xf]
        %v2454 = vld [vmem:[#allocation4 + $0x210] sm:$0xf]
        %v2455 = vld [vmem:[#allocation4 + $0x214] sm:$0xf]
        %v2456 = vld [vmem:[#allocation4 + $0x218] sm:$0xf]
        %v2457 = vld [vmem:[#allocation4 + $0x21c] sm:$0xf]
        %v2458 = vld [vmem:[#allocation4 + $0x220] sm:$0xf]
        %v2459 = vld [vmem:[#allocation4 + $0x224] sm:$0xf]
        %v2460 = vld [vmem:[#allocation4 + $0x228] sm:$0xf]
        %v2461 = vld [vmem:[#allocation4 + $0x22c] sm:$0xf]
        %v2462 = vld [vmem:[#allocation4 + $0x230] sm:$0xf]
        %v2463 = vld [vmem:[#allocation4 + $0x234] sm:$0xf]
        %v2464 = vld [vmem:[#allocation4 + $0x238] sm:$0xf]
        %v2465 = vld [vmem:[#allocation4 + $0x23c] sm:$0xf]
        %v2466 = vpack.c.bf16 %v1447, %v1444
        %v2467 = vpack.c.bf16 %v1553, %v1550
        %v2468 = vpack.c.bf16 %v1659, %v1656
        %v2469 = vpack.c.bf16 %v1765, %v1762
        %v2470 = vpack.c.bf16 %v1871, %v1868
        %v2471 = vpack.c.bf16 %v1977, %v1974
        %v2472 = vpack.c.bf16 %v2083, %v2080
        %v2473 = vpack.c.bf16 %v2189, %v2186
        %v2474 = vpack.c.bf16 %v2295, %v2292
        %v2475 = vpack.c.bf16 %v1455, %v1452
        %v2476 = vpack.c.bf16 %v1561, %v1558
        %v2477 = vpack.c.bf16 %v1667, %v1664
        %v2478 = vpack.c.bf16 %v1773, %v1770
        %v2479 = vpack.c.bf16 %v1879, %v1876
        %v2480 = vpack.c.bf16 %v1985, %v1982
        %v2481 = vpack.c.bf16 %v2091, %v2088
        %v2482 = vpack.c.bf16 %v2197, %v2194
        %v2483 = vpack.c.bf16 %v2303, %v2300
        %v2484 = vpack.c.bf16 %v1463, %v1460
        %v2485 = vpack.c.bf16 %v1569, %v1566
        %v2486 = vpack.c.bf16 %v1675, %v1672
        %v2487 = vpack.c.bf16 %v1781, %v1778
        %v2488 = vpack.c.bf16 %v1887, %v1884
        %v2489 = vpack.c.bf16 %v1993, %v1990
        %v2490 = vpack.c.bf16 %v2099, %v2096
        %v2491 = vpack.c.bf16 %v2205, %v2202
        %v2492 = vpack.c.bf16 %v2311, %v2308
        %v2493 = vpack.c.bf16 %v1471, %v1468
        %v2494 = vpack.c.bf16 %v1577, %v1574
        %v2495 = vpack.c.bf16 %v1683, %v1680
        %v2496 = vpack.c.bf16 %v1789, %v1786
        %v2497 = vpack.c.bf16 %v1895, %v1892
        %v2498 = vpack.c.bf16 %v2001, %v1998
        %v2499 = vpack.c.bf16 %v2107, %v2104
        %v2500 = vpack.c.bf16 %v2213, %v2210
        %v2501 = vpack.c.bf16 %v2319, %v2316
        %v2502 = vld [vmem:[%s9] sm:$0x1]
        %v2504 = vlaneseq
        %v2505 = vshrl.u32 %v2504, 7
        %v2506 = vsub.s32 0, %v2505
        %v2507 = vrot.slane %v2502, %v2506
        %v2653 = vunpack.c.l.b16 %v2322
        %v2654 = vunpack.c.l.b16 %v2323
        %v2655 = vunpack.c.l.b16 %v2324
        %v2656 = vunpack.c.l.b16 %v2325
        %v2657 = vunpack.c.l.b16 %v2326
        %v2658 = vunpack.c.l.b16 %v2327
        %v2659 = vunpack.c.l.b16 %v2328
        %v2660 = vunpack.c.l.b16 %v2329
        %v2661 = vunpack.c.l.b16 %v2330
        %v2662 = vunpack.c.l.b16 %v2331
        %v2663 = vunpack.c.l.b16 %v2332
        %v2664 = vunpack.c.l.b16 %v2333
        %v2665 = vunpack.c.l.b16 %v2334
        %v2666 = vunpack.c.l.b16 %v2335
        %v2667 = vunpack.c.l.b16 %v2336
        %v2668 = vunpack.c.l.b16 %v2337
        %v2669 = vunpack.c.l.b16 %v2338
        %v2670 = vunpack.c.l.b16 %v2339
        %v2671 = vunpack.c.l.b16 %v2340
        %v2672 = vunpack.c.l.b16 %v2341
        %v2673 = vunpack.c.l.b16 %v2342
        %v2674 = vunpack.c.l.b16 %v2343
        %v2675 = vunpack.c.l.b16 %v2344
        %v2676 = vunpack.c.l.b16 %v2345
        %v2677 = vunpack.c.l.b16 %v2346
        %v2678 = vunpack.c.l.b16 %v2347
        %v2679 = vunpack.c.l.b16 %v2348
        %v2680 = vunpack.c.l.b16 %v2349
        %v2681 = vunpack.c.l.b16 %v2350
        %v2682 = vunpack.c.l.b16 %v2351
        %v2683 = vunpack.c.l.b16 %v2352
        %v2684 = vunpack.c.l.b16 %v2353
        %v2685 = vunpack.c.l.b16 %v2354
        %v2686 = vunpack.c.l.b16 %v2355
        %v2687 = vunpack.c.l.b16 %v2356
        %v2688 = vunpack.c.l.b16 %v2357
        %v2689 = vunpack.c.l.b16 %v2358
        %v2690 = vunpack.c.l.b16 %v2359
        %v2691 = vunpack.c.l.b16 %v2360
        %v2692 = vunpack.c.l.b16 %v2361
        %v2693 = vunpack.c.l.b16 %v2362
        %v2694 = vunpack.c.l.b16 %v2363
        %v2695 = vunpack.c.l.b16 %v2364
        %v2696 = vunpack.c.l.b16 %v2365
        %v2697 = vunpack.c.l.b16 %v2366
        %v2698 = vunpack.c.l.b16 %v2367
        %v2699 = vunpack.c.l.b16 %v2368
        %v2700 = vunpack.c.l.b16 %v2369
        %v2701 = vunpack.c.l.b16 %v2370
        %v2702 = vunpack.c.l.b16 %v2371
        %v2703 = vunpack.c.l.b16 %v2372
        %v2704 = vunpack.c.l.b16 %v2373
        %v2705 = vunpack.c.l.b16 %v2374
        %v2706 = vunpack.c.l.b16 %v2375
        %v2707 = vunpack.c.l.b16 %v2376
        %v2708 = vunpack.c.l.b16 %v2377
        %v2709 = vunpack.c.l.b16 %v2378
        %v2710 = vunpack.c.l.b16 %v2379
        %v2711 = vunpack.c.l.b16 %v2380
        %v2712 = vunpack.c.l.b16 %v2381
        %v2713 = vunpack.c.l.b16 %v2382
        %v2714 = vunpack.c.l.b16 %v2383
        %v2715 = vunpack.c.l.b16 %v2384
        %v2716 = vunpack.c.l.b16 %v2385
        %v2717 = vunpack.c.l.b16 %v2386
        %v2718 = vunpack.c.l.b16 %v2387
        %v2719 = vunpack.c.l.b16 %v2388
        %v2720 = vunpack.c.l.b16 %v2389
        %v2721 = vunpack.c.l.b16 %v2390
        %v2722 = vunpack.c.l.b16 %v2391
        %v2723 = vunpack.c.l.b16 %v2392
        %v2724 = vunpack.c.l.b16 %v2393
        %v2725 = vunpack.c.l.b16 %v2394
        %v2726 = vunpack.c.l.b16 %v2395
        %v2727 = vunpack.c.l.b16 %v2396
        %v2728 = vunpack.c.l.b16 %v2397
        %v2729 = vunpack.c.l.b16 %v2398
        %v2730 = vunpack.c.l.b16 %v2399
        %v2731 = vunpack.c.l.b16 %v2400
        %v2732 = vunpack.c.l.b16 %v2401
        %v2733 = vunpack.c.l.b16 %v2402
        %v2734 = vunpack.c.l.b16 %v2403
        %v2735 = vunpack.c.l.b16 %v2404
        %v2736 = vunpack.c.l.b16 %v2405
        %v2737 = vunpack.c.l.b16 %v2406
        %v2738 = vunpack.c.l.b16 %v2407
        %v2739 = vunpack.c.l.b16 %v2408
        %v2740 = vunpack.c.l.b16 %v2409
        %v2741 = vunpack.c.l.b16 %v2410
        %v2742 = vunpack.c.l.b16 %v2411
        %v2743 = vunpack.c.l.b16 %v2412
        %v2744 = vunpack.c.l.b16 %v2413
        %v2745 = vunpack.c.l.b16 %v2414
        %v2746 = vunpack.c.l.b16 %v2415
        %v2747 = vunpack.c.l.b16 %v2416
        %v2748 = vunpack.c.l.b16 %v2417
        %v2749 = vunpack.c.l.b16 %v2418
        %v2750 = vunpack.c.l.b16 %v2419
        %v2751 = vunpack.c.l.b16 %v2420
        %v2752 = vunpack.c.l.b16 %v2421
        %v2753 = vunpack.c.l.b16 %v2422
        %v2754 = vunpack.c.l.b16 %v2423
        %v2755 = vunpack.c.l.b16 %v2424
        %v2756 = vunpack.c.l.b16 %v2425
        %v2757 = vunpack.c.l.b16 %v2426
        %v2758 = vunpack.c.l.b16 %v2427
        %v2759 = vunpack.c.l.b16 %v2428
        %v2760 = vunpack.c.l.b16 %v2429
        %v2761 = vunpack.c.l.b16 %v2430
        %v2762 = vunpack.c.l.b16 %v2431
        %v2763 = vunpack.c.l.b16 %v2432
        %v2764 = vunpack.c.l.b16 %v2433
        %v2765 = vunpack.c.l.b16 %v2434
        %v2766 = vunpack.c.l.b16 %v2435
        %v2767 = vunpack.c.l.b16 %v2436
        %v2768 = vunpack.c.l.b16 %v2437
        %v2769 = vunpack.c.l.b16 %v2438
        %v2770 = vunpack.c.l.b16 %v2439
        %v2771 = vunpack.c.l.b16 %v2440
        %v2772 = vunpack.c.l.b16 %v2441
        %v2773 = vunpack.c.l.b16 %v2442
        %v2774 = vunpack.c.l.b16 %v2443
        %v2775 = vunpack.c.l.b16 %v2444
        %v2776 = vunpack.c.l.b16 %v2445
        %v2777 = vunpack.c.l.b16 %v2446
        %v2778 = vunpack.c.l.b16 %v2447
        %v2779 = vunpack.c.l.b16 %v2448
        %v2780 = vunpack.c.l.b16 %v2449
        %v2781 = vunpack.c.l.b16 %v2450
        %v2782 = vunpack.c.l.b16 %v2451
        %v2783 = vunpack.c.l.b16 %v2452
        %v2784 = vunpack.c.l.b16 %v2453
        %v2785 = vunpack.c.l.b16 %v2454
        %v2786 = vunpack.c.l.b16 %v2455
        %v2787 = vunpack.c.l.b16 %v2456
        %v2788 = vunpack.c.l.b16 %v2457
        %v2789 = vunpack.c.l.b16 %v2458
        %v2790 = vunpack.c.l.b16 %v2459
        %v2791 = vunpack.c.l.b16 %v2460
        %v2792 = vunpack.c.l.b16 %v2461
        %v2793 = vunpack.c.l.b16 %v2462
        %v2794 = vunpack.c.l.b16 %v2463
        %v2795 = vunpack.c.l.b16 %v2464
        %v2796 = vunpack.c.l.b16 %v2465
        %v2797 = vpack.c.b16 %v2654, %v2653
        %v2798 = vpack.c.b16 %v2656, %v2655
        %v2799 = vpack.c.b16 %v2658, %v2657
        %v2800 = vpack.c.b16 %v2660, %v2659
        %v2801 = vpack.c.b16 %v2662, %v2661
        %v2802 = vpack.c.b16 %v2664, %v2663
        %v2803 = vpack.c.b16 %v2666, %v2665
        %v2804 = vpack.c.b16 %v2668, %v2667
        %v2805 = vpack.c.b16 %v2670, %v2669
        %v2806 = vpack.c.b16 %v2672, %v2671
        %v2807 = vpack.c.b16 %v2674, %v2673
        %v2808 = vpack.c.b16 %v2676, %v2675
        %v2809 = vpack.c.b16 %v2678, %v2677
        %v2810 = vpack.c.b16 %v2680, %v2679
        %v2811 = vpack.c.b16 %v2682, %v2681
        %v2812 = vpack.c.b16 %v2684, %v2683
        %v2813 = vpack.c.b16 %v2686, %v2685
        %v2814 = vpack.c.b16 %v2688, %v2687
        %v2815 = vpack.c.b16 %v2690, %v2689
        %v2816 = vpack.c.b16 %v2692, %v2691
        %v2817 = vpack.c.b16 %v2694, %v2693
        %v2818 = vpack.c.b16 %v2696, %v2695
        %v2819 = vpack.c.b16 %v2698, %v2697
        %v2820 = vpack.c.b16 %v2700, %v2699
        %v2821 = vpack.c.b16 %v2702, %v2701
        %v2822 = vpack.c.b16 %v2704, %v2703
        %v2823 = vpack.c.b16 %v2706, %v2705
        %v2824 = vpack.c.b16 %v2708, %v2707
        %v2825 = vpack.c.b16 %v2710, %v2709
        %v2826 = vpack.c.b16 %v2712, %v2711
        %v2827 = vpack.c.b16 %v2714, %v2713
        %v2828 = vpack.c.b16 %v2716, %v2715
        %v2829 = vpack.c.b16 %v2718, %v2717
        %v2830 = vpack.c.b16 %v2720, %v2719
        %v2831 = vpack.c.b16 %v2722, %v2721
        %v2832 = vpack.c.b16 %v2724, %v2723
        %v2833 = vpack.c.b16 %v2726, %v2725
        %v2834 = vpack.c.b16 %v2728, %v2727
        %v2835 = vpack.c.b16 %v2730, %v2729
        %v2836 = vpack.c.b16 %v2732, %v2731
        %v2837 = vpack.c.b16 %v2734, %v2733
        %v2838 = vpack.c.b16 %v2736, %v2735
        %v2839 = vpack.c.b16 %v2738, %v2737
        %v2840 = vpack.c.b16 %v2740, %v2739
        %v2841 = vpack.c.b16 %v2742, %v2741
        %v2842 = vpack.c.b16 %v2744, %v2743
        %v2843 = vpack.c.b16 %v2746, %v2745
        %v2844 = vpack.c.b16 %v2748, %v2747
        %v2845 = vpack.c.b16 %v2750, %v2749
        %v2846 = vpack.c.b16 %v2752, %v2751
        %v2847 = vpack.c.b16 %v2754, %v2753
        %v2848 = vpack.c.b16 %v2756, %v2755
        %v2849 = vpack.c.b16 %v2758, %v2757
        %v2850 = vpack.c.b16 %v2760, %v2759
        %v2851 = vpack.c.b16 %v2762, %v2761
        %v2852 = vpack.c.b16 %v2764, %v2763
        %v2853 = vpack.c.b16 %v2766, %v2765
        %v2854 = vpack.c.b16 %v2768, %v2767
        %v2855 = vpack.c.b16 %v2770, %v2769
        %v2856 = vpack.c.b16 %v2772, %v2771
        %v2857 = vpack.c.b16 %v2774, %v2773
        %v2858 = vpack.c.b16 %v2776, %v2775
        %v2859 = vpack.c.b16 %v2778, %v2777
        %v2860 = vpack.c.b16 %v2780, %v2779
        %v2861 = vpack.c.b16 %v2782, %v2781
        %v2862 = vpack.c.b16 %v2784, %v2783
        %v2863 = vpack.c.b16 %v2786, %v2785
        %v2864 = vpack.c.b16 %v2788, %v2787
        %v2865 = vpack.c.b16 %v2790, %v2789
        %v2866 = vpack.c.b16 %v2792, %v2791
        %v2867 = vpack.c.b16 %v2794, %v2793
        %v2868 = vpack.c.b16 %v2796, %v2795
        %2941 = vmatprep.subr.bf16.mxu0 0
        %2942 = vmatpush1.bf16.msra.mxu0 %v2804
        %2943 = vmatprep.subr.bf16.mxu0 0
        %2944 = vmatpush1.bf16.msra.mxu0 %v2803
        %2945 = vmatprep.subr.bf16.mxu0 0
        %2946 = vmatpush1.bf16.msra.mxu0 %v2802
        %2947 = vmatprep.subr.bf16.mxu0 0
        %2948 = vmatpush1.bf16.msra.mxu0 %v2801
        %2949 = vmatprep.subr.bf16.mxu0 0
        %2950 = vmatpush1.bf16.msra.mxu0 %v2800
        %2951 = vmatprep.subr.bf16.mxu0 0
        %2952 = vmatpush1.bf16.msra.mxu0 %v2799
        %2953 = vmatprep.subr.bf16.mxu0 0
        %2954 = vmatpush1.bf16.msra.mxu0 %v2798
        %2955 = vmatprep.subr.bf16.mxu0 0
        %2956 = vmatpush1.bf16.msra.mxu0 %v2797
        %2957 = vmatprep.subr.bf16.mxu0 0
        %2958 = vmatpush2.bf16.msra.mxu0 %v2812
        %2959 = vmatprep.subr.bf16.mxu0 0
        %2960 = vmatpush2.bf16.msra.mxu0 %v2811
        %2961 = vmatprep.subr.bf16.mxu0 0
        %2962 = vmatpush2.bf16.msra.mxu0 %v2810
        %2963 = vmatprep.subr.bf16.mxu0 0
        %2964 = vmatpush2.bf16.msra.mxu0 %v2809
        %2965 = vmatprep.subr.bf16.mxu0 0
        %2966 = vmatpush2.bf16.msra.mxu0 %v2808
        %2967 = vmatprep.subr.bf16.mxu0 0
        %2968 = vmatpush2.bf16.msra.mxu0 %v2807
        %2969 = vmatprep.subr.bf16.mxu0 0
        %2970 = vmatpush2.bf16.msra.mxu0 %v2806
        %2971 = vmatprep.subr.bf16.mxu0 0
        %2972 = vmatpush2.bf16.msra.mxu0 %v2805
        %2973 = vmatprep.mubr.bf16.mxu0 %v2467
        %2974 = vmatmul.mubr.bf16.gmra.mxu0 %v2466
        %v2975 = vpop.f32.mrf.mxu0
        %v2976 = vadd.f32 %v2507, %v2975
        %v2977 = vpop.f32.mrf.mxu0
        %v2978 = vpop.f32.mrf.mxu0
        %v2979 = vadd.f32 %v2507, %v2978
        %v2980 = vpop.f32.mrf.mxu0
        %2981 = vmatprep.mubr.bf16.mxu0 %v2476
        %2982 = vmatmul.mubr.bf16.gmra.mxu0 %v2475
        %v2983 = vpop.f32.mrf.mxu0
        %v2984 = vadd.f32 %v2507, %v2983
        %v2985 = vpop.f32.mrf.mxu0
        %v2986 = vpop.f32.mrf.mxu0
        %v2987 = vadd.f32 %v2507, %v2986
        %v2988 = vpop.f32.mrf.mxu0
        %2989 = vmatprep.mubr.bf16.mxu0 %v2485
        %2990 = vmatmul.mubr.bf16.gmra.mxu0 %v2484
        %v2991 = vpop.f32.mrf.mxu0
        %v2992 = vadd.f32 %v2507, %v2991
        %v2993 = vpop.f32.mrf.mxu0
        %v2994 = vpop.f32.mrf.mxu0
        %v2995 = vadd.f32 %v2507, %v2994
        %v2996 = vpop.f32.mrf.mxu0
        %2997 = vmatprep.mubr.bf16.mxu0 %v2494
        %2998 = vmatmul.mubr.bf16.gmra.mxu0 %v2493
        %v2999 = vpop.f32.mrf.mxu0
        %v3000 = vadd.f32 %v2507, %v2999
        %v3001 = vpop.f32.mrf.mxu0
        %v3002 = vpop.f32.mrf.mxu0
        %v3003 = vadd.f32 %v2507, %v3002
        %v3004 = vpop.f32.mrf.mxu0
        %3005 = vdwg.mxu0
        %3006 = vmatprep.subr.bf16.mxu0 0
        %3007 = vmatpush1.bf16.msra.mxu0 %v2820
        %3008 = vmatprep.subr.bf16.mxu0 0
        %3009 = vmatpush1.bf16.msra.mxu0 %v2819
        %3010 = vmatprep.subr.bf16.mxu0 0
        %3011 = vmatpush1.bf16.msra.mxu0 %v2818
        %3012 = vmatprep.subr.bf16.mxu0 0
        %3013 = vmatpush1.bf16.msra.mxu0 %v2817
        %3014 = vmatprep.subr.bf16.mxu0 0
        %3015 = vmatpush1.bf16.msra.mxu0 %v2816
        %3016 = vmatprep.subr.bf16.mxu0 0
        %3017 = vmatpush1.bf16.msra.mxu0 %v2815
        %3018 = vmatprep.subr.bf16.mxu0 0
        %3019 = vmatpush1.bf16.msra.mxu0 %v2814
        %3020 = vmatprep.subr.bf16.mxu0 0
        %3021 = vmatpush1.bf16.msra.mxu0 %v2813
        %3022 = vmatprep.subr.bf16.mxu0 0
        %3023 = vmatpush2.bf16.msra.mxu0 %v2828
        %3024 = vmatprep.subr.bf16.mxu0 0
        %3025 = vmatpush2.bf16.msra.mxu0 %v2827
        %3026 = vmatprep.subr.bf16.mxu0 0
        %3027 = vmatpush2.bf16.msra.mxu0 %v2826
        %3028 = vmatprep.subr.bf16.mxu0 0
        %3029 = vmatpush2.bf16.msra.mxu0 %v2825
        %3030 = vmatprep.subr.bf16.mxu0 0
        %3031 = vmatpush2.bf16.msra.mxu0 %v2824
        %3032 = vmatprep.subr.bf16.mxu0 0
        %3033 = vmatpush2.bf16.msra.mxu0 %v2823
        %3034 = vmatprep.subr.bf16.mxu0 0
        %3035 = vmatpush2.bf16.msra.mxu0 %v2822
        %3036 = vmatprep.subr.bf16.mxu0 0
        %3037 = vmatpush2.bf16.msra.mxu0 %v2821
        %3038 = vmatprep.mubr.bf16.mxu0 %v2469
        %3039 = vmatmul.mubr.bf16.gmra.mxu0 %v2468
        %v3040 = vpop.f32.mrf.mxu0
        %v3041 = vadd.f32 %v2976, %v3040
        %v3042 = vpop.f32.mrf.mxu0
        %v3043 = vpop.f32.mrf.mxu0
        %v3044 = vadd.f32 %v2979, %v3043
        %v3045 = vpop.f32.mrf.mxu0
        %3046 = vmatprep.mubr.bf16.mxu0 %v2478
        %3047 = vmatmul.mubr.bf16.gmra.mxu0 %v2477
        %v3048 = vpop.f32.mrf.mxu0
        %v3049 = vadd.f32 %v2984, %v3048
        %v3050 = vpop.f32.mrf.mxu0
        %v3051 = vpop.f32.mrf.mxu0
        %v3052 = vadd.f32 %v2987, %v3051
        %v3053 = vpop.f32.mrf.mxu0
        %3054 = vmatprep.mubr.bf16.mxu0 %v2487
        %3055 = vmatmul.mubr.bf16.gmra.mxu0 %v2486
        %v3056 = vpop.f32.mrf.mxu0
        %v3057 = vadd.f32 %v2992, %v3056
        %v3058 = vpop.f32.mrf.mxu0
        %v3059 = vpop.f32.mrf.mxu0
        %v3060 = vadd.f32 %v2995, %v3059
        %v3061 = vpop.f32.mrf.mxu0
        %3062 = vmatprep.mubr.bf16.mxu0 %v2496
        %3063 = vmatmul.mubr.bf16.gmra.mxu0 %v2495
        %v3064 = vpop.f32.mrf.mxu0
        %v3065 = vadd.f32 %v3000, %v3064
        %v3066 = vpop.f32.mrf.mxu0
        %v3067 = vpop.f32.mrf.mxu0
        %v3068 = vadd.f32 %v3003, %v3067
        %v3069 = vpop.f32.mrf.mxu0
        %3070 = vdwg.mxu0
        %3071 = vmatprep.subr.bf16.mxu0 0
        %3072 = vmatpush1.bf16.msra.mxu0 %v2836
        %3073 = vmatprep.subr.bf16.mxu0 0
        %3074 = vmatpush1.bf16.msra.mxu0 %v2835
        %3075 = vmatprep.subr.bf16.mxu0 0
        %3076 = vmatpush1.bf16.msra.mxu0 %v2834
        %3077 = vmatprep.subr.bf16.mxu0 0
        %3078 = vmatpush1.bf16.msra.mxu0 %v2833
        %3079 = vmatprep.subr.bf16.mxu0 0
        %3080 = vmatpush1.bf16.msra.mxu0 %v2832
        %3081 = vmatprep.subr.bf16.mxu0 0
        %3082 = vmatpush1.bf16.msra.mxu0 %v2831
        %3083 = vmatprep.subr.bf16.mxu0 0
        %3084 = vmatpush1.bf16.msra.mxu0 %v2830
        %3085 = vmatprep.subr.bf16.mxu0 0
        %3086 = vmatpush1.bf16.msra.mxu0 %v2829
        %3087 = vmatprep.subr.bf16.mxu0 0
        %3088 = vmatpush2.bf16.msra.mxu0 %v2844
        %3089 = vmatprep.subr.bf16.mxu0 0
        %3090 = vmatpush2.bf16.msra.mxu0 %v2843
        %3091 = vmatprep.subr.bf16.mxu0 0
        %3092 = vmatpush2.bf16.msra.mxu0 %v2842
        %3093 = vmatprep.subr.bf16.mxu0 0
        %3094 = vmatpush2.bf16.msra.mxu0 %v2841
        %3095 = vmatprep.subr.bf16.mxu0 0
        %3096 = vmatpush2.bf16.msra.mxu0 %v2840
        %3097 = vmatprep.subr.bf16.mxu0 0
        %3098 = vmatpush2.bf16.msra.mxu0 %v2839
        %3099 = vmatprep.subr.bf16.mxu0 0
        %3100 = vmatpush2.bf16.msra.mxu0 %v2838
        %3101 = vmatprep.subr.bf16.mxu0 0
        %3102 = vmatpush2.bf16.msra.mxu0 %v2837
        %3103 = vmatprep.mubr.bf16.mxu0 %v2471
        %3104 = vmatmul.mubr.bf16.gmra.mxu0 %v2470
        %v3105 = vpop.f32.mrf.mxu0
        %v3106 = vadd.f32 %v3041, %v3105
        %v3107 = vpop.f32.mrf.mxu0
        %v3108 = vpop.f32.mrf.mxu0
        %v3109 = vadd.f32 %v3044, %v3108
        %v3110 = vpop.f32.mrf.mxu0
        %3111 = vmatprep.mubr.bf16.mxu0 %v2480
        %3112 = vmatmul.mubr.bf16.gmra.mxu0 %v2479
        %v3113 = vpop.f32.mrf.mxu0
        %v3114 = vadd.f32 %v3049, %v3113
        %v3115 = vpop.f32.mrf.mxu0
        %v3116 = vpop.f32.mrf.mxu0
        %v3117 = vadd.f32 %v3052, %v3116
        %v3118 = vpop.f32.mrf.mxu0
        %3119 = vmatprep.mubr.bf16.mxu0 %v2489
        %3120 = vmatmul.mubr.bf16.gmra.mxu0 %v2488
        %v3121 = vpop.f32.mrf.mxu0
        %v3122 = vadd.f32 %v3057, %v3121
        %v3123 = vpop.f32.mrf.mxu0
        %v3124 = vpop.f32.mrf.mxu0
        %v3125 = vadd.f32 %v3060, %v3124
        %v3126 = vpop.f32.mrf.mxu0
        %3127 = vmatprep.mubr.bf16.mxu0 %v2498
        %3128 = vmatmul.mubr.bf16.gmra.mxu0 %v2497
        %v3129 = vpop.f32.mrf.mxu0
        %v3130 = vadd.f32 %v3065, %v3129
        %v3131 = vpop.f32.mrf.mxu0
        %v3132 = vpop.f32.mrf.mxu0
        %v3133 = vadd.f32 %v3068, %v3132
        %v3134 = vpop.f32.mrf.mxu0
        %3135 = vdwg.mxu0
        %3136 = vmatprep.subr.bf16.mxu0 0
        %3137 = vmatpush1.bf16.msra.mxu0 %v2852
        %3138 = vmatprep.subr.bf16.mxu0 0
        %3139 = vmatpush1.bf16.msra.mxu0 %v2851
        %3140 = vmatprep.subr.bf16.mxu0 0
        %3141 = vmatpush1.bf16.msra.mxu0 %v2850
        %3142 = vmatprep.subr.bf16.mxu0 0
        %3143 = vmatpush1.bf16.msra.mxu0 %v2849
        %3144 = vmatprep.subr.bf16.mxu0 0
        %3145 = vmatpush1.bf16.msra.mxu0 %v2848
        %3146 = vmatprep.subr.bf16.mxu0 0
        %3147 = vmatpush1.bf16.msra.mxu0 %v2847
        %3148 = vmatprep.subr.bf16.mxu0 0
        %3149 = vmatpush1.bf16.msra.mxu0 %v2846
        %3150 = vmatprep.subr.bf16.mxu0 0
        %3151 = vmatpush1.bf16.msra.mxu0 %v2845
        %3152 = vmatprep.subr.bf16.mxu0 0
        %3153 = vmatpush2.bf16.msra.mxu0 %v2860
        %3154 = vmatprep.subr.bf16.mxu0 0
        %3155 = vmatpush2.bf16.msra.mxu0 %v2859
        %3156 = vmatprep.subr.bf16.mxu0 0
        %3157 = vmatpush2.bf16.msra.mxu0 %v2858
        %3158 = vmatprep.subr.bf16.mxu0 0
        %3159 = vmatpush2.bf16.msra.mxu0 %v2857
        %3160 = vmatprep.subr.bf16.mxu0 0
        %3161 = vmatpush2.bf16.msra.mxu0 %v2856
        %3162 = vmatprep.subr.bf16.mxu0 0
        %3163 = vmatpush2.bf16.msra.mxu0 %v2855
        %3164 = vmatprep.subr.bf16.mxu0 0
        %3165 = vmatpush2.bf16.msra.mxu0 %v2854
        %3166 = vmatprep.subr.bf16.mxu0 0
        %3167 = vmatpush2.bf16.msra.mxu0 %v2853
        %3168 = vmatprep.mubr.bf16.mxu0 %v2473
        %3169 = vmatmul.mubr.bf16.gmra.mxu0 %v2472
        %v3170 = vpop.f32.mrf.mxu0
        %v3171 = vadd.f32 %v3106, %v3170
        %v3172 = vpop.f32.mrf.mxu0
        %v3173 = vpop.f32.mrf.mxu0
        %v3174 = vadd.f32 %v3109, %v3173
        %v3175 = vpop.f32.mrf.mxu0
        %3176 = vmatprep.mubr.bf16.mxu0 %v2482
        %3177 = vmatmul.mubr.bf16.gmra.mxu0 %v2481
        %v3178 = vpop.f32.mrf.mxu0
        %v3179 = vadd.f32 %v3114, %v3178
        %v3180 = vpop.f32.mrf.mxu0
        %v3181 = vpop.f32.mrf.mxu0
        %v3182 = vadd.f32 %v3117, %v3181
        %v3183 = vpop.f32.mrf.mxu0
        %3184 = vmatprep.mubr.bf16.mxu0 %v2491
        %3185 = vmatmul.mubr.bf16.gmra.mxu0 %v2490
        %v3186 = vpop.f32.mrf.mxu0
        %v3187 = vadd.f32 %v3122, %v3186
        %v3188 = vpop.f32.mrf.mxu0
        %v3189 = vpop.f32.mrf.mxu0
        %v3190 = vadd.f32 %v3125, %v3189
        %v3191 = vpop.f32.mrf.mxu0
        %3192 = vmatprep.mubr.bf16.mxu0 %v2500
        %3193 = vmatmul.mubr.bf16.gmra.mxu0 %v2499
        %v3194 = vpop.f32.mrf.mxu0
        %v3195 = vadd.f32 %v3130, %v3194
        %v3196 = vpop.f32.mrf.mxu0
        %v3197 = vpop.f32.mrf.mxu0
        %v3198 = vadd.f32 %v3133, %v3197
        %v3199 = vpop.f32.mrf.mxu0
        %3200 = vdwg.mxu0
        %3201 = vmatprep.subr.bf16.mxu0 0
        %3202 = vmatpush1.bf16.msra.mxu0 %v2868
        %3203 = vmatprep.subr.bf16.mxu0 0
        %3204 = vmatpush1.bf16.msra.mxu0 %v2867
        %3205 = vmatprep.subr.bf16.mxu0 0
        %3206 = vmatpush1.bf16.msra.mxu0 %v2866
        %3207 = vmatprep.subr.bf16.mxu0 0
        %3208 = vmatpush1.bf16.msra.mxu0 %v2865
        %3209 = vmatprep.subr.bf16.mxu0 0
        %3210 = vmatpush1.bf16.msra.mxu0 %v2864
        %3211 = vmatprep.subr.bf16.mxu0 0
        %3212 = vmatpush1.bf16.msra.mxu0 %v2863
        %3213 = vmatprep.subr.bf16.mxu0 0
        %3214 = vmatpush1.bf16.msra.mxu0 %v2862
        %3215 = vmatprep.subr.bf16.mxu0 0
        %3216 = vmatpush1.bf16.msra.mxu0 %v2861
        %3217 = vmatprep.subr.bf16.mxu0 0
        %3218 = vmatpush2.bf16.msra.mxu0 0
        %3219 = vmatprep.subr.bf16.mxu0 0
        %3220 = vmatpush2.bf16.msra.mxu0 0
        %3221 = vmatprep.subr.bf16.mxu0 0
        %3222 = vmatpush2.bf16.msra.mxu0 0
        %3223 = vmatprep.subr.bf16.mxu0 0
        %3224 = vmatpush2.bf16.msra.mxu0 0
        %3225 = vmatprep.subr.bf16.mxu0 0
        %3226 = vmatpush2.bf16.msra.mxu0 0
        %3227 = vmatprep.subr.bf16.mxu0 0
        %3228 = vmatpush2.bf16.msra.mxu0 0
        %3229 = vmatprep.subr.bf16.mxu0 0
        %3230 = vmatpush2.bf16.msra.mxu0 0
        %3231 = vmatprep.subr.bf16.mxu0 0
        %3232 = vmatpush2.bf16.msra.mxu0 0
        %3233 = vmatprep.mubr.bf16.mxu0 0
        %3234 = vmatmul.mubr.bf16.gmra.mxu0 %v2474
        %v3235 = vpop.f32.mrf.mxu0
        %v3236 = vadd.f32 %v3171, %v3235
        %v3237 = vpop.f32.mrf.mxu0
        %v3238 = vpop.f32.mrf.mxu0
        %v3239 = vadd.f32 %v3174, %v3238
        %v3240 = vpop.f32.mrf.mxu0
        %3241 = vmatprep.mubr.bf16.mxu0 0
        %3242 = vmatmul.mubr.bf16.gmra.mxu0 %v2483
        %v3243 = vpop.f32.mrf.mxu0
        %v3244 = vadd.f32 %v3179, %v3243
        %v3245 = vpop.f32.mrf.mxu0
        %v3246 = vpop.f32.mrf.mxu0
        %v3247 = vadd.f32 %v3182, %v3246
        %v3248 = vpop.f32.mrf.mxu0
        %3249 = vmatprep.mubr.bf16.mxu0 0
        %3250 = vmatmul.mubr.bf16.gmra.mxu0 %v2492
        %v3251 = vpop.f32.mrf.mxu0
        %v3252 = vadd.f32 %v3187, %v3251
        %v3253 = vpop.f32.mrf.mxu0
        %v3254 = vpop.f32.mrf.mxu0
        %v3255 = vadd.f32 %v3190, %v3254
        %v3256 = vpop.f32.mrf.mxu0
        %3257 = vmatprep.mubr.bf16.mxu0 0
        %3258 = vmatmul.mubr.bf16.gmra.mxu0 %v2501
        %v3259 = vpop.f32.mrf.mxu0
        %v3260 = vadd.f32 %v3195, %v3259
        %v3261 = vpop.f32.mrf.mxu0
        %v3262 = vpop.f32.mrf.mxu0
        %v3263 = vadd.f32 %v3198, %v3262
        %v3264 = vpop.f32.mrf.mxu0
        %3265 = vdwg.mxu0
        %v3266 = vmax.f32 %v3236, 0.0
        %v3267 = vmax.f32 %v3239, 0.0
        %v3268 = vmax.f32 %v3244, 0.0
        %v3269 = vmax.f32 %v3247, 0.0
        %v3270 = vmax.f32 %v3252, 0.0
        %v3271 = vmax.f32 %v3255, 0.0
        %v3272 = vmax.f32 %v3260, 0.0
        %v3273 = vmax.f32 %v3263, 0.0
        %v3274 = vpack.c.bf16 %v3267, %v3266
        %v3275 = vpack.c.bf16 %v3269, %v3268
        %v3276 = vpack.c.bf16 %v3271, %v3270
        %v3277 = vpack.c.bf16 %v3273, %v3272
        %3278 = vmatprep.subr.bf16.mxu0 0
        %3279 = vmatpush1.bf16.msra.mxu0 0
        %3280 = vmatprep.subr.bf16.mxu0 0
        %3281 = vmatpush1.bf16.msra.mxu0 0
        %3282 = vmatprep.subr.bf16.mxu0 0
        %3283 = vmatpush1.bf16.msra.mxu0 0
        %3284 = vmatprep.subr.bf16.mxu0 0
        %3285 = vmatpush1.bf16.msra.mxu0 0
        %3286 = vmatprep.subr.bf16.mxu0 0
        %3287 = vmatpush1.bf16.msra.mxu0 %v3277
        %3288 = vmatprep.subr.bf16.mxu0 0
        %3289 = vmatpush1.bf16.msra.mxu0 %v3276
        %3290 = vmatprep.subr.bf16.mxu0 0
        %3291 = vmatpush1.bf16.msra.mxu0 %v3275
        %3292 = vmatprep.subr.bf16.mxu0 0
        %3293 = vmatpush1.bf16.msra.mxu0 %v3274
        %3294 = vmatprep.subr.bf16.mxu0 0
        %3295 = vmatpush2.bf16.msra.mxu0 0
        %3296 = vmatprep.subr.bf16.mxu0 0
        %3297 = vmatpush2.bf16.msra.mxu0 0
        %3298 = vmatprep.subr.bf16.mxu0 0
        %3299 = vmatpush2.bf16.msra.mxu0 0
        %3300 = vmatprep.subr.bf16.mxu0 0
        %3301 = vmatpush2.bf16.msra.mxu0 0
        %3302 = vmatprep.subr.bf16.mxu0 0
        %3303 = vmatpush2.bf16.msra.mxu0 0
        %3304 = vmatprep.subr.bf16.mxu0 0
        %3305 = vmatpush2.bf16.msra.mxu0 0
        %3306 = vmatprep.subr.bf16.mxu0 0
        %3307 = vmatpush2.bf16.msra.mxu0 0
        %3308 = vmatprep.subr.bf16.mxu0 0
        %3309 = vmatpush2.bf16.msra.mxu0 0
        %3310 = vmatprep.mubr.bf16.mxu0 0
        %3311 = vmatmul.mubr.bf16.gmra.mxu0 %v1398
        %v3312 = vpop.f32.mrf.mxu0
        %v3313 = vadd.f32 0.0, %v3312
        %v3314 = vpop.f32.mrf.mxu0
        %v3315 = vpop.f32.mrf.mxu0
        %v3316 = vadd.f32 0.0, %v3315
        %v3317 = vpop.f32.mrf.mxu0
        %3318 = vmatprep.mubr.bf16.mxu0 0
        %3319 = vmatmul.mubr.bf16.gmra.mxu0 %v1401
        %v3320 = vpop.f32.mrf.mxu0
        %v3321 = vadd.f32 0.0, %v3320
        %v3322 = vpop.f32.mrf.mxu0
        %v3323 = vpop.f32.mrf.mxu0
        %v3324 = vadd.f32 0.0, %v3323
        %v3325 = vpop.f32.mrf.mxu0
        %3326 = vmatprep.mubr.bf16.mxu0 0
        %3327 = vmatmul.mubr.bf16.gmra.mxu0 %v1404
        %v3328 = vpop.f32.mrf.mxu0
        %v3329 = vadd.f32 0.0, %v3328
        %v3330 = vpop.f32.mrf.mxu0
        %v3331 = vpop.f32.mrf.mxu0
        %v3332 = vadd.f32 0.0, %v3331
        %v3333 = vpop.f32.mrf.mxu0
        %3334 = vmatprep.mubr.bf16.mxu0 0
        %3335 = vmatmul.mubr.bf16.gmra.mxu0 %v1407
        %v3336 = vpop.f32.mrf.mxu0
        %v3337 = vadd.f32 0.0, %v3336
        %v3338 = vpop.f32.mrf.mxu0
        %v3339 = vpop.f32.mrf.mxu0
        %v3340 = vadd.f32 0.0, %v3339
        %v3341 = vpop.f32.mrf.mxu0
        %3342 = vdwg.mxu0
        %3343 = vmatprep.subr.bf16.mxu0 0
        %3344 = vmatpush1.bf16.msra.mxu0 0
        %3345 = vmatprep.subr.bf16.mxu0 0
        %3346 = vmatpush1.bf16.msra.mxu0 0
        %3347 = vmatprep.subr.bf16.mxu0 0
        %3348 = vmatpush1.bf16.msra.mxu0 0
        %3349 = vmatprep.subr.bf16.mxu0 0
        %3350 = vmatpush1.bf16.msra.mxu0 0
        %3351 = vmatprep.subr.bf16.mxu0 0
        %3352 = vmatpush1.bf16.msra.mxu0 %v3277
        %3353 = vmatprep.subr.bf16.mxu0 0
        %3354 = vmatpush1.bf16.msra.mxu0 %v3276
        %3355 = vmatprep.subr.bf16.mxu0 0
        %3356 = vmatpush1.bf16.msra.mxu0 %v3275
        %3357 = vmatprep.subr.bf16.mxu0 0
        %3358 = vmatpush1.bf16.msra.mxu0 %v3274
        %3359 = vmatprep.subr.bf16.mxu0 0
        %3360 = vmatpush2.bf16.msra.mxu0 0
        %3361 = vmatprep.subr.bf16.mxu0 0
        %3362 = vmatpush2.bf16.msra.mxu0 0
        %3363 = vmatprep.subr.bf16.mxu0 0
        %3364 = vmatpush2.bf16.msra.mxu0 0
        %3365 = vmatprep.subr.bf16.mxu0 0
        %3366 = vmatpush2.bf16.msra.mxu0 0
        %3367 = vmatprep.subr.bf16.mxu0 0
        %3368 = vmatpush2.bf16.msra.mxu0 0
        %3369 = vmatprep.subr.bf16.mxu0 0
        %3370 = vmatpush2.bf16.msra.mxu0 0
        %3371 = vmatprep.subr.bf16.mxu0 0
        %3372 = vmatpush2.bf16.msra.mxu0 0
        %3373 = vmatprep.subr.bf16.mxu0 0
        %3374 = vmatpush2.bf16.msra.mxu0 0
        %3375 = vmatprep.mubr.bf16.mxu0 0
        %3376 = vmatmul.mubr.bf16.gmra.mxu0 %v1504
        %v3377 = vpop.f32.mrf.mxu0
        %v3378 = vadd.f32 0.0, %v3377
        %v3379 = vpop.f32.mrf.mxu0
        %v3380 = vpop.f32.mrf.mxu0
        %v3381 = vadd.f32 0.0, %v3380
        %v3382 = vpop.f32.mrf.mxu0
        %3383 = vmatprep.mubr.bf16.mxu0 0
        %3384 = vmatmul.mubr.bf16.gmra.mxu0 %v1507
        %v3385 = vpop.f32.mrf.mxu0
        %v3386 = vadd.f32 0.0, %v3385
        %v3387 = vpop.f32.mrf.mxu0
        %v3388 = vpop.f32.mrf.mxu0
        %v3389 = vadd.f32 0.0, %v3388
        %v3390 = vpop.f32.mrf.mxu0
        %3391 = vmatprep.mubr.bf16.mxu0 0
        %3392 = vmatmul.mubr.bf16.gmra.mxu0 %v1510
        %v3393 = vpop.f32.mrf.mxu0
        %v3394 = vadd.f32 0.0, %v3393
        %v3395 = vpop.f32.mrf.mxu0
        %v3396 = vpop.f32.mrf.mxu0
        %v3397 = vadd.f32 0.0, %v3396
        %v3398 = vpop.f32.mrf.mxu0
        %3399 = vmatprep.mubr.bf16.mxu0 0
        %3400 = vmatmul.mubr.bf16.gmra.mxu0 %v1513
        %v3401 = vpop.f32.mrf.mxu0
        %v3402 = vadd.f32 0.0, %v3401
        %v3403 = vpop.f32.mrf.mxu0
        %v3404 = vpop.f32.mrf.mxu0
        %v3405 = vadd.f32 0.0, %v3404
        %v3406 = vpop.f32.mrf.mxu0
        %3407 = vdwg.mxu0
        %3408 = vmatprep.subr.bf16.mxu0 0
        %3409 = vmatpush1.bf16.msra.mxu0 0
        %3410 = vmatprep.subr.bf16.mxu0 0
        %3411 = vmatpush1.bf16.msra.mxu0 0
        %3412 = vmatprep.subr.bf16.mxu0 0
        %3413 = vmatpush1.bf16.msra.mxu0 0
        %3414 = vmatprep.subr.bf16.mxu0 0
        %3415 = vmatpush1.bf16.msra.mxu0 0
        %3416 = vmatprep.subr.bf16.mxu0 0
        %3417 = vmatpush1.bf16.msra.mxu0 %v3277
        %3418 = vmatprep.subr.bf16.mxu0 0
        %3419 = vmatpush1.bf16.msra.mxu0 %v3276
        %3420 = vmatprep.subr.bf16.mxu0 0
        %3421 = vmatpush1.bf16.msra.mxu0 %v3275
        %3422 = vmatprep.subr.bf16.mxu0 0
        %3423 = vmatpush1.bf16.msra.mxu0 %v3274
        %3424 = vmatprep.subr.bf16.mxu0 0
        %3425 = vmatpush2.bf16.msra.mxu0 0
        %3426 = vmatprep.subr.bf16.mxu0 0
        %3427 = vmatpush2.bf16.msra.mxu0 0
        %3428 = vmatprep.subr.bf16.mxu0 0
        %3429 = vmatpush2.bf16.msra.mxu0 0
        %3430 = vmatprep.subr.bf16.mxu0 0
        %3431 = vmatpush2.bf16.msra.mxu0 0
        %3432 = vmatprep.subr.bf16.mxu0 0
        %3433 = vmatpush2.bf16.msra.mxu0 0
        %3434 = vmatprep.subr.bf16.mxu0 0
        %3435 = vmatpush2.bf16.msra.mxu0 0
        %3436 = vmatprep.subr.bf16.mxu0 0
        %3437 = vmatpush2.bf16.msra.mxu0 0
        %3438 = vmatprep.subr.bf16.mxu0 0
        %3439 = vmatpush2.bf16.msra.mxu0 0
        %3440 = vmatprep.mubr.bf16.mxu0 0
        %3441 = vmatmul.mubr.bf16.gmra.mxu0 %v1610
        %v3442 = vpop.f32.mrf.mxu0
        %v3443 = vadd.f32 0.0, %v3442
        %v3444 = vpop.f32.mrf.mxu0
        %v3445 = vpop.f32.mrf.mxu0
        %v3446 = vadd.f32 0.0, %v3445
        %v3447 = vpop.f32.mrf.mxu0
        %3448 = vmatprep.mubr.bf16.mxu0 0
        %3449 = vmatmul.mubr.bf16.gmra.mxu0 %v1613
        %v3450 = vpop.f32.mrf.mxu0
        %v3451 = vadd.f32 0.0, %v3450
        %v3452 = vpop.f32.mrf.mxu0
        %v3453 = vpop.f32.mrf.mxu0
        %v3454 = vadd.f32 0.0, %v3453
        %v3455 = vpop.f32.mrf.mxu0
        %3456 = vmatprep.mubr.bf16.mxu0 0
        %3457 = vmatmul.mubr.bf16.gmra.mxu0 %v1616
        %v3458 = vpop.f32.mrf.mxu0
        %v3459 = vadd.f32 0.0, %v3458
        %v3460 = vpop.f32.mrf.mxu0
        %v3461 = vpop.f32.mrf.mxu0
        %v3462 = vadd.f32 0.0, %v3461
        %v3463 = vpop.f32.mrf.mxu0
        %3464 = vmatprep.mubr.bf16.mxu0 0
        %3465 = vmatmul.mubr.bf16.gmra.mxu0 %v1619
        %v3466 = vpop.f32.mrf.mxu0
        %v3467 = vadd.f32 0.0, %v3466
        %v3468 = vpop.f32.mrf.mxu0
        %v3469 = vpop.f32.mrf.mxu0
        %v3470 = vadd.f32 0.0, %v3469
        %v3471 = vpop.f32.mrf.mxu0
        %3472 = vdwg.mxu0
        %3473 = vmatprep.subr.bf16.mxu0 0
        %3474 = vmatpush1.bf16.msra.mxu0 0
        %3475 = vmatprep.subr.bf16.mxu0 0
        %3476 = vmatpush1.bf16.msra.mxu0 0
        %3477 = vmatprep.subr.bf16.mxu0 0
        %3478 = vmatpush1.bf16.msra.mxu0 0
        %3479 = vmatprep.subr.bf16.mxu0 0
        %3480 = vmatpush1.bf16.msra.mxu0 0
        %3481 = vmatprep.subr.bf16.mxu0 0
        %3482 = vmatpush1.bf16.msra.mxu0 %v3277
        %3483 = vmatprep.subr.bf16.mxu0 0
        %3484 = vmatpush1.bf16.msra.mxu0 %v3276
        %3485 = vmatprep.subr.bf16.mxu0 0
        %3486 = vmatpush1.bf16.msra.mxu0 %v3275
        %3487 = vmatprep.subr.bf16.mxu0 0
        %3488 = vmatpush1.bf16.msra.mxu0 %v3274
        %3489 = vmatprep.subr.bf16.mxu0 0
        %3490 = vmatpush2.bf16.msra.mxu0 0
        %3491 = vmatprep.subr.bf16.mxu0 0
        %3492 = vmatpush2.bf16.msra.mxu0 0
        %3493 = vmatprep.subr.bf16.mxu0 0
        %3494 = vmatpush2.bf16.msra.mxu0 0
        %3495 = vmatprep.subr.bf16.mxu0 0
        %3496 = vmatpush2.bf16.msra.mxu0 0
        %3497 = vmatprep.subr.bf16.mxu0 0
        %3498 = vmatpush2.bf16.msra.mxu0 0
        %3499 = vmatprep.subr.bf16.mxu0 0
        %3500 = vmatpush2.bf16.msra.mxu0 0
        %3501 = vmatprep.subr.bf16.mxu0 0
        %3502 = vmatpush2.bf16.msra.mxu0 0
        %3503 = vmatprep.subr.bf16.mxu0 0
        %3504 = vmatpush2.bf16.msra.mxu0 0
        %3505 = vmatprep.mubr.bf16.mxu0 0
        %3506 = vmatmul.mubr.bf16.gmra.mxu0 %v1716
        %v3507 = vpop.f32.mrf.mxu0
        %v3508 = vadd.f32 0.0, %v3507
        %v3509 = vpop.f32.mrf.mxu0
        %v3510 = vpop.f32.mrf.mxu0
        %v3511 = vadd.f32 0.0, %v3510
        %v3512 = vpop.f32.mrf.mxu0
        %3513 = vmatprep.mubr.bf16.mxu0 0
        %3514 = vmatmul.mubr.bf16.gmra.mxu0 %v1719
        %v3515 = vpop.f32.mrf.mxu0
        %v3516 = vadd.f32 0.0, %v3515
        %v3517 = vpop.f32.mrf.mxu0
        %v3518 = vpop.f32.mrf.mxu0
        %v3519 = vadd.f32 0.0, %v3518
        %v3520 = vpop.f32.mrf.mxu0
        %3521 = vmatprep.mubr.bf16.mxu0 0
        %3522 = vmatmul.mubr.bf16.gmra.mxu0 %v1722
        %v3523 = vpop.f32.mrf.mxu0
        %v3524 = vadd.f32 0.0, %v3523
        %v3525 = vpop.f32.mrf.mxu0
        %v3526 = vpop.f32.mrf.mxu0
        %v3527 = vadd.f32 0.0, %v3526
        %v3528 = vpop.f32.mrf.mxu0
        %3529 = vmatprep.mubr.bf16.mxu0 0
        %3530 = vmatmul.mubr.bf16.gmra.mxu0 %v1725
        %v3531 = vpop.f32.mrf.mxu0
        %v3532 = vadd.f32 0.0, %v3531
        %v3533 = vpop.f32.mrf.mxu0
        %v3534 = vpop.f32.mrf.mxu0
        %v3535 = vadd.f32 0.0, %v3534
        %v3536 = vpop.f32.mrf.mxu0
        %3537 = vdwg.mxu0
        %3538 = vmatprep.subr.bf16.mxu0 0
        %3539 = vmatpush1.bf16.msra.mxu0 0
        %3540 = vmatprep.subr.bf16.mxu0 0
        %3541 = vmatpush1.bf16.msra.mxu0 0
        %3542 = vmatprep.subr.bf16.mxu0 0
        %3543 = vmatpush1.bf16.msra.mxu0 0
        %3544 = vmatprep.subr.bf16.mxu0 0
        %3545 = vmatpush1.bf16.msra.mxu0 0
        %3546 = vmatprep.subr.bf16.mxu0 0
        %3547 = vmatpush1.bf16.msra.mxu0 %v3277
        %3548 = vmatprep.subr.bf16.mxu0 0
        %3549 = vmatpush1.bf16.msra.mxu0 %v3276
        %3550 = vmatprep.subr.bf16.mxu0 0
        %3551 = vmatpush1.bf16.msra.mxu0 %v3275
        %3552 = vmatprep.subr.bf16.mxu0 0
        %3553 = vmatpush1.bf16.msra.mxu0 %v3274
        %3554 = vmatprep.subr.bf16.mxu0 0
        %3555 = vmatpush2.bf16.msra.mxu0 0
        %3556 = vmatprep.subr.bf16.mxu0 0
        %3557 = vmatpush2.bf16.msra.mxu0 0
        %3558 = vmatprep.subr.bf16.mxu0 0
        %3559 = vmatpush2.bf16.msra.mxu0 0
        %3560 = vmatprep.subr.bf16.mxu0 0
        %3561 = vmatpush2.bf16.msra.mxu0 0
        %3562 = vmatprep.subr.bf16.mxu0 0
        %3563 = vmatpush2.bf16.msra.mxu0 0
        %3564 = vmatprep.subr.bf16.mxu0 0
        %3565 = vmatpush2.bf16.msra.mxu0 0
        %3566 = vmatprep.subr.bf16.mxu0 0
        %3567 = vmatpush2.bf16.msra.mxu0 0
        %3568 = vmatprep.subr.bf16.mxu0 0
        %3569 = vmatpush2.bf16.msra.mxu0 0
        %3570 = vmatprep.mubr.bf16.mxu0 0
        %3571 = vmatmul.mubr.bf16.gmra.mxu0 %v1822
        %v3572 = vpop.f32.mrf.mxu0
        %v3573 = vadd.f32 0.0, %v3572
        %v3574 = vpop.f32.mrf.mxu0
        %v3575 = vpop.f32.mrf.mxu0
        %v3576 = vadd.f32 0.0, %v3575
        %v3577 = vpop.f32.mrf.mxu0
        %3578 = vmatprep.mubr.bf16.mxu0 0
        %3579 = vmatmul.mubr.bf16.gmra.mxu0 %v1825
        %v3580 = vpop.f32.mrf.mxu0
        %v3581 = vadd.f32 0.0, %v3580
        %v3582 = vpop.f32.mrf.mxu0
        %v3583 = vpop.f32.mrf.mxu0
        %v3584 = vadd.f32 0.0, %v3583
        %v3585 = vpop.f32.mrf.mxu0
        %3586 = vmatprep.mubr.bf16.mxu0 0
        %3587 = vmatmul.mubr.bf16.gmra.mxu0 %v1828
        %v3588 = vpop.f32.mrf.mxu0
        %v3589 = vadd.f32 0.0, %v3588
        %v3590 = vpop.f32.mrf.mxu0
        %v3591 = vpop.f32.mrf.mxu0
        %v3592 = vadd.f32 0.0, %v3591
        %v3593 = vpop.f32.mrf.mxu0
        %3594 = vmatprep.mubr.bf16.mxu0 0
        %3595 = vmatmul.mubr.bf16.gmra.mxu0 %v1831
        %v3596 = vpop.f32.mrf.mxu0
        %v3597 = vadd.f32 0.0, %v3596
        %v3598 = vpop.f32.mrf.mxu0
        %v3599 = vpop.f32.mrf.mxu0
        %v3600 = vadd.f32 0.0, %v3599
        %v3601 = vpop.f32.mrf.mxu0
        %3602 = vdwg.mxu0
        %3603 = vmatprep.subr.bf16.mxu0 0
        %3604 = vmatpush1.bf16.msra.mxu0 0
        %3605 = vmatprep.subr.bf16.mxu0 0
        %3606 = vmatpush1.bf16.msra.mxu0 0
        %3607 = vmatprep.subr.bf16.mxu0 0
        %3608 = vmatpush1.bf16.msra.mxu0 0
        %3609 = vmatprep.subr.bf16.mxu0 0
        %3610 = vmatpush1.bf16.msra.mxu0 0
        %3611 = vmatprep.subr.bf16.mxu0 0
        %3612 = vmatpush1.bf16.msra.mxu0 %v3277
        %3613 = vmatprep.subr.bf16.mxu0 0
        %3614 = vmatpush1.bf16.msra.mxu0 %v3276
        %3615 = vmatprep.subr.bf16.mxu0 0
        %3616 = vmatpush1.bf16.msra.mxu0 %v3275
        %3617 = vmatprep.subr.bf16.mxu0 0
        %3618 = vmatpush1.bf16.msra.mxu0 %v3274
        %3619 = vmatprep.subr.bf16.mxu0 0
        %3620 = vmatpush2.bf16.msra.mxu0 0
        %3621 = vmatprep.subr.bf16.mxu0 0
        %3622 = vmatpush2.bf16.msra.mxu0 0
        %3623 = vmatprep.subr.bf16.mxu0 0
        %3624 = vmatpush2.bf16.msra.mxu0 0
        %3625 = vmatprep.subr.bf16.mxu0 0
        %3626 = vmatpush2.bf16.msra.mxu0 0
        %3627 = vmatprep.subr.bf16.mxu0 0
        %3628 = vmatpush2.bf16.msra.mxu0 0
        %3629 = vmatprep.subr.bf16.mxu0 0
        %3630 = vmatpush2.bf16.msra.mxu0 0
        %3631 = vmatprep.subr.bf16.mxu0 0
        %3632 = vmatpush2.bf16.msra.mxu0 0
        %3633 = vmatprep.subr.bf16.mxu0 0
        %3634 = vmatpush2.bf16.msra.mxu0 0
        %3635 = vmatprep.mubr.bf16.mxu0 0
        %3636 = vmatmul.mubr.bf16.gmra.mxu0 %v1928
        %v3637 = vpop.f32.mrf.mxu0
        %v3638 = vadd.f32 0.0, %v3637
        %v3639 = vpop.f32.mrf.mxu0
        %v3640 = vpop.f32.mrf.mxu0
        %v3641 = vadd.f32 0.0, %v3640
        %v3642 = vpop.f32.mrf.mxu0
        %3643 = vmatprep.mubr.bf16.mxu0 0
        %3644 = vmatmul.mubr.bf16.gmra.mxu0 %v1931
        %v3645 = vpop.f32.mrf.mxu0
        %v3646 = vadd.f32 0.0, %v3645
        %v3647 = vpop.f32.mrf.mxu0
        %v3648 = vpop.f32.mrf.mxu0
        %v3649 = vadd.f32 0.0, %v3648
        %v3650 = vpop.f32.mrf.mxu0
        %3651 = vmatprep.mubr.bf16.mxu0 0
        %3652 = vmatmul.mubr.bf16.gmra.mxu0 %v1934
        %v3653 = vpop.f32.mrf.mxu0
        %v3654 = vadd.f32 0.0, %v3653
        %v3655 = vpop.f32.mrf.mxu0
        %v3656 = vpop.f32.mrf.mxu0
        %v3657 = vadd.f32 0.0, %v3656
        %v3658 = vpop.f32.mrf.mxu0
        %3659 = vmatprep.mubr.bf16.mxu0 0
        %3660 = vmatmul.mubr.bf16.gmra.mxu0 %v1937
        %v3661 = vpop.f32.mrf.mxu0
        %v3662 = vadd.f32 0.0, %v3661
        %v3663 = vpop.f32.mrf.mxu0
        %v3664 = vpop.f32.mrf.mxu0
        %v3665 = vadd.f32 0.0, %v3664
        %v3666 = vpop.f32.mrf.mxu0
        %3667 = vdwg.mxu0
        %3668 = vmatprep.subr.bf16.mxu0 0
        %3669 = vmatpush1.bf16.msra.mxu0 0
        %3670 = vmatprep.subr.bf16.mxu0 0
        %3671 = vmatpush1.bf16.msra.mxu0 0
        %3672 = vmatprep.subr.bf16.mxu0 0
        %3673 = vmatpush1.bf16.msra.mxu0 0
        %3674 = vmatprep.subr.bf16.mxu0 0
        %3675 = vmatpush1.bf16.msra.mxu0 0
        %3676 = vmatprep.subr.bf16.mxu0 0
        %3677 = vmatpush1.bf16.msra.mxu0 %v3277
        %3678 = vmatprep.subr.bf16.mxu0 0
        %3679 = vmatpush1.bf16.msra.mxu0 %v3276
        %3680 = vmatprep.subr.bf16.mxu0 0
        %3681 = vmatpush1.bf16.msra.mxu0 %v3275
        %3682 = vmatprep.subr.bf16.mxu0 0
        %3683 = vmatpush1.bf16.msra.mxu0 %v3274
        %3684 = vmatprep.subr.bf16.mxu0 0
        %3685 = vmatpush2.bf16.msra.mxu0 0
        %3686 = vmatprep.subr.bf16.mxu0 0
        %3687 = vmatpush2.bf16.msra.mxu0 0
        %3688 = vmatprep.subr.bf16.mxu0 0
        %3689 = vmatpush2.bf16.msra.mxu0 0
        %3690 = vmatprep.subr.bf16.mxu0 0
        %3691 = vmatpush2.bf16.msra.mxu0 0
        %3692 = vmatprep.subr.bf16.mxu0 0
        %3693 = vmatpush2.bf16.msra.mxu0 0
        %3694 = vmatprep.subr.bf16.mxu0 0
        %3695 = vmatpush2.bf16.msra.mxu0 0
        %3696 = vmatprep.subr.bf16.mxu0 0
        %3697 = vmatpush2.bf16.msra.mxu0 0
        %3698 = vmatprep.subr.bf16.mxu0 0
        %3699 = vmatpush2.bf16.msra.mxu0 0
        %3700 = vmatprep.mubr.bf16.mxu0 0
        %3701 = vmatmul.mubr.bf16.gmra.mxu0 %v2034
        %v3702 = vpop.f32.mrf.mxu0
        %v3703 = vadd.f32 0.0, %v3702
        %v3704 = vpop.f32.mrf.mxu0
        %v3705 = vpop.f32.mrf.mxu0
        %v3706 = vadd.f32 0.0, %v3705
        %v3707 = vpop.f32.mrf.mxu0
        %3708 = vmatprep.mubr.bf16.mxu0 0
        %3709 = vmatmul.mubr.bf16.gmra.mxu0 %v2037
        %v3710 = vpop.f32.mrf.mxu0
        %v3711 = vadd.f32 0.0, %v3710
        %v3712 = vpop.f32.mrf.mxu0
        %v3713 = vpop.f32.mrf.mxu0
        %v3714 = vadd.f32 0.0, %v3713
        %v3715 = vpop.f32.mrf.mxu0
        %3716 = vmatprep.mubr.bf16.mxu0 0
        %3717 = vmatmul.mubr.bf16.gmra.mxu0 %v2040
        %v3718 = vpop.f32.mrf.mxu0
        %v3719 = vadd.f32 0.0, %v3718
        %v3720 = vpop.f32.mrf.mxu0
        %v3721 = vpop.f32.mrf.mxu0
        %v3722 = vadd.f32 0.0, %v3721
        %v3723 = vpop.f32.mrf.mxu0
        %3724 = vmatprep.mubr.bf16.mxu0 0
        %3725 = vmatmul.mubr.bf16.gmra.mxu0 %v2043
        %v3726 = vpop.f32.mrf.mxu0
        %v3727 = vadd.f32 0.0, %v3726
        %v3728 = vpop.f32.mrf.mxu0
        %v3729 = vpop.f32.mrf.mxu0
        %v3730 = vadd.f32 0.0, %v3729
        %v3731 = vpop.f32.mrf.mxu0
        %3732 = vdwg.mxu0
        %3733 = vmatprep.subr.bf16.mxu0 0
        %3734 = vmatpush1.bf16.msra.mxu0 0
        %3735 = vmatprep.subr.bf16.mxu0 0
        %3736 = vmatpush1.bf16.msra.mxu0 0
        %3737 = vmatprep.subr.bf16.mxu0 0
        %3738 = vmatpush1.bf16.msra.mxu0 0
        %3739 = vmatprep.subr.bf16.mxu0 0
        %3740 = vmatpush1.bf16.msra.mxu0 0
        %3741 = vmatprep.subr.bf16.mxu0 0
        %3742 = vmatpush1.bf16.msra.mxu0 %v3277
        %3743 = vmatprep.subr.bf16.mxu0 0
        %3744 = vmatpush1.bf16.msra.mxu0 %v3276
        %3745 = vmatprep.subr.bf16.mxu0 0
        %3746 = vmatpush1.bf16.msra.mxu0 %v3275
        %3747 = vmatprep.subr.bf16.mxu0 0
        %3748 = vmatpush1.bf16.msra.mxu0 %v3274
        %3749 = vmatprep.subr.bf16.mxu0 0
        %3750 = vmatpush2.bf16.msra.mxu0 0
        %3751 = vmatprep.subr.bf16.mxu0 0
        %3752 = vmatpush2.bf16.msra.mxu0 0
        %3753 = vmatprep.subr.bf16.mxu0 0
        %3754 = vmatpush2.bf16.msra.mxu0 0
        %3755 = vmatprep.subr.bf16.mxu0 0
        %3756 = vmatpush2.bf16.msra.mxu0 0
        %3757 = vmatprep.subr.bf16.mxu0 0
        %3758 = vmatpush2.bf16.msra.mxu0 0
        %3759 = vmatprep.subr.bf16.mxu0 0
        %3760 = vmatpush2.bf16.msra.mxu0 0
        %3761 = vmatprep.subr.bf16.mxu0 0
        %3762 = vmatpush2.bf16.msra.mxu0 0
        %3763 = vmatprep.subr.bf16.mxu0 0
        %3764 = vmatpush2.bf16.msra.mxu0 0
        %3765 = vmatprep.mubr.bf16.mxu0 0
        %3766 = vmatmul.mubr.bf16.gmra.mxu0 %v2140
        %v3767 = vpop.f32.mrf.mxu0
        %v3768 = vadd.f32 0.0, %v3767
        %v3769 = vpop.f32.mrf.mxu0
        %v3770 = vpop.f32.mrf.mxu0
        %v3771 = vadd.f32 0.0, %v3770
        %v3772 = vpop.f32.mrf.mxu0
        %3773 = vmatprep.mubr.bf16.mxu0 0
        %3774 = vmatmul.mubr.bf16.gmra.mxu0 %v2143
        %v3775 = vpop.f32.mrf.mxu0
        %v3776 = vadd.f32 0.0, %v3775
        %v3777 = vpop.f32.mrf.mxu0
        %v3778 = vpop.f32.mrf.mxu0
        %v3779 = vadd.f32 0.0, %v3778
        %v3780 = vpop.f32.mrf.mxu0
        %3781 = vmatprep.mubr.bf16.mxu0 0
        %3782 = vmatmul.mubr.bf16.gmra.mxu0 %v2146
        %v3783 = vpop.f32.mrf.mxu0
        %v3784 = vadd.f32 0.0, %v3783
        %v3785 = vpop.f32.mrf.mxu0
        %v3786 = vpop.f32.mrf.mxu0
        %v3787 = vadd.f32 0.0, %v3786
        %v3788 = vpop.f32.mrf.mxu0
        %3789 = vmatprep.mubr.bf16.mxu0 0
        %3790 = vmatmul.mubr.bf16.gmra.mxu0 %v2149
        %v3791 = vpop.f32.mrf.mxu0
        %v3792 = vadd.f32 0.0, %v3791
        %v3793 = vpop.f32.mrf.mxu0
        %v3794 = vpop.f32.mrf.mxu0
        %v3795 = vadd.f32 0.0, %v3794
        %v3796 = vpop.f32.mrf.mxu0
        %3797 = vdwg.mxu0
        %3798 = vmatprep.subr.bf16.mxu0 0
        %3799 = vmatpush1.bf16.msra.mxu0 0
        %3800 = vmatprep.subr.bf16.mxu0 0
        %3801 = vmatpush1.bf16.msra.mxu0 0
        %3802 = vmatprep.subr.bf16.mxu0 0
        %3803 = vmatpush1.bf16.msra.mxu0 0
        %3804 = vmatprep.subr.bf16.mxu0 0
        %3805 = vmatpush1.bf16.msra.mxu0 0
        %3806 = vmatprep.subr.bf16.mxu0 0
        %3807 = vmatpush1.bf16.msra.mxu0 %v3277
        %3808 = vmatprep.subr.bf16.mxu0 0
        %3809 = vmatpush1.bf16.msra.mxu0 %v3276
        %3810 = vmatprep.subr.bf16.mxu0 0
        %3811 = vmatpush1.bf16.msra.mxu0 %v3275
        %3812 = vmatprep.subr.bf16.mxu0 0
        %3813 = vmatpush1.bf16.msra.mxu0 %v3274
        %3814 = vmatprep.subr.bf16.mxu0 0
        %3815 = vmatpush2.bf16.msra.mxu0 0
        %3816 = vmatprep.subr.bf16.mxu0 0
        %3817 = vmatpush2.bf16.msra.mxu0 0
        %3818 = vmatprep.subr.bf16.mxu0 0
        %3819 = vmatpush2.bf16.msra.mxu0 0
        %3820 = vmatprep.subr.bf16.mxu0 0
        %3821 = vmatpush2.bf16.msra.mxu0 0
        %3822 = vmatprep.subr.bf16.mxu0 0
        %3823 = vmatpush2.bf16.msra.mxu0 0
        %3824 = vmatprep.subr.bf16.mxu0 0
        %3825 = vmatpush2.bf16.msra.mxu0 0
        %3826 = vmatprep.subr.bf16.mxu0 0
        %3827 = vmatpush2.bf16.msra.mxu0 0
        %3828 = vmatprep.subr.bf16.mxu0 0
        %3829 = vmatpush2.bf16.msra.mxu0 0
        %3830 = vmatprep.mubr.bf16.mxu0 0
        %3831 = vmatmul.mubr.bf16.gmra.mxu0 %v2246
        %v3832 = vpop.f32.mrf.mxu0
        %v3833 = vadd.f32 0.0, %v3832
        %v3834 = vpop.f32.mrf.mxu0
        %v3835 = vpop.f32.mrf.mxu0
        %v3836 = vadd.f32 0.0, %v3835
        %v3837 = vpop.f32.mrf.mxu0
        %3838 = vmatprep.mubr.bf16.mxu0 0
        %3839 = vmatmul.mubr.bf16.gmra.mxu0 %v2249
        %v3840 = vpop.f32.mrf.mxu0
        %v3841 = vadd.f32 0.0, %v3840
        %v3842 = vpop.f32.mrf.mxu0
        %v3843 = vpop.f32.mrf.mxu0
        %v3844 = vadd.f32 0.0, %v3843
        %v3845 = vpop.f32.mrf.mxu0
        %3846 = vmatprep.mubr.bf16.mxu0 0
        %3847 = vmatmul.mubr.bf16.gmra.mxu0 %v2252
        %v3848 = vpop.f32.mrf.mxu0
        %v3849 = vadd.f32 0.0, %v3848
        %v3850 = vpop.f32.mrf.mxu0
        %v3851 = vpop.f32.mrf.mxu0
        %v3852 = vadd.f32 0.0, %v3851
        %v3853 = vpop.f32.mrf.mxu0
        %3854 = vmatprep.mubr.bf16.mxu0 0
        %3855 = vmatmul.mubr.bf16.gmra.mxu0 %v2255
        %v3856 = vpop.f32.mrf.mxu0
        %v3857 = vadd.f32 0.0, %v3856
        %v3858 = vpop.f32.mrf.mxu0
        %v3859 = vpop.f32.mrf.mxu0
        %v3860 = vadd.f32 0.0, %v3859
        %v3861 = vpop.f32.mrf.mxu0
        %3862 = vdwg.mxu0
        %v3863 = vld [vmem:[#allocation6] sm:$0xf]
        %v3864 = vld [vmem:[#allocation6 + $0x4] sm:$0xf]
        %v3865 = vld [vmem:[#allocation6 + $0x8] sm:$0xf]
        %v3866 = vld [vmem:[#allocation6 + $0xc] sm:$0xf]
        %v3867 = vld [vmem:[#allocation6 + $0x10] sm:$0xf]
        %v3868 = vld [vmem:[#allocation6 + $0x14] sm:$0xf]
        %v3869 = vld [vmem:[#allocation6 + $0x18] sm:$0xf]
        %v3870 = vld [vmem:[#allocation6 + $0x1c] sm:$0xf]
        %v3871 = vld [vmem:[#allocation6 + $0x20] sm:$0xf]
        %v3872 = vld [vmem:[#allocation6 + $0x24] sm:$0xf]
        %v3873 = vld [vmem:[#allocation6 + $0x28] sm:$0xf]
        %v3874 = vld [vmem:[#allocation6 + $0x2c] sm:$0xf]
        %v3875 = vld [vmem:[#allocation6 + $0x30] sm:$0xf]
        %v3876 = vld [vmem:[#allocation6 + $0x34] sm:$0xf]
        %v3877 = vld [vmem:[#allocation6 + $0x38] sm:$0xf]
        %v3878 = vld [vmem:[#allocation6 + $0x3c] sm:$0xf]
        %v3879 = vld [vmem:[#allocation6 + $0x40] sm:$0xf]
        %v3880 = vld [vmem:[#allocation6 + $0x44] sm:$0xf]
        %v3881 = vld [vmem:[#allocation6 + $0x48] sm:$0xf]
        %v3882 = vld [vmem:[#allocation6 + $0x4c] sm:$0xf]
        %v3883 = vld [vmem:[#allocation6 + $0x50] sm:$0xf]
        %v3884 = vld [vmem:[#allocation6 + $0x54] sm:$0xf]
        %v3885 = vld [vmem:[#allocation6 + $0x58] sm:$0xf]
        %v3886 = vld [vmem:[#allocation6 + $0x5c] sm:$0xf]
        %v3887 = vld [vmem:[#allocation6 + $0x60] sm:$0xf]
        %v3888 = vld [vmem:[#allocation6 + $0x64] sm:$0xf]
        %v3889 = vld [vmem:[#allocation6 + $0x68] sm:$0xf]
        %v3890 = vld [vmem:[#allocation6 + $0x6c] sm:$0xf]
        %v3891 = vld [vmem:[#allocation6 + $0x70] sm:$0xf]
        %v3892 = vld [vmem:[#allocation6 + $0x74] sm:$0xf]
        %v3893 = vld [vmem:[#allocation6 + $0x78] sm:$0xf]
        %v3894 = vld [vmem:[#allocation6 + $0x7c] sm:$0xf]
        %v3895 = vld [vmem:[#allocation6 + $0x80] sm:$0xf]
        %v3896 = vld [vmem:[#allocation6 + $0x84] sm:$0xf]
        %v3897 = vld [vmem:[#allocation6 + $0x88] sm:$0xf]
        %v3898 = vld [vmem:[#allocation6 + $0x8c] sm:$0xf]
        %v3899 = vld [vmem:[#allocation6 + $0x90] sm:$0xf]
        %v3900 = vld [vmem:[#allocation6 + $0x94] sm:$0xf]
        %v3901 = vld [vmem:[#allocation6 + $0x98] sm:$0xf]
        %v3902 = vld [vmem:[#allocation6 + $0x9c] sm:$0xf]
        %v3903 = vld [vmem:[#allocation6 + $0xa0] sm:$0xf]
        %v3904 = vld [vmem:[#allocation6 + $0xa4] sm:$0xf]
        %v3905 = vld [vmem:[#allocation6 + $0xa8] sm:$0xf]
        %v3906 = vld [vmem:[#allocation6 + $0xac] sm:$0xf]
        %v3907 = vld [vmem:[#allocation6 + $0xb0] sm:$0xf]
        %v3908 = vld [vmem:[#allocation6 + $0xb4] sm:$0xf]
        %v3909 = vld [vmem:[#allocation6 + $0xb8] sm:$0xf]
        %v3910 = vld [vmem:[#allocation6 + $0xbc] sm:$0xf]
        %v3911 = vld [vmem:[#allocation6 + $0xc0] sm:$0xf]
        %v3912 = vld [vmem:[#allocation6 + $0xc4] sm:$0xf]
        %v3913 = vld [vmem:[#allocation6 + $0xc8] sm:$0xf]
        %v3914 = vld [vmem:[#allocation6 + $0xcc] sm:$0xf]
        %v3915 = vld [vmem:[#allocation6 + $0xd0] sm:$0xf]
        %v3916 = vld [vmem:[#allocation6 + $0xd4] sm:$0xf]
        %v3917 = vld [vmem:[#allocation6 + $0xd8] sm:$0xf]
        %v3918 = vld [vmem:[#allocation6 + $0xdc] sm:$0xf]
        %v3919 = vld [vmem:[#allocation6 + $0xe0] sm:$0xf]
        %v3920 = vld [vmem:[#allocation6 + $0xe4] sm:$0xf]
        %v3921 = vld [vmem:[#allocation6 + $0xe8] sm:$0xf]
        %v3922 = vld [vmem:[#allocation6 + $0xec] sm:$0xf]
        %v3923 = vld [vmem:[#allocation6 + $0xf0] sm:$0xf]
        %v3924 = vld [vmem:[#allocation6 + $0xf4] sm:$0xf]
        %v3925 = vld [vmem:[#allocation6 + $0xf8] sm:$0xf]
        %v3926 = vld [vmem:[#allocation6 + $0xfc] sm:$0xf]
        %v3927 = vld [vmem:[#allocation6 + $0x100] sm:$0xf]
        %v3928 = vld [vmem:[#allocation6 + $0x104] sm:$0xf]
        %v3929 = vld [vmem:[#allocation6 + $0x108] sm:$0xf]
        %v3930 = vld [vmem:[#allocation6 + $0x10c] sm:$0xf]
        %v3931 = vld [vmem:[#allocation6 + $0x110] sm:$0xf]
        %v3932 = vld [vmem:[#allocation6 + $0x114] sm:$0xf]
        %v3933 = vld [vmem:[#allocation6 + $0x118] sm:$0xf]
        %v3934 = vld [vmem:[#allocation6 + $0x11c] sm:$0xf]
        %v3935 = vld [vmem:[#allocation6 + $0x120] sm:$0xf]
        %v3936 = vld [vmem:[#allocation6 + $0x124] sm:$0xf]
        %v3937 = vld [vmem:[#allocation6 + $0x128] sm:$0xf]
        %v3938 = vld [vmem:[#allocation6 + $0x12c] sm:$0xf]
        %v3939 = vld [vmem:[#allocation6 + $0x130] sm:$0xf]
        %v3940 = vld [vmem:[#allocation6 + $0x134] sm:$0xf]
        %v3941 = vld [vmem:[#allocation6 + $0x138] sm:$0xf]
        %v3942 = vld [vmem:[#allocation6 + $0x13c] sm:$0xf]
        %v3943 = vld [vmem:[#allocation6 + $0x140] sm:$0xf]
        %v3944 = vld [vmem:[#allocation6 + $0x144] sm:$0xf]
        %v3945 = vld [vmem:[#allocation6 + $0x148] sm:$0xf]
        %v3946 = vld [vmem:[#allocation6 + $0x14c] sm:$0xf]
        %v3947 = vld [vmem:[#allocation6 + $0x150] sm:$0xf]
        %v3948 = vld [vmem:[#allocation6 + $0x154] sm:$0xf]
        %v3949 = vld [vmem:[#allocation6 + $0x158] sm:$0xf]
        %v3950 = vld [vmem:[#allocation6 + $0x15c] sm:$0xf]
        %v3951 = vld [vmem:[#allocation6 + $0x160] sm:$0xf]
        %v3952 = vld [vmem:[#allocation6 + $0x164] sm:$0xf]
        %v3953 = vld [vmem:[#allocation6 + $0x168] sm:$0xf]
        %v3954 = vld [vmem:[#allocation6 + $0x16c] sm:$0xf]
        %v3955 = vld [vmem:[#allocation6 + $0x170] sm:$0xf]
        %v3956 = vld [vmem:[#allocation6 + $0x174] sm:$0xf]
        %v3957 = vld [vmem:[#allocation6 + $0x178] sm:$0xf]
        %v3958 = vld [vmem:[#allocation6 + $0x17c] sm:$0xf]
        %v3959 = vld [vmem:[#allocation6 + $0x180] sm:$0xf]
        %v3960 = vld [vmem:[#allocation6 + $0x184] sm:$0xf]
        %v3961 = vld [vmem:[#allocation6 + $0x188] sm:$0xf]
        %v3962 = vld [vmem:[#allocation6 + $0x18c] sm:$0xf]
        %v3963 = vld [vmem:[#allocation6 + $0x190] sm:$0xf]
        %v3964 = vld [vmem:[#allocation6 + $0x194] sm:$0xf]
        %v3965 = vld [vmem:[#allocation6 + $0x198] sm:$0xf]
        %v3966 = vld [vmem:[#allocation6 + $0x19c] sm:$0xf]
        %v3967 = vld [vmem:[#allocation6 + $0x1a0] sm:$0xf]
        %v3968 = vld [vmem:[#allocation6 + $0x1a4] sm:$0xf]
        %v3969 = vld [vmem:[#allocation6 + $0x1a8] sm:$0xf]
        %v3970 = vld [vmem:[#allocation6 + $0x1ac] sm:$0xf]
        %v3971 = vld [vmem:[#allocation6 + $0x1b0] sm:$0xf]
        %v3972 = vld [vmem:[#allocation6 + $0x1b4] sm:$0xf]
        %v3973 = vld [vmem:[#allocation6 + $0x1b8] sm:$0xf]
        %v3974 = vld [vmem:[#allocation6 + $0x1bc] sm:$0xf]
        %v3975 = vld [vmem:[#allocation6 + $0x1c0] sm:$0xf]
        %v3976 = vld [vmem:[#allocation6 + $0x1c4] sm:$0xf]
        %v3977 = vld [vmem:[#allocation6 + $0x1c8] sm:$0xf]
        %v3978 = vld [vmem:[#allocation6 + $0x1cc] sm:$0xf]
        %v3979 = vld [vmem:[#allocation6 + $0x1d0] sm:$0xf]
        %v3980 = vld [vmem:[#allocation6 + $0x1d4] sm:$0xf]
        %v3981 = vld [vmem:[#allocation6 + $0x1d8] sm:$0xf]
        %v3982 = vld [vmem:[#allocation6 + $0x1dc] sm:$0xf]
        %v3983 = vld [vmem:[#allocation6 + $0x1e0] sm:$0xf]
        %v3984 = vld [vmem:[#allocation6 + $0x1e4] sm:$0xf]
        %v3985 = vld [vmem:[#allocation6 + $0x1e8] sm:$0xf]
        %v3986 = vld [vmem:[#allocation6 + $0x1ec] sm:$0xf]
        %v3987 = vld [vmem:[#allocation6 + $0x1f0] sm:$0xf]
        %v3988 = vld [vmem:[#allocation6 + $0x1f4] sm:$0xf]
        %v3989 = vld [vmem:[#allocation6 + $0x1f8] sm:$0xf]
        %v3990 = vld [vmem:[#allocation6 + $0x1fc] sm:$0xf]
        %v3991 = vld [vmem:[#allocation6 + $0x200] sm:$0xf]
        %v3992 = vld [vmem:[#allocation6 + $0x204] sm:$0xf]
        %v3993 = vld [vmem:[#allocation6 + $0x208] sm:$0xf]
        %v3994 = vld [vmem:[#allocation6 + $0x20c] sm:$0xf]
        %v3995 = vld [vmem:[#allocation6 + $0x210] sm:$0xf]
        %v3996 = vld [vmem:[#allocation6 + $0x214] sm:$0xf]
        %v3997 = vld [vmem:[#allocation6 + $0x218] sm:$0xf]
        %v3998 = vld [vmem:[#allocation6 + $0x21c] sm:$0xf]
        %v3999 = vld [vmem:[#allocation6 + $0x220] sm:$0xf]
        %v4000 = vld [vmem:[#allocation6 + $0x224] sm:$0xf]
        %v4001 = vld [vmem:[#allocation6 + $0x228] sm:$0xf]
        %v4002 = vld [vmem:[#allocation6 + $0x22c] sm:$0xf]
        %v4003 = vld [vmem:[#allocation6 + $0x230] sm:$0xf]
        %v4004 = vld [vmem:[#allocation6 + $0x234] sm:$0xf]
        %v4005 = vld [vmem:[#allocation6 + $0x238] sm:$0xf]
        %v4006 = vld [vmem:[#allocation6 + $0x23c] sm:$0xf]
        %v4007 = vpack.c.bf16 %v3316, %v3313
        %v4008 = vpack.c.bf16 %v3381, %v3378
        %v4009 = vpack.c.bf16 %v3446, %v3443
        %v4010 = vpack.c.bf16 %v3511, %v3508
        %v4011 = vpack.c.bf16 %v3576, %v3573
        %v4012 = vpack.c.bf16 %v3641, %v3638
        %v4013 = vpack.c.bf16 %v3706, %v3703
        %v4014 = vpack.c.bf16 %v3771, %v3768
        %v4015 = vpack.c.bf16 %v3836, %v3833
        %v4016 = vpack.c.bf16 %v3324, %v3321
        %v4017 = vpack.c.bf16 %v3389, %v3386
        %v4018 = vpack.c.bf16 %v3454, %v3451
        %v4019 = vpack.c.bf16 %v3519, %v3516
        %v4020 = vpack.c.bf16 %v3584, %v3581
        %v4021 = vpack.c.bf16 %v3649, %v3646
        %v4022 = vpack.c.bf16 %v3714, %v3711
        %v4023 = vpack.c.bf16 %v3779, %v3776
        %v4024 = vpack.c.bf16 %v3844, %v3841
        %v4025 = vpack.c.bf16 %v3332, %v3329
        %v4026 = vpack.c.bf16 %v3397, %v3394
        %v4027 = vpack.c.bf16 %v3462, %v3459
        %v4028 = vpack.c.bf16 %v3527, %v3524
        %v4029 = vpack.c.bf16 %v3592, %v3589
        %v4030 = vpack.c.bf16 %v3657, %v3654
        %v4031 = vpack.c.bf16 %v3722, %v3719
        %v4032 = vpack.c.bf16 %v3787, %v3784
        %v4033 = vpack.c.bf16 %v3852, %v3849
        %v4034 = vpack.c.bf16 %v3340, %v3337
        %v4035 = vpack.c.bf16 %v3405, %v3402
        %v4036 = vpack.c.bf16 %v3470, %v3467
        %v4037 = vpack.c.bf16 %v3535, %v3532
        %v4038 = vpack.c.bf16 %v3600, %v3597
        %v4039 = vpack.c.bf16 %v3665, %v3662
        %v4040 = vpack.c.bf16 %v3730, %v3727
        %v4041 = vpack.c.bf16 %v3795, %v3792
        %v4042 = vpack.c.bf16 %v3860, %v3857
        %v4043 = vld [vmem:[%s13] sm:$0x1]
        %v4045 = vlaneseq
        %v4046 = vshrl.u32 %v4045, 7
        %v4047 = vsub.s32 0, %v4046
        %v4048 = vrot.slane %v4043, %v4047
        %v4194 = vunpack.c.l.b16 %v3863
        %v4195 = vunpack.c.l.b16 %v3864
        %v4196 = vunpack.c.l.b16 %v3865
        %v4197 = vunpack.c.l.b16 %v3866
        %v4198 = vunpack.c.l.b16 %v3867
        %v4199 = vunpack.c.l.b16 %v3868
        %v4200 = vunpack.c.l.b16 %v3869
        %v4201 = vunpack.c.l.b16 %v3870
        %v4202 = vunpack.c.l.b16 %v3871
        %v4203 = vunpack.c.l.b16 %v3872
        %v4204 = vunpack.c.l.b16 %v3873
        %v4205 = vunpack.c.l.b16 %v3874
        %v4206 = vunpack.c.l.b16 %v3875
        %v4207 = vunpack.c.l.b16 %v3876
        %v4208 = vunpack.c.l.b16 %v3877
        %v4209 = vunpack.c.l.b16 %v3878
        %v4210 = vunpack.c.l.b16 %v3879
        %v4211 = vunpack.c.l.b16 %v3880
        %v4212 = vunpack.c.l.b16 %v3881
        %v4213 = vunpack.c.l.b16 %v3882
        %v4214 = vunpack.c.l.b16 %v3883
        %v4215 = vunpack.c.l.b16 %v3884
        %v4216 = vunpack.c.l.b16 %v3885
        %v4217 = vunpack.c.l.b16 %v3886
        %v4218 = vunpack.c.l.b16 %v3887
        %v4219 = vunpack.c.l.b16 %v3888
        %v4220 = vunpack.c.l.b16 %v3889
        %v4221 = vunpack.c.l.b16 %v3890
        %v4222 = vunpack.c.l.b16 %v3891
        %v4223 = vunpack.c.l.b16 %v3892
        %v4224 = vunpack.c.l.b16 %v3893
        %v4225 = vunpack.c.l.b16 %v3894
        %v4226 = vunpack.c.l.b16 %v3895
        %v4227 = vunpack.c.l.b16 %v3896
        %v4228 = vunpack.c.l.b16 %v3897
        %v4229 = vunpack.c.l.b16 %v3898
        %v4230 = vunpack.c.l.b16 %v3899
        %v4231 = vunpack.c.l.b16 %v3900
        %v4232 = vunpack.c.l.b16 %v3901
        %v4233 = vunpack.c.l.b16 %v3902
        %v4234 = vunpack.c.l.b16 %v3903
        %v4235 = vunpack.c.l.b16 %v3904
        %v4236 = vunpack.c.l.b16 %v3905
        %v4237 = vunpack.c.l.b16 %v3906
        %v4238 = vunpack.c.l.b16 %v3907
        %v4239 = vunpack.c.l.b16 %v3908
        %v4240 = vunpack.c.l.b16 %v3909
        %v4241 = vunpack.c.l.b16 %v3910
        %v4242 = vunpack.c.l.b16 %v3911
        %v4243 = vunpack.c.l.b16 %v3912
        %v4244 = vunpack.c.l.b16 %v3913
        %v4245 = vunpack.c.l.b16 %v3914
        %v4246 = vunpack.c.l.b16 %v3915
        %v4247 = vunpack.c.l.b16 %v3916
        %v4248 = vunpack.c.l.b16 %v3917
        %v4249 = vunpack.c.l.b16 %v3918
        %v4250 = vunpack.c.l.b16 %v3919
        %v4251 = vunpack.c.l.b16 %v3920
        %v4252 = vunpack.c.l.b16 %v3921
        %v4253 = vunpack.c.l.b16 %v3922
        %v4254 = vunpack.c.l.b16 %v3923
        %v4255 = vunpack.c.l.b16 %v3924
        %v4256 = vunpack.c.l.b16 %v3925
        %v4257 = vunpack.c.l.b16 %v3926
        %v4258 = vunpack.c.l.b16 %v3927
        %v4259 = vunpack.c.l.b16 %v3928
        %v4260 = vunpack.c.l.b16 %v3929
        %v4261 = vunpack.c.l.b16 %v3930
        %v4262 = vunpack.c.l.b16 %v3931
        %v4263 = vunpack.c.l.b16 %v3932
        %v4264 = vunpack.c.l.b16 %v3933
        %v4265 = vunpack.c.l.b16 %v3934
        %v4266 = vunpack.c.l.b16 %v3935
        %v4267 = vunpack.c.l.b16 %v3936
        %v4268 = vunpack.c.l.b16 %v3937
        %v4269 = vunpack.c.l.b16 %v3938
        %v4270 = vunpack.c.l.b16 %v3939
        %v4271 = vunpack.c.l.b16 %v3940
        %v4272 = vunpack.c.l.b16 %v3941
        %v4273 = vunpack.c.l.b16 %v3942
        %v4274 = vunpack.c.l.b16 %v3943
        %v4275 = vunpack.c.l.b16 %v3944
        %v4276 = vunpack.c.l.b16 %v3945
        %v4277 = vunpack.c.l.b16 %v3946
        %v4278 = vunpack.c.l.b16 %v3947
        %v4279 = vunpack.c.l.b16 %v3948
        %v4280 = vunpack.c.l.b16 %v3949
        %v4281 = vunpack.c.l.b16 %v3950
        %v4282 = vunpack.c.l.b16 %v3951
        %v4283 = vunpack.c.l.b16 %v3952
        %v4284 = vunpack.c.l.b16 %v3953
        %v4285 = vunpack.c.l.b16 %v3954
        %v4286 = vunpack.c.l.b16 %v3955
        %v4287 = vunpack.c.l.b16 %v3956
        %v4288 = vunpack.c.l.b16 %v3957
        %v4289 = vunpack.c.l.b16 %v3958
        %v4290 = vunpack.c.l.b16 %v3959
        %v4291 = vunpack.c.l.b16 %v3960
        %v4292 = vunpack.c.l.b16 %v3961
        %v4293 = vunpack.c.l.b16 %v3962
        %v4294 = vunpack.c.l.b16 %v3963
        %v4295 = vunpack.c.l.b16 %v3964
        %v4296 = vunpack.c.l.b16 %v3965
        %v4297 = vunpack.c.l.b16 %v3966
        %v4298 = vunpack.c.l.b16 %v3967
        %v4299 = vunpack.c.l.b16 %v3968
        %v4300 = vunpack.c.l.b16 %v3969
        %v4301 = vunpack.c.l.b16 %v3970
        %v4302 = vunpack.c.l.b16 %v3971
        %v4303 = vunpack.c.l.b16 %v3972
        %v4304 = vunpack.c.l.b16 %v3973
        %v4305 = vunpack.c.l.b16 %v3974
        %v4306 = vunpack.c.l.b16 %v3975
        %v4307 = vunpack.c.l.b16 %v3976
        %v4308 = vunpack.c.l.b16 %v3977
        %v4309 = vunpack.c.l.b16 %v3978
        %v4310 = vunpack.c.l.b16 %v3979
        %v4311 = vunpack.c.l.b16 %v3980
        %v4312 = vunpack.c.l.b16 %v3981
        %v4313 = vunpack.c.l.b16 %v3982
        %v4314 = vunpack.c.l.b16 %v3983
        %v4315 = vunpack.c.l.b16 %v3984
        %v4316 = vunpack.c.l.b16 %v3985
        %v4317 = vunpack.c.l.b16 %v3986
        %v4318 = vunpack.c.l.b16 %v3987
        %v4319 = vunpack.c.l.b16 %v3988
        %v4320 = vunpack.c.l.b16 %v3989
        %v4321 = vunpack.c.l.b16 %v3990
        %v4322 = vunpack.c.l.b16 %v3991
        %v4323 = vunpack.c.l.b16 %v3992
        %v4324 = vunpack.c.l.b16 %v3993
        %v4325 = vunpack.c.l.b16 %v3994
        %v4326 = vunpack.c.l.b16 %v3995
        %v4327 = vunpack.c.l.b16 %v3996
        %v4328 = vunpack.c.l.b16 %v3997
        %v4329 = vunpack.c.l.b16 %v3998
        %v4330 = vunpack.c.l.b16 %v3999
        %v4331 = vunpack.c.l.b16 %v4000
        %v4332 = vunpack.c.l.b16 %v4001
        %v4333 = vunpack.c.l.b16 %v4002
        %v4334 = vunpack.c.l.b16 %v4003
        %v4335 = vunpack.c.l.b16 %v4004
        %v4336 = vunpack.c.l.b16 %v4005
        %v4337 = vunpack.c.l.b16 %v4006
        %v4338 = vpack.c.b16 %v4195, %v4194
        %v4339 = vpack.c.b16 %v4197, %v4196
        %v4340 = vpack.c.b16 %v4199, %v4198
        %v4341 = vpack.c.b16 %v4201, %v4200
        %v4342 = vpack.c.b16 %v4203, %v4202
        %v4343 = vpack.c.b16 %v4205, %v4204
        %v4344 = vpack.c.b16 %v4207, %v4206
        %v4345 = vpack.c.b16 %v4209, %v4208
        %v4346 = vpack.c.b16 %v4211, %v4210
        %v4347 = vpack.c.b16 %v4213, %v4212
        %v4348 = vpack.c.b16 %v4215, %v4214
        %v4349 = vpack.c.b16 %v4217, %v4216
        %v4350 = vpack.c.b16 %v4219, %v4218
        %v4351 = vpack.c.b16 %v4221, %v4220
        %v4352 = vpack.c.b16 %v4223, %v4222
        %v4353 = vpack.c.b16 %v4225, %v4224
        %v4354 = vpack.c.b16 %v4227, %v4226
        %v4355 = vpack.c.b16 %v4229, %v4228
        %v4356 = vpack.c.b16 %v4231, %v4230
        %v4357 = vpack.c.b16 %v4233, %v4232
        %v4358 = vpack.c.b16 %v4235, %v4234
        %v4359 = vpack.c.b16 %v4237, %v4236
        %v4360 = vpack.c.b16 %v4239, %v4238
        %v4361 = vpack.c.b16 %v4241, %v4240
        %v4362 = vpack.c.b16 %v4243, %v4242
        %v4363 = vpack.c.b16 %v4245, %v4244
        %v4364 = vpack.c.b16 %v4247, %v4246
        %v4365 = vpack.c.b16 %v4249, %v4248
        %v4366 = vpack.c.b16 %v4251, %v4250
        %v4367 = vpack.c.b16 %v4253, %v4252
        %v4368 = vpack.c.b16 %v4255, %v4254
        %v4369 = vpack.c.b16 %v4257, %v4256
        %v4370 = vpack.c.b16 %v4259, %v4258
        %v4371 = vpack.c.b16 %v4261, %v4260
        %v4372 = vpack.c.b16 %v4263, %v4262
        %v4373 = vpack.c.b16 %v4265, %v4264
        %v4374 = vpack.c.b16 %v4267, %v4266
        %v4375 = vpack.c.b16 %v4269, %v4268
        %v4376 = vpack.c.b16 %v4271, %v4270
        %v4377 = vpack.c.b16 %v4273, %v4272
        %v4378 = vpack.c.b16 %v4275, %v4274
        %v4379 = vpack.c.b16 %v4277, %v4276
        %v4380 = vpack.c.b16 %v4279, %v4278
        %v4381 = vpack.c.b16 %v4281, %v4280
        %v4382 = vpack.c.b16 %v4283, %v4282
        %v4383 = vpack.c.b16 %v4285, %v4284
        %v4384 = vpack.c.b16 %v4287, %v4286
        %v4385 = vpack.c.b16 %v4289, %v4288
        %v4386 = vpack.c.b16 %v4291, %v4290
        %v4387 = vpack.c.b16 %v4293, %v4292
        %v4388 = vpack.c.b16 %v4295, %v4294
        %v4389 = vpack.c.b16 %v4297, %v4296
        %v4390 = vpack.c.b16 %v4299, %v4298
        %v4391 = vpack.c.b16 %v4301, %v4300
        %v4392 = vpack.c.b16 %v4303, %v4302
        %v4393 = vpack.c.b16 %v4305, %v4304
        %v4394 = vpack.c.b16 %v4307, %v4306
        %v4395 = vpack.c.b16 %v4309, %v4308
        %v4396 = vpack.c.b16 %v4311, %v4310
        %v4397 = vpack.c.b16 %v4313, %v4312
        %v4398 = vpack.c.b16 %v4315, %v4314
        %v4399 = vpack.c.b16 %v4317, %v4316
        %v4400 = vpack.c.b16 %v4319, %v4318
        %v4401 = vpack.c.b16 %v4321, %v4320
        %v4402 = vpack.c.b16 %v4323, %v4322
        %v4403 = vpack.c.b16 %v4325, %v4324
        %v4404 = vpack.c.b16 %v4327, %v4326
        %v4405 = vpack.c.b16 %v4329, %v4328
        %v4406 = vpack.c.b16 %v4331, %v4330
        %v4407 = vpack.c.b16 %v4333, %v4332
        %v4408 = vpack.c.b16 %v4335, %v4334
        %v4409 = vpack.c.b16 %v4337, %v4336
        %4482 = vmatprep.subr.bf16.mxu0 0
        %4483 = vmatpush1.bf16.msra.mxu0 %v4345
        %4484 = vmatprep.subr.bf16.mxu0 0
        %4485 = vmatpush1.bf16.msra.mxu0 %v4344
        %4486 = vmatprep.subr.bf16.mxu0 0
        %4487 = vmatpush1.bf16.msra.mxu0 %v4343
        %4488 = vmatprep.subr.bf16.mxu0 0
        %4489 = vmatpush1.bf16.msra.mxu0 %v4342
        %4490 = vmatprep.subr.bf16.mxu0 0
        %4491 = vmatpush1.bf16.msra.mxu0 %v4341
        %4492 = vmatprep.subr.bf16.mxu0 0
        %4493 = vmatpush1.bf16.msra.mxu0 %v4340
        %4494 = vmatprep.subr.bf16.mxu0 0
        %4495 = vmatpush1.bf16.msra.mxu0 %v4339
        %4496 = vmatprep.subr.bf16.mxu0 0
        %4497 = vmatpush1.bf16.msra.mxu0 %v4338
        %4498 = vmatprep.subr.bf16.mxu0 0
        %4499 = vmatpush2.bf16.msra.mxu0 %v4353
        %4500 = vmatprep.subr.bf16.mxu0 0
        %4501 = vmatpush2.bf16.msra.mxu0 %v4352
        %4502 = vmatprep.subr.bf16.mxu0 0
        %4503 = vmatpush2.bf16.msra.mxu0 %v4351
        %4504 = vmatprep.subr.bf16.mxu0 0
        %4505 = vmatpush2.bf16.msra.mxu0 %v4350
        %4506 = vmatprep.subr.bf16.mxu0 0
        %4507 = vmatpush2.bf16.msra.mxu0 %v4349
        %4508 = vmatprep.subr.bf16.mxu0 0
        %4509 = vmatpush2.bf16.msra.mxu0 %v4348
        %4510 = vmatprep.subr.bf16.mxu0 0
        %4511 = vmatpush2.bf16.msra.mxu0 %v4347
        %4512 = vmatprep.subr.bf16.mxu0 0
        %4513 = vmatpush2.bf16.msra.mxu0 %v4346
        %4514 = vmatprep.mubr.bf16.mxu0 %v4008
        %4515 = vmatmul.mubr.bf16.gmra.mxu0 %v4007
        %v4516 = vpop.f32.mrf.mxu0
        %v4517 = vadd.f32 %v4048, %v4516
        %v4518 = vpop.f32.mrf.mxu0
        %v4519 = vpop.f32.mrf.mxu0
        %v4520 = vadd.f32 %v4048, %v4519
        %v4521 = vpop.f32.mrf.mxu0
        %4522 = vmatprep.mubr.bf16.mxu0 %v4017
        %4523 = vmatmul.mubr.bf16.gmra.mxu0 %v4016
        %v4524 = vpop.f32.mrf.mxu0
        %v4525 = vadd.f32 %v4048, %v4524
        %v4526 = vpop.f32.mrf.mxu0
        %v4527 = vpop.f32.mrf.mxu0
        %v4528 = vadd.f32 %v4048, %v4527
        %v4529 = vpop.f32.mrf.mxu0
        %4530 = vmatprep.mubr.bf16.mxu0 %v4026
        %4531 = vmatmul.mubr.bf16.gmra.mxu0 %v4025
        %v4532 = vpop.f32.mrf.mxu0
        %v4533 = vadd.f32 %v4048, %v4532
        %v4534 = vpop.f32.mrf.mxu0
        %v4535 = vpop.f32.mrf.mxu0
        %v4536 = vadd.f32 %v4048, %v4535
        %v4537 = vpop.f32.mrf.mxu0
        %4538 = vmatprep.mubr.bf16.mxu0 %v4035
        %4539 = vmatmul.mubr.bf16.gmra.mxu0 %v4034
        %v4540 = vpop.f32.mrf.mxu0
        %v4541 = vadd.f32 %v4048, %v4540
        %v4542 = vpop.f32.mrf.mxu0
        %v4543 = vpop.f32.mrf.mxu0
        %v4544 = vadd.f32 %v4048, %v4543
        %v4545 = vpop.f32.mrf.mxu0
        %4546 = vdwg.mxu0
        %4547 = vmatprep.subr.bf16.mxu0 0
        %4548 = vmatpush1.bf16.msra.mxu0 %v4361
        %4549 = vmatprep.subr.bf16.mxu0 0
        %4550 = vmatpush1.bf16.msra.mxu0 %v4360
        %4551 = vmatprep.subr.bf16.mxu0 0
        %4552 = vmatpush1.bf16.msra.mxu0 %v4359
        %4553 = vmatprep.subr.bf16.mxu0 0
        %4554 = vmatpush1.bf16.msra.mxu0 %v4358
        %4555 = vmatprep.subr.bf16.mxu0 0
        %4556 = vmatpush1.bf16.msra.mxu0 %v4357
        %4557 = vmatprep.subr.bf16.mxu0 0
        %4558 = vmatpush1.bf16.msra.mxu0 %v4356
        %4559 = vmatprep.subr.bf16.mxu0 0
        %4560 = vmatpush1.bf16.msra.mxu0 %v4355
        %4561 = vmatprep.subr.bf16.mxu0 0
        %4562 = vmatpush1.bf16.msra.mxu0 %v4354
        %4563 = vmatprep.subr.bf16.mxu0 0
        %4564 = vmatpush2.bf16.msra.mxu0 %v4369
        %4565 = vmatprep.subr.bf16.mxu0 0
        %4566 = vmatpush2.bf16.msra.mxu0 %v4368
        %4567 = vmatprep.subr.bf16.mxu0 0
        %4568 = vmatpush2.bf16.msra.mxu0 %v4367
        %4569 = vmatprep.subr.bf16.mxu0 0
        %4570 = vmatpush2.bf16.msra.mxu0 %v4366
        %4571 = vmatprep.subr.bf16.mxu0 0
        %4572 = vmatpush2.bf16.msra.mxu0 %v4365
        %4573 = vmatprep.subr.bf16.mxu0 0
        %4574 = vmatpush2.bf16.msra.mxu0 %v4364
        %4575 = vmatprep.subr.bf16.mxu0 0
        %4576 = vmatpush2.bf16.msra.mxu0 %v4363
        %4577 = vmatprep.subr.bf16.mxu0 0
        %4578 = vmatpush2.bf16.msra.mxu0 %v4362
        %4579 = vmatprep.mubr.bf16.mxu0 %v4010
        %4580 = vmatmul.mubr.bf16.gmra.mxu0 %v4009
        %v4581 = vpop.f32.mrf.mxu0
        %v4582 = vadd.f32 %v4517, %v4581
        %v4583 = vpop.f32.mrf.mxu0
        %v4584 = vpop.f32.mrf.mxu0
        %v4585 = vadd.f32 %v4520, %v4584
        %v4586 = vpop.f32.mrf.mxu0
        %4587 = vmatprep.mubr.bf16.mxu0 %v4019
        %4588 = vmatmul.mubr.bf16.gmra.mxu0 %v4018
        %v4589 = vpop.f32.mrf.mxu0
        %v4590 = vadd.f32 %v4525, %v4589
        %v4591 = vpop.f32.mrf.mxu0
        %v4592 = vpop.f32.mrf.mxu0
        %v4593 = vadd.f32 %v4528, %v4592
        %v4594 = vpop.f32.mrf.mxu0
        %4595 = vmatprep.mubr.bf16.mxu0 %v4028
        %4596 = vmatmul.mubr.bf16.gmra.mxu0 %v4027
        %v4597 = vpop.f32.mrf.mxu0
        %v4598 = vadd.f32 %v4533, %v4597
        %v4599 = vpop.f32.mrf.mxu0
        %v4600 = vpop.f32.mrf.mxu0
        %v4601 = vadd.f32 %v4536, %v4600
        %v4602 = vpop.f32.mrf.mxu0
        %4603 = vmatprep.mubr.bf16.mxu0 %v4037
        %4604 = vmatmul.mubr.bf16.gmra.mxu0 %v4036
        %v4605 = vpop.f32.mrf.mxu0
        %v4606 = vadd.f32 %v4541, %v4605
        %v4607 = vpop.f32.mrf.mxu0
        %v4608 = vpop.f32.mrf.mxu0
        %v4609 = vadd.f32 %v4544, %v4608
        %v4610 = vpop.f32.mrf.mxu0
        %4611 = vdwg.mxu0
        %4612 = vmatprep.subr.bf16.mxu0 0
        %4613 = vmatpush1.bf16.msra.mxu0 %v4377
        %4614 = vmatprep.subr.bf16.mxu0 0
        %4615 = vmatpush1.bf16.msra.mxu0 %v4376
        %4616 = vmatprep.subr.bf16.mxu0 0
        %4617 = vmatpush1.bf16.msra.mxu0 %v4375
        %4618 = vmatprep.subr.bf16.mxu0 0
        %4619 = vmatpush1.bf16.msra.mxu0 %v4374
        %4620 = vmatprep.subr.bf16.mxu0 0
        %4621 = vmatpush1.bf16.msra.mxu0 %v4373
        %4622 = vmatprep.subr.bf16.mxu0 0
        %4623 = vmatpush1.bf16.msra.mxu0 %v4372
        %4624 = vmatprep.subr.bf16.mxu0 0
        %4625 = vmatpush1.bf16.msra.mxu0 %v4371
        %4626 = vmatprep.subr.bf16.mxu0 0
        %4627 = vmatpush1.bf16.msra.mxu0 %v4370
        %4628 = vmatprep.subr.bf16.mxu0 0
        %4629 = vmatpush2.bf16.msra.mxu0 %v4385
        %4630 = vmatprep.subr.bf16.mxu0 0
        %4631 = vmatpush2.bf16.msra.mxu0 %v4384
        %4632 = vmatprep.subr.bf16.mxu0 0
        %4633 = vmatpush2.bf16.msra.mxu0 %v4383
        %4634 = vmatprep.subr.bf16.mxu0 0
        %4635 = vmatpush2.bf16.msra.mxu0 %v4382
        %4636 = vmatprep.subr.bf16.mxu0 0
        %4637 = vmatpush2.bf16.msra.mxu0 %v4381
        %4638 = vmatprep.subr.bf16.mxu0 0
        %4639 = vmatpush2.bf16.msra.mxu0 %v4380
        %4640 = vmatprep.subr.bf16.mxu0 0
        %4641 = vmatpush2.bf16.msra.mxu0 %v4379
        %4642 = vmatprep.subr.bf16.mxu0 0
        %4643 = vmatpush2.bf16.msra.mxu0 %v4378
        %4644 = vmatprep.mubr.bf16.mxu0 %v4012
        %4645 = vmatmul.mubr.bf16.gmra.mxu0 %v4011
        %v4646 = vpop.f32.mrf.mxu0
        %v4647 = vadd.f32 %v4582, %v4646
        %v4648 = vpop.f32.mrf.mxu0
        %v4649 = vpop.f32.mrf.mxu0
        %v4650 = vadd.f32 %v4585, %v4649
        %v4651 = vpop.f32.mrf.mxu0
        %4652 = vmatprep.mubr.bf16.mxu0 %v4021
        %4653 = vmatmul.mubr.bf16.gmra.mxu0 %v4020
        %v4654 = vpop.f32.mrf.mxu0
        %v4655 = vadd.f32 %v4590, %v4654
        %v4656 = vpop.f32.mrf.mxu0
        %v4657 = vpop.f32.mrf.mxu0
        %v4658 = vadd.f32 %v4593, %v4657
        %v4659 = vpop.f32.mrf.mxu0
        %4660 = vmatprep.mubr.bf16.mxu0 %v4030
        %4661 = vmatmul.mubr.bf16.gmra.mxu0 %v4029
        %v4662 = vpop.f32.mrf.mxu0
        %v4663 = vadd.f32 %v4598, %v4662
        %v4664 = vpop.f32.mrf.mxu0
        %v4665 = vpop.f32.mrf.mxu0
        %v4666 = vadd.f32 %v4601, %v4665
        %v4667 = vpop.f32.mrf.mxu0
        %4668 = vmatprep.mubr.bf16.mxu0 %v4039
        %4669 = vmatmul.mubr.bf16.gmra.mxu0 %v4038
        %v4670 = vpop.f32.mrf.mxu0
        %v4671 = vadd.f32 %v4606, %v4670
        %v4672 = vpop.f32.mrf.mxu0
        %v4673 = vpop.f32.mrf.mxu0
        %v4674 = vadd.f32 %v4609, %v4673
        %v4675 = vpop.f32.mrf.mxu0
        %4676 = vdwg.mxu0
        %4677 = vmatprep.subr.bf16.mxu0 0
        %4678 = vmatpush1.bf16.msra.mxu0 %v4393
        %4679 = vmatprep.subr.bf16.mxu0 0
        %4680 = vmatpush1.bf16.msra.mxu0 %v4392
        %4681 = vmatprep.subr.bf16.mxu0 0
        %4682 = vmatpush1.bf16.msra.mxu0 %v4391
        %4683 = vmatprep.subr.bf16.mxu0 0
        %4684 = vmatpush1.bf16.msra.mxu0 %v4390
        %4685 = vmatprep.subr.bf16.mxu0 0
        %4686 = vmatpush1.bf16.msra.mxu0 %v4389
        %4687 = vmatprep.subr.bf16.mxu0 0
        %4688 = vmatpush1.bf16.msra.mxu0 %v4388
        %4689 = vmatprep.subr.bf16.mxu0 0
        %4690 = vmatpush1.bf16.msra.mxu0 %v4387
        %4691 = vmatprep.subr.bf16.mxu0 0
        %4692 = vmatpush1.bf16.msra.mxu0 %v4386
        %4693 = vmatprep.subr.bf16.mxu0 0
        %4694 = vmatpush2.bf16.msra.mxu0 %v4401
        %4695 = vmatprep.subr.bf16.mxu0 0
        %4696 = vmatpush2.bf16.msra.mxu0 %v4400
        %4697 = vmatprep.subr.bf16.mxu0 0
        %4698 = vmatpush2.bf16.msra.mxu0 %v4399
        %4699 = vmatprep.subr.bf16.mxu0 0
        %4700 = vmatpush2.bf16.msra.mxu0 %v4398
        %4701 = vmatprep.subr.bf16.mxu0 0
        %4702 = vmatpush2.bf16.msra.mxu0 %v4397
        %4703 = vmatprep.subr.bf16.mxu0 0
        %4704 = vmatpush2.bf16.msra.mxu0 %v4396
        %4705 = vmatprep.subr.bf16.mxu0 0
        %4706 = vmatpush2.bf16.msra.mxu0 %v4395
        %4707 = vmatprep.subr.bf16.mxu0 0
        %4708 = vmatpush2.bf16.msra.mxu0 %v4394
        %4709 = vmatprep.mubr.bf16.mxu0 %v4014
        %4710 = vmatmul.mubr.bf16.gmra.mxu0 %v4013
        %v4711 = vpop.f32.mrf.mxu0
        %v4712 = vadd.f32 %v4647, %v4711
        %v4713 = vpop.f32.mrf.mxu0
        %v4714 = vpop.f32.mrf.mxu0
        %v4715 = vadd.f32 %v4650, %v4714
        %v4716 = vpop.f32.mrf.mxu0
        %4717 = vmatprep.mubr.bf16.mxu0 %v4023
        %4718 = vmatmul.mubr.bf16.gmra.mxu0 %v4022
        %v4719 = vpop.f32.mrf.mxu0
        %v4720 = vadd.f32 %v4655, %v4719
        %v4721 = vpop.f32.mrf.mxu0
        %v4722 = vpop.f32.mrf.mxu0
        %v4723 = vadd.f32 %v4658, %v4722
        %v4724 = vpop.f32.mrf.mxu0
        %4725 = vmatprep.mubr.bf16.mxu0 %v4032
        %4726 = vmatmul.mubr.bf16.gmra.mxu0 %v4031
        %v4727 = vpop.f32.mrf.mxu0
        %v4728 = vadd.f32 %v4663, %v4727
        %v4729 = vpop.f32.mrf.mxu0
        %v4730 = vpop.f32.mrf.mxu0
        %v4731 = vadd.f32 %v4666, %v4730
        %v4732 = vpop.f32.mrf.mxu0
        %4733 = vmatprep.mubr.bf16.mxu0 %v4041
        %4734 = vmatmul.mubr.bf16.gmra.mxu0 %v4040
        %v4735 = vpop.f32.mrf.mxu0
        %v4736 = vadd.f32 %v4671, %v4735
        %v4737 = vpop.f32.mrf.mxu0
        %v4738 = vpop.f32.mrf.mxu0
        %v4739 = vadd.f32 %v4674, %v4738
        %v4740 = vpop.f32.mrf.mxu0
        %4741 = vdwg.mxu0
        %4742 = vmatprep.subr.bf16.mxu0 0
        %4743 = vmatpush1.bf16.msra.mxu0 %v4409
        %4744 = vmatprep.subr.bf16.mxu0 0
        %4745 = vmatpush1.bf16.msra.mxu0 %v4408
        %4746 = vmatprep.subr.bf16.mxu0 0
        %4747 = vmatpush1.bf16.msra.mxu0 %v4407
        %4748 = vmatprep.subr.bf16.mxu0 0
        %4749 = vmatpush1.bf16.msra.mxu0 %v4406
        %4750 = vmatprep.subr.bf16.mxu0 0
        %4751 = vmatpush1.bf16.msra.mxu0 %v4405
        %4752 = vmatprep.subr.bf16.mxu0 0
        %4753 = vmatpush1.bf16.msra.mxu0 %v4404
        %4754 = vmatprep.subr.bf16.mxu0 0
        %4755 = vmatpush1.bf16.msra.mxu0 %v4403
        %4756 = vmatprep.subr.bf16.mxu0 0
        %4757 = vmatpush1.bf16.msra.mxu0 %v4402
        %4758 = vmatprep.subr.bf16.mxu0 0
        %4759 = vmatpush2.bf16.msra.mxu0 0
        %4760 = vmatprep.subr.bf16.mxu0 0
        %4761 = vmatpush2.bf16.msra.mxu0 0
        %4762 = vmatprep.subr.bf16.mxu0 0
        %4763 = vmatpush2.bf16.msra.mxu0 0
        %4764 = vmatprep.subr.bf16.mxu0 0
        %4765 = vmatpush2.bf16.msra.mxu0 0
        %4766 = vmatprep.subr.bf16.mxu0 0
        %4767 = vmatpush2.bf16.msra.mxu0 0
        %4768 = vmatprep.subr.bf16.mxu0 0
        %4769 = vmatpush2.bf16.msra.mxu0 0
        %4770 = vmatprep.subr.bf16.mxu0 0
        %4771 = vmatpush2.bf16.msra.mxu0 0
        %4772 = vmatprep.subr.bf16.mxu0 0
        %4773 = vmatpush2.bf16.msra.mxu0 0
        %4774 = vmatprep.mubr.bf16.mxu0 0
        %4775 = vmatmul.mubr.bf16.gmra.mxu0 %v4015
        %v4776 = vpop.f32.mrf.mxu0
        %v4777 = vadd.f32 %v4712, %v4776
        %v4778 = vpop.f32.mrf.mxu0
        %v4779 = vpop.f32.mrf.mxu0
        %v4780 = vadd.f32 %v4715, %v4779
        %v4781 = vpop.f32.mrf.mxu0
        %4782 = vmatprep.mubr.bf16.mxu0 0
        %4783 = vmatmul.mubr.bf16.gmra.mxu0 %v4024
        %v4784 = vpop.f32.mrf.mxu0
        %v4785 = vadd.f32 %v4720, %v4784
        %v4786 = vpop.f32.mrf.mxu0
        %v4787 = vpop.f32.mrf.mxu0
        %v4788 = vadd.f32 %v4723, %v4787
        %v4789 = vpop.f32.mrf.mxu0
        %4790 = vmatprep.mubr.bf16.mxu0 0
        %4791 = vmatmul.mubr.bf16.gmra.mxu0 %v4033
        %v4792 = vpop.f32.mrf.mxu0
        %v4793 = vadd.f32 %v4728, %v4792
        %v4794 = vpop.f32.mrf.mxu0
        %v4795 = vpop.f32.mrf.mxu0
        %v4796 = vadd.f32 %v4731, %v4795
        %v4797 = vpop.f32.mrf.mxu0
        %4798 = vmatprep.mubr.bf16.mxu0 0
        %4799 = vmatmul.mubr.bf16.gmra.mxu0 %v4042
        %v4800 = vpop.f32.mrf.mxu0
        %v4801 = vadd.f32 %v4736, %v4800
        %v4802 = vpop.f32.mrf.mxu0
        %v4803 = vpop.f32.mrf.mxu0
        %v4804 = vadd.f32 %v4739, %v4803
        %v4805 = vpop.f32.mrf.mxu0
        %4806 = vdwg.mxu0
        %v4807 = vmax.f32 %v4777, 0.0
        %v4808 = vmax.f32 %v4780, 0.0
        %v4809 = vmax.f32 %v4785, 0.0
        %v4810 = vmax.f32 %v4788, 0.0
        %v4811 = vmax.f32 %v4793, 0.0
        %v4812 = vmax.f32 %v4796, 0.0
        %v4813 = vmax.f32 %v4801, 0.0
        %v4814 = vmax.f32 %v4804, 0.0
        %v4815 = vld [vmem:[#allocation27] sm:$0xf]
        %v4816 = vld [vmem:[#allocation27 + $0x4] sm:$0xf]
        %v4817 = vpack.c.bf16 %v4808, %v4807
        %v4818 = vpack.c.bf16 %v4810, %v4809
        %v4819 = vpack.c.bf16 %v4812, %v4811
        %v4820 = vpack.c.bf16 %v4814, %v4813
        %v4823 = vunpack.c.l.b16 %v4815
        %v4824 = vunpack.c.l.b16 %v4816
        %v4825 = vpack.c.b16 %v4824, %v4823
        %v4827 = vsel %vm1396, %v4825, 0
        %4829 = vmatprep.subr.bf16.mxu0 0
        %4830 = vmatpush1.bf16.msra.mxu0 0
        %4831 = vmatprep.subr.bf16.mxu0 0
        %4832 = vmatpush1.bf16.msra.mxu0 0
        %4833 = vmatprep.subr.bf16.mxu0 0
        %4834 = vmatpush1.bf16.msra.mxu0 0
        %4835 = vmatprep.subr.bf16.mxu0 0
        %4836 = vmatpush1.bf16.msra.mxu0 0
        %4837 = vmatprep.subr.bf16.mxu0 0
        %4838 = vmatpush1.bf16.msra.mxu0 %v4820
        %4839 = vmatprep.subr.bf16.mxu0 0
        %4840 = vmatpush1.bf16.msra.mxu0 %v4819
        %4841 = vmatprep.subr.bf16.mxu0 0
        %4842 = vmatpush1.bf16.msra.mxu0 %v4818
        %4843 = vmatprep.subr.bf16.mxu0 0
        %4844 = vmatpush1.bf16.msra.mxu0 %v4817
        %4845 = vmatprep.subr.bf16.mxu0 0
        %4846 = vmatpush2.bf16.msra.mxu0 0
        %4847 = vmatprep.subr.bf16.mxu0 0
        %4848 = vmatpush2.bf16.msra.mxu0 0
        %4849 = vmatprep.subr.bf16.mxu0 0
        %4850 = vmatpush2.bf16.msra.mxu0 0
        %4851 = vmatprep.subr.bf16.mxu0 0
        %4852 = vmatpush2.bf16.msra.mxu0 0
        %4853 = vmatprep.subr.bf16.mxu0 0
        %4854 = vmatpush2.bf16.msra.mxu0 0
        %4855 = vmatprep.subr.bf16.mxu0 0
        %4856 = vmatpush2.bf16.msra.mxu0 0
        %4857 = vmatprep.subr.bf16.mxu0 0
        %4858 = vmatpush2.bf16.msra.mxu0 0
        %4859 = vmatprep.subr.bf16.mxu0 0
        %4860 = vmatpush2.bf16.msra.mxu0 0
        %4861 = vmatprep.mubr.bf16.mxu0 0
        %4862 = vmatmul.mubr.bf16.gmra.mxu0 %v4827
        %v4863 = vpop.f32.mrf.mxu0
        %v4864 = vadd.f32 0.0, %v4863
        %v4865 = vpop.f32.mrf.mxu0
        %v4866 = vpop.f32.mrf.mxu0
        %v4867 = vadd.f32 0.0, %v4866
        %v4868 = vpop.f32.mrf.mxu0
        %4869 = vdwg.mxu0
        %s4870 = scalar_lea.vmem [#allocation27], 8
        %v4871 = vld [vmem:[%s4870] sm:$0xf]
        %v4872 = vld [vmem:[%s4870 + $0x4] sm:$0xf]
        %v4875 = vunpack.c.l.b16 %v4871
        %v4876 = vunpack.c.l.b16 %v4872
        %v4877 = vpack.c.b16 %v4876, %v4875
        %v4879 = vsel %vm1396, %v4877, 0
        %4881 = vmatprep.subr.bf16.mxu0 0
        %4882 = vmatpush1.bf16.msra.mxu0 0
        %4883 = vmatprep.subr.bf16.mxu0 0
        %4884 = vmatpush1.bf16.msra.mxu0 0
        %4885 = vmatprep.subr.bf16.mxu0 0
        %4886 = vmatpush1.bf16.msra.mxu0 0
        %4887 = vmatprep.subr.bf16.mxu0 0
        %4888 = vmatpush1.bf16.msra.mxu0 0
        %4889 = vmatprep.subr.bf16.mxu0 0
        %4890 = vmatpush1.bf16.msra.mxu0 %v4820
        %4891 = vmatprep.subr.bf16.mxu0 0
        %4892 = vmatpush1.bf16.msra.mxu0 %v4819
        %4893 = vmatprep.subr.bf16.mxu0 0
        %4894 = vmatpush1.bf16.msra.mxu0 %v4818
        %4895 = vmatprep.subr.bf16.mxu0 0
        %4896 = vmatpush1.bf16.msra.mxu0 %v4817
        %4897 = vmatprep.subr.bf16.mxu0 0
        %4898 = vmatpush2.bf16.msra.mxu0 0
        %4899 = vmatprep.subr.bf16.mxu0 0
        %4900 = vmatpush2.bf16.msra.mxu0 0
        %4901 = vmatprep.subr.bf16.mxu0 0
        %4902 = vmatpush2.bf16.msra.mxu0 0
        %4903 = vmatprep.subr.bf16.mxu0 0
        %4904 = vmatpush2.bf16.msra.mxu0 0
        %4905 = vmatprep.subr.bf16.mxu0 0
        %4906 = vmatpush2.bf16.msra.mxu0 0
        %4907 = vmatprep.subr.bf16.mxu0 0
        %4908 = vmatpush2.bf16.msra.mxu0 0
        %4909 = vmatprep.subr.bf16.mxu0 0
        %4910 = vmatpush2.bf16.msra.mxu0 0
        %4911 = vmatprep.subr.bf16.mxu0 0
        %4912 = vmatpush2.bf16.msra.mxu0 0
        %4913 = vmatprep.mubr.bf16.mxu0 0
        %4914 = vmatmul.mubr.bf16.gmra.mxu0 %v4879
        %v4915 = vpop.f32.mrf.mxu0
        %v4916 = vadd.f32 0.0, %v4915
        %v4917 = vpop.f32.mrf.mxu0
        %v4918 = vpop.f32.mrf.mxu0
        %v4919 = vadd.f32 0.0, %v4918
        %v4920 = vpop.f32.mrf.mxu0
        %4921 = vdwg.mxu0
        %v4922 = vmax.f32 %v4864, %v4916
        %v4923 = vmax.f32 %v4867, %v4919
        %s4924 = scalar_lea.vmem [#allocation27], 16
        %v4925 = vld [vmem:[%s4924] sm:$0xf]
        %v4926 = vld [vmem:[%s4924 + $0x4] sm:$0xf]
        %v4929 = vunpack.c.l.b16 %v4925
        %v4930 = vunpack.c.l.b16 %v4926
        %v4931 = vpack.c.b16 %v4930, %v4929
        %v4933 = vsel %vm1396, %v4931, 0
        %4935 = vmatprep.subr.bf16.mxu0 0
        %4936 = vmatpush1.bf16.msra.mxu0 0
        %4937 = vmatprep.subr.bf16.mxu0 0
        %4938 = vmatpush1.bf16.msra.mxu0 0
        %4939 = vmatprep.subr.bf16.mxu0 0
        %4940 = vmatpush1.bf16.msra.mxu0 0
        %4941 = vmatprep.subr.bf16.mxu0 0
        %4942 = vmatpush1.bf16.msra.mxu0 0
        %4943 = vmatprep.subr.bf16.mxu0 0
        %4944 = vmatpush1.bf16.msra.mxu0 %v4820
        %4945 = vmatprep.subr.bf16.mxu0 0
        %4946 = vmatpush1.bf16.msra.mxu0 %v4819
        %4947 = vmatprep.subr.bf16.mxu0 0
        %4948 = vmatpush1.bf16.msra.mxu0 %v4818
        %4949 = vmatprep.subr.bf16.mxu0 0
        %4950 = vmatpush1.bf16.msra.mxu0 %v4817
        %4951 = vmatprep.subr.bf16.mxu0 0
        %4952 = vmatpush2.bf16.msra.mxu0 0
        %4953 = vmatprep.subr.bf16.mxu0 0
        %4954 = vmatpush2.bf16.msra.mxu0 0
        %4955 = vmatprep.subr.bf16.mxu0 0
        %4956 = vmatpush2.bf16.msra.mxu0 0
        %4957 = vmatprep.subr.bf16.mxu0 0
        %4958 = vmatpush2.bf16.msra.mxu0 0
        %4959 = vmatprep.subr.bf16.mxu0 0
        %4960 = vmatpush2.bf16.msra.mxu0 0
        %4961 = vmatprep.subr.bf16.mxu0 0
        %4962 = vmatpush2.bf16.msra.mxu0 0
        %4963 = vmatprep.subr.bf16.mxu0 0
        %4964 = vmatpush2.bf16.msra.mxu0 0
        %4965 = vmatprep.subr.bf16.mxu0 0
        %4966 = vmatpush2.bf16.msra.mxu0 0
        %4967 = vmatprep.mubr.bf16.mxu0 0
        %4968 = vmatmul.mubr.bf16.gmra.mxu0 %v4933
        %v4969 = vpop.f32.mrf.mxu0
        %v4970 = vadd.f32 0.0, %v4969
        %v4971 = vpop.f32.mrf.mxu0
        %v4972 = vpop.f32.mrf.mxu0
        %v4973 = vadd.f32 0.0, %v4972
        %v4974 = vpop.f32.mrf.mxu0
        %4975 = vdwg.mxu0
        %v4976 = vmax.f32 %v4922, %v4970
        %v4977 = vmax.f32 %v4923, %v4973
        %s4978 = scalar_lea.vmem [#allocation27], 24
        %v4979 = vld [vmem:[%s4978] sm:$0xf]
        %v4980 = vld [vmem:[%s4978 + $0x4] sm:$0xf]
        %v4983 = vunpack.c.l.b16 %v4979
        %v4984 = vunpack.c.l.b16 %v4980
        %v4985 = vpack.c.b16 %v4984, %v4983
        %v4987 = vsel %vm1396, %v4985, 0
        %4989 = vmatprep.subr.bf16.mxu0 0
        %4990 = vmatpush1.bf16.msra.mxu0 0
        %4991 = vmatprep.subr.bf16.mxu0 0
        %4992 = vmatpush1.bf16.msra.mxu0 0
        %4993 = vmatprep.subr.bf16.mxu0 0
        %4994 = vmatpush1.bf16.msra.mxu0 0
        %4995 = vmatprep.subr.bf16.mxu0 0
        %4996 = vmatpush1.bf16.msra.mxu0 0
        %4997 = vmatprep.subr.bf16.mxu0 0
        %4998 = vmatpush1.bf16.msra.mxu0 %v4820
        %4999 = vmatprep.subr.bf16.mxu0 0
        %5000 = vmatpush1.bf16.msra.mxu0 %v4819
        %5001 = vmatprep.subr.bf16.mxu0 0
        %5002 = vmatpush1.bf16.msra.mxu0 %v4818
        %5003 = vmatprep.subr.bf16.mxu0 0
        %5004 = vmatpush1.bf16.msra.mxu0 %v4817
        %5005 = vmatprep.subr.bf16.mxu0 0
        %5006 = vmatpush2.bf16.msra.mxu0 0
        %5007 = vmatprep.subr.bf16.mxu0 0
        %5008 = vmatpush2.bf16.msra.mxu0 0
        %5009 = vmatprep.subr.bf16.mxu0 0
        %5010 = vmatpush2.bf16.msra.mxu0 0
        %5011 = vmatprep.subr.bf16.mxu0 0
        %5012 = vmatpush2.bf16.msra.mxu0 0
        %5013 = vmatprep.subr.bf16.mxu0 0
        %5014 = vmatpush2.bf16.msra.mxu0 0
        %5015 = vmatprep.subr.bf16.mxu0 0
        %5016 = vmatpush2.bf16.msra.mxu0 0
        %5017 = vmatprep.subr.bf16.mxu0 0
        %5018 = vmatpush2.bf16.msra.mxu0 0
        %5019 = vmatprep.subr.bf16.mxu0 0
        %5020 = vmatpush2.bf16.msra.mxu0 0
        %5021 = vmatprep.mubr.bf16.mxu0 0
        %5022 = vmatmul.mubr.bf16.gmra.mxu0 %v4987
        %v5023 = vpop.f32.mrf.mxu0
        %v5024 = vadd.f32 0.0, %v5023
        %v5025 = vpop.f32.mrf.mxu0
        %v5026 = vpop.f32.mrf.mxu0
        %v5027 = vadd.f32 0.0, %v5026
        %v5028 = vpop.f32.mrf.mxu0
        %5029 = vdwg.mxu0
        %v5030 = vmax.f32 %v4976, %v5024
        %v5031 = vmax.f32 %v4977, %v5027
        %v5032 = vld [vmem:[#allocation7] sm:$0xf]
        %v5033 = vld [vmem:[#allocation7 + $0x4] sm:$0xf]
        %v5034 = vld [vmem:[#allocation7 + $0x8] sm:$0xf]
        %v5035 = vld [vmem:[#allocation7 + $0xc] sm:$0xf]
        %v5036 = vld [vmem:[#allocation7 + $0x10] sm:$0xf]
        %v5037 = vld [vmem:[#allocation7 + $0x14] sm:$0xf]
        %v5038 = vld [vmem:[#allocation7 + $0x18] sm:$0xf]
        %v5039 = vld [vmem:[#allocation7 + $0x1c] sm:$0xf]
        %v5040 = vld [vmem:[#allocation7 + $0x20] sm:$0xf]
        %v5041 = vld [vmem:[#allocation7 + $0x24] sm:$0xf]
        %v5042 = vld [vmem:[#allocation7 + $0x28] sm:$0xf]
        %v5043 = vld [vmem:[#allocation7 + $0x2c] sm:$0xf]
        %v5044 = vld [vmem:[#allocation7 + $0x30] sm:$0xf]
        %v5045 = vld [vmem:[#allocation7 + $0x34] sm:$0xf]
        %v5046 = vld [vmem:[#allocation7 + $0x38] sm:$0xf]
        %v5047 = vld [vmem:[#allocation7 + $0x3c] sm:$0xf]
        %v5048 = vpack.c.bf16 %v5031, %v5030
        %v5049 = vld [vmem:[%s17] sm:$0x1]
        %v5051 = vlaneseq
        %v5052 = vshrl.u32 %v5051, 7
        %v5053 = vsub.s32 0, %v5052
        %v5054 = vrot.slane %v5049, %v5053
        %v5072 = vunpack.c.l.b16 %v5032
        %v5073 = vunpack.c.l.b16 %v5033
        %v5074 = vunpack.c.l.b16 %v5034
        %v5075 = vunpack.c.l.b16 %v5035
        %v5076 = vunpack.c.l.b16 %v5036
        %v5077 = vunpack.c.l.b16 %v5037
        %v5078 = vunpack.c.l.b16 %v5038
        %v5079 = vunpack.c.l.b16 %v5039
        %v5080 = vunpack.c.l.b16 %v5040
        %v5081 = vunpack.c.l.b16 %v5041
        %v5082 = vunpack.c.l.b16 %v5042
        %v5083 = vunpack.c.l.b16 %v5043
        %v5084 = vunpack.c.l.b16 %v5044
        %v5085 = vunpack.c.l.b16 %v5045
        %v5086 = vunpack.c.l.b16 %v5046
        %v5087 = vunpack.c.l.b16 %v5047
        %v5088 = vpack.c.b16 %v5073, %v5072
        %v5089 = vpack.c.b16 %v5075, %v5074
        %v5090 = vpack.c.b16 %v5077, %v5076
        %v5091 = vpack.c.b16 %v5079, %v5078
        %v5092 = vpack.c.b16 %v5081, %v5080
        %v5093 = vpack.c.b16 %v5083, %v5082
        %v5094 = vpack.c.b16 %v5085, %v5084
        %v5095 = vpack.c.b16 %v5087, %v5086
        %5104 = vmatprep.subr.bf16.mxu0 0
        %5105 = vmatpush1.bf16.msra.mxu0 %v5095
        %5106 = vmatprep.subr.bf16.mxu0 0
        %5107 = vmatpush1.bf16.msra.mxu0 %v5094
        %5108 = vmatprep.subr.bf16.mxu0 0
        %5109 = vmatpush1.bf16.msra.mxu0 %v5093
        %5110 = vmatprep.subr.bf16.mxu0 0
        %5111 = vmatpush1.bf16.msra.mxu0 %v5092
        %5112 = vmatprep.subr.bf16.mxu0 0
        %5113 = vmatpush1.bf16.msra.mxu0 %v5091
        %5114 = vmatprep.subr.bf16.mxu0 0
        %5115 = vmatpush1.bf16.msra.mxu0 %v5090
        %5116 = vmatprep.subr.bf16.mxu0 0
        %5117 = vmatpush1.bf16.msra.mxu0 %v5089
        %5118 = vmatprep.subr.bf16.mxu0 0
        %5119 = vmatpush1.bf16.msra.mxu0 %v5088
        %5120 = vmatprep.subr.bf16.mxu0 0
        %5121 = vmatpush2.bf16.msra.mxu0 0
        %5122 = vmatprep.subr.bf16.mxu0 0
        %5123 = vmatpush2.bf16.msra.mxu0 0
        %5124 = vmatprep.subr.bf16.mxu0 0
        %5125 = vmatpush2.bf16.msra.mxu0 0
        %5126 = vmatprep.subr.bf16.mxu0 0
        %5127 = vmatpush2.bf16.msra.mxu0 0
        %5128 = vmatprep.subr.bf16.mxu0 0
        %5129 = vmatpush2.bf16.msra.mxu0 0
        %5130 = vmatprep.subr.bf16.mxu0 0
        %5131 = vmatpush2.bf16.msra.mxu0 0
        %5132 = vmatprep.subr.bf16.mxu0 0
        %5133 = vmatpush2.bf16.msra.mxu0 0
        %5134 = vmatprep.subr.bf16.mxu0 0
        %5135 = vmatpush2.bf16.msra.mxu0 0
        %5136 = vmatprep.mubr.bf16.mxu0 0
        %5137 = vmatmul.mubr.bf16.gmra.mxu0 %v5048
        %v5138 = vpop.f32.mrf.mxu0
        %v5139 = vadd.f32 %v5054, %v5138
        %v5140 = vpop.f32.mrf.mxu0
        %v5141 = vpop.f32.mrf.mxu0
        %v5142 = vadd.f32 %v5054, %v5141
        %v5143 = vpop.f32.mrf.mxu0
        %5144 = vdwg.mxu0
        %v5145 = vmax.f32 %v5139, 0.0
        %v5146 = vmax.f32 %v5142, 0.0
        %v5147 = vld [vmem:[#allocation25] sm:$0xf]
        %v5148 = vld [vmem:[#allocation25 + $0x4] sm:$0xf]
        %v5149 = vpack.c.bf16 %v5146, %v5145
        %v5152 = vunpack.c.l.b16 %v5147
        %v5153 = vunpack.c.l.b16 %v5148
        %v5154 = vpack.c.b16 %v5153, %v5152
        %vm5155 = vcmask 130048
        %v5157 = vsel %vm5155, %v5154, 0
        %5159 = vmatprep.subr.bf16.mxu0 0
        %5160 = vmatpush1.bf16.msra.mxu0 0
        %5161 = vmatprep.subr.bf16.mxu0 0
        %5162 = vmatpush1.bf16.msra.mxu0 0
        %5163 = vmatprep.subr.bf16.mxu0 0
        %5164 = vmatpush1.bf16.msra.mxu0 0
        %5165 = vmatprep.subr.bf16.mxu0 0
        %5166 = vmatpush1.bf16.msra.mxu0 0
        %5167 = vmatprep.subr.bf16.mxu0 0
        %5168 = vmatpush1.bf16.msra.mxu0 0
        %5169 = vmatprep.subr.bf16.mxu0 0
        %5170 = vmatpush1.bf16.msra.mxu0 0
        %5171 = vmatprep.subr.bf16.mxu0 0
        %5172 = vmatpush1.bf16.msra.mxu0 0
        %5173 = vmatprep.subr.bf16.mxu0 0
        %5174 = vmatpush1.bf16.msra.mxu0 %v5149
        %5175 = vmatprep.subr.bf16.mxu0 0
        %5176 = vmatpush2.bf16.msra.mxu0 0
        %5177 = vmatprep.subr.bf16.mxu0 0
        %5178 = vmatpush2.bf16.msra.mxu0 0
        %5179 = vmatprep.subr.bf16.mxu0 0
        %5180 = vmatpush2.bf16.msra.mxu0 0
        %5181 = vmatprep.subr.bf16.mxu0 0
        %5182 = vmatpush2.bf16.msra.mxu0 0
        %5183 = vmatprep.subr.bf16.mxu0 0
        %5184 = vmatpush2.bf16.msra.mxu0 0
        %5185 = vmatprep.subr.bf16.mxu0 0
        %5186 = vmatpush2.bf16.msra.mxu0 0
        %5187 = vmatprep.subr.bf16.mxu0 0
        %5188 = vmatpush2.bf16.msra.mxu0 0
        %5189 = vmatprep.subr.bf16.mxu0 0
        %5190 = vmatpush2.bf16.msra.mxu0 0
        %5191 = vmatprep.mubr.bf16.mxu0 0
        %5192 = vmatmul.mubr.bf16.gmra.mxu0 %v5157
        %v5193 = vpop.f32.mrf.mxu0
        %v5194 = vadd.f32 0.0, %v5193
        %v5195 = vpop.f32.mrf.mxu0
        %v5196 = vpop.f32.mrf.mxu0
        %v5197 = vadd.f32 0.0, %v5196
        %v5198 = vpop.f32.mrf.mxu0
        %5199 = vdwg.mxu0
        %s5200 = scalar_lea.vmem [#allocation25], 8
        %v5201 = vld [vmem:[%s5200] sm:$0xf]
        %v5202 = vld [vmem:[%s5200 + $0x4] sm:$0xf]
        %v5205 = vunpack.c.l.b16 %v5201
        %v5206 = vunpack.c.l.b16 %v5202
        %v5207 = vpack.c.b16 %v5206, %v5205
        %v5209 = vsel %vm5155, %v5207, 0
        %5211 = vmatprep.subr.bf16.mxu0 0
        %5212 = vmatpush1.bf16.msra.mxu0 0
        %5213 = vmatprep.subr.bf16.mxu0 0
        %5214 = vmatpush1.bf16.msra.mxu0 0
        %5215 = vmatprep.subr.bf16.mxu0 0
        %5216 = vmatpush1.bf16.msra.mxu0 0
        %5217 = vmatprep.subr.bf16.mxu0 0
        %5218 = vmatpush1.bf16.msra.mxu0 0
        %5219 = vmatprep.subr.bf16.mxu0 0
        %5220 = vmatpush1.bf16.msra.mxu0 0
        %5221 = vmatprep.subr.bf16.mxu0 0
        %5222 = vmatpush1.bf16.msra.mxu0 0
        %5223 = vmatprep.subr.bf16.mxu0 0
        %5224 = vmatpush1.bf16.msra.mxu0 0
        %5225 = vmatprep.subr.bf16.mxu0 0
        %5226 = vmatpush1.bf16.msra.mxu0 %v5149
        %5227 = vmatprep.subr.bf16.mxu0 0
        %5228 = vmatpush2.bf16.msra.mxu0 0
        %5229 = vmatprep.subr.bf16.mxu0 0
        %5230 = vmatpush2.bf16.msra.mxu0 0
        %5231 = vmatprep.subr.bf16.mxu0 0
        %5232 = vmatpush2.bf16.msra.mxu0 0
        %5233 = vmatprep.subr.bf16.mxu0 0
        %5234 = vmatpush2.bf16.msra.mxu0 0
        %5235 = vmatprep.subr.bf16.mxu0 0
        %5236 = vmatpush2.bf16.msra.mxu0 0
        %5237 = vmatprep.subr.bf16.mxu0 0
        %5238 = vmatpush2.bf16.msra.mxu0 0
        %5239 = vmatprep.subr.bf16.mxu0 0
        %5240 = vmatpush2.bf16.msra.mxu0 0
        %5241 = vmatprep.subr.bf16.mxu0 0
        %5242 = vmatpush2.bf16.msra.mxu0 0
        %5243 = vmatprep.mubr.bf16.mxu0 0
        %5244 = vmatmul.mubr.bf16.gmra.mxu0 %v5209
        %v5245 = vpop.f32.mrf.mxu0
        %v5246 = vadd.f32 0.0, %v5245
        %v5247 = vpop.f32.mrf.mxu0
        %v5248 = vpop.f32.mrf.mxu0
        %v5249 = vadd.f32 0.0, %v5248
        %v5250 = vpop.f32.mrf.mxu0
        %5251 = vdwg.mxu0
        %s5252 = scalar_lea.vmem [#allocation25], 16
        %v5253 = vld [vmem:[%s5252] sm:$0xf]
        %v5254 = vld [vmem:[%s5252 + $0x4] sm:$0xf]
        %v5257 = vunpack.c.l.b16 %v5253
        %v5258 = vunpack.c.l.b16 %v5254
        %v5259 = vpack.c.b16 %v5258, %v5257
        %v5261 = vsel %vm5155, %v5259, 0
        %5263 = vmatprep.subr.bf16.mxu0 0
        %5264 = vmatpush1.bf16.msra.mxu0 0
        %5265 = vmatprep.subr.bf16.mxu0 0
        %5266 = vmatpush1.bf16.msra.mxu0 0
        %5267 = vmatprep.subr.bf16.mxu0 0
        %5268 = vmatpush1.bf16.msra.mxu0 0
        %5269 = vmatprep.subr.bf16.mxu0 0
        %5270 = vmatpush1.bf16.msra.mxu0 0
        %5271 = vmatprep.subr.bf16.mxu0 0
        %5272 = vmatpush1.bf16.msra.mxu0 0
        %5273 = vmatprep.subr.bf16.mxu0 0
        %5274 = vmatpush1.bf16.msra.mxu0 0
        %5275 = vmatprep.subr.bf16.mxu0 0
        %5276 = vmatpush1.bf16.msra.mxu0 0
        %5277 = vmatprep.subr.bf16.mxu0 0
        %5278 = vmatpush1.bf16.msra.mxu0 %v5149
        %5279 = vmatprep.subr.bf16.mxu0 0
        %5280 = vmatpush2.bf16.msra.mxu0 0
        %5281 = vmatprep.subr.bf16.mxu0 0
        %5282 = vmatpush2.bf16.msra.mxu0 0
        %5283 = vmatprep.subr.bf16.mxu0 0
        %5284 = vmatpush2.bf16.msra.mxu0 0
        %5285 = vmatprep.subr.bf16.mxu0 0
        %5286 = vmatpush2.bf16.msra.mxu0 0
        %5287 = vmatprep.subr.bf16.mxu0 0
        %5288 = vmatpush2.bf16.msra.mxu0 0
        %5289 = vmatprep.subr.bf16.mxu0 0
        %5290 = vmatpush2.bf16.msra.mxu0 0
        %5291 = vmatprep.subr.bf16.mxu0 0
        %5292 = vmatpush2.bf16.msra.mxu0 0
        %5293 = vmatprep.subr.bf16.mxu0 0
        %5294 = vmatpush2.bf16.msra.mxu0 0
        %5295 = vmatprep.mubr.bf16.mxu0 0
        %5296 = vmatmul.mubr.bf16.gmra.mxu0 %v5261
        %v5297 = vpop.f32.mrf.mxu0
        %v5298 = vadd.f32 0.0, %v5297
        %v5299 = vpop.f32.mrf.mxu0
        %v5300 = vpop.f32.mrf.mxu0
        %v5301 = vadd.f32 0.0, %v5300
        %v5302 = vpop.f32.mrf.mxu0
        %5303 = vdwg.mxu0
        %s5304 = scalar_lea.vmem [#allocation25], 24
        %v5305 = vld [vmem:[%s5304] sm:$0xf]
        %v5306 = vld [vmem:[%s5304 + $0x4] sm:$0xf]
        %v5309 = vunpack.c.l.b16 %v5305
        %v5310 = vunpack.c.l.b16 %v5306
        %v5311 = vpack.c.b16 %v5310, %v5309
        %v5313 = vsel %vm5155, %v5311, 0
        %5315 = vmatprep.subr.bf16.mxu0 0
        %5316 = vmatpush1.bf16.msra.mxu0 0
        %5317 = vmatprep.subr.bf16.mxu0 0
        %5318 = vmatpush1.bf16.msra.mxu0 0
        %5319 = vmatprep.subr.bf16.mxu0 0
        %5320 = vmatpush1.bf16.msra.mxu0 0
        %5321 = vmatprep.subr.bf16.mxu0 0
        %5322 = vmatpush1.bf16.msra.mxu0 0
        %5323 = vmatprep.subr.bf16.mxu0 0
        %5324 = vmatpush1.bf16.msra.mxu0 0
        %5325 = vmatprep.subr.bf16.mxu0 0
        %5326 = vmatpush1.bf16.msra.mxu0 0
        %5327 = vmatprep.subr.bf16.mxu0 0
        %5328 = vmatpush1.bf16.msra.mxu0 0
        %5329 = vmatprep.subr.bf16.mxu0 0
        %5330 = vmatpush1.bf16.msra.mxu0 %v5149
        %5331 = vmatprep.subr.bf16.mxu0 0
        %5332 = vmatpush2.bf16.msra.mxu0 0
        %5333 = vmatprep.subr.bf16.mxu0 0
        %5334 = vmatpush2.bf16.msra.mxu0 0
        %5335 = vmatprep.subr.bf16.mxu0 0
        %5336 = vmatpush2.bf16.msra.mxu0 0
        %5337 = vmatprep.subr.bf16.mxu0 0
        %5338 = vmatpush2.bf16.msra.mxu0 0
        %5339 = vmatprep.subr.bf16.mxu0 0
        %5340 = vmatpush2.bf16.msra.mxu0 0
        %5341 = vmatprep.subr.bf16.mxu0 0
        %5342 = vmatpush2.bf16.msra.mxu0 0
        %5343 = vmatprep.subr.bf16.mxu0 0
        %5344 = vmatpush2.bf16.msra.mxu0 0
        %5345 = vmatprep.subr.bf16.mxu0 0
        %5346 = vmatpush2.bf16.msra.mxu0 0
        %5347 = vmatprep.mubr.bf16.mxu0 0
        %5348 = vmatmul.mubr.bf16.gmra.mxu0 %v5313
        %v5349 = vpop.f32.mrf.mxu0
        %v5350 = vadd.f32 0.0, %v5349
        %v5351 = vpop.f32.mrf.mxu0
        %v5352 = vpop.f32.mrf.mxu0
        %v5353 = vadd.f32 0.0, %v5352
        %v5354 = vpop.f32.mrf.mxu0
        %5355 = vdwg.mxu0
        %s5356 = scalar_lea.vmem [#allocation25], 32
        %v5357 = vld [vmem:[%s5356] sm:$0xf]
        %v5358 = vld [vmem:[%s5356 + $0x4] sm:$0xf]
        %v5361 = vunpack.c.l.b16 %v5357
        %v5362 = vunpack.c.l.b16 %v5358
        %v5363 = vpack.c.b16 %v5362, %v5361
        %v5365 = vsel %vm5155, %v5363, 0
        %5367 = vmatprep.subr.bf16.mxu0 0
        %5368 = vmatpush1.bf16.msra.mxu0 0
        %5369 = vmatprep.subr.bf16.mxu0 0
        %5370 = vmatpush1.bf16.msra.mxu0 0
        %5371 = vmatprep.subr.bf16.mxu0 0
        %5372 = vmatpush1.bf16.msra.mxu0 0
        %5373 = vmatprep.subr.bf16.mxu0 0
        %5374 = vmatpush1.bf16.msra.mxu0 0
        %5375 = vmatprep.subr.bf16.mxu0 0
        %5376 = vmatpush1.bf16.msra.mxu0 0
        %5377 = vmatprep.subr.bf16.mxu0 0
        %5378 = vmatpush1.bf16.msra.mxu0 0
        %5379 = vmatprep.subr.bf16.mxu0 0
        %5380 = vmatpush1.bf16.msra.mxu0 0
        %5381 = vmatprep.subr.bf16.mxu0 0
        %5382 = vmatpush1.bf16.msra.mxu0 %v5149
        %5383 = vmatprep.subr.bf16.mxu0 0
        %5384 = vmatpush2.bf16.msra.mxu0 0
        %5385 = vmatprep.subr.bf16.mxu0 0
        %5386 = vmatpush2.bf16.msra.mxu0 0
        %5387 = vmatprep.subr.bf16.mxu0 0
        %5388 = vmatpush2.bf16.msra.mxu0 0
        %5389 = vmatprep.subr.bf16.mxu0 0
        %5390 = vmatpush2.bf16.msra.mxu0 0
        %5391 = vmatprep.subr.bf16.mxu0 0
        %5392 = vmatpush2.bf16.msra.mxu0 0
        %5393 = vmatprep.subr.bf16.mxu0 0
        %5394 = vmatpush2.bf16.msra.mxu0 0
        %5395 = vmatprep.subr.bf16.mxu0 0
        %5396 = vmatpush2.bf16.msra.mxu0 0
        %5397 = vmatprep.subr.bf16.mxu0 0
        %5398 = vmatpush2.bf16.msra.mxu0 0
        %5399 = vmatprep.mubr.bf16.mxu0 0
        %5400 = vmatmul.mubr.bf16.gmra.mxu0 %v5365
        %v5401 = vpop.f32.mrf.mxu0
        %v5402 = vadd.f32 0.0, %v5401
        %v5403 = vpop.f32.mrf.mxu0
        %v5404 = vpop.f32.mrf.mxu0
        %v5405 = vadd.f32 0.0, %v5404
        %v5406 = vpop.f32.mrf.mxu0
        %5407 = vdwg.mxu0
        %s5408 = scalar_lea.vmem [#allocation25], 40
        %v5409 = vld [vmem:[%s5408] sm:$0xf]
        %v5410 = vld [vmem:[%s5408 + $0x4] sm:$0xf]
        %v5413 = vunpack.c.l.b16 %v5409
        %v5414 = vunpack.c.l.b16 %v5410
        %v5415 = vpack.c.b16 %v5414, %v5413
        %v5417 = vsel %vm5155, %v5415, 0
        %5419 = vmatprep.subr.bf16.mxu0 0
        %5420 = vmatpush1.bf16.msra.mxu0 0
        %5421 = vmatprep.subr.bf16.mxu0 0
        %5422 = vmatpush1.bf16.msra.mxu0 0
        %5423 = vmatprep.subr.bf16.mxu0 0
        %5424 = vmatpush1.bf16.msra.mxu0 0
        %5425 = vmatprep.subr.bf16.mxu0 0
        %5426 = vmatpush1.bf16.msra.mxu0 0
        %5427 = vmatprep.subr.bf16.mxu0 0
        %5428 = vmatpush1.bf16.msra.mxu0 0
        %5429 = vmatprep.subr.bf16.mxu0 0
        %5430 = vmatpush1.bf16.msra.mxu0 0
        %5431 = vmatprep.subr.bf16.mxu0 0
        %5432 = vmatpush1.bf16.msra.mxu0 0
        %5433 = vmatprep.subr.bf16.mxu0 0
        %5434 = vmatpush1.bf16.msra.mxu0 %v5149
        %5435 = vmatprep.subr.bf16.mxu0 0
        %5436 = vmatpush2.bf16.msra.mxu0 0
        %5437 = vmatprep.subr.bf16.mxu0 0
        %5438 = vmatpush2.bf16.msra.mxu0 0
        %5439 = vmatprep.subr.bf16.mxu0 0
        %5440 = vmatpush2.bf16.msra.mxu0 0
        %5441 = vmatprep.subr.bf16.mxu0 0
        %5442 = vmatpush2.bf16.msra.mxu0 0
        %5443 = vmatprep.subr.bf16.mxu0 0
        %5444 = vmatpush2.bf16.msra.mxu0 0
        %5445 = vmatprep.subr.bf16.mxu0 0
        %5446 = vmatpush2.bf16.msra.mxu0 0
        %5447 = vmatprep.subr.bf16.mxu0 0
        %5448 = vmatpush2.bf16.msra.mxu0 0
        %5449 = vmatprep.subr.bf16.mxu0 0
        %5450 = vmatpush2.bf16.msra.mxu0 0
        %5451 = vmatprep.mubr.bf16.mxu0 0
        %5452 = vmatmul.mubr.bf16.gmra.mxu0 %v5417
        %v5453 = vpop.f32.mrf.mxu0
        %v5454 = vadd.f32 0.0, %v5453
        %v5455 = vpop.f32.mrf.mxu0
        %v5456 = vpop.f32.mrf.mxu0
        %v5457 = vadd.f32 0.0, %v5456
        %v5458 = vpop.f32.mrf.mxu0
        %5459 = vdwg.mxu0
        %s5460 = scalar_lea.vmem [#allocation25], 48
        %v5461 = vld [vmem:[%s5460] sm:$0xf]
        %v5462 = vld [vmem:[%s5460 + $0x4] sm:$0xf]
        %v5465 = vunpack.c.l.b16 %v5461
        %v5466 = vunpack.c.l.b16 %v5462
        %v5467 = vpack.c.b16 %v5466, %v5465
        %v5469 = vsel %vm5155, %v5467, 0
        %5471 = vmatprep.subr.bf16.mxu0 0
        %5472 = vmatpush1.bf16.msra.mxu0 0
        %5473 = vmatprep.subr.bf16.mxu0 0
        %5474 = vmatpush1.bf16.msra.mxu0 0
        %5475 = vmatprep.subr.bf16.mxu0 0
        %5476 = vmatpush1.bf16.msra.mxu0 0
        %5477 = vmatprep.subr.bf16.mxu0 0
        %5478 = vmatpush1.bf16.msra.mxu0 0
        %5479 = vmatprep.subr.bf16.mxu0 0
        %5480 = vmatpush1.bf16.msra.mxu0 0
        %5481 = vmatprep.subr.bf16.mxu0 0
        %5482 = vmatpush1.bf16.msra.mxu0 0
        %5483 = vmatprep.subr.bf16.mxu0 0
        %5484 = vmatpush1.bf16.msra.mxu0 0
        %5485 = vmatprep.subr.bf16.mxu0 0
        %5486 = vmatpush1.bf16.msra.mxu0 %v5149
        %5487 = vmatprep.subr.bf16.mxu0 0
        %5488 = vmatpush2.bf16.msra.mxu0 0
        %5489 = vmatprep.subr.bf16.mxu0 0
        %5490 = vmatpush2.bf16.msra.mxu0 0
        %5491 = vmatprep.subr.bf16.mxu0 0
        %5492 = vmatpush2.bf16.msra.mxu0 0
        %5493 = vmatprep.subr.bf16.mxu0 0
        %5494 = vmatpush2.bf16.msra.mxu0 0
        %5495 = vmatprep.subr.bf16.mxu0 0
        %5496 = vmatpush2.bf16.msra.mxu0 0
        %5497 = vmatprep.subr.bf16.mxu0 0
        %5498 = vmatpush2.bf16.msra.mxu0 0
        %5499 = vmatprep.subr.bf16.mxu0 0
        %5500 = vmatpush2.bf16.msra.mxu0 0
        %5501 = vmatprep.subr.bf16.mxu0 0
        %5502 = vmatpush2.bf16.msra.mxu0 0
        %5503 = vmatprep.mubr.bf16.mxu0 0
        %5504 = vmatmul.mubr.bf16.gmra.mxu0 %v5469
        %v5505 = vpop.f32.mrf.mxu0
        %v5506 = vadd.f32 0.0, %v5505
        %v5507 = vpop.f32.mrf.mxu0
        %v5508 = vpop.f32.mrf.mxu0
        %v5509 = vadd.f32 0.0, %v5508
        %v5510 = vpop.f32.mrf.mxu0
        %5511 = vdwg.mxu0
        %s5512 = scalar_lea.vmem [#allocation25], 56
        %v5513 = vld [vmem:[%s5512] sm:$0xf]
        %v5514 = vld [vmem:[%s5512 + $0x4] sm:$0xf]
        %v5517 = vunpack.c.l.b16 %v5513
        %v5518 = vunpack.c.l.b16 %v5514
        %v5519 = vpack.c.b16 %v5518, %v5517
        %v5521 = vsel %vm5155, %v5519, 0
        %5523 = vmatprep.subr.bf16.mxu0 0
        %5524 = vmatpush1.bf16.msra.mxu0 0
        %5525 = vmatprep.subr.bf16.mxu0 0
        %5526 = vmatpush1.bf16.msra.mxu0 0
        %5527 = vmatprep.subr.bf16.mxu0 0
        %5528 = vmatpush1.bf16.msra.mxu0 0
        %5529 = vmatprep.subr.bf16.mxu0 0
        %5530 = vmatpush1.bf16.msra.mxu0 0
        %5531 = vmatprep.subr.bf16.mxu0 0
        %5532 = vmatpush1.bf16.msra.mxu0 0
        %5533 = vmatprep.subr.bf16.mxu0 0
        %5534 = vmatpush1.bf16.msra.mxu0 0
        %5535 = vmatprep.subr.bf16.mxu0 0
        %5536 = vmatpush1.bf16.msra.mxu0 0
        %5537 = vmatprep.subr.bf16.mxu0 0
        %5538 = vmatpush1.bf16.msra.mxu0 %v5149
        %5539 = vmatprep.subr.bf16.mxu0 0
        %5540 = vmatpush2.bf16.msra.mxu0 0
        %5541 = vmatprep.subr.bf16.mxu0 0
        %5542 = vmatpush2.bf16.msra.mxu0 0
        %5543 = vmatprep.subr.bf16.mxu0 0
        %5544 = vmatpush2.bf16.msra.mxu0 0
        %5545 = vmatprep.subr.bf16.mxu0 0
        %5546 = vmatpush2.bf16.msra.mxu0 0
        %5547 = vmatprep.subr.bf16.mxu0 0
        %5548 = vmatpush2.bf16.msra.mxu0 0
        %5549 = vmatprep.subr.bf16.mxu0 0
        %5550 = vmatpush2.bf16.msra.mxu0 0
        %5551 = vmatprep.subr.bf16.mxu0 0
        %5552 = vmatpush2.bf16.msra.mxu0 0
        %5553 = vmatprep.subr.bf16.mxu0 0
        %5554 = vmatpush2.bf16.msra.mxu0 0
        %5555 = vmatprep.mubr.bf16.mxu0 0
        %5556 = vmatmul.mubr.bf16.gmra.mxu0 %v5521
        %v5557 = vpop.f32.mrf.mxu0
        %v5558 = vadd.f32 0.0, %v5557
        %v5559 = vpop.f32.mrf.mxu0
        %v5560 = vpop.f32.mrf.mxu0
        %v5561 = vadd.f32 0.0, %v5560
        %v5562 = vpop.f32.mrf.mxu0
        %5563 = vdwg.mxu0
        %s5564 = scalar_lea.vmem [#allocation25], 64
        %v5565 = vld [vmem:[%s5564] sm:$0xf]
        %v5566 = vld [vmem:[%s5564 + $0x4] sm:$0xf]
        %v5569 = vunpack.c.l.b16 %v5565
        %v5570 = vunpack.c.l.b16 %v5566
        %v5571 = vpack.c.b16 %v5570, %v5569
        %v5573 = vsel %vm5155, %v5571, 0
        %5575 = vmatprep.subr.bf16.mxu0 0
        %5576 = vmatpush1.bf16.msra.mxu0 0
        %5577 = vmatprep.subr.bf16.mxu0 0
        %5578 = vmatpush1.bf16.msra.mxu0 0
        %5579 = vmatprep.subr.bf16.mxu0 0
        %5580 = vmatpush1.bf16.msra.mxu0 0
        %5581 = vmatprep.subr.bf16.mxu0 0
        %5582 = vmatpush1.bf16.msra.mxu0 0
        %5583 = vmatprep.subr.bf16.mxu0 0
        %5584 = vmatpush1.bf16.msra.mxu0 0
        %5585 = vmatprep.subr.bf16.mxu0 0
        %5586 = vmatpush1.bf16.msra.mxu0 0
        %5587 = vmatprep.subr.bf16.mxu0 0
        %5588 = vmatpush1.bf16.msra.mxu0 0
        %5589 = vmatprep.subr.bf16.mxu0 0
        %5590 = vmatpush1.bf16.msra.mxu0 %v5149
        %5591 = vmatprep.subr.bf16.mxu0 0
        %5592 = vmatpush2.bf16.msra.mxu0 0
        %5593 = vmatprep.subr.bf16.mxu0 0
        %5594 = vmatpush2.bf16.msra.mxu0 0
        %5595 = vmatprep.subr.bf16.mxu0 0
        %5596 = vmatpush2.bf16.msra.mxu0 0
        %5597 = vmatprep.subr.bf16.mxu0 0
        %5598 = vmatpush2.bf16.msra.mxu0 0
        %5599 = vmatprep.subr.bf16.mxu0 0
        %5600 = vmatpush2.bf16.msra.mxu0 0
        %5601 = vmatprep.subr.bf16.mxu0 0
        %5602 = vmatpush2.bf16.msra.mxu0 0
        %5603 = vmatprep.subr.bf16.mxu0 0
        %5604 = vmatpush2.bf16.msra.mxu0 0
        %5605 = vmatprep.subr.bf16.mxu0 0
        %5606 = vmatpush2.bf16.msra.mxu0 0
        %5607 = vmatprep.mubr.bf16.mxu0 0
        %5608 = vmatmul.mubr.bf16.gmra.mxu0 %v5573
        %v5609 = vpop.f32.mrf.mxu0
        %v5610 = vadd.f32 0.0, %v5609
        %v5611 = vpop.f32.mrf.mxu0
        %v5612 = vpop.f32.mrf.mxu0
        %v5613 = vadd.f32 0.0, %v5612
        %v5614 = vpop.f32.mrf.mxu0
        %5615 = vdwg.mxu0
        %v5616 = vld [vmem:[#allocation9] sm:$0xf]
        %v5617 = vld [vmem:[#allocation9 + $0x4] sm:$0xf]
        %v5618 = vld [vmem:[#allocation9 + $0x8] sm:$0xf]
        %v5619 = vld [vmem:[#allocation9 + $0xc] sm:$0xf]
        %v5620 = vld [vmem:[#allocation9 + $0x10] sm:$0xf]
        %v5621 = vld [vmem:[#allocation9 + $0x14] sm:$0xf]
        %v5622 = vld [vmem:[#allocation9 + $0x18] sm:$0xf]
        %v5623 = vld [vmem:[#allocation9 + $0x1c] sm:$0xf]
        %v5624 = vld [vmem:[#allocation9 + $0x20] sm:$0xf]
        %v5625 = vld [vmem:[#allocation9 + $0x24] sm:$0xf]
        %v5626 = vld [vmem:[#allocation9 + $0x28] sm:$0xf]
        %v5627 = vld [vmem:[#allocation9 + $0x2c] sm:$0xf]
        %v5628 = vld [vmem:[#allocation9 + $0x30] sm:$0xf]
        %v5629 = vld [vmem:[#allocation9 + $0x34] sm:$0xf]
        %v5630 = vld [vmem:[#allocation9 + $0x38] sm:$0xf]
        %v5631 = vld [vmem:[#allocation9 + $0x3c] sm:$0xf]
        %v5632 = vld [vmem:[#allocation9 + $0x40] sm:$0xf]
        %v5633 = vld [vmem:[#allocation9 + $0x44] sm:$0xf]
        %v5634 = vld [vmem:[#allocation9 + $0x48] sm:$0xf]
        %v5635 = vld [vmem:[#allocation9 + $0x4c] sm:$0xf]
        %v5636 = vld [vmem:[#allocation9 + $0x50] sm:$0xf]
        %v5637 = vld [vmem:[#allocation9 + $0x54] sm:$0xf]
        %v5638 = vld [vmem:[#allocation9 + $0x58] sm:$0xf]
        %v5639 = vld [vmem:[#allocation9 + $0x5c] sm:$0xf]
        %v5640 = vld [vmem:[#allocation9 + $0x60] sm:$0xf]
        %v5641 = vld [vmem:[#allocation9 + $0x64] sm:$0xf]
        %v5642 = vld [vmem:[#allocation9 + $0x68] sm:$0xf]
        %v5643 = vld [vmem:[#allocation9 + $0x6c] sm:$0xf]
        %v5644 = vld [vmem:[#allocation9 + $0x70] sm:$0xf]
        %v5645 = vld [vmem:[#allocation9 + $0x74] sm:$0xf]
        %v5646 = vld [vmem:[#allocation9 + $0x78] sm:$0xf]
        %v5647 = vld [vmem:[#allocation9 + $0x7c] sm:$0xf]
        %v5648 = vld [vmem:[#allocation9 + $0x80] sm:$0xf]
        %v5649 = vld [vmem:[#allocation9 + $0x84] sm:$0xf]
        %v5650 = vld [vmem:[#allocation9 + $0x88] sm:$0xf]
        %v5651 = vld [vmem:[#allocation9 + $0x8c] sm:$0xf]
        %v5652 = vld [vmem:[#allocation9 + $0x90] sm:$0xf]
        %v5653 = vld [vmem:[#allocation9 + $0x94] sm:$0xf]
        %v5654 = vld [vmem:[#allocation9 + $0x98] sm:$0xf]
        %v5655 = vld [vmem:[#allocation9 + $0x9c] sm:$0xf]
        %v5656 = vld [vmem:[#allocation9 + $0xa0] sm:$0xf]
        %v5657 = vld [vmem:[#allocation9 + $0xa4] sm:$0xf]
        %v5658 = vld [vmem:[#allocation9 + $0xa8] sm:$0xf]
        %v5659 = vld [vmem:[#allocation9 + $0xac] sm:$0xf]
        %v5660 = vld [vmem:[#allocation9 + $0xb0] sm:$0xf]
        %v5661 = vld [vmem:[#allocation9 + $0xb4] sm:$0xf]
        %v5662 = vld [vmem:[#allocation9 + $0xb8] sm:$0xf]
        %v5663 = vld [vmem:[#allocation9 + $0xbc] sm:$0xf]
        %v5664 = vld [vmem:[#allocation9 + $0xc0] sm:$0xf]
        %v5665 = vld [vmem:[#allocation9 + $0xc4] sm:$0xf]
        %v5666 = vld [vmem:[#allocation9 + $0xc8] sm:$0xf]
        %v5667 = vld [vmem:[#allocation9 + $0xcc] sm:$0xf]
        %v5668 = vld [vmem:[#allocation9 + $0xd0] sm:$0xf]
        %v5669 = vld [vmem:[#allocation9 + $0xd4] sm:$0xf]
        %v5670 = vld [vmem:[#allocation9 + $0xd8] sm:$0xf]
        %v5671 = vld [vmem:[#allocation9 + $0xdc] sm:$0xf]
        %v5672 = vld [vmem:[#allocation9 + $0xe0] sm:$0xf]
        %v5673 = vld [vmem:[#allocation9 + $0xe4] sm:$0xf]
        %v5674 = vld [vmem:[#allocation9 + $0xe8] sm:$0xf]
        %v5675 = vld [vmem:[#allocation9 + $0xec] sm:$0xf]
        %v5676 = vld [vmem:[#allocation9 + $0xf0] sm:$0xf]
        %v5677 = vld [vmem:[#allocation9 + $0xf4] sm:$0xf]
        %v5678 = vld [vmem:[#allocation9 + $0xf8] sm:$0xf]
        %v5679 = vld [vmem:[#allocation9 + $0xfc] sm:$0xf]
        %v5680 = vld [vmem:[#allocation9 + $0x100] sm:$0xf]
        %v5681 = vld [vmem:[#allocation9 + $0x104] sm:$0xf]
        %v5682 = vld [vmem:[#allocation9 + $0x108] sm:$0xf]
        %v5683 = vld [vmem:[#allocation9 + $0x10c] sm:$0xf]
        %v5684 = vld [vmem:[#allocation9 + $0x110] sm:$0xf]
        %v5685 = vld [vmem:[#allocation9 + $0x114] sm:$0xf]
        %v5686 = vld [vmem:[#allocation9 + $0x118] sm:$0xf]
        %v5687 = vld [vmem:[#allocation9 + $0x11c] sm:$0xf]
        %v5688 = vld [vmem:[#allocation9 + $0x120] sm:$0xf]
        %v5689 = vld [vmem:[#allocation9 + $0x124] sm:$0xf]
        %v5690 = vld [vmem:[#allocation9 + $0x128] sm:$0xf]
        %v5691 = vld [vmem:[#allocation9 + $0x12c] sm:$0xf]
        %v5692 = vld [vmem:[#allocation9 + $0x130] sm:$0xf]
        %v5693 = vld [vmem:[#allocation9 + $0x134] sm:$0xf]
        %v5694 = vld [vmem:[#allocation9 + $0x138] sm:$0xf]
        %v5695 = vld [vmem:[#allocation9 + $0x13c] sm:$0xf]
        %v5696 = vld [vmem:[#allocation9 + $0x140] sm:$0xf]
        %v5697 = vld [vmem:[#allocation9 + $0x144] sm:$0xf]
        %v5698 = vld [vmem:[#allocation9 + $0x148] sm:$0xf]
        %v5699 = vld [vmem:[#allocation9 + $0x14c] sm:$0xf]
        %v5700 = vld [vmem:[#allocation9 + $0x150] sm:$0xf]
        %v5701 = vld [vmem:[#allocation9 + $0x154] sm:$0xf]
        %v5702 = vld [vmem:[#allocation9 + $0x158] sm:$0xf]
        %v5703 = vld [vmem:[#allocation9 + $0x15c] sm:$0xf]
        %v5704 = vld [vmem:[#allocation9 + $0x160] sm:$0xf]
        %v5705 = vld [vmem:[#allocation9 + $0x164] sm:$0xf]
        %v5706 = vld [vmem:[#allocation9 + $0x168] sm:$0xf]
        %v5707 = vld [vmem:[#allocation9 + $0x16c] sm:$0xf]
        %v5708 = vld [vmem:[#allocation9 + $0x170] sm:$0xf]
        %v5709 = vld [vmem:[#allocation9 + $0x174] sm:$0xf]
        %v5710 = vld [vmem:[#allocation9 + $0x178] sm:$0xf]
        %v5711 = vld [vmem:[#allocation9 + $0x17c] sm:$0xf]
        %v5712 = vld [vmem:[#allocation9 + $0x180] sm:$0xf]
        %v5713 = vld [vmem:[#allocation9 + $0x184] sm:$0xf]
        %v5714 = vld [vmem:[#allocation9 + $0x188] sm:$0xf]
        %v5715 = vld [vmem:[#allocation9 + $0x18c] sm:$0xf]
        %v5716 = vld [vmem:[#allocation9 + $0x190] sm:$0xf]
        %v5717 = vld [vmem:[#allocation9 + $0x194] sm:$0xf]
        %v5718 = vld [vmem:[#allocation9 + $0x198] sm:$0xf]
        %v5719 = vld [vmem:[#allocation9 + $0x19c] sm:$0xf]
        %v5720 = vld [vmem:[#allocation9 + $0x1a0] sm:$0xf]
        %v5721 = vld [vmem:[#allocation9 + $0x1a4] sm:$0xf]
        %v5722 = vld [vmem:[#allocation9 + $0x1a8] sm:$0xf]
        %v5723 = vld [vmem:[#allocation9 + $0x1ac] sm:$0xf]
        %v5724 = vld [vmem:[#allocation9 + $0x1b0] sm:$0xf]
        %v5725 = vld [vmem:[#allocation9 + $0x1b4] sm:$0xf]
        %v5726 = vld [vmem:[#allocation9 + $0x1b8] sm:$0xf]
        %v5727 = vld [vmem:[#allocation9 + $0x1bc] sm:$0xf]
        %v5728 = vld [vmem:[#allocation9 + $0x1c0] sm:$0xf]
        %v5729 = vld [vmem:[#allocation9 + $0x1c4] sm:$0xf]
        %v5730 = vld [vmem:[#allocation9 + $0x1c8] sm:$0xf]
        %v5731 = vld [vmem:[#allocation9 + $0x1cc] sm:$0xf]
        %v5732 = vld [vmem:[#allocation9 + $0x1d0] sm:$0xf]
        %v5733 = vld [vmem:[#allocation9 + $0x1d4] sm:$0xf]
        %v5734 = vld [vmem:[#allocation9 + $0x1d8] sm:$0xf]
        %v5735 = vld [vmem:[#allocation9 + $0x1dc] sm:$0xf]
        %v5736 = vld [vmem:[#allocation9 + $0x1e0] sm:$0xf]
        %v5737 = vld [vmem:[#allocation9 + $0x1e4] sm:$0xf]
        %v5738 = vld [vmem:[#allocation9 + $0x1e8] sm:$0xf]
        %v5739 = vld [vmem:[#allocation9 + $0x1ec] sm:$0xf]
        %v5740 = vld [vmem:[#allocation9 + $0x1f0] sm:$0xf]
        %v5741 = vld [vmem:[#allocation9 + $0x1f4] sm:$0xf]
        %v5742 = vld [vmem:[#allocation9 + $0x1f8] sm:$0xf]
        %v5743 = vld [vmem:[#allocation9 + $0x1fc] sm:$0xf]
        %v5744 = vld [vmem:[#allocation9 + $0x200] sm:$0xf]
        %v5745 = vld [vmem:[#allocation9 + $0x204] sm:$0xf]
        %v5746 = vld [vmem:[#allocation9 + $0x208] sm:$0xf]
        %v5747 = vld [vmem:[#allocation9 + $0x20c] sm:$0xf]
        %v5748 = vld [vmem:[#allocation9 + $0x210] sm:$0xf]
        %v5749 = vld [vmem:[#allocation9 + $0x214] sm:$0xf]
        %v5750 = vld [vmem:[#allocation9 + $0x218] sm:$0xf]
        %v5751 = vld [vmem:[#allocation9 + $0x21c] sm:$0xf]
        %v5752 = vld [vmem:[#allocation9 + $0x220] sm:$0xf]
        %v5753 = vld [vmem:[#allocation9 + $0x224] sm:$0xf]
        %v5754 = vld [vmem:[#allocation9 + $0x228] sm:$0xf]
        %v5755 = vld [vmem:[#allocation9 + $0x22c] sm:$0xf]
        %v5756 = vld [vmem:[#allocation9 + $0x230] sm:$0xf]
        %v5757 = vld [vmem:[#allocation9 + $0x234] sm:$0xf]
        %v5758 = vld [vmem:[#allocation9 + $0x238] sm:$0xf]
        %v5759 = vld [vmem:[#allocation9 + $0x23c] sm:$0xf]
        %v5760 = vpack.c.bf16 %v5197, %v5194
        %v5761 = vpack.c.bf16 %v5249, %v5246
        %v5762 = vpack.c.bf16 %v5301, %v5298
        %v5763 = vpack.c.bf16 %v5353, %v5350
        %v5764 = vpack.c.bf16 %v5405, %v5402
        %v5765 = vpack.c.bf16 %v5457, %v5454
        %v5766 = vpack.c.bf16 %v5509, %v5506
        %v5767 = vpack.c.bf16 %v5561, %v5558
        %v5768 = vpack.c.bf16 %v5613, %v5610
        %v5769 = vld [vmem:[%s21] sm:$0x1]
        %v5771 = vlaneseq
        %v5772 = vshrl.u32 %v5771, 7
        %v5773 = vsub.s32 0, %v5772
        %v5774 = vrot.slane %v5769, %v5773
        %v5920 = vunpack.c.l.b16 %v5616
        %v5921 = vunpack.c.l.b16 %v5617
        %v5922 = vunpack.c.l.b16 %v5618
        %v5923 = vunpack.c.l.b16 %v5619
        %v5924 = vunpack.c.l.b16 %v5620
        %v5925 = vunpack.c.l.b16 %v5621
        %v5926 = vunpack.c.l.b16 %v5622
        %v5927 = vunpack.c.l.b16 %v5623
        %v5928 = vunpack.c.l.b16 %v5624
        %v5929 = vunpack.c.l.b16 %v5625
        %v5930 = vunpack.c.l.b16 %v5626
        %v5931 = vunpack.c.l.b16 %v5627
        %v5932 = vunpack.c.l.b16 %v5628
        %v5933 = vunpack.c.l.b16 %v5629
        %v5934 = vunpack.c.l.b16 %v5630
        %v5935 = vunpack.c.l.b16 %v5631
        %v5936 = vunpack.c.l.b16 %v5632
        %v5937 = vunpack.c.l.b16 %v5633
        %v5938 = vunpack.c.l.b16 %v5634
        %v5939 = vunpack.c.l.b16 %v5635
        %v5940 = vunpack.c.l.b16 %v5636
        %v5941 = vunpack.c.l.b16 %v5637
        %v5942 = vunpack.c.l.b16 %v5638
        %v5943 = vunpack.c.l.b16 %v5639
        %v5944 = vunpack.c.l.b16 %v5640
        %v5945 = vunpack.c.l.b16 %v5641
        %v5946 = vunpack.c.l.b16 %v5642
        %v5947 = vunpack.c.l.b16 %v5643
        %v5948 = vunpack.c.l.b16 %v5644
        %v5949 = vunpack.c.l.b16 %v5645
        %v5950 = vunpack.c.l.b16 %v5646
        %v5951 = vunpack.c.l.b16 %v5647
        %v5952 = vunpack.c.l.b16 %v5648
        %v5953 = vunpack.c.l.b16 %v5649
        %v5954 = vunpack.c.l.b16 %v5650
        %v5955 = vunpack.c.l.b16 %v5651
        %v5956 = vunpack.c.l.b16 %v5652
        %v5957 = vunpack.c.l.b16 %v5653
        %v5958 = vunpack.c.l.b16 %v5654
        %v5959 = vunpack.c.l.b16 %v5655
        %v5960 = vunpack.c.l.b16 %v5656
        %v5961 = vunpack.c.l.b16 %v5657
        %v5962 = vunpack.c.l.b16 %v5658
        %v5963 = vunpack.c.l.b16 %v5659
        %v5964 = vunpack.c.l.b16 %v5660
        %v5965 = vunpack.c.l.b16 %v5661
        %v5966 = vunpack.c.l.b16 %v5662
        %v5967 = vunpack.c.l.b16 %v5663
        %v5968 = vunpack.c.l.b16 %v5664
        %v5969 = vunpack.c.l.b16 %v5665
        %v5970 = vunpack.c.l.b16 %v5666
        %v5971 = vunpack.c.l.b16 %v5667
        %v5972 = vunpack.c.l.b16 %v5668
        %v5973 = vunpack.c.l.b16 %v5669
        %v5974 = vunpack.c.l.b16 %v5670
        %v5975 = vunpack.c.l.b16 %v5671
        %v5976 = vunpack.c.l.b16 %v5672
        %v5977 = vunpack.c.l.b16 %v5673
        %v5978 = vunpack.c.l.b16 %v5674
        %v5979 = vunpack.c.l.b16 %v5675
        %v5980 = vunpack.c.l.b16 %v5676
        %v5981 = vunpack.c.l.b16 %v5677
        %v5982 = vunpack.c.l.b16 %v5678
        %v5983 = vunpack.c.l.b16 %v5679
        %v5984 = vunpack.c.l.b16 %v5680
        %v5985 = vunpack.c.l.b16 %v5681
        %v5986 = vunpack.c.l.b16 %v5682
        %v5987 = vunpack.c.l.b16 %v5683
        %v5988 = vunpack.c.l.b16 %v5684
        %v5989 = vunpack.c.l.b16 %v5685
        %v5990 = vunpack.c.l.b16 %v5686
        %v5991 = vunpack.c.l.b16 %v5687
        %v5992 = vunpack.c.l.b16 %v5688
        %v5993 = vunpack.c.l.b16 %v5689
        %v5994 = vunpack.c.l.b16 %v5690
        %v5995 = vunpack.c.l.b16 %v5691
        %v5996 = vunpack.c.l.b16 %v5692
        %v5997 = vunpack.c.l.b16 %v5693
        %v5998 = vunpack.c.l.b16 %v5694
        %v5999 = vunpack.c.l.b16 %v5695
        %v6000 = vunpack.c.l.b16 %v5696
        %v6001 = vunpack.c.l.b16 %v5697
        %v6002 = vunpack.c.l.b16 %v5698
        %v6003 = vunpack.c.l.b16 %v5699
        %v6004 = vunpack.c.l.b16 %v5700
        %v6005 = vunpack.c.l.b16 %v5701
        %v6006 = vunpack.c.l.b16 %v5702
        %v6007 = vunpack.c.l.b16 %v5703
        %v6008 = vunpack.c.l.b16 %v5704
        %v6009 = vunpack.c.l.b16 %v5705
        %v6010 = vunpack.c.l.b16 %v5706
        %v6011 = vunpack.c.l.b16 %v5707
        %v6012 = vunpack.c.l.b16 %v5708
        %v6013 = vunpack.c.l.b16 %v5709
        %v6014 = vunpack.c.l.b16 %v5710
        %v6015 = vunpack.c.l.b16 %v5711
        %v6016 = vunpack.c.l.b16 %v5712
        %v6017 = vunpack.c.l.b16 %v5713
        %v6018 = vunpack.c.l.b16 %v5714
        %v6019 = vunpack.c.l.b16 %v5715
        %v6020 = vunpack.c.l.b16 %v5716
        %v6021 = vunpack.c.l.b16 %v5717
        %v6022 = vunpack.c.l.b16 %v5718
        %v6023 = vunpack.c.l.b16 %v5719
        %v6024 = vunpack.c.l.b16 %v5720
        %v6025 = vunpack.c.l.b16 %v5721
        %v6026 = vunpack.c.l.b16 %v5722
        %v6027 = vunpack.c.l.b16 %v5723
        %v6028 = vunpack.c.l.b16 %v5724
        %v6029 = vunpack.c.l.b16 %v5725
        %v6030 = vunpack.c.l.b16 %v5726
        %v6031 = vunpack.c.l.b16 %v5727
        %v6032 = vunpack.c.l.b16 %v5728
        %v6033 = vunpack.c.l.b16 %v5729
        %v6034 = vunpack.c.l.b16 %v5730
        %v6035 = vunpack.c.l.b16 %v5731
        %v6036 = vunpack.c.l.b16 %v5732
        %v6037 = vunpack.c.l.b16 %v5733
        %v6038 = vunpack.c.l.b16 %v5734
        %v6039 = vunpack.c.l.b16 %v5735
        %v6040 = vunpack.c.l.b16 %v5736
        %v6041 = vunpack.c.l.b16 %v5737
        %v6042 = vunpack.c.l.b16 %v5738
        %v6043 = vunpack.c.l.b16 %v5739
        %v6044 = vunpack.c.l.b16 %v5740
        %v6045 = vunpack.c.l.b16 %v5741
        %v6046 = vunpack.c.l.b16 %v5742
        %v6047 = vunpack.c.l.b16 %v5743
        %v6048 = vunpack.c.l.b16 %v5744
        %v6049 = vunpack.c.l.b16 %v5745
        %v6050 = vunpack.c.l.b16 %v5746
        %v6051 = vunpack.c.l.b16 %v5747
        %v6052 = vunpack.c.l.b16 %v5748
        %v6053 = vunpack.c.l.b16 %v5749
        %v6054 = vunpack.c.l.b16 %v5750
        %v6055 = vunpack.c.l.b16 %v5751
        %v6056 = vunpack.c.l.b16 %v5752
        %v6057 = vunpack.c.l.b16 %v5753
        %v6058 = vunpack.c.l.b16 %v5754
        %v6059 = vunpack.c.l.b16 %v5755
        %v6060 = vunpack.c.l.b16 %v5756
        %v6061 = vunpack.c.l.b16 %v5757
        %v6062 = vunpack.c.l.b16 %v5758
        %v6063 = vunpack.c.l.b16 %v5759
        %v6064 = vpack.c.b16 %v5921, %v5920
        %v6065 = vpack.c.b16 %v5923, %v5922
        %v6066 = vpack.c.b16 %v5925, %v5924
        %v6067 = vpack.c.b16 %v5927, %v5926
        %v6068 = vpack.c.b16 %v5929, %v5928
        %v6069 = vpack.c.b16 %v5931, %v5930
        %v6070 = vpack.c.b16 %v5933, %v5932
        %v6071 = vpack.c.b16 %v5935, %v5934
        %v6072 = vpack.c.b16 %v5937, %v5936
        %v6073 = vpack.c.b16 %v5939, %v5938
        %v6074 = vpack.c.b16 %v5941, %v5940
        %v6075 = vpack.c.b16 %v5943, %v5942
        %v6076 = vpack.c.b16 %v5945, %v5944
        %v6077 = vpack.c.b16 %v5947, %v5946
        %v6078 = vpack.c.b16 %v5949, %v5948
        %v6079 = vpack.c.b16 %v5951, %v5950
        %v6080 = vpack.c.b16 %v5953, %v5952
        %v6081 = vpack.c.b16 %v5955, %v5954
        %v6082 = vpack.c.b16 %v5957, %v5956
        %v6083 = vpack.c.b16 %v5959, %v5958
        %v6084 = vpack.c.b16 %v5961, %v5960
        %v6085 = vpack.c.b16 %v5963, %v5962
        %v6086 = vpack.c.b16 %v5965, %v5964
        %v6087 = vpack.c.b16 %v5967, %v5966
        %v6088 = vpack.c.b16 %v5969, %v5968
        %v6089 = vpack.c.b16 %v5971, %v5970
        %v6090 = vpack.c.b16 %v5973, %v5972
        %v6091 = vpack.c.b16 %v5975, %v5974
        %v6092 = vpack.c.b16 %v5977, %v5976
        %v6093 = vpack.c.b16 %v5979, %v5978
        %v6094 = vpack.c.b16 %v5981, %v5980
        %v6095 = vpack.c.b16 %v5983, %v5982
        %v6096 = vpack.c.b16 %v5985, %v5984
        %v6097 = vpack.c.b16 %v5987, %v5986
        %v6098 = vpack.c.b16 %v5989, %v5988
        %v6099 = vpack.c.b16 %v5991, %v5990
        %v6100 = vpack.c.b16 %v5993, %v5992
        %v6101 = vpack.c.b16 %v5995, %v5994
        %v6102 = vpack.c.b16 %v5997, %v5996
        %v6103 = vpack.c.b16 %v5999, %v5998
        %v6104 = vpack.c.b16 %v6001, %v6000
        %v6105 = vpack.c.b16 %v6003, %v6002
        %v6106 = vpack.c.b16 %v6005, %v6004
        %v6107 = vpack.c.b16 %v6007, %v6006
        %v6108 = vpack.c.b16 %v6009, %v6008
        %v6109 = vpack.c.b16 %v6011, %v6010
        %v6110 = vpack.c.b16 %v6013, %v6012
        %v6111 = vpack.c.b16 %v6015, %v6014
        %v6112 = vpack.c.b16 %v6017, %v6016
        %v6113 = vpack.c.b16 %v6019, %v6018
        %v6114 = vpack.c.b16 %v6021, %v6020
        %v6115 = vpack.c.b16 %v6023, %v6022
        %v6116 = vpack.c.b16 %v6025, %v6024
        %v6117 = vpack.c.b16 %v6027, %v6026
        %v6118 = vpack.c.b16 %v6029, %v6028
        %v6119 = vpack.c.b16 %v6031, %v6030
        %v6120 = vpack.c.b16 %v6033, %v6032
        %v6121 = vpack.c.b16 %v6035, %v6034
        %v6122 = vpack.c.b16 %v6037, %v6036
        %v6123 = vpack.c.b16 %v6039, %v6038
        %v6124 = vpack.c.b16 %v6041, %v6040
        %v6125 = vpack.c.b16 %v6043, %v6042
        %v6126 = vpack.c.b16 %v6045, %v6044
        %v6127 = vpack.c.b16 %v6047, %v6046
        %v6128 = vpack.c.b16 %v6049, %v6048
        %v6129 = vpack.c.b16 %v6051, %v6050
        %v6130 = vpack.c.b16 %v6053, %v6052
        %v6131 = vpack.c.b16 %v6055, %v6054
        %v6132 = vpack.c.b16 %v6057, %v6056
        %v6133 = vpack.c.b16 %v6059, %v6058
        %v6134 = vpack.c.b16 %v6061, %v6060
        %v6135 = vpack.c.b16 %v6063, %v6062
        %6208 = vmatprep.subr.bf16.mxu0 0
        %6209 = vmatpush1.bf16.msra.mxu0 %v6071
        %6210 = vmatprep.subr.bf16.mxu0 0
        %6211 = vmatpush1.bf16.msra.mxu0 %v6070
        %6212 = vmatprep.subr.bf16.mxu0 0
        %6213 = vmatpush1.bf16.msra.mxu0 %v6069
        %6214 = vmatprep.subr.bf16.mxu0 0
        %6215 = vmatpush1.bf16.msra.mxu0 %v6068
        %6216 = vmatprep.subr.bf16.mxu0 0
        %6217 = vmatpush1.bf16.msra.mxu0 %v6067
        %6218 = vmatprep.subr.bf16.mxu0 0
        %6219 = vmatpush1.bf16.msra.mxu0 %v6066
        %6220 = vmatprep.subr.bf16.mxu0 0
        %6221 = vmatpush1.bf16.msra.mxu0 %v6065
        %6222 = vmatprep.subr.bf16.mxu0 0
        %6223 = vmatpush1.bf16.msra.mxu0 %v6064
        %6224 = vmatprep.subr.bf16.mxu0 0
        %6225 = vmatpush2.bf16.msra.mxu0 %v6079
        %6226 = vmatprep.subr.bf16.mxu0 0
        %6227 = vmatpush2.bf16.msra.mxu0 %v6078
        %6228 = vmatprep.subr.bf16.mxu0 0
        %6229 = vmatpush2.bf16.msra.mxu0 %v6077
        %6230 = vmatprep.subr.bf16.mxu0 0
        %6231 = vmatpush2.bf16.msra.mxu0 %v6076
        %6232 = vmatprep.subr.bf16.mxu0 0
        %6233 = vmatpush2.bf16.msra.mxu0 %v6075
        %6234 = vmatprep.subr.bf16.mxu0 0
        %6235 = vmatpush2.bf16.msra.mxu0 %v6074
        %6236 = vmatprep.subr.bf16.mxu0 0
        %6237 = vmatpush2.bf16.msra.mxu0 %v6073
        %6238 = vmatprep.subr.bf16.mxu0 0
        %6239 = vmatpush2.bf16.msra.mxu0 %v6072
        %6240 = vmatprep.mubr.bf16.mxu0 %v5761
        %6241 = vmatmul.mubr.bf16.gmra.mxu0 %v5760
        %v6242 = vpop.f32.mrf.mxu0
        %v6243 = vadd.f32 %v5774, %v6242
        %v6244 = vpop.f32.mrf.mxu0
        %v6245 = vpop.f32.mrf.mxu0
        %v6246 = vadd.f32 %v5774, %v6245
        %v6247 = vpop.f32.mrf.mxu0
        %6248 = vdwg.mxu0
        %6249 = vmatprep.subr.bf16.mxu0 0
        %6250 = vmatpush1.bf16.msra.mxu0 %v6087
        %6251 = vmatprep.subr.bf16.mxu0 0
        %6252 = vmatpush1.bf16.msra.mxu0 %v6086
        %6253 = vmatprep.subr.bf16.mxu0 0
        %6254 = vmatpush1.bf16.msra.mxu0 %v6085
        %6255 = vmatprep.subr.bf16.mxu0 0
        %6256 = vmatpush1.bf16.msra.mxu0 %v6084
        %6257 = vmatprep.subr.bf16.mxu0 0
        %6258 = vmatpush1.bf16.msra.mxu0 %v6083
        %6259 = vmatprep.subr.bf16.mxu0 0
        %6260 = vmatpush1.bf16.msra.mxu0 %v6082
        %6261 = vmatprep.subr.bf16.mxu0 0
        %6262 = vmatpush1.bf16.msra.mxu0 %v6081
        %6263 = vmatprep.subr.bf16.mxu0 0
        %6264 = vmatpush1.bf16.msra.mxu0 %v6080
        %6265 = vmatprep.subr.bf16.mxu0 0
        %6266 = vmatpush2.bf16.msra.mxu0 %v6095
        %6267 = vmatprep.subr.bf16.mxu0 0
        %6268 = vmatpush2.bf16.msra.mxu0 %v6094
        %6269 = vmatprep.subr.bf16.mxu0 0
        %6270 = vmatpush2.bf16.msra.mxu0 %v6093
        %6271 = vmatprep.subr.bf16.mxu0 0
        %6272 = vmatpush2.bf16.msra.mxu0 %v6092
        %6273 = vmatprep.subr.bf16.mxu0 0
        %6274 = vmatpush2.bf16.msra.mxu0 %v6091
        %6275 = vmatprep.subr.bf16.mxu0 0
        %6276 = vmatpush2.bf16.msra.mxu0 %v6090
        %6277 = vmatprep.subr.bf16.mxu0 0
        %6278 = vmatpush2.bf16.msra.mxu0 %v6089
        %6279 = vmatprep.subr.bf16.mxu0 0
        %6280 = vmatpush2.bf16.msra.mxu0 %v6088
        %6281 = vmatprep.mubr.bf16.mxu0 %v5763
        %6282 = vmatmul.mubr.bf16.gmra.mxu0 %v5762
        %v6283 = vpop.f32.mrf.mxu0
        %v6284 = vadd.f32 %v6243, %v6283
        %v6285 = vpop.f32.mrf.mxu0
        %v6286 = vpop.f32.mrf.mxu0
        %v6287 = vadd.f32 %v6246, %v6286
        %v6288 = vpop.f32.mrf.mxu0
        %6289 = vdwg.mxu0
        %6290 = vmatprep.subr.bf16.mxu0 0
        %6291 = vmatpush1.bf16.msra.mxu0 %v6103
        %6292 = vmatprep.subr.bf16.mxu0 0
        %6293 = vmatpush1.bf16.msra.mxu0 %v6102
        %6294 = vmatprep.subr.bf16.mxu0 0
        %6295 = vmatpush1.bf16.msra.mxu0 %v6101
        %6296 = vmatprep.subr.bf16.mxu0 0
        %6297 = vmatpush1.bf16.msra.mxu0 %v6100
        %6298 = vmatprep.subr.bf16.mxu0 0
        %6299 = vmatpush1.bf16.msra.mxu0 %v6099
        %6300 = vmatprep.subr.bf16.mxu0 0
        %6301 = vmatpush1.bf16.msra.mxu0 %v6098
        %6302 = vmatprep.subr.bf16.mxu0 0
        %6303 = vmatpush1.bf16.msra.mxu0 %v6097
        %6304 = vmatprep.subr.bf16.mxu0 0
        %6305 = vmatpush1.bf16.msra.mxu0 %v6096
        %6306 = vmatprep.subr.bf16.mxu0 0
        %6307 = vmatpush2.bf16.msra.mxu0 %v6111
        %6308 = vmatprep.subr.bf16.mxu0 0
        %6309 = vmatpush2.bf16.msra.mxu0 %v6110
        %6310 = vmatprep.subr.bf16.mxu0 0
        %6311 = vmatpush2.bf16.msra.mxu0 %v6109
        %6312 = vmatprep.subr.bf16.mxu0 0
        %6313 = vmatpush2.bf16.msra.mxu0 %v6108
        %6314 = vmatprep.subr.bf16.mxu0 0
        %6315 = vmatpush2.bf16.msra.mxu0 %v6107
        %6316 = vmatprep.subr.bf16.mxu0 0
        %6317 = vmatpush2.bf16.msra.mxu0 %v6106
        %6318 = vmatprep.subr.bf16.mxu0 0
        %6319 = vmatpush2.bf16.msra.mxu0 %v6105
        %6320 = vmatprep.subr.bf16.mxu0 0
        %6321 = vmatpush2.bf16.msra.mxu0 %v6104
        %6322 = vmatprep.mubr.bf16.mxu0 %v5765
        %6323 = vmatmul.mubr.bf16.gmra.mxu0 %v5764
        %v6324 = vpop.f32.mrf.mxu0
        %v6325 = vadd.f32 %v6284, %v6324
        %v6326 = vpop.f32.mrf.mxu0
        %v6327 = vpop.f32.mrf.mxu0
        %v6328 = vadd.f32 %v6287, %v6327
        %v6329 = vpop.f32.mrf.mxu0
        %6330 = vdwg.mxu0
        %6331 = vmatprep.subr.bf16.mxu0 0
        %6332 = vmatpush1.bf16.msra.mxu0 %v6119
        %6333 = vmatprep.subr.bf16.mxu0 0
        %6334 = vmatpush1.bf16.msra.mxu0 %v6118
        %6335 = vmatprep.subr.bf16.mxu0 0
        %6336 = vmatpush1.bf16.msra.mxu0 %v6117
        %6337 = vmatprep.subr.bf16.mxu0 0
        %6338 = vmatpush1.bf16.msra.mxu0 %v6116
        %6339 = vmatprep.subr.bf16.mxu0 0
        %6340 = vmatpush1.bf16.msra.mxu0 %v6115
        %6341 = vmatprep.subr.bf16.mxu0 0
        %6342 = vmatpush1.bf16.msra.mxu0 %v6114
        %6343 = vmatprep.subr.bf16.mxu0 0
        %6344 = vmatpush1.bf16.msra.mxu0 %v6113
        %6345 = vmatprep.subr.bf16.mxu0 0
        %6346 = vmatpush1.bf16.msra.mxu0 %v6112
        %6347 = vmatprep.subr.bf16.mxu0 0
        %6348 = vmatpush2.bf16.msra.mxu0 %v6127
        %6349 = vmatprep.subr.bf16.mxu0 0
        %6350 = vmatpush2.bf16.msra.mxu0 %v6126
        %6351 = vmatprep.subr.bf16.mxu0 0
        %6352 = vmatpush2.bf16.msra.mxu0 %v6125
        %6353 = vmatprep.subr.bf16.mxu0 0
        %6354 = vmatpush2.bf16.msra.mxu0 %v6124
        %6355 = vmatprep.subr.bf16.mxu0 0
        %6356 = vmatpush2.bf16.msra.mxu0 %v6123
        %6357 = vmatprep.subr.bf16.mxu0 0
        %6358 = vmatpush2.bf16.msra.mxu0 %v6122
        %6359 = vmatprep.subr.bf16.mxu0 0
        %6360 = vmatpush2.bf16.msra.mxu0 %v6121
        %6361 = vmatprep.subr.bf16.mxu0 0
        %6362 = vmatpush2.bf16.msra.mxu0 %v6120
        %6363 = vmatprep.mubr.bf16.mxu0 %v5767
        %6364 = vmatmul.mubr.bf16.gmra.mxu0 %v5766
        %v6365 = vpop.f32.mrf.mxu0
        %v6366 = vadd.f32 %v6325, %v6365
        %v6367 = vpop.f32.mrf.mxu0
        %v6368 = vpop.f32.mrf.mxu0
        %v6369 = vadd.f32 %v6328, %v6368
        %v6370 = vpop.f32.mrf.mxu0
        %6371 = vdwg.mxu0
        %6372 = vmatprep.subr.bf16.mxu0 0
        %6373 = vmatpush1.bf16.msra.mxu0 %v6135
        %6374 = vmatprep.subr.bf16.mxu0 0
        %6375 = vmatpush1.bf16.msra.mxu0 %v6134
        %6376 = vmatprep.subr.bf16.mxu0 0
        %6377 = vmatpush1.bf16.msra.mxu0 %v6133
        %6378 = vmatprep.subr.bf16.mxu0 0
        %6379 = vmatpush1.bf16.msra.mxu0 %v6132
        %6380 = vmatprep.subr.bf16.mxu0 0
        %6381 = vmatpush1.bf16.msra.mxu0 %v6131
        %6382 = vmatprep.subr.bf16.mxu0 0
        %6383 = vmatpush1.bf16.msra.mxu0 %v6130
        %6384 = vmatprep.subr.bf16.mxu0 0
        %6385 = vmatpush1.bf16.msra.mxu0 %v6129
        %6386 = vmatprep.subr.bf16.mxu0 0
        %6387 = vmatpush1.bf16.msra.mxu0 %v6128
        %6388 = vmatprep.subr.bf16.mxu0 0
        %6389 = vmatpush2.bf16.msra.mxu0 0
        %6390 = vmatprep.subr.bf16.mxu0 0
        %6391 = vmatpush2.bf16.msra.mxu0 0
        %6392 = vmatprep.subr.bf16.mxu0 0
        %6393 = vmatpush2.bf16.msra.mxu0 0
        %6394 = vmatprep.subr.bf16.mxu0 0
        %6395 = vmatpush2.bf16.msra.mxu0 0
        %6396 = vmatprep.subr.bf16.mxu0 0
        %6397 = vmatpush2.bf16.msra.mxu0 0
        %6398 = vmatprep.subr.bf16.mxu0 0
        %6399 = vmatpush2.bf16.msra.mxu0 0
        %6400 = vmatprep.subr.bf16.mxu0 0
        %6401 = vmatpush2.bf16.msra.mxu0 0
        %6402 = vmatprep.subr.bf16.mxu0 0
        %6403 = vmatpush2.bf16.msra.mxu0 0
        %6404 = vmatprep.mubr.bf16.mxu0 0
        %6405 = vmatmul.mubr.bf16.gmra.mxu0 %v5768
        %v6406 = vpop.f32.mrf.mxu0
        %v6407 = vadd.f32 %v6366, %v6406
        %v6408 = vpop.f32.mrf.mxu0
        %v6409 = vpop.f32.mrf.mxu0
        %v6410 = vadd.f32 %v6369, %v6409
        %v6411 = vpop.f32.mrf.mxu0
        %6412 = vdwg.mxu0
        %v6413 = vmax.f32 %v6407, 0.0
        %v6414 = vmax.f32 %v6410, 0.0
        %v6415 = vld [vmem:[#allocation10] sm:$0xf]
        %v6416 = vld [vmem:[#allocation10 + $0x4] sm:$0xf]
        %v6417 = vld [vmem:[#allocation10 + $0x8] sm:$0xf]
        %v6418 = vld [vmem:[#allocation10 + $0xc] sm:$0xf]
        %v6419 = vld [vmem:[#allocation10 + $0x10] sm:$0xf]
        %v6420 = vld [vmem:[#allocation10 + $0x14] sm:$0xf]
        %v6421 = vld [vmem:[#allocation10 + $0x18] sm:$0xf]
        %v6422 = vld [vmem:[#allocation10 + $0x1c] sm:$0xf]
        %v6423 = vld [vmem:[#allocation10 + $0x20] sm:$0xf]
        %v6424 = vld [vmem:[#allocation10 + $0x24] sm:$0xf]
        %v6425 = vld [vmem:[#allocation10 + $0x28] sm:$0xf]
        %v6426 = vld [vmem:[#allocation10 + $0x2c] sm:$0xf]
        %v6427 = vld [vmem:[#allocation10 + $0x30] sm:$0xf]
        %v6428 = vld [vmem:[#allocation10 + $0x34] sm:$0xf]
        %v6429 = vld [vmem:[#allocation10 + $0x38] sm:$0xf]
        %v6430 = vld [vmem:[#allocation10 + $0x3c] sm:$0xf]
        %v6431 = vpack.c.bf16 %v6414, %v6413
        %v6432 = vld [vmem:[%s25] sm:$0x1]
        %v6434 = vlaneseq
        %v6435 = vshrl.u32 %v6434, 7
        %v6436 = vsub.s32 0, %v6435
        %v6437 = vrot.slane %v6432, %v6436
        %v6455 = vunpack.c.l.b16 %v6415
        %v6456 = vunpack.c.l.b16 %v6416
        %v6457 = vunpack.c.l.b16 %v6417
        %v6458 = vunpack.c.l.b16 %v6418
        %v6459 = vunpack.c.l.b16 %v6419
        %v6460 = vunpack.c.l.b16 %v6420
        %v6461 = vunpack.c.l.b16 %v6421
        %v6462 = vunpack.c.l.b16 %v6422
        %v6463 = vunpack.c.l.b16 %v6423
        %v6464 = vunpack.c.l.b16 %v6424
        %v6465 = vunpack.c.l.b16 %v6425
        %v6466 = vunpack.c.l.b16 %v6426
        %v6467 = vunpack.c.l.b16 %v6427
        %v6468 = vunpack.c.l.b16 %v6428
        %v6469 = vunpack.c.l.b16 %v6429
        %v6470 = vunpack.c.l.b16 %v6430
        %v6471 = vpack.c.b16 %v6456, %v6455
        %v6472 = vpack.c.b16 %v6458, %v6457
        %v6473 = vpack.c.b16 %v6460, %v6459
        %v6474 = vpack.c.b16 %v6462, %v6461
        %v6475 = vpack.c.b16 %v6464, %v6463
        %v6476 = vpack.c.b16 %v6466, %v6465
        %v6477 = vpack.c.b16 %v6468, %v6467
        %v6478 = vpack.c.b16 %v6470, %v6469
        %6487 = vmatprep.subr.bf16.mxu0 0
        %6488 = vmatpush1.bf16.msra.mxu0 %v6478
        %6489 = vmatprep.subr.bf16.mxu0 0
        %6490 = vmatpush1.bf16.msra.mxu0 %v6477
        %6491 = vmatprep.subr.bf16.mxu0 0
        %6492 = vmatpush1.bf16.msra.mxu0 %v6476
        %6493 = vmatprep.subr.bf16.mxu0 0
        %6494 = vmatpush1.bf16.msra.mxu0 %v6475
        %6495 = vmatprep.subr.bf16.mxu0 0
        %6496 = vmatpush1.bf16.msra.mxu0 %v6474
        %6497 = vmatprep.subr.bf16.mxu0 0
        %6498 = vmatpush1.bf16.msra.mxu0 %v6473
        %6499 = vmatprep.subr.bf16.mxu0 0
        %6500 = vmatpush1.bf16.msra.mxu0 %v6472
        %6501 = vmatprep.subr.bf16.mxu0 0
        %6502 = vmatpush1.bf16.msra.mxu0 %v6471
        %6503 = vmatprep.subr.bf16.mxu0 0
        %6504 = vmatpush2.bf16.msra.mxu0 0
        %6505 = vmatprep.subr.bf16.mxu0 0
        %6506 = vmatpush2.bf16.msra.mxu0 0
        %6507 = vmatprep.subr.bf16.mxu0 0
        %6508 = vmatpush2.bf16.msra.mxu0 0
        %6509 = vmatprep.subr.bf16.mxu0 0
        %6510 = vmatpush2.bf16.msra.mxu0 0
        %6511 = vmatprep.subr.bf16.mxu0 0
        %6512 = vmatpush2.bf16.msra.mxu0 0
        %6513 = vmatprep.subr.bf16.mxu0 0
        %6514 = vmatpush2.bf16.msra.mxu0 0
        %6515 = vmatprep.subr.bf16.mxu0 0
        %6516 = vmatpush2.bf16.msra.mxu0 0
        %6517 = vmatprep.subr.bf16.mxu0 0
        %6518 = vmatpush2.bf16.msra.mxu0 0
        %6519 = vmatprep.mubr.bf16.mxu0 0
        %6520 = vmatmul.mubr.bf16.gmra.mxu0 %v6431
        %v6521 = vpop.f32.mrf.mxu0
        %v6522 = vadd.f32 %v6437, %v6521
        %v6523 = vpop.f32.mrf.mxu0
        %v6524 = vpop.f32.mrf.mxu0
        %v6525 = vadd.f32 %v6437, %v6524
        %v6526 = vpop.f32.mrf.mxu0
        %6527 = vdwg.mxu0
        %v6528 = vmax.f32 %v6522, 0.0
        %v6529 = vmax.f32 %v6525, 0.0
        %v6530 = vld [vmem:[#allocation28] sm:$0x3]
        %v6531 = vpack.c.bf16 %v6529, %v6528
        %v6533 = vsel %vm5155, %v6530, 0
        %6535 = vmatprep.subr.bf16.mxu0 0
        %6536 = vmatpush1.bf16.msra.mxu0 0
        %6537 = vmatprep.subr.bf16.mxu0 0
        %6538 = vmatpush1.bf16.msra.mxu0 0
        %6539 = vmatprep.subr.bf16.mxu0 0
        %6540 = vmatpush1.bf16.msra.mxu0 0
        %6541 = vmatprep.subr.bf16.mxu0 0
        %6542 = vmatpush1.bf16.msra.mxu0 0
        %6543 = vmatprep.subr.bf16.mxu0 0
        %6544 = vmatpush1.bf16.msra.mxu0 0
        %6545 = vmatprep.subr.bf16.mxu0 0
        %6546 = vmatpush1.bf16.msra.mxu0 0
        %6547 = vmatprep.subr.bf16.mxu0 0
        %6548 = vmatpush1.bf16.msra.mxu0 0
        %6549 = vmatprep.subr.bf16.mxu0 0
        %6550 = vmatpush1.bf16.msra.mxu0 %v6531
        %6551 = vmatprep.subr.bf16.mxu0 0
        %6552 = vmatpush2.bf16.msra.mxu0 0
        %6553 = vmatprep.subr.bf16.mxu0 0
        %6554 = vmatpush2.bf16.msra.mxu0 0
        %6555 = vmatprep.subr.bf16.mxu0 0
        %6556 = vmatpush2.bf16.msra.mxu0 0
        %6557 = vmatprep.subr.bf16.mxu0 0
        %6558 = vmatpush2.bf16.msra.mxu0 0
        %6559 = vmatprep.subr.bf16.mxu0 0
        %6560 = vmatpush2.bf16.msra.mxu0 0
        %6561 = vmatprep.subr.bf16.mxu0 0
        %6562 = vmatpush2.bf16.msra.mxu0 0
        %6563 = vmatprep.subr.bf16.mxu0 0
        %6564 = vmatpush2.bf16.msra.mxu0 0
        %6565 = vmatprep.subr.bf16.mxu0 0
        %6566 = vmatpush2.bf16.msra.mxu0 0
        %6567 = vmatprep.mubr.bf16.mxu0 0
        %6568 = vmatmul.mubr.bf16.gmra.mxu0 %v6533
        %v6569 = vpop.f32.mrf.mxu0
        %v6570 = vadd.f32 0.0, %v6569
        %v6571 = vpop.f32.mrf.mxu0
        %v6572 = vpop.f32.mrf.mxu0
        %v6573 = vpop.f32.mrf.mxu0
        %6574 = vdwg.mxu0
        %s6575 = scalar_lea.vmem [#allocation28], 2
        %v6576 = vld [vmem:[%s6575] sm:$0x3]
        %v6578 = vsel %vm5155, %v6576, 0
        %6580 = vmatprep.subr.bf16.mxu0 0
        %6581 = vmatpush1.bf16.msra.mxu0 0
        %6582 = vmatprep.subr.bf16.mxu0 0
        %6583 = vmatpush1.bf16.msra.mxu0 0
        %6584 = vmatprep.subr.bf16.mxu0 0
        %6585 = vmatpush1.bf16.msra.mxu0 0
        %6586 = vmatprep.subr.bf16.mxu0 0
        %6587 = vmatpush1.bf16.msra.mxu0 0
        %6588 = vmatprep.subr.bf16.mxu0 0
        %6589 = vmatpush1.bf16.msra.mxu0 0
        %6590 = vmatprep.subr.bf16.mxu0 0
        %6591 = vmatpush1.bf16.msra.mxu0 0
        %6592 = vmatprep.subr.bf16.mxu0 0
        %6593 = vmatpush1.bf16.msra.mxu0 0
        %6594 = vmatprep.subr.bf16.mxu0 0
        %6595 = vmatpush1.bf16.msra.mxu0 %v6531
        %6596 = vmatprep.subr.bf16.mxu0 0
        %6597 = vmatpush2.bf16.msra.mxu0 0
        %6598 = vmatprep.subr.bf16.mxu0 0
        %6599 = vmatpush2.bf16.msra.mxu0 0
        %6600 = vmatprep.subr.bf16.mxu0 0
        %6601 = vmatpush2.bf16.msra.mxu0 0
        %6602 = vmatprep.subr.bf16.mxu0 0
        %6603 = vmatpush2.bf16.msra.mxu0 0
        %6604 = vmatprep.subr.bf16.mxu0 0
        %6605 = vmatpush2.bf16.msra.mxu0 0
        %6606 = vmatprep.subr.bf16.mxu0 0
        %6607 = vmatpush2.bf16.msra.mxu0 0
        %6608 = vmatprep.subr.bf16.mxu0 0
        %6609 = vmatpush2.bf16.msra.mxu0 0
        %6610 = vmatprep.subr.bf16.mxu0 0
        %6611 = vmatpush2.bf16.msra.mxu0 0
        %6612 = vmatprep.mubr.bf16.mxu0 0
        %6613 = vmatmul.mubr.bf16.gmra.mxu0 %v6578
        %v6614 = vpop.f32.mrf.mxu0
        %v6615 = vadd.f32 0.0, %v6614
        %v6616 = vpop.f32.mrf.mxu0
        %v6617 = vpop.f32.mrf.mxu0
        %v6618 = vpop.f32.mrf.mxu0
        %6619 = vdwg.mxu0
        %v6620 = vmax.f32 %v6570, %v6615
        %s6621 = scalar_lea.vmem [#allocation28], 4
        %v6622 = vld [vmem:[%s6621] sm:$0x3]
        %v6624 = vsel %vm5155, %v6622, 0
        %6626 = vmatprep.subr.bf16.mxu0 0
        %6627 = vmatpush1.bf16.msra.mxu0 0
        %6628 = vmatprep.subr.bf16.mxu0 0
        %6629 = vmatpush1.bf16.msra.mxu0 0
        %6630 = vmatprep.subr.bf16.mxu0 0
        %6631 = vmatpush1.bf16.msra.mxu0 0
        %6632 = vmatprep.subr.bf16.mxu0 0
        %6633 = vmatpush1.bf16.msra.mxu0 0
        %6634 = vmatprep.subr.bf16.mxu0 0
        %6635 = vmatpush1.bf16.msra.mxu0 0
        %6636 = vmatprep.subr.bf16.mxu0 0
        %6637 = vmatpush1.bf16.msra.mxu0 0
        %6638 = vmatprep.subr.bf16.mxu0 0
        %6639 = vmatpush1.bf16.msra.mxu0 0
        %6640 = vmatprep.subr.bf16.mxu0 0
        %6641 = vmatpush1.bf16.msra.mxu0 %v6531
        %6642 = vmatprep.subr.bf16.mxu0 0
        %6643 = vmatpush2.bf16.msra.mxu0 0
        %6644 = vmatprep.subr.bf16.mxu0 0
        %6645 = vmatpush2.bf16.msra.mxu0 0
        %6646 = vmatprep.subr.bf16.mxu0 0
        %6647 = vmatpush2.bf16.msra.mxu0 0
        %6648 = vmatprep.subr.bf16.mxu0 0
        %6649 = vmatpush2.bf16.msra.mxu0 0
        %6650 = vmatprep.subr.bf16.mxu0 0
        %6651 = vmatpush2.bf16.msra.mxu0 0
        %6652 = vmatprep.subr.bf16.mxu0 0
        %6653 = vmatpush2.bf16.msra.mxu0 0
        %6654 = vmatprep.subr.bf16.mxu0 0
        %6655 = vmatpush2.bf16.msra.mxu0 0
        %6656 = vmatprep.subr.bf16.mxu0 0
        %6657 = vmatpush2.bf16.msra.mxu0 0
        %6658 = vmatprep.mubr.bf16.mxu0 0
        %6659 = vmatmul.mubr.bf16.gmra.mxu0 %v6624
        %v6660 = vpop.f32.mrf.mxu0
        %v6661 = vadd.f32 0.0, %v6660
        %v6662 = vpop.f32.mrf.mxu0
        %v6663 = vpop.f32.mrf.mxu0
        %v6664 = vpop.f32.mrf.mxu0
        %6665 = vdwg.mxu0
        %v6666 = vmax.f32 %v6620, %v6661
        %s6667 = scalar_lea.vmem [#allocation28], 6
        %v6668 = vld [vmem:[%s6667] sm:$0x3]
        %v6670 = vsel %vm5155, %v6668, 0
        %6672 = vmatprep.subr.bf16.mxu0 0
        %6673 = vmatpush1.bf16.msra.mxu0 0
        %6674 = vmatprep.subr.bf16.mxu0 0
        %6675 = vmatpush1.bf16.msra.mxu0 0
        %6676 = vmatprep.subr.bf16.mxu0 0
        %6677 = vmatpush1.bf16.msra.mxu0 0
        %6678 = vmatprep.subr.bf16.mxu0 0
        %6679 = vmatpush1.bf16.msra.mxu0 0
        %6680 = vmatprep.subr.bf16.mxu0 0
        %6681 = vmatpush1.bf16.msra.mxu0 0
        %6682 = vmatprep.subr.bf16.mxu0 0
        %6683 = vmatpush1.bf16.msra.mxu0 0
        %6684 = vmatprep.subr.bf16.mxu0 0
        %6685 = vmatpush1.bf16.msra.mxu0 0
        %6686 = vmatprep.subr.bf16.mxu0 0
        %6687 = vmatpush1.bf16.msra.mxu0 %v6531
        %6688 = vmatprep.subr.bf16.mxu0 0
        %6689 = vmatpush2.bf16.msra.mxu0 0
        %6690 = vmatprep.subr.bf16.mxu0 0
        %6691 = vmatpush2.bf16.msra.mxu0 0
        %6692 = vmatprep.subr.bf16.mxu0 0
        %6693 = vmatpush2.bf16.msra.mxu0 0
        %6694 = vmatprep.subr.bf16.mxu0 0
        %6695 = vmatpush2.bf16.msra.mxu0 0
        %6696 = vmatprep.subr.bf16.mxu0 0
        %6697 = vmatpush2.bf16.msra.mxu0 0
        %6698 = vmatprep.subr.bf16.mxu0 0
        %6699 = vmatpush2.bf16.msra.mxu0 0
        %6700 = vmatprep.subr.bf16.mxu0 0
        %6701 = vmatpush2.bf16.msra.mxu0 0
        %6702 = vmatprep.subr.bf16.mxu0 0
        %6703 = vmatpush2.bf16.msra.mxu0 0
        %6704 = vmatprep.mubr.bf16.mxu0 0
        %6705 = vmatmul.mubr.bf16.gmra.mxu0 %v6670
        %v6706 = vpop.f32.mrf.mxu0
        %v6707 = vadd.f32 0.0, %v6706
        %v6708 = vpop.f32.mrf.mxu0
        %v6709 = vpop.f32.mrf.mxu0
        %v6710 = vpop.f32.mrf.mxu0
        %6711 = vdwg.mxu0
        %v6712 = vmax.f32 %v6666, %v6707
        %v6713 = vld [vmem:[#allocation12] sm:$0xff]
        %v6714 = vld [vmem:[#allocation12 + $0x8] sm:$0xff]
        %v6715 = vld [vmem:[#allocation12 + $0x10] sm:$0xff]
        %v6716 = vld [vmem:[#allocation12 + $0x18] sm:$0xff]
        %v6717 = vld [vmem:[#allocation12 + $0x20] sm:$0xff]
        %v6718 = vld [vmem:[#allocation12 + $0x28] sm:$0xff]
        %v6719 = vld [vmem:[#allocation12 + $0x30] sm:$0xff]
        %v6720 = vld [vmem:[#allocation12 + $0x38] sm:$0xff]
        %v6721 = vld [vmem:[#allocation12 + $0x40] sm:$0xff]
        %v6722 = vld [vmem:[#allocation12 + $0x48] sm:$0xff]
        %v6723 = vld [vmem:[#allocation12 + $0x50] sm:$0xff]
        %v6724 = vld [vmem:[#allocation12 + $0x58] sm:$0xff]
        %v6725 = vld [vmem:[#allocation12 + $0x60] sm:$0xff]
        %v6726 = vld [vmem:[#allocation12 + $0x68] sm:$0xff]
        %v6727 = vld [vmem:[#allocation12 + $0x70] sm:$0xff]
        %v6728 = vld [vmem:[#allocation12 + $0x78] sm:$0xff]
        %v6729 = vpack.c.bf16 %v6712, %v6712
        %v6730 = vld [vmem:[%s29] sm:$0x3]
        %v6732 = vlaneseq
        %v6733 = vshrl.u32 %v6732, 7
        %v6734 = vsub.s32 0, %v6733
        %v6735 = vrot.slane %v6730, %v6734
        %v6736 = vlaneseq
        %v6737 = vshrl.u32 %v6736, 7
        %v6738 = vsub.s32 1, %v6737
        %v6739 = vrot.slane %v6730, %v6738
        %v6758 = vunpack.c.l.b16 %v6713
        %v6759 = vunpack.c.h.b16 %v6713
        %v6760 = vunpack.c.l.b16 %v6714
        %v6761 = vunpack.c.h.b16 %v6714
        %v6762 = vunpack.c.l.b16 %v6715
        %v6763 = vunpack.c.h.b16 %v6715
        %v6764 = vunpack.c.l.b16 %v6716
        %v6765 = vunpack.c.h.b16 %v6716
        %v6766 = vunpack.c.l.b16 %v6717
        %v6767 = vunpack.c.h.b16 %v6717
        %v6768 = vunpack.c.l.b16 %v6718
        %v6769 = vunpack.c.h.b16 %v6718
        %v6770 = vunpack.c.l.b16 %v6719
        %v6771 = vunpack.c.h.b16 %v6719
        %v6772 = vunpack.c.l.b16 %v6720
        %v6773 = vunpack.c.h.b16 %v6720
        %v6774 = vunpack.c.l.b16 %v6721
        %v6775 = vunpack.c.h.b16 %v6721
        %v6776 = vunpack.c.l.b16 %v6722
        %v6777 = vunpack.c.h.b16 %v6722
        %v6778 = vunpack.c.l.b16 %v6723
        %v6779 = vunpack.c.h.b16 %v6723
        %v6780 = vunpack.c.l.b16 %v6724
        %v6781 = vunpack.c.h.b16 %v6724
        %v6782 = vunpack.c.l.b16 %v6725
        %v6783 = vunpack.c.h.b16 %v6725
        %v6784 = vunpack.c.l.b16 %v6726
        %v6785 = vunpack.c.h.b16 %v6726
        %v6786 = vunpack.c.l.b16 %v6727
        %v6787 = vunpack.c.h.b16 %v6727
        %v6788 = vunpack.c.l.b16 %v6728
        %v6789 = vunpack.c.h.b16 %v6728
        %v6790 = vpack.c.b16 %v6760, %v6758
        %v6791 = vpack.c.b16 %v6761, %v6759
        %v6792 = vpack.c.b16 %v6764, %v6762
        %v6793 = vpack.c.b16 %v6765, %v6763
        %v6794 = vpack.c.b16 %v6768, %v6766
        %v6795 = vpack.c.b16 %v6769, %v6767
        %v6796 = vpack.c.b16 %v6772, %v6770
        %v6797 = vpack.c.b16 %v6773, %v6771
        %v6798 = vpack.c.b16 %v6776, %v6774
        %v6799 = vpack.c.b16 %v6777, %v6775
        %v6800 = vpack.c.b16 %v6780, %v6778
        %v6801 = vpack.c.b16 %v6781, %v6779
        %v6802 = vpack.c.b16 %v6784, %v6782
        %v6803 = vpack.c.b16 %v6785, %v6783
        %v6804 = vpack.c.b16 %v6788, %v6786
        %v6805 = vpack.c.b16 %v6789, %v6787
        %6822 = vmatprep.subr.bf16.mxu0 %v6805
        %6823 = vmatpush1.bf16.msra.mxu0 %v6804
        %6824 = vmatprep.subr.bf16.mxu0 %v6803
        %6825 = vmatpush1.bf16.msra.mxu0 %v6802
        %6826 = vmatprep.subr.bf16.mxu0 %v6801
        %6827 = vmatpush1.bf16.msra.mxu0 %v6800
        %6828 = vmatprep.subr.bf16.mxu0 %v6799
        %6829 = vmatpush1.bf16.msra.mxu0 %v6798
        %6830 = vmatprep.subr.bf16.mxu0 %v6797
        %6831 = vmatpush1.bf16.msra.mxu0 %v6796
        %6832 = vmatprep.subr.bf16.mxu0 %v6795
        %6833 = vmatpush1.bf16.msra.mxu0 %v6794
        %6834 = vmatprep.subr.bf16.mxu0 %v6793
        %6835 = vmatpush1.bf16.msra.mxu0 %v6792
        %6836 = vmatprep.subr.bf16.mxu0 %v6791
        %6837 = vmatpush1.bf16.msra.mxu0 %v6790
        %6838 = vmatprep.subr.bf16.mxu0 0
        %6839 = vmatpush2.bf16.msra.mxu0 0
        %6840 = vmatprep.subr.bf16.mxu0 0
        %6841 = vmatpush2.bf16.msra.mxu0 0
        %6842 = vmatprep.subr.bf16.mxu0 0
        %6843 = vmatpush2.bf16.msra.mxu0 0
        %6844 = vmatprep.subr.bf16.mxu0 0
        %6845 = vmatpush2.bf16.msra.mxu0 0
        %6846 = vmatprep.subr.bf16.mxu0 0
        %6847 = vmatpush2.bf16.msra.mxu0 0
        %6848 = vmatprep.subr.bf16.mxu0 0
        %6849 = vmatpush2.bf16.msra.mxu0 0
        %6850 = vmatprep.subr.bf16.mxu0 0
        %6851 = vmatpush2.bf16.msra.mxu0 0
        %6852 = vmatprep.subr.bf16.mxu0 0
        %6853 = vmatpush2.bf16.msra.mxu0 0
        %6854 = vmatprep.mubr.bf16.mxu0 0
        %6855 = vmatmul.mubr.bf16.gmra.mxu0 %v6729
        %v6856 = vpop.f32.mrf.mxu0
        %v6857 = vadd.f32 %v6735, %v6856
        %v6858 = vpop.f32.mrf.mxu0
        %v6859 = vadd.f32 %v6739, %v6858
        %v6860 = vpop.f32.mrf.mxu0
        %v6861 = vpop.f32.mrf.mxu0
        %6862 = vdwg.mxu0
        %v6863 = vmax.f32 %v6857, 0.0
        %v6864 = vmax.f32 %v6859, 0.0
        %v6865 = vld [vmem:[%s55] sm:$0x3]
        %v6866 = vpack.c.bf16 %v6863, %v6863
        %v6867 = vpack.c.bf16 %v6864, %v6864
        %vm6868 = vcmask 31744
        %v6870 = vsel %vm6868, %v6865, 0
        %vm6872 = vcmask 1041408
        %v6874 = vsel %vm6872, %v6866, 0
        %v6877 = vsel %vm6872, %v6867, 0
        %6879 = vmatprep.subr.bf16.mxu0 0
        %6880 = vmatpush1.bf16.msra.mxu0 0
        %6881 = vmatprep.subr.bf16.mxu0 0
        %6882 = vmatpush1.bf16.msra.mxu0 0
        %6883 = vmatprep.subr.bf16.mxu0 0
        %6884 = vmatpush1.bf16.msra.mxu0 0
        %6885 = vmatprep.subr.bf16.mxu0 0
        %6886 = vmatpush1.bf16.msra.mxu0 0
        %6887 = vmatprep.subr.bf16.mxu0 0
        %6888 = vmatpush1.bf16.msra.mxu0 0
        %6889 = vmatprep.subr.bf16.mxu0 0
        %6890 = vmatpush1.bf16.msra.mxu0 0
        %6891 = vmatprep.subr.bf16.mxu0 0
        %6892 = vmatpush1.bf16.msra.mxu0 0
        %6893 = vmatprep.subr.bf16.mxu0 %v6877
        %6894 = vmatpush1.bf16.msra.mxu0 %v6874
        %6895 = vmatprep.subr.bf16.mxu0 0
        %6896 = vmatpush2.bf16.msra.mxu0 0
        %6897 = vmatprep.subr.bf16.mxu0 0
        %6898 = vmatpush2.bf16.msra.mxu0 0
        %6899 = vmatprep.subr.bf16.mxu0 0
        %6900 = vmatpush2.bf16.msra.mxu0 0
        %6901 = vmatprep.subr.bf16.mxu0 0
        %6902 = vmatpush2.bf16.msra.mxu0 0
        %6903 = vmatprep.subr.bf16.mxu0 0
        %6904 = vmatpush2.bf16.msra.mxu0 0
        %6905 = vmatprep.subr.bf16.mxu0 0
        %6906 = vmatpush2.bf16.msra.mxu0 0
        %6907 = vmatprep.subr.bf16.mxu0 0
        %6908 = vmatpush2.bf16.msra.mxu0 0
        %6909 = vmatprep.subr.bf16.mxu0 0
        %6910 = vmatpush2.bf16.msra.mxu0 0
        %6911 = vmatprep.mubr.bf16.mxu0 0
        %6912 = vmatmul.mubr.bf16.gmra.mxu0 %v6870
        %v6913 = vpop.f32.mrf.mxu0
        %v6914 = vadd.f32 0.0, %v6913
        %v6915 = vpop.f32.mrf.mxu0
        %v6916 = vadd.f32 0.0, %v6915
        %v6917 = vpop.f32.mrf.mxu0
        %v6918 = vpop.f32.mrf.mxu0
        %6919 = vdwg.mxu0
        %s6920 = scalar_lea.vmem %s55, 2
        %v6921 = vld [vmem:[%s6920] sm:$0x3]
        %v6923 = vsel %vm6868, %v6921, 0
        %6925 = vmatprep.subr.bf16.mxu0 0
        %6926 = vmatpush1.bf16.msra.mxu0 0
        %6927 = vmatprep.subr.bf16.mxu0 0
        %6928 = vmatpush1.bf16.msra.mxu0 0
        %6929 = vmatprep.subr.bf16.mxu0 0
        %6930 = vmatpush1.bf16.msra.mxu0 0
        %6931 = vmatprep.subr.bf16.mxu0 0
        %6932 = vmatpush1.bf16.msra.mxu0 0
        %6933 = vmatprep.subr.bf16.mxu0 0
        %6934 = vmatpush1.bf16.msra.mxu0 0
        %6935 = vmatprep.subr.bf16.mxu0 0
        %6936 = vmatpush1.bf16.msra.mxu0 0
        %6937 = vmatprep.subr.bf16.mxu0 0
        %6938 = vmatpush1.bf16.msra.mxu0 0
        %6939 = vmatprep.subr.bf16.mxu0 %v6877
        %6940 = vmatpush1.bf16.msra.mxu0 %v6874
        %6941 = vmatprep.subr.bf16.mxu0 0
        %6942 = vmatpush2.bf16.msra.mxu0 0
        %6943 = vmatprep.subr.bf16.mxu0 0
        %6944 = vmatpush2.bf16.msra.mxu0 0
        %6945 = vmatprep.subr.bf16.mxu0 0
        %6946 = vmatpush2.bf16.msra.mxu0 0
        %6947 = vmatprep.subr.bf16.mxu0 0
        %6948 = vmatpush2.bf16.msra.mxu0 0
        %6949 = vmatprep.subr.bf16.mxu0 0
        %6950 = vmatpush2.bf16.msra.mxu0 0
        %6951 = vmatprep.subr.bf16.mxu0 0
        %6952 = vmatpush2.bf16.msra.mxu0 0
        %6953 = vmatprep.subr.bf16.mxu0 0
        %6954 = vmatpush2.bf16.msra.mxu0 0
        %6955 = vmatprep.subr.bf16.mxu0 0
        %6956 = vmatpush2.bf16.msra.mxu0 0
        %6957 = vmatprep.mubr.bf16.mxu0 0
        %6958 = vmatmul.mubr.bf16.gmra.mxu0 %v6923
        %v6959 = vpop.f32.mrf.mxu0
        %v6960 = vadd.f32 0.0, %v6959
        %v6961 = vpop.f32.mrf.mxu0
        %v6962 = vadd.f32 0.0, %v6961
        %v6963 = vpop.f32.mrf.mxu0
        %v6964 = vpop.f32.mrf.mxu0
        %6965 = vdwg.mxu0
        %s6966 = scalar_lea.vmem %s55, 4
        %v6967 = vld [vmem:[%s6966] sm:$0x3]
        %v6969 = vsel %vm6868, %v6967, 0
        %6971 = vmatprep.subr.bf16.mxu0 0
        %6972 = vmatpush1.bf16.msra.mxu0 0
        %6973 = vmatprep.subr.bf16.mxu0 0
        %6974 = vmatpush1.bf16.msra.mxu0 0
        %6975 = vmatprep.subr.bf16.mxu0 0
        %6976 = vmatpush1.bf16.msra.mxu0 0
        %6977 = vmatprep.subr.bf16.mxu0 0
        %6978 = vmatpush1.bf16.msra.mxu0 0
        %6979 = vmatprep.subr.bf16.mxu0 0
        %6980 = vmatpush1.bf16.msra.mxu0 0
        %6981 = vmatprep.subr.bf16.mxu0 0
        %6982 = vmatpush1.bf16.msra.mxu0 0
        %6983 = vmatprep.subr.bf16.mxu0 0
        %6984 = vmatpush1.bf16.msra.mxu0 0
        %6985 = vmatprep.subr.bf16.mxu0 %v6877
        %6986 = vmatpush1.bf16.msra.mxu0 %v6874
        %6987 = vmatprep.subr.bf16.mxu0 0
        %6988 = vmatpush2.bf16.msra.mxu0 0
        %6989 = vmatprep.subr.bf16.mxu0 0
        %6990 = vmatpush2.bf16.msra.mxu0 0
        %6991 = vmatprep.subr.bf16.mxu0 0
        %6992 = vmatpush2.bf16.msra.mxu0 0
        %6993 = vmatprep.subr.bf16.mxu0 0
        %6994 = vmatpush2.bf16.msra.mxu0 0
        %6995 = vmatprep.subr.bf16.mxu0 0
        %6996 = vmatpush2.bf16.msra.mxu0 0
        %6997 = vmatprep.subr.bf16.mxu0 0
        %6998 = vmatpush2.bf16.msra.mxu0 0
        %6999 = vmatprep.subr.bf16.mxu0 0
        %7000 = vmatpush2.bf16.msra.mxu0 0
        %7001 = vmatprep.subr.bf16.mxu0 0
        %7002 = vmatpush2.bf16.msra.mxu0 0
        %7003 = vmatprep.mubr.bf16.mxu0 0
        %7004 = vmatmul.mubr.bf16.gmra.mxu0 %v6969
        %v7005 = vpop.f32.mrf.mxu0
        %v7006 = vadd.f32 0.0, %v7005
        %v7007 = vpop.f32.mrf.mxu0
        %v7008 = vadd.f32 0.0, %v7007
        %v7009 = vpop.f32.mrf.mxu0
        %v7010 = vpop.f32.mrf.mxu0
        %7011 = vdwg.mxu0
        %s7012 = scalar_lea.vmem %s55, 6
        %v7013 = vld [vmem:[%s7012] sm:$0x3]
        %v7015 = vsel %vm6868, %v7013, 0
        %7017 = vmatprep.subr.bf16.mxu0 0
        %7018 = vmatpush1.bf16.msra.mxu0 0
        %7019 = vmatprep.subr.bf16.mxu0 0
        %7020 = vmatpush1.bf16.msra.mxu0 0
        %7021 = vmatprep.subr.bf16.mxu0 0
        %7022 = vmatpush1.bf16.msra.mxu0 0
        %7023 = vmatprep.subr.bf16.mxu0 0
        %7024 = vmatpush1.bf16.msra.mxu0 0
        %7025 = vmatprep.subr.bf16.mxu0 0
        %7026 = vmatpush1.bf16.msra.mxu0 0
        %7027 = vmatprep.subr.bf16.mxu0 0
        %7028 = vmatpush1.bf16.msra.mxu0 0
        %7029 = vmatprep.subr.bf16.mxu0 0
        %7030 = vmatpush1.bf16.msra.mxu0 0
        %7031 = vmatprep.subr.bf16.mxu0 %v6877
        %7032 = vmatpush1.bf16.msra.mxu0 %v6874
        %7033 = vmatprep.subr.bf16.mxu0 0
        %7034 = vmatpush2.bf16.msra.mxu0 0
        %7035 = vmatprep.subr.bf16.mxu0 0
        %7036 = vmatpush2.bf16.msra.mxu0 0
        %7037 = vmatprep.subr.bf16.mxu0 0
        %7038 = vmatpush2.bf16.msra.mxu0 0
        %7039 = vmatprep.subr.bf16.mxu0 0
        %7040 = vmatpush2.bf16.msra.mxu0 0
        %7041 = vmatprep.subr.bf16.mxu0 0
        %7042 = vmatpush2.bf16.msra.mxu0 0
        %7043 = vmatprep.subr.bf16.mxu0 0
        %7044 = vmatpush2.bf16.msra.mxu0 0
        %7045 = vmatprep.subr.bf16.mxu0 0
        %7046 = vmatpush2.bf16.msra.mxu0 0
        %7047 = vmatprep.subr.bf16.mxu0 0
        %7048 = vmatpush2.bf16.msra.mxu0 0
        %7049 = vmatprep.mubr.bf16.mxu0 0
        %7050 = vmatmul.mubr.bf16.gmra.mxu0 %v7015
        %v7051 = vpop.f32.mrf.mxu0
        %v7052 = vadd.f32 0.0, %v7051
        %v7053 = vpop.f32.mrf.mxu0
        %v7054 = vadd.f32 0.0, %v7053
        %v7055 = vpop.f32.mrf.mxu0
        %v7056 = vpop.f32.mrf.mxu0
        %7057 = vdwg.mxu0
        %s7058 = scalar_lea.vmem %s55, 8
        %v7059 = vld [vmem:[%s7058] sm:$0x3]
        %v7061 = vsel %vm6868, %v7059, 0
        %7063 = vmatprep.subr.bf16.mxu0 0
        %7064 = vmatpush1.bf16.msra.mxu0 0
        %7065 = vmatprep.subr.bf16.mxu0 0
        %7066 = vmatpush1.bf16.msra.mxu0 0
        %7067 = vmatprep.subr.bf16.mxu0 0
        %7068 = vmatpush1.bf16.msra.mxu0 0
        %7069 = vmatprep.subr.bf16.mxu0 0
        %7070 = vmatpush1.bf16.msra.mxu0 0
        %7071 = vmatprep.subr.bf16.mxu0 0
        %7072 = vmatpush1.bf16.msra.mxu0 0
        %7073 = vmatprep.subr.bf16.mxu0 0
        %7074 = vmatpush1.bf16.msra.mxu0 0
        %7075 = vmatprep.subr.bf16.mxu0 0
        %7076 = vmatpush1.bf16.msra.mxu0 0
        %7077 = vmatprep.subr.bf16.mxu0 %v6877
        %7078 = vmatpush1.bf16.msra.mxu0 %v6874
        %7079 = vmatprep.subr.bf16.mxu0 0
        %7080 = vmatpush2.bf16.msra.mxu0 0
        %7081 = vmatprep.subr.bf16.mxu0 0
        %7082 = vmatpush2.bf16.msra.mxu0 0
        %7083 = vmatprep.subr.bf16.mxu0 0
        %7084 = vmatpush2.bf16.msra.mxu0 0
        %7085 = vmatprep.subr.bf16.mxu0 0
        %7086 = vmatpush2.bf16.msra.mxu0 0
        %7087 = vmatprep.subr.bf16.mxu0 0
        %7088 = vmatpush2.bf16.msra.mxu0 0
        %7089 = vmatprep.subr.bf16.mxu0 0
        %7090 = vmatpush2.bf16.msra.mxu0 0
        %7091 = vmatprep.subr.bf16.mxu0 0
        %7092 = vmatpush2.bf16.msra.mxu0 0
        %7093 = vmatprep.subr.bf16.mxu0 0
        %7094 = vmatpush2.bf16.msra.mxu0 0
        %7095 = vmatprep.mubr.bf16.mxu0 0
        %7096 = vmatmul.mubr.bf16.gmra.mxu0 %v7061
        %v7097 = vpop.f32.mrf.mxu0
        %v7098 = vadd.f32 0.0, %v7097
        %v7099 = vpop.f32.mrf.mxu0
        %v7100 = vadd.f32 0.0, %v7099
        %v7101 = vpop.f32.mrf.mxu0
        %v7102 = vpop.f32.mrf.mxu0
        %7103 = vdwg.mxu0
        %s7104 = scalar_lea.vmem %s55, 10
        %v7105 = vld [vmem:[%s7104] sm:$0x3]
        %v7107 = vsel %vm6868, %v7105, 0
        %7109 = vmatprep.subr.bf16.mxu0 0
        %7110 = vmatpush1.bf16.msra.mxu0 0
        %7111 = vmatprep.subr.bf16.mxu0 0
        %7112 = vmatpush1.bf16.msra.mxu0 0
        %7113 = vmatprep.subr.bf16.mxu0 0
        %7114 = vmatpush1.bf16.msra.mxu0 0
        %7115 = vmatprep.subr.bf16.mxu0 0
        %7116 = vmatpush1.bf16.msra.mxu0 0
        %7117 = vmatprep.subr.bf16.mxu0 0
        %7118 = vmatpush1.bf16.msra.mxu0 0
        %7119 = vmatprep.subr.bf16.mxu0 0
        %7120 = vmatpush1.bf16.msra.mxu0 0
        %7121 = vmatprep.subr.bf16.mxu0 0
        %7122 = vmatpush1.bf16.msra.mxu0 0
        %7123 = vmatprep.subr.bf16.mxu0 %v6877
        %7124 = vmatpush1.bf16.msra.mxu0 %v6874
        %7125 = vmatprep.subr.bf16.mxu0 0
        %7126 = vmatpush2.bf16.msra.mxu0 0
        %7127 = vmatprep.subr.bf16.mxu0 0
        %7128 = vmatpush2.bf16.msra.mxu0 0
        %7129 = vmatprep.subr.bf16.mxu0 0
        %7130 = vmatpush2.bf16.msra.mxu0 0
        %7131 = vmatprep.subr.bf16.mxu0 0
        %7132 = vmatpush2.bf16.msra.mxu0 0
        %7133 = vmatprep.subr.bf16.mxu0 0
        %7134 = vmatpush2.bf16.msra.mxu0 0
        %7135 = vmatprep.subr.bf16.mxu0 0
        %7136 = vmatpush2.bf16.msra.mxu0 0
        %7137 = vmatprep.subr.bf16.mxu0 0
        %7138 = vmatpush2.bf16.msra.mxu0 0
        %7139 = vmatprep.subr.bf16.mxu0 0
        %7140 = vmatpush2.bf16.msra.mxu0 0
        %7141 = vmatprep.mubr.bf16.mxu0 0
        %7142 = vmatmul.mubr.bf16.gmra.mxu0 %v7107
        %v7143 = vpop.f32.mrf.mxu0
        %v7144 = vadd.f32 0.0, %v7143
        %v7145 = vpop.f32.mrf.mxu0
        %v7146 = vadd.f32 0.0, %v7145
        %v7147 = vpop.f32.mrf.mxu0
        %v7148 = vpop.f32.mrf.mxu0
        %7149 = vdwg.mxu0
        %s7150 = scalar_lea.vmem %s55, 12
        %v7151 = vld [vmem:[%s7150] sm:$0x3]
        %v7153 = vsel %vm6868, %v7151, 0
        %7155 = vmatprep.subr.bf16.mxu0 0
        %7156 = vmatpush1.bf16.msra.mxu0 0
        %7157 = vmatprep.subr.bf16.mxu0 0
        %7158 = vmatpush1.bf16.msra.mxu0 0
        %7159 = vmatprep.subr.bf16.mxu0 0
        %7160 = vmatpush1.bf16.msra.mxu0 0
        %7161 = vmatprep.subr.bf16.mxu0 0
        %7162 = vmatpush1.bf16.msra.mxu0 0
        %7163 = vmatprep.subr.bf16.mxu0 0
        %7164 = vmatpush1.bf16.msra.mxu0 0
        %7165 = vmatprep.subr.bf16.mxu0 0
        %7166 = vmatpush1.bf16.msra.mxu0 0
        %7167 = vmatprep.subr.bf16.mxu0 0
        %7168 = vmatpush1.bf16.msra.mxu0 0
        %7169 = vmatprep.subr.bf16.mxu0 %v6877
        %7170 = vmatpush1.bf16.msra.mxu0 %v6874
        %7171 = vmatprep.subr.bf16.mxu0 0
        %7172 = vmatpush2.bf16.msra.mxu0 0
        %7173 = vmatprep.subr.bf16.mxu0 0
        %7174 = vmatpush2.bf16.msra.mxu0 0
        %7175 = vmatprep.subr.bf16.mxu0 0
        %7176 = vmatpush2.bf16.msra.mxu0 0
        %7177 = vmatprep.subr.bf16.mxu0 0
        %7178 = vmatpush2.bf16.msra.mxu0 0
        %7179 = vmatprep.subr.bf16.mxu0 0
        %7180 = vmatpush2.bf16.msra.mxu0 0
        %7181 = vmatprep.subr.bf16.mxu0 0
        %7182 = vmatpush2.bf16.msra.mxu0 0
        %7183 = vmatprep.subr.bf16.mxu0 0
        %7184 = vmatpush2.bf16.msra.mxu0 0
        %7185 = vmatprep.subr.bf16.mxu0 0
        %7186 = vmatpush2.bf16.msra.mxu0 0
        %7187 = vmatprep.mubr.bf16.mxu0 0
        %7188 = vmatmul.mubr.bf16.gmra.mxu0 %v7153
        %v7189 = vpop.f32.mrf.mxu0
        %v7190 = vadd.f32 0.0, %v7189
        %v7191 = vpop.f32.mrf.mxu0
        %v7192 = vadd.f32 0.0, %v7191
        %v7193 = vpop.f32.mrf.mxu0
        %v7194 = vpop.f32.mrf.mxu0
        %7195 = vdwg.mxu0
        %s7196 = scalar_lea.vmem %s55, 14
        %v7197 = vld [vmem:[%s7196] sm:$0x3]
        %v7199 = vsel %vm6868, %v7197, 0
        %7201 = vmatprep.subr.bf16.mxu0 0
        %7202 = vmatpush1.bf16.msra.mxu0 0
        %7203 = vmatprep.subr.bf16.mxu0 0
        %7204 = vmatpush1.bf16.msra.mxu0 0
        %7205 = vmatprep.subr.bf16.mxu0 0
        %7206 = vmatpush1.bf16.msra.mxu0 0
        %7207 = vmatprep.subr.bf16.mxu0 0
        %7208 = vmatpush1.bf16.msra.mxu0 0
        %7209 = vmatprep.subr.bf16.mxu0 0
        %7210 = vmatpush1.bf16.msra.mxu0 0
        %7211 = vmatprep.subr.bf16.mxu0 0
        %7212 = vmatpush1.bf16.msra.mxu0 0
        %7213 = vmatprep.subr.bf16.mxu0 0
        %7214 = vmatpush1.bf16.msra.mxu0 0
        %7215 = vmatprep.subr.bf16.mxu0 %v6877
        %7216 = vmatpush1.bf16.msra.mxu0 %v6874
        %7217 = vmatprep.subr.bf16.mxu0 0
        %7218 = vmatpush2.bf16.msra.mxu0 0
        %7219 = vmatprep.subr.bf16.mxu0 0
        %7220 = vmatpush2.bf16.msra.mxu0 0
        %7221 = vmatprep.subr.bf16.mxu0 0
        %7222 = vmatpush2.bf16.msra.mxu0 0
        %7223 = vmatprep.subr.bf16.mxu0 0
        %7224 = vmatpush2.bf16.msra.mxu0 0
        %7225 = vmatprep.subr.bf16.mxu0 0
        %7226 = vmatpush2.bf16.msra.mxu0 0
        %7227 = vmatprep.subr.bf16.mxu0 0
        %7228 = vmatpush2.bf16.msra.mxu0 0
        %7229 = vmatprep.subr.bf16.mxu0 0
        %7230 = vmatpush2.bf16.msra.mxu0 0
        %7231 = vmatprep.subr.bf16.mxu0 0
        %7232 = vmatpush2.bf16.msra.mxu0 0
        %7233 = vmatprep.mubr.bf16.mxu0 0
        %7234 = vmatmul.mubr.bf16.gmra.mxu0 %v7199
        %v7235 = vpop.f32.mrf.mxu0
        %v7236 = vadd.f32 0.0, %v7235
        %v7237 = vpop.f32.mrf.mxu0
        %v7238 = vadd.f32 0.0, %v7237
        %v7239 = vpop.f32.mrf.mxu0
        %v7240 = vpop.f32.mrf.mxu0
        %7241 = vdwg.mxu0
        %s7242 = scalar_lea.vmem %s55, 16
        %v7243 = vld [vmem:[%s7242] sm:$0x3]
        %v7245 = vsel %vm6868, %v7243, 0
        %7247 = vmatprep.subr.bf16.mxu0 0
        %7248 = vmatpush1.bf16.msra.mxu0 0
        %7249 = vmatprep.subr.bf16.mxu0 0
        %7250 = vmatpush1.bf16.msra.mxu0 0
        %7251 = vmatprep.subr.bf16.mxu0 0
        %7252 = vmatpush1.bf16.msra.mxu0 0
        %7253 = vmatprep.subr.bf16.mxu0 0
        %7254 = vmatpush1.bf16.msra.mxu0 0
        %7255 = vmatprep.subr.bf16.mxu0 0
        %7256 = vmatpush1.bf16.msra.mxu0 0
        %7257 = vmatprep.subr.bf16.mxu0 0
        %7258 = vmatpush1.bf16.msra.mxu0 0
        %7259 = vmatprep.subr.bf16.mxu0 0
        %7260 = vmatpush1.bf16.msra.mxu0 0
        %7261 = vmatprep.subr.bf16.mxu0 %v6877
        %7262 = vmatpush1.bf16.msra.mxu0 %v6874
        %7263 = vmatprep.subr.bf16.mxu0 0
        %7264 = vmatpush2.bf16.msra.mxu0 0
        %7265 = vmatprep.subr.bf16.mxu0 0
        %7266 = vmatpush2.bf16.msra.mxu0 0
        %7267 = vmatprep.subr.bf16.mxu0 0
        %7268 = vmatpush2.bf16.msra.mxu0 0
        %7269 = vmatprep.subr.bf16.mxu0 0
        %7270 = vmatpush2.bf16.msra.mxu0 0
        %7271 = vmatprep.subr.bf16.mxu0 0
        %7272 = vmatpush2.bf16.msra.mxu0 0
        %7273 = vmatprep.subr.bf16.mxu0 0
        %7274 = vmatpush2.bf16.msra.mxu0 0
        %7275 = vmatprep.subr.bf16.mxu0 0
        %7276 = vmatpush2.bf16.msra.mxu0 0
        %7277 = vmatprep.subr.bf16.mxu0 0
        %7278 = vmatpush2.bf16.msra.mxu0 0
        %7279 = vmatprep.mubr.bf16.mxu0 0
        %7280 = vmatmul.mubr.bf16.gmra.mxu0 %v7245
        %v7281 = vpop.f32.mrf.mxu0
        %v7282 = vadd.f32 0.0, %v7281
        %v7283 = vpop.f32.mrf.mxu0
        %v7284 = vadd.f32 0.0, %v7283
        %v7285 = vpop.f32.mrf.mxu0
        %v7286 = vpop.f32.mrf.mxu0
        %7287 = vdwg.mxu0
        %v7288 = vld [vmem:[%s31] sm:$0xff]
        %v7289 = vld [vmem:[%s31 + $0x8] sm:$0xff]
        %v7290 = vld [vmem:[%s31 + $0x10] sm:$0xff]
        %v7291 = vld [vmem:[%s31 + $0x18] sm:$0xff]
        %v7292 = vld [vmem:[%s31 + $0x20] sm:$0xff]
        %v7293 = vld [vmem:[%s31 + $0x28] sm:$0xff]
        %v7294 = vld [vmem:[%s31 + $0x30] sm:$0xff]
        %v7295 = vld [vmem:[%s31 + $0x38] sm:$0xff]
        %v7296 = vld [vmem:[%s31 + $0x40] sm:$0xff]
        %v7297 = vld [vmem:[%s31 + $0x48] sm:$0xff]
        %v7298 = vld [vmem:[%s31 + $0x50] sm:$0xff]
        %v7299 = vld [vmem:[%s31 + $0x58] sm:$0xff]
        %v7300 = vld [vmem:[%s31 + $0x60] sm:$0xff]
        %v7301 = vld [vmem:[%s31 + $0x68] sm:$0xff]
        %v7302 = vld [vmem:[%s31 + $0x70] sm:$0xff]
        %v7303 = vld [vmem:[%s31 + $0x78] sm:$0xff]
        %v7304 = vld [vmem:[%s31 + $0x80] sm:$0xff]
        %v7305 = vld [vmem:[%s31 + $0x88] sm:$0xff]
        %v7306 = vld [vmem:[%s31 + $0x90] sm:$0xff]
        %v7307 = vld [vmem:[%s31 + $0x98] sm:$0xff]
        %v7308 = vld [vmem:[%s31 + $0xa0] sm:$0xff]
        %v7309 = vld [vmem:[%s31 + $0xa8] sm:$0xff]
        %v7310 = vld [vmem:[%s31 + $0xb0] sm:$0xff]
        %v7311 = vld [vmem:[%s31 + $0xb8] sm:$0xff]
        %v7312 = vld [vmem:[%s31 + $0xc0] sm:$0xff]
        %v7313 = vld [vmem:[%s31 + $0xc8] sm:$0xff]
        %v7314 = vld [vmem:[%s31 + $0xd0] sm:$0xff]
        %v7315 = vld [vmem:[%s31 + $0xd8] sm:$0xff]
        %v7316 = vld [vmem:[%s31 + $0xe0] sm:$0xff]
        %v7317 = vld [vmem:[%s31 + $0xe8] sm:$0xff]
        %v7318 = vld [vmem:[%s31 + $0xf0] sm:$0xff]
        %v7319 = vld [vmem:[%s31 + $0xf8] sm:$0xff]
        %v7320 = vld [vmem:[%s31 + $0x100] sm:$0xff]
        %v7321 = vld [vmem:[%s31 + $0x108] sm:$0xff]
        %v7322 = vld [vmem:[%s31 + $0x110] sm:$0xff]
        %v7323 = vld [vmem:[%s31 + $0x118] sm:$0xff]
        %v7324 = vld [vmem:[%s31 + $0x120] sm:$0xff]
        %v7325 = vld [vmem:[%s31 + $0x128] sm:$0xff]
        %v7326 = vld [vmem:[%s31 + $0x130] sm:$0xff]
        %v7327 = vld [vmem:[%s31 + $0x138] sm:$0xff]
        %v7328 = vld [vmem:[%s31 + $0x140] sm:$0xff]
        %v7329 = vld [vmem:[%s31 + $0x148] sm:$0xff]
        %v7330 = vld [vmem:[%s31 + $0x150] sm:$0xff]
        %v7331 = vld [vmem:[%s31 + $0x158] sm:$0xff]
        %v7332 = vld [vmem:[%s31 + $0x160] sm:$0xff]
        %v7333 = vld [vmem:[%s31 + $0x168] sm:$0xff]
        %v7334 = vld [vmem:[%s31 + $0x170] sm:$0xff]
        %v7335 = vld [vmem:[%s31 + $0x178] sm:$0xff]
        %v7336 = vld [vmem:[%s31 + $0x180] sm:$0xff]
        %v7337 = vld [vmem:[%s31 + $0x188] sm:$0xff]
        %v7338 = vld [vmem:[%s31 + $0x190] sm:$0xff]
        %v7339 = vld [vmem:[%s31 + $0x198] sm:$0xff]
        %v7340 = vld [vmem:[%s31 + $0x1a0] sm:$0xff]
        %v7341 = vld [vmem:[%s31 + $0x1a8] sm:$0xff]
        %v7342 = vld [vmem:[%s31 + $0x1b0] sm:$0xff]
        %v7343 = vld [vmem:[%s31 + $0x1b8] sm:$0xff]
        %v7344 = vld [vmem:[%s31 + $0x1c0] sm:$0xff]
        %v7345 = vld [vmem:[%s31 + $0x1c8] sm:$0xff]
        %v7346 = vld [vmem:[%s31 + $0x1d0] sm:$0xff]
        %v7347 = vld [vmem:[%s31 + $0x1d8] sm:$0xff]
        %v7348 = vld [vmem:[%s31 + $0x1e0] sm:$0xff]
        %v7349 = vld [vmem:[%s31 + $0x1e8] sm:$0xff]
        %v7350 = vld [vmem:[%s31 + $0x1f0] sm:$0xff]
        %v7351 = vld [vmem:[%s31 + $0x1f8] sm:$0xff]
        %v7352 = vld [vmem:[%s31 + $0x200] sm:$0xff]
        %v7353 = vld [vmem:[%s31 + $0x208] sm:$0xff]
        %v7354 = vld [vmem:[%s31 + $0x210] sm:$0xff]
        %v7355 = vld [vmem:[%s31 + $0x218] sm:$0xff]
        %v7356 = vld [vmem:[%s31 + $0x220] sm:$0xff]
        %v7357 = vld [vmem:[%s31 + $0x228] sm:$0xff]
        %v7358 = vld [vmem:[%s31 + $0x230] sm:$0xff]
        %v7359 = vld [vmem:[%s31 + $0x238] sm:$0xff]
        %v7360 = vld [vmem:[%s31 + $0x240] sm:$0xff]
        %v7361 = vld [vmem:[%s31 + $0x248] sm:$0xff]
        %v7362 = vld [vmem:[%s31 + $0x250] sm:$0xff]
        %v7363 = vld [vmem:[%s31 + $0x258] sm:$0xff]
        %v7364 = vld [vmem:[%s31 + $0x260] sm:$0xff]
        %v7365 = vld [vmem:[%s31 + $0x268] sm:$0xff]
        %v7366 = vld [vmem:[%s31 + $0x270] sm:$0xff]
        %v7367 = vld [vmem:[%s31 + $0x278] sm:$0xff]
        %v7368 = vld [vmem:[%s31 + $0x280] sm:$0xff]
        %v7369 = vld [vmem:[%s31 + $0x288] sm:$0xff]
        %v7370 = vld [vmem:[%s31 + $0x290] sm:$0xff]
        %v7371 = vld [vmem:[%s31 + $0x298] sm:$0xff]
        %v7372 = vld [vmem:[%s31 + $0x2a0] sm:$0xff]
        %v7373 = vld [vmem:[%s31 + $0x2a8] sm:$0xff]
        %v7374 = vld [vmem:[%s31 + $0x2b0] sm:$0xff]
        %v7375 = vld [vmem:[%s31 + $0x2b8] sm:$0xff]
        %v7376 = vld [vmem:[%s31 + $0x2c0] sm:$0xff]
        %v7377 = vld [vmem:[%s31 + $0x2c8] sm:$0xff]
        %v7378 = vld [vmem:[%s31 + $0x2d0] sm:$0xff]
        %v7379 = vld [vmem:[%s31 + $0x2d8] sm:$0xff]
        %v7380 = vld [vmem:[%s31 + $0x2e0] sm:$0xff]
        %v7381 = vld [vmem:[%s31 + $0x2e8] sm:$0xff]
        %v7382 = vld [vmem:[%s31 + $0x2f0] sm:$0xff]
        %v7383 = vld [vmem:[%s31 + $0x2f8] sm:$0xff]
        %v7384 = vld [vmem:[%s31 + $0x300] sm:$0xff]
        %v7385 = vld [vmem:[%s31 + $0x308] sm:$0xff]
        %v7386 = vld [vmem:[%s31 + $0x310] sm:$0xff]
        %v7387 = vld [vmem:[%s31 + $0x318] sm:$0xff]
        %v7388 = vld [vmem:[%s31 + $0x320] sm:$0xff]
        %v7389 = vld [vmem:[%s31 + $0x328] sm:$0xff]
        %v7390 = vld [vmem:[%s31 + $0x330] sm:$0xff]
        %v7391 = vld [vmem:[%s31 + $0x338] sm:$0xff]
        %v7392 = vld [vmem:[%s31 + $0x340] sm:$0xff]
        %v7393 = vld [vmem:[%s31 + $0x348] sm:$0xff]
        %v7394 = vld [vmem:[%s31 + $0x350] sm:$0xff]
        %v7395 = vld [vmem:[%s31 + $0x358] sm:$0xff]
        %v7396 = vld [vmem:[%s31 + $0x360] sm:$0xff]
        %v7397 = vld [vmem:[%s31 + $0x368] sm:$0xff]
        %v7398 = vld [vmem:[%s31 + $0x370] sm:$0xff]
        %v7399 = vld [vmem:[%s31 + $0x378] sm:$0xff]
        %v7400 = vld [vmem:[%s31 + $0x380] sm:$0xff]
        %v7401 = vld [vmem:[%s31 + $0x388] sm:$0xff]
        %v7402 = vld [vmem:[%s31 + $0x390] sm:$0xff]
        %v7403 = vld [vmem:[%s31 + $0x398] sm:$0xff]
        %v7404 = vld [vmem:[%s31 + $0x3a0] sm:$0xff]
        %v7405 = vld [vmem:[%s31 + $0x3a8] sm:$0xff]
        %v7406 = vld [vmem:[%s31 + $0x3b0] sm:$0xff]
        %v7407 = vld [vmem:[%s31 + $0x3b8] sm:$0xff]
        %v7408 = vld [vmem:[%s31 + $0x3c0] sm:$0xff]
        %v7409 = vld [vmem:[%s31 + $0x3c8] sm:$0xff]
        %v7410 = vld [vmem:[%s31 + $0x3d0] sm:$0xff]
        %v7411 = vld [vmem:[%s31 + $0x3d8] sm:$0xff]
        %v7412 = vld [vmem:[%s31 + $0x3e0] sm:$0xff]
        %v7413 = vld [vmem:[%s31 + $0x3e8] sm:$0xff]
        %v7414 = vld [vmem:[%s31 + $0x3f0] sm:$0xff]
        %v7415 = vld [vmem:[%s31 + $0x3f8] sm:$0xff]
        %v7416 = vld [vmem:[%s31 + $0x400] sm:$0xff]
        %v7417 = vld [vmem:[%s31 + $0x408] sm:$0xff]
        %v7418 = vld [vmem:[%s31 + $0x410] sm:$0xff]
        %v7419 = vld [vmem:[%s31 + $0x418] sm:$0xff]
        %v7420 = vld [vmem:[%s31 + $0x420] sm:$0xff]
        %v7421 = vld [vmem:[%s31 + $0x428] sm:$0xff]
        %v7422 = vld [vmem:[%s31 + $0x430] sm:$0xff]
        %v7423 = vld [vmem:[%s31 + $0x438] sm:$0xff]
        %v7424 = vld [vmem:[%s31 + $0x440] sm:$0xff]
        %v7425 = vld [vmem:[%s31 + $0x448] sm:$0xff]
        %v7426 = vld [vmem:[%s31 + $0x450] sm:$0xff]
        %v7427 = vld [vmem:[%s31 + $0x458] sm:$0xff]
        %v7428 = vld [vmem:[%s31 + $0x460] sm:$0xff]
        %v7429 = vld [vmem:[%s31 + $0x468] sm:$0xff]
        %v7430 = vld [vmem:[%s31 + $0x470] sm:$0xff]
        %v7431 = vld [vmem:[%s31 + $0x478] sm:$0xff]
        %v7432 = vld [vmem:[%s31 + $0x480] sm:$0xff]
        %v7433 = vld [vmem:[%s31 + $0x488] sm:$0xff]
        %v7434 = vld [vmem:[%s31 + $0x490] sm:$0xff]
        %v7435 = vld [vmem:[%s31 + $0x498] sm:$0xff]
        %v7436 = vld [vmem:[%s31 + $0x4a0] sm:$0xff]
        %v7437 = vld [vmem:[%s31 + $0x4a8] sm:$0xff]
        %v7438 = vld [vmem:[%s31 + $0x4b0] sm:$0xff]
        %v7439 = vld [vmem:[%s31 + $0x4b8] sm:$0xff]
        %v7440 = vld [vmem:[%s31 + $0x4c0] sm:$0xff]
        %v7441 = vld [vmem:[%s31 + $0x4c8] sm:$0xff]
        %v7442 = vld [vmem:[%s31 + $0x4d0] sm:$0xff]
        %v7443 = vld [vmem:[%s31 + $0x4d8] sm:$0xff]
        %v7444 = vld [vmem:[%s31 + $0x4e0] sm:$0xff]
        %v7445 = vld [vmem:[%s31 + $0x4e8] sm:$0xff]
        %v7446 = vld [vmem:[%s31 + $0x4f0] sm:$0xff]
        %v7447 = vld [vmem:[%s31 + $0x4f8] sm:$0xff]
        %v7448 = vld [vmem:[%s31 + $0x500] sm:$0xff]
        %v7449 = vld [vmem:[%s31 + $0x508] sm:$0xff]
        %v7450 = vld [vmem:[%s31 + $0x510] sm:$0xff]
        %v7451 = vld [vmem:[%s31 + $0x518] sm:$0xff]
        %v7452 = vld [vmem:[%s31 + $0x520] sm:$0xff]
        %v7453 = vld [vmem:[%s31 + $0x528] sm:$0xff]
        %v7454 = vld [vmem:[%s31 + $0x530] sm:$0xff]
        %v7455 = vld [vmem:[%s31 + $0x538] sm:$0xff]
        %v7456 = vld [vmem:[%s31 + $0x540] sm:$0xff]
        %v7457 = vld [vmem:[%s31 + $0x548] sm:$0xff]
        %v7458 = vld [vmem:[%s31 + $0x550] sm:$0xff]
        %v7459 = vld [vmem:[%s31 + $0x558] sm:$0xff]
        %v7460 = vld [vmem:[%s31 + $0x560] sm:$0xff]
        %v7461 = vld [vmem:[%s31 + $0x568] sm:$0xff]
        %v7462 = vld [vmem:[%s31 + $0x570] sm:$0xff]
        %v7463 = vld [vmem:[%s31 + $0x578] sm:$0xff]
        %v7464 = vld [vmem:[%s31 + $0x580] sm:$0xff]
        %v7465 = vld [vmem:[%s31 + $0x588] sm:$0xff]
        %v7466 = vld [vmem:[%s31 + $0x590] sm:$0xff]
        %v7467 = vld [vmem:[%s31 + $0x598] sm:$0xff]
        %v7468 = vld [vmem:[%s31 + $0x5a0] sm:$0xff]
        %v7469 = vld [vmem:[%s31 + $0x5a8] sm:$0xff]
        %v7470 = vld [vmem:[%s31 + $0x5b0] sm:$0xff]
        %v7471 = vld [vmem:[%s31 + $0x5b8] sm:$0xff]
        %v7472 = vld [vmem:[%s31 + $0x5c0] sm:$0xff]
        %v7473 = vld [vmem:[%s31 + $0x5c8] sm:$0xff]
        %v7474 = vld [vmem:[%s31 + $0x5d0] sm:$0xff]
        %v7475 = vld [vmem:[%s31 + $0x5d8] sm:$0xff]
        %v7476 = vld [vmem:[%s31 + $0x5e0] sm:$0xff]
        %v7477 = vld [vmem:[%s31 + $0x5e8] sm:$0xff]
        %v7478 = vld [vmem:[%s31 + $0x5f0] sm:$0xff]
        %v7479 = vld [vmem:[%s31 + $0x5f8] sm:$0xff]
        %v7480 = vld [vmem:[%s31 + $0x600] sm:$0xff]
        %v7481 = vld [vmem:[%s31 + $0x608] sm:$0xff]
        %v7482 = vld [vmem:[%s31 + $0x610] sm:$0xff]
        %v7483 = vld [vmem:[%s31 + $0x618] sm:$0xff]
        %v7484 = vld [vmem:[%s31 + $0x620] sm:$0xff]
        %v7485 = vld [vmem:[%s31 + $0x628] sm:$0xff]
        %v7486 = vld [vmem:[%s31 + $0x630] sm:$0xff]
        %v7487 = vld [vmem:[%s31 + $0x638] sm:$0xff]
        %v7488 = vld [vmem:[%s31 + $0x640] sm:$0xff]
        %v7489 = vld [vmem:[%s31 + $0x648] sm:$0xff]
        %v7490 = vld [vmem:[%s31 + $0x650] sm:$0xff]
        %v7491 = vld [vmem:[%s31 + $0x658] sm:$0xff]
        %v7492 = vld [vmem:[%s31 + $0x660] sm:$0xff]
        %v7493 = vld [vmem:[%s31 + $0x668] sm:$0xff]
        %v7494 = vld [vmem:[%s31 + $0x670] sm:$0xff]
        %v7495 = vld [vmem:[%s31 + $0x678] sm:$0xff]
        %v7496 = vld [vmem:[%s31 + $0x680] sm:$0xff]
        %v7497 = vld [vmem:[%s31 + $0x688] sm:$0xff]
        %v7498 = vld [vmem:[%s31 + $0x690] sm:$0xff]
        %v7499 = vld [vmem:[%s31 + $0x698] sm:$0xff]
        %v7500 = vld [vmem:[%s31 + $0x6a0] sm:$0xff]
        %v7501 = vld [vmem:[%s31 + $0x6a8] sm:$0xff]
        %v7502 = vld [vmem:[%s31 + $0x6b0] sm:$0xff]
        %v7503 = vld [vmem:[%s31 + $0x6b8] sm:$0xff]
        %v7504 = vld [vmem:[%s31 + $0x6c0] sm:$0xff]
        %v7505 = vld [vmem:[%s31 + $0x6c8] sm:$0xff]
        %v7506 = vld [vmem:[%s31 + $0x6d0] sm:$0xff]
        %v7507 = vld [vmem:[%s31 + $0x6d8] sm:$0xff]
        %v7508 = vld [vmem:[%s31 + $0x6e0] sm:$0xff]
        %v7509 = vld [vmem:[%s31 + $0x6e8] sm:$0xff]
        %v7510 = vld [vmem:[%s31 + $0x6f0] sm:$0xff]
        %v7511 = vld [vmem:[%s31 + $0x6f8] sm:$0xff]
        %v7512 = vld [vmem:[%s31 + $0x700] sm:$0xff]
        %v7513 = vld [vmem:[%s31 + $0x708] sm:$0xff]
        %v7514 = vld [vmem:[%s31 + $0x710] sm:$0xff]
        %v7515 = vld [vmem:[%s31 + $0x718] sm:$0xff]
        %v7516 = vld [vmem:[%s31 + $0x720] sm:$0xff]
        %v7517 = vld [vmem:[%s31 + $0x728] sm:$0xff]
        %v7518 = vld [vmem:[%s31 + $0x730] sm:$0xff]
        %v7519 = vld [vmem:[%s31 + $0x738] sm:$0xff]
        %v7520 = vld [vmem:[%s31 + $0x740] sm:$0xff]
        %v7521 = vld [vmem:[%s31 + $0x748] sm:$0xff]
        %v7522 = vld [vmem:[%s31 + $0x750] sm:$0xff]
        %v7523 = vld [vmem:[%s31 + $0x758] sm:$0xff]
        %v7524 = vld [vmem:[%s31 + $0x760] sm:$0xff]
        %v7525 = vld [vmem:[%s31 + $0x768] sm:$0xff]
        %v7526 = vld [vmem:[%s31 + $0x770] sm:$0xff]
        %v7527 = vld [vmem:[%s31 + $0x778] sm:$0xff]
        %v7528 = vld [vmem:[%s31 + $0x780] sm:$0xff]
        %v7529 = vld [vmem:[%s31 + $0x788] sm:$0xff]
        %v7530 = vld [vmem:[%s31 + $0x790] sm:$0xff]
        %v7531 = vld [vmem:[%s31 + $0x798] sm:$0xff]
        %v7532 = vld [vmem:[%s31 + $0x7a0] sm:$0xff]
        %v7533 = vld [vmem:[%s31 + $0x7a8] sm:$0xff]
        %v7534 = vld [vmem:[%s31 + $0x7b0] sm:$0xff]
        %v7535 = vld [vmem:[%s31 + $0x7b8] sm:$0xff]
        %v7536 = vld [vmem:[%s31 + $0x7c0] sm:$0xff]
        %v7537 = vld [vmem:[%s31 + $0x7c8] sm:$0xff]
        %v7538 = vld [vmem:[%s31 + $0x7d0] sm:$0xff]
        %v7539 = vld [vmem:[%s31 + $0x7d8] sm:$0xff]
        %v7540 = vld [vmem:[%s31 + $0x7e0] sm:$0xff]
        %v7541 = vld [vmem:[%s31 + $0x7e8] sm:$0xff]
        %v7542 = vld [vmem:[%s31 + $0x7f0] sm:$0xff]
        %v7543 = vld [vmem:[%s31 + $0x7f8] sm:$0xff]
        %v7544 = vld [vmem:[%s31 + $0x800] sm:$0xff]
        %v7545 = vld [vmem:[%s31 + $0x808] sm:$0xff]
        %v7546 = vld [vmem:[%s31 + $0x810] sm:$0xff]
        %v7547 = vld [vmem:[%s31 + $0x818] sm:$0xff]
        %v7548 = vld [vmem:[%s31 + $0x820] sm:$0xff]
        %v7549 = vld [vmem:[%s31 + $0x828] sm:$0xff]
        %v7550 = vld [vmem:[%s31 + $0x830] sm:$0xff]
        %v7551 = vld [vmem:[%s31 + $0x838] sm:$0xff]
        %v7552 = vld [vmem:[%s31 + $0x840] sm:$0xff]
        %v7553 = vld [vmem:[%s31 + $0x848] sm:$0xff]
        %v7554 = vld [vmem:[%s31 + $0x850] sm:$0xff]
        %v7555 = vld [vmem:[%s31 + $0x858] sm:$0xff]
        %v7556 = vld [vmem:[%s31 + $0x860] sm:$0xff]
        %v7557 = vld [vmem:[%s31 + $0x868] sm:$0xff]
        %v7558 = vld [vmem:[%s31 + $0x870] sm:$0xff]
        %v7559 = vld [vmem:[%s31 + $0x878] sm:$0xff]
        %v7560 = vld [vmem:[%s31 + $0x880] sm:$0xff]
        %v7561 = vld [vmem:[%s31 + $0x888] sm:$0xff]
        %v7562 = vld [vmem:[%s31 + $0x890] sm:$0xff]
        %v7563 = vld [vmem:[%s31 + $0x898] sm:$0xff]
        %v7564 = vld [vmem:[%s31 + $0x8a0] sm:$0xff]
        %v7565 = vld [vmem:[%s31 + $0x8a8] sm:$0xff]
        %v7566 = vld [vmem:[%s31 + $0x8b0] sm:$0xff]
        %v7567 = vld [vmem:[%s31 + $0x8b8] sm:$0xff]
        %v7568 = vld [vmem:[%s31 + $0x8c0] sm:$0xff]
        %v7569 = vld [vmem:[%s31 + $0x8c8] sm:$0xff]
        %v7570 = vld [vmem:[%s31 + $0x8d0] sm:$0xff]
        %v7571 = vld [vmem:[%s31 + $0x8d8] sm:$0xff]
        %v7572 = vld [vmem:[%s31 + $0x8e0] sm:$0xff]
        %v7573 = vld [vmem:[%s31 + $0x8e8] sm:$0xff]
        %v7574 = vld [vmem:[%s31 + $0x8f0] sm:$0xff]
        %v7575 = vld [vmem:[%s31 + $0x8f8] sm:$0xff]
        %v7576 = vpack.c.bf16 %v6914, %v6914
        %v7577 = vpack.c.bf16 %v6916, %v6916
        %v7578 = vpack.c.bf16 %v6960, %v6960
        %v7579 = vpack.c.bf16 %v6962, %v6962
        %v7580 = vpack.c.bf16 %v7006, %v7006
        %v7581 = vpack.c.bf16 %v7008, %v7008
        %v7582 = vpack.c.bf16 %v7052, %v7052
        %v7583 = vpack.c.bf16 %v7054, %v7054
        %v7584 = vpack.c.bf16 %v7098, %v7098
        %v7585 = vpack.c.bf16 %v7100, %v7100
        %v7586 = vpack.c.bf16 %v7144, %v7144
        %v7587 = vpack.c.bf16 %v7146, %v7146
        %v7588 = vpack.c.bf16 %v7190, %v7190
        %v7589 = vpack.c.bf16 %v7192, %v7192
        %v7590 = vpack.c.bf16 %v7236, %v7236
        %v7591 = vpack.c.bf16 %v7238, %v7238
        %v7592 = vpack.c.bf16 %v7282, %v7282
        %v7593 = vpack.c.bf16 %v7284, %v7284
        %v7594 = vld [vmem:[%s33] sm:$0x3]
        %v7596 = vlaneseq
        %v7597 = vshrl.u32 %v7596, 7
        %v7598 = vsub.s32 0, %v7597
        %v7599 = vrot.slane %v7594, %v7598
        %v7600 = vlaneseq
        %v7601 = vshrl.u32 %v7600, 7
        %v7602 = vsub.s32 1, %v7601
        %v7603 = vrot.slane %v7594, %v7602
        %v7894 = vunpack.c.l.b16 %v7288
        %v7895 = vunpack.c.h.b16 %v7288
        %v7896 = vunpack.c.l.b16 %v7289
        %v7897 = vunpack.c.h.b16 %v7289
        %v7898 = vunpack.c.l.b16 %v7290
        %v7899 = vunpack.c.h.b16 %v7290
        %v7900 = vunpack.c.l.b16 %v7291
        %v7901 = vunpack.c.h.b16 %v7291
        %v7902 = vunpack.c.l.b16 %v7292
        %v7903 = vunpack.c.h.b16 %v7292
        %v7904 = vunpack.c.l.b16 %v7293
        %v7905 = vunpack.c.h.b16 %v7293
        %v7906 = vunpack.c.l.b16 %v7294
        %v7907 = vunpack.c.h.b16 %v7294
        %v7908 = vunpack.c.l.b16 %v7295
        %v7909 = vunpack.c.h.b16 %v7295
        %v7910 = vunpack.c.l.b16 %v7296
        %v7911 = vunpack.c.h.b16 %v7296
        %v7912 = vunpack.c.l.b16 %v7297
        %v7913 = vunpack.c.h.b16 %v7297
        %v7914 = vunpack.c.l.b16 %v7298
        %v7915 = vunpack.c.h.b16 %v7298
        %v7916 = vunpack.c.l.b16 %v7299
        %v7917 = vunpack.c.h.b16 %v7299
        %v7918 = vunpack.c.l.b16 %v7300
        %v7919 = vunpack.c.h.b16 %v7300
        %v7920 = vunpack.c.l.b16 %v7301
        %v7921 = vunpack.c.h.b16 %v7301
        %v7922 = vunpack.c.l.b16 %v7302
        %v7923 = vunpack.c.h.b16 %v7302
        %v7924 = vunpack.c.l.b16 %v7303
        %v7925 = vunpack.c.h.b16 %v7303
        %v7926 = vunpack.c.l.b16 %v7304
        %v7927 = vunpack.c.h.b16 %v7304
        %v7928 = vunpack.c.l.b16 %v7305
        %v7929 = vunpack.c.h.b16 %v7305
        %v7930 = vunpack.c.l.b16 %v7306
        %v7931 = vunpack.c.h.b16 %v7306
        %v7932 = vunpack.c.l.b16 %v7307
        %v7933 = vunpack.c.h.b16 %v7307
        %v7934 = vunpack.c.l.b16 %v7308
        %v7935 = vunpack.c.h.b16 %v7308
        %v7936 = vunpack.c.l.b16 %v7309
        %v7937 = vunpack.c.h.b16 %v7309
        %v7938 = vunpack.c.l.b16 %v7310
        %v7939 = vunpack.c.h.b16 %v7310
        %v7940 = vunpack.c.l.b16 %v7311
        %v7941 = vunpack.c.h.b16 %v7311
        %v7942 = vunpack.c.l.b16 %v7312
        %v7943 = vunpack.c.h.b16 %v7312
        %v7944 = vunpack.c.l.b16 %v7313
        %v7945 = vunpack.c.h.b16 %v7313
        %v7946 = vunpack.c.l.b16 %v7314
        %v7947 = vunpack.c.h.b16 %v7314
        %v7948 = vunpack.c.l.b16 %v7315
        %v7949 = vunpack.c.h.b16 %v7315
        %v7950 = vunpack.c.l.b16 %v7316
        %v7951 = vunpack.c.h.b16 %v7316
        %v7952 = vunpack.c.l.b16 %v7317
        %v7953 = vunpack.c.h.b16 %v7317
        %v7954 = vunpack.c.l.b16 %v7318
        %v7955 = vunpack.c.h.b16 %v7318
        %v7956 = vunpack.c.l.b16 %v7319
        %v7957 = vunpack.c.h.b16 %v7319
        %v7958 = vunpack.c.l.b16 %v7320
        %v7959 = vunpack.c.h.b16 %v7320
        %v7960 = vunpack.c.l.b16 %v7321
        %v7961 = vunpack.c.h.b16 %v7321
        %v7962 = vunpack.c.l.b16 %v7322
        %v7963 = vunpack.c.h.b16 %v7322
        %v7964 = vunpack.c.l.b16 %v7323
        %v7965 = vunpack.c.h.b16 %v7323
        %v7966 = vunpack.c.l.b16 %v7324
        %v7967 = vunpack.c.h.b16 %v7324
        %v7968 = vunpack.c.l.b16 %v7325
        %v7969 = vunpack.c.h.b16 %v7325
        %v7970 = vunpack.c.l.b16 %v7326
        %v7971 = vunpack.c.h.b16 %v7326
        %v7972 = vunpack.c.l.b16 %v7327
        %v7973 = vunpack.c.h.b16 %v7327
        %v7974 = vunpack.c.l.b16 %v7328
        %v7975 = vunpack.c.h.b16 %v7328
        %v7976 = vunpack.c.l.b16 %v7329
        %v7977 = vunpack.c.h.b16 %v7329
        %v7978 = vunpack.c.l.b16 %v7330
        %v7979 = vunpack.c.h.b16 %v7330
        %v7980 = vunpack.c.l.b16 %v7331
        %v7981 = vunpack.c.h.b16 %v7331
        %v7982 = vunpack.c.l.b16 %v7332
        %v7983 = vunpack.c.h.b16 %v7332
        %v7984 = vunpack.c.l.b16 %v7333
        %v7985 = vunpack.c.h.b16 %v7333
        %v7986 = vunpack.c.l.b16 %v7334
        %v7987 = vunpack.c.h.b16 %v7334
        %v7988 = vunpack.c.l.b16 %v7335
        %v7989 = vunpack.c.h.b16 %v7335
        %v7990 = vunpack.c.l.b16 %v7336
        %v7991 = vunpack.c.h.b16 %v7336
        %v7992 = vunpack.c.l.b16 %v7337
        %v7993 = vunpack.c.h.b16 %v7337
        %v7994 = vunpack.c.l.b16 %v7338
        %v7995 = vunpack.c.h.b16 %v7338
        %v7996 = vunpack.c.l.b16 %v7339
        %v7997 = vunpack.c.h.b16 %v7339
        %v7998 = vunpack.c.l.b16 %v7340
        %v7999 = vunpack.c.h.b16 %v7340
        %v8000 = vunpack.c.l.b16 %v7341
        %v8001 = vunpack.c.h.b16 %v7341
        %v8002 = vunpack.c.l.b16 %v7342
        %v8003 = vunpack.c.h.b16 %v7342
        %v8004 = vunpack.c.l.b16 %v7343
        %v8005 = vunpack.c.h.b16 %v7343
        %v8006 = vunpack.c.l.b16 %v7344
        %v8007 = vunpack.c.h.b16 %v7344
        %v8008 = vunpack.c.l.b16 %v7345
        %v8009 = vunpack.c.h.b16 %v7345
        %v8010 = vunpack.c.l.b16 %v7346
        %v8011 = vunpack.c.h.b16 %v7346
        %v8012 = vunpack.c.l.b16 %v7347
        %v8013 = vunpack.c.h.b16 %v7347
        %v8014 = vunpack.c.l.b16 %v7348
        %v8015 = vunpack.c.h.b16 %v7348
        %v8016 = vunpack.c.l.b16 %v7349
        %v8017 = vunpack.c.h.b16 %v7349
        %v8018 = vunpack.c.l.b16 %v7350
        %v8019 = vunpack.c.h.b16 %v7350
        %v8020 = vunpack.c.l.b16 %v7351
        %v8021 = vunpack.c.h.b16 %v7351
        %v8022 = vunpack.c.l.b16 %v7352
        %v8023 = vunpack.c.h.b16 %v7352
        %v8024 = vunpack.c.l.b16 %v7353
        %v8025 = vunpack.c.h.b16 %v7353
        %v8026 = vunpack.c.l.b16 %v7354
        %v8027 = vunpack.c.h.b16 %v7354
        %v8028 = vunpack.c.l.b16 %v7355
        %v8029 = vunpack.c.h.b16 %v7355
        %v8030 = vunpack.c.l.b16 %v7356
        %v8031 = vunpack.c.h.b16 %v7356
        %v8032 = vunpack.c.l.b16 %v7357
        %v8033 = vunpack.c.h.b16 %v7357
        %v8034 = vunpack.c.l.b16 %v7358
        %v8035 = vunpack.c.h.b16 %v7358
        %v8036 = vunpack.c.l.b16 %v7359
        %v8037 = vunpack.c.h.b16 %v7359
        %v8038 = vunpack.c.l.b16 %v7360
        %v8039 = vunpack.c.h.b16 %v7360
        %v8040 = vunpack.c.l.b16 %v7361
        %v8041 = vunpack.c.h.b16 %v7361
        %v8042 = vunpack.c.l.b16 %v7362
        %v8043 = vunpack.c.h.b16 %v7362
        %v8044 = vunpack.c.l.b16 %v7363
        %v8045 = vunpack.c.h.b16 %v7363
        %v8046 = vunpack.c.l.b16 %v7364
        %v8047 = vunpack.c.h.b16 %v7364
        %v8048 = vunpack.c.l.b16 %v7365
        %v8049 = vunpack.c.h.b16 %v7365
        %v8050 = vunpack.c.l.b16 %v7366
        %v8051 = vunpack.c.h.b16 %v7366
        %v8052 = vunpack.c.l.b16 %v7367
        %v8053 = vunpack.c.h.b16 %v7367
        %v8054 = vunpack.c.l.b16 %v7368
        %v8055 = vunpack.c.h.b16 %v7368
        %v8056 = vunpack.c.l.b16 %v7369
        %v8057 = vunpack.c.h.b16 %v7369
        %v8058 = vunpack.c.l.b16 %v7370
        %v8059 = vunpack.c.h.b16 %v7370
        %v8060 = vunpack.c.l.b16 %v7371
        %v8061 = vunpack.c.h.b16 %v7371
        %v8062 = vunpack.c.l.b16 %v7372
        %v8063 = vunpack.c.h.b16 %v7372
        %v8064 = vunpack.c.l.b16 %v7373
        %v8065 = vunpack.c.h.b16 %v7373
        %v8066 = vunpack.c.l.b16 %v7374
        %v8067 = vunpack.c.h.b16 %v7374
        %v8068 = vunpack.c.l.b16 %v7375
        %v8069 = vunpack.c.h.b16 %v7375
        %v8070 = vunpack.c.l.b16 %v7376
        %v8071 = vunpack.c.h.b16 %v7376
        %v8072 = vunpack.c.l.b16 %v7377
        %v8073 = vunpack.c.h.b16 %v7377
        %v8074 = vunpack.c.l.b16 %v7378
        %v8075 = vunpack.c.h.b16 %v7378
        %v8076 = vunpack.c.l.b16 %v7379
        %v8077 = vunpack.c.h.b16 %v7379
        %v8078 = vunpack.c.l.b16 %v7380
        %v8079 = vunpack.c.h.b16 %v7380
        %v8080 = vunpack.c.l.b16 %v7381
        %v8081 = vunpack.c.h.b16 %v7381
        %v8082 = vunpack.c.l.b16 %v7382
        %v8083 = vunpack.c.h.b16 %v7382
        %v8084 = vunpack.c.l.b16 %v7383
        %v8085 = vunpack.c.h.b16 %v7383
        %v8086 = vunpack.c.l.b16 %v7384
        %v8087 = vunpack.c.h.b16 %v7384
        %v8088 = vunpack.c.l.b16 %v7385
        %v8089 = vunpack.c.h.b16 %v7385
        %v8090 = vunpack.c.l.b16 %v7386
        %v8091 = vunpack.c.h.b16 %v7386
        %v8092 = vunpack.c.l.b16 %v7387
        %v8093 = vunpack.c.h.b16 %v7387
        %v8094 = vunpack.c.l.b16 %v7388
        %v8095 = vunpack.c.h.b16 %v7388
        %v8096 = vunpack.c.l.b16 %v7389
        %v8097 = vunpack.c.h.b16 %v7389
        %v8098 = vunpack.c.l.b16 %v7390
        %v8099 = vunpack.c.h.b16 %v7390
        %v8100 = vunpack.c.l.b16 %v7391
        %v8101 = vunpack.c.h.b16 %v7391
        %v8102 = vunpack.c.l.b16 %v7392
        %v8103 = vunpack.c.h.b16 %v7392
        %v8104 = vunpack.c.l.b16 %v7393
        %v8105 = vunpack.c.h.b16 %v7393
        %v8106 = vunpack.c.l.b16 %v7394
        %v8107 = vunpack.c.h.b16 %v7394
        %v8108 = vunpack.c.l.b16 %v7395
        %v8109 = vunpack.c.h.b16 %v7395
        %v8110 = vunpack.c.l.b16 %v7396
        %v8111 = vunpack.c.h.b16 %v7396
        %v8112 = vunpack.c.l.b16 %v7397
        %v8113 = vunpack.c.h.b16 %v7397
        %v8114 = vunpack.c.l.b16 %v7398
        %v8115 = vunpack.c.h.b16 %v7398
        %v8116 = vunpack.c.l.b16 %v7399
        %v8117 = vunpack.c.h.b16 %v7399
        %v8118 = vunpack.c.l.b16 %v7400
        %v8119 = vunpack.c.h.b16 %v7400
        %v8120 = vunpack.c.l.b16 %v7401
        %v8121 = vunpack.c.h.b16 %v7401
        %v8122 = vunpack.c.l.b16 %v7402
        %v8123 = vunpack.c.h.b16 %v7402
        %v8124 = vunpack.c.l.b16 %v7403
        %v8125 = vunpack.c.h.b16 %v7403
        %v8126 = vunpack.c.l.b16 %v7404
        %v8127 = vunpack.c.h.b16 %v7404
        %v8128 = vunpack.c.l.b16 %v7405
        %v8129 = vunpack.c.h.b16 %v7405
        %v8130 = vunpack.c.l.b16 %v7406
        %v8131 = vunpack.c.h.b16 %v7406
        %v8132 = vunpack.c.l.b16 %v7407
        %v8133 = vunpack.c.h.b16 %v7407
        %v8134 = vunpack.c.l.b16 %v7408
        %v8135 = vunpack.c.h.b16 %v7408
        %v8136 = vunpack.c.l.b16 %v7409
        %v8137 = vunpack.c.h.b16 %v7409
        %v8138 = vunpack.c.l.b16 %v7410
        %v8139 = vunpack.c.h.b16 %v7410
        %v8140 = vunpack.c.l.b16 %v7411
        %v8141 = vunpack.c.h.b16 %v7411
        %v8142 = vunpack.c.l.b16 %v7412
        %v8143 = vunpack.c.h.b16 %v7412
        %v8144 = vunpack.c.l.b16 %v7413
        %v8145 = vunpack.c.h.b16 %v7413
        %v8146 = vunpack.c.l.b16 %v7414
        %v8147 = vunpack.c.h.b16 %v7414
        %v8148 = vunpack.c.l.b16 %v7415
        %v8149 = vunpack.c.h.b16 %v7415
        %v8150 = vunpack.c.l.b16 %v7416
        %v8151 = vunpack.c.h.b16 %v7416
        %v8152 = vunpack.c.l.b16 %v7417
        %v8153 = vunpack.c.h.b16 %v7417
        %v8154 = vunpack.c.l.b16 %v7418
        %v8155 = vunpack.c.h.b16 %v7418
        %v8156 = vunpack.c.l.b16 %v7419
        %v8157 = vunpack.c.h.b16 %v7419
        %v8158 = vunpack.c.l.b16 %v7420
        %v8159 = vunpack.c.h.b16 %v7420
        %v8160 = vunpack.c.l.b16 %v7421
        %v8161 = vunpack.c.h.b16 %v7421
        %v8162 = vunpack.c.l.b16 %v7422
        %v8163 = vunpack.c.h.b16 %v7422
        %v8164 = vunpack.c.l.b16 %v7423
        %v8165 = vunpack.c.h.b16 %v7423
        %v8166 = vunpack.c.l.b16 %v7424
        %v8167 = vunpack.c.h.b16 %v7424
        %v8168 = vunpack.c.l.b16 %v7425
        %v8169 = vunpack.c.h.b16 %v7425
        %v8170 = vunpack.c.l.b16 %v7426
        %v8171 = vunpack.c.h.b16 %v7426
        %v8172 = vunpack.c.l.b16 %v7427
        %v8173 = vunpack.c.h.b16 %v7427
        %v8174 = vunpack.c.l.b16 %v7428
        %v8175 = vunpack.c.h.b16 %v7428
        %v8176 = vunpack.c.l.b16 %v7429
        %v8177 = vunpack.c.h.b16 %v7429
        %v8178 = vunpack.c.l.b16 %v7430
        %v8179 = vunpack.c.h.b16 %v7430
        %v8180 = vunpack.c.l.b16 %v7431
        %v8181 = vunpack.c.h.b16 %v7431
        %v8182 = vunpack.c.l.b16 %v7432
        %v8183 = vunpack.c.h.b16 %v7432
        %v8184 = vunpack.c.l.b16 %v7433
        %v8185 = vunpack.c.h.b16 %v7433
        %v8186 = vunpack.c.l.b16 %v7434
        %v8187 = vunpack.c.h.b16 %v7434
        %v8188 = vunpack.c.l.b16 %v7435
        %v8189 = vunpack.c.h.b16 %v7435
        %v8190 = vunpack.c.l.b16 %v7436
        %v8191 = vunpack.c.h.b16 %v7436
        %v8192 = vunpack.c.l.b16 %v7437
        %v8193 = vunpack.c.h.b16 %v7437
        %v8194 = vunpack.c.l.b16 %v7438
        %v8195 = vunpack.c.h.b16 %v7438
        %v8196 = vunpack.c.l.b16 %v7439
        %v8197 = vunpack.c.h.b16 %v7439
        %v8198 = vunpack.c.l.b16 %v7440
        %v8199 = vunpack.c.h.b16 %v7440
        %v8200 = vunpack.c.l.b16 %v7441
        %v8201 = vunpack.c.h.b16 %v7441
        %v8202 = vunpack.c.l.b16 %v7442
        %v8203 = vunpack.c.h.b16 %v7442
        %v8204 = vunpack.c.l.b16 %v7443
        %v8205 = vunpack.c.h.b16 %v7443
        %v8206 = vunpack.c.l.b16 %v7444
        %v8207 = vunpack.c.h.b16 %v7444
        %v8208 = vunpack.c.l.b16 %v7445
        %v8209 = vunpack.c.h.b16 %v7445
        %v8210 = vunpack.c.l.b16 %v7446
        %v8211 = vunpack.c.h.b16 %v7446
        %v8212 = vunpack.c.l.b16 %v7447
        %v8213 = vunpack.c.h.b16 %v7447
        %v8214 = vunpack.c.l.b16 %v7448
        %v8215 = vunpack.c.h.b16 %v7448
        %v8216 = vunpack.c.l.b16 %v7449
        %v8217 = vunpack.c.h.b16 %v7449
        %v8218 = vunpack.c.l.b16 %v7450
        %v8219 = vunpack.c.h.b16 %v7450
        %v8220 = vunpack.c.l.b16 %v7451
        %v8221 = vunpack.c.h.b16 %v7451
        %v8222 = vunpack.c.l.b16 %v7452
        %v8223 = vunpack.c.h.b16 %v7452
        %v8224 = vunpack.c.l.b16 %v7453
        %v8225 = vunpack.c.h.b16 %v7453
        %v8226 = vunpack.c.l.b16 %v7454
        %v8227 = vunpack.c.h.b16 %v7454
        %v8228 = vunpack.c.l.b16 %v7455
        %v8229 = vunpack.c.h.b16 %v7455
        %v8230 = vunpack.c.l.b16 %v7456
        %v8231 = vunpack.c.h.b16 %v7456
        %v8232 = vunpack.c.l.b16 %v7457
        %v8233 = vunpack.c.h.b16 %v7457
        %v8234 = vunpack.c.l.b16 %v7458
        %v8235 = vunpack.c.h.b16 %v7458
        %v8236 = vunpack.c.l.b16 %v7459
        %v8237 = vunpack.c.h.b16 %v7459
        %v8238 = vunpack.c.l.b16 %v7460
        %v8239 = vunpack.c.h.b16 %v7460
        %v8240 = vunpack.c.l.b16 %v7461
        %v8241 = vunpack.c.h.b16 %v7461
        %v8242 = vunpack.c.l.b16 %v7462
        %v8243 = vunpack.c.h.b16 %v7462
        %v8244 = vunpack.c.l.b16 %v7463
        %v8245 = vunpack.c.h.b16 %v7463
        %v8246 = vunpack.c.l.b16 %v7464
        %v8247 = vunpack.c.h.b16 %v7464
        %v8248 = vunpack.c.l.b16 %v7465
        %v8249 = vunpack.c.h.b16 %v7465
        %v8250 = vunpack.c.l.b16 %v7466
        %v8251 = vunpack.c.h.b16 %v7466
        %v8252 = vunpack.c.l.b16 %v7467
        %v8253 = vunpack.c.h.b16 %v7467
        %v8254 = vunpack.c.l.b16 %v7468
        %v8255 = vunpack.c.h.b16 %v7468
        %v8256 = vunpack.c.l.b16 %v7469
        %v8257 = vunpack.c.h.b16 %v7469
        %v8258 = vunpack.c.l.b16 %v7470
        %v8259 = vunpack.c.h.b16 %v7470
        %v8260 = vunpack.c.l.b16 %v7471
        %v8261 = vunpack.c.h.b16 %v7471
        %v8262 = vunpack.c.l.b16 %v7472
        %v8263 = vunpack.c.h.b16 %v7472
        %v8264 = vunpack.c.l.b16 %v7473
        %v8265 = vunpack.c.h.b16 %v7473
        %v8266 = vunpack.c.l.b16 %v7474
        %v8267 = vunpack.c.h.b16 %v7474
        %v8268 = vunpack.c.l.b16 %v7475
        %v8269 = vunpack.c.h.b16 %v7475
        %v8270 = vunpack.c.l.b16 %v7476
        %v8271 = vunpack.c.h.b16 %v7476
        %v8272 = vunpack.c.l.b16 %v7477
        %v8273 = vunpack.c.h.b16 %v7477
        %v8274 = vunpack.c.l.b16 %v7478
        %v8275 = vunpack.c.h.b16 %v7478
        %v8276 = vunpack.c.l.b16 %v7479
        %v8277 = vunpack.c.h.b16 %v7479
        %v8278 = vunpack.c.l.b16 %v7480
        %v8279 = vunpack.c.h.b16 %v7480
        %v8280 = vunpack.c.l.b16 %v7481
        %v8281 = vunpack.c.h.b16 %v7481
        %v8282 = vunpack.c.l.b16 %v7482
        %v8283 = vunpack.c.h.b16 %v7482
        %v8284 = vunpack.c.l.b16 %v7483
        %v8285 = vunpack.c.h.b16 %v7483
        %v8286 = vunpack.c.l.b16 %v7484
        %v8287 = vunpack.c.h.b16 %v7484
        %v8288 = vunpack.c.l.b16 %v7485
        %v8289 = vunpack.c.h.b16 %v7485
        %v8290 = vunpack.c.l.b16 %v7486
        %v8291 = vunpack.c.h.b16 %v7486
        %v8292 = vunpack.c.l.b16 %v7487
        %v8293 = vunpack.c.h.b16 %v7487
        %v8294 = vunpack.c.l.b16 %v7488
        %v8295 = vunpack.c.h.b16 %v7488
        %v8296 = vunpack.c.l.b16 %v7489
        %v8297 = vunpack.c.h.b16 %v7489
        %v8298 = vunpack.c.l.b16 %v7490
        %v8299 = vunpack.c.h.b16 %v7490
        %v8300 = vunpack.c.l.b16 %v7491
        %v8301 = vunpack.c.h.b16 %v7491
        %v8302 = vunpack.c.l.b16 %v7492
        %v8303 = vunpack.c.h.b16 %v7492
        %v8304 = vunpack.c.l.b16 %v7493
        %v8305 = vunpack.c.h.b16 %v7493
        %v8306 = vunpack.c.l.b16 %v7494
        %v8307 = vunpack.c.h.b16 %v7494
        %v8308 = vunpack.c.l.b16 %v7495
        %v8309 = vunpack.c.h.b16 %v7495
        %v8310 = vunpack.c.l.b16 %v7496
        %v8311 = vunpack.c.h.b16 %v7496
        %v8312 = vunpack.c.l.b16 %v7497
        %v8313 = vunpack.c.h.b16 %v7497
        %v8314 = vunpack.c.l.b16 %v7498
        %v8315 = vunpack.c.h.b16 %v7498
        %v8316 = vunpack.c.l.b16 %v7499
        %v8317 = vunpack.c.h.b16 %v7499
        %v8318 = vunpack.c.l.b16 %v7500
        %v8319 = vunpack.c.h.b16 %v7500
        %v8320 = vunpack.c.l.b16 %v7501
        %v8321 = vunpack.c.h.b16 %v7501
        %v8322 = vunpack.c.l.b16 %v7502
        %v8323 = vunpack.c.h.b16 %v7502
        %v8324 = vunpack.c.l.b16 %v7503
        %v8325 = vunpack.c.h.b16 %v7503
        %v8326 = vunpack.c.l.b16 %v7504
        %v8327 = vunpack.c.h.b16 %v7504
        %v8328 = vunpack.c.l.b16 %v7505
        %v8329 = vunpack.c.h.b16 %v7505
        %v8330 = vunpack.c.l.b16 %v7506
        %v8331 = vunpack.c.h.b16 %v7506
        %v8332 = vunpack.c.l.b16 %v7507
        %v8333 = vunpack.c.h.b16 %v7507
        %v8334 = vunpack.c.l.b16 %v7508
        %v8335 = vunpack.c.h.b16 %v7508
        %v8336 = vunpack.c.l.b16 %v7509
        %v8337 = vunpack.c.h.b16 %v7509
        %v8338 = vunpack.c.l.b16 %v7510
        %v8339 = vunpack.c.h.b16 %v7510
        %v8340 = vunpack.c.l.b16 %v7511
        %v8341 = vunpack.c.h.b16 %v7511
        %v8342 = vunpack.c.l.b16 %v7512
        %v8343 = vunpack.c.h.b16 %v7512
        %v8344 = vunpack.c.l.b16 %v7513
        %v8345 = vunpack.c.h.b16 %v7513
        %v8346 = vunpack.c.l.b16 %v7514
        %v8347 = vunpack.c.h.b16 %v7514
        %v8348 = vunpack.c.l.b16 %v7515
        %v8349 = vunpack.c.h.b16 %v7515
        %v8350 = vunpack.c.l.b16 %v7516
        %v8351 = vunpack.c.h.b16 %v7516
        %v8352 = vunpack.c.l.b16 %v7517
        %v8353 = vunpack.c.h.b16 %v7517
        %v8354 = vunpack.c.l.b16 %v7518
        %v8355 = vunpack.c.h.b16 %v7518
        %v8356 = vunpack.c.l.b16 %v7519
        %v8357 = vunpack.c.h.b16 %v7519
        %v8358 = vunpack.c.l.b16 %v7520
        %v8359 = vunpack.c.h.b16 %v7520
        %v8360 = vunpack.c.l.b16 %v7521
        %v8361 = vunpack.c.h.b16 %v7521
        %v8362 = vunpack.c.l.b16 %v7522
        %v8363 = vunpack.c.h.b16 %v7522
        %v8364 = vunpack.c.l.b16 %v7523
        %v8365 = vunpack.c.h.b16 %v7523
        %v8366 = vunpack.c.l.b16 %v7524
        %v8367 = vunpack.c.h.b16 %v7524
        %v8368 = vunpack.c.l.b16 %v7525
        %v8369 = vunpack.c.h.b16 %v7525
        %v8370 = vunpack.c.l.b16 %v7526
        %v8371 = vunpack.c.h.b16 %v7526
        %v8372 = vunpack.c.l.b16 %v7527
        %v8373 = vunpack.c.h.b16 %v7527
        %v8374 = vunpack.c.l.b16 %v7528
        %v8375 = vunpack.c.h.b16 %v7528
        %v8376 = vunpack.c.l.b16 %v7529
        %v8377 = vunpack.c.h.b16 %v7529
        %v8378 = vunpack.c.l.b16 %v7530
        %v8379 = vunpack.c.h.b16 %v7530
        %v8380 = vunpack.c.l.b16 %v7531
        %v8381 = vunpack.c.h.b16 %v7531
        %v8382 = vunpack.c.l.b16 %v7532
        %v8383 = vunpack.c.h.b16 %v7532
        %v8384 = vunpack.c.l.b16 %v7533
        %v8385 = vunpack.c.h.b16 %v7533
        %v8386 = vunpack.c.l.b16 %v7534
        %v8387 = vunpack.c.h.b16 %v7534
        %v8388 = vunpack.c.l.b16 %v7535
        %v8389 = vunpack.c.h.b16 %v7535
        %v8390 = vunpack.c.l.b16 %v7536
        %v8391 = vunpack.c.h.b16 %v7536
        %v8392 = vunpack.c.l.b16 %v7537
        %v8393 = vunpack.c.h.b16 %v7537
        %v8394 = vunpack.c.l.b16 %v7538
        %v8395 = vunpack.c.h.b16 %v7538
        %v8396 = vunpack.c.l.b16 %v7539
        %v8397 = vunpack.c.h.b16 %v7539
        %v8398 = vunpack.c.l.b16 %v7540
        %v8399 = vunpack.c.h.b16 %v7540
        %v8400 = vunpack.c.l.b16 %v7541
        %v8401 = vunpack.c.h.b16 %v7541
        %v8402 = vunpack.c.l.b16 %v7542
        %v8403 = vunpack.c.h.b16 %v7542
        %v8404 = vunpack.c.l.b16 %v7543
        %v8405 = vunpack.c.h.b16 %v7543
        %v8406 = vunpack.c.l.b16 %v7544
        %v8407 = vunpack.c.h.b16 %v7544
        %v8408 = vunpack.c.l.b16 %v7545
        %v8409 = vunpack.c.h.b16 %v7545
        %v8410 = vunpack.c.l.b16 %v7546
        %v8411 = vunpack.c.h.b16 %v7546
        %v8412 = vunpack.c.l.b16 %v7547
        %v8413 = vunpack.c.h.b16 %v7547
        %v8414 = vunpack.c.l.b16 %v7548
        %v8415 = vunpack.c.h.b16 %v7548
        %v8416 = vunpack.c.l.b16 %v7549
        %v8417 = vunpack.c.h.b16 %v7549
        %v8418 = vunpack.c.l.b16 %v7550
        %v8419 = vunpack.c.h.b16 %v7550
        %v8420 = vunpack.c.l.b16 %v7551
        %v8421 = vunpack.c.h.b16 %v7551
        %v8422 = vunpack.c.l.b16 %v7552
        %v8423 = vunpack.c.h.b16 %v7552
        %v8424 = vunpack.c.l.b16 %v7553
        %v8425 = vunpack.c.h.b16 %v7553
        %v8426 = vunpack.c.l.b16 %v7554
        %v8427 = vunpack.c.h.b16 %v7554
        %v8428 = vunpack.c.l.b16 %v7555
        %v8429 = vunpack.c.h.b16 %v7555
        %v8430 = vunpack.c.l.b16 %v7556
        %v8431 = vunpack.c.h.b16 %v7556
        %v8432 = vunpack.c.l.b16 %v7557
        %v8433 = vunpack.c.h.b16 %v7557
        %v8434 = vunpack.c.l.b16 %v7558
        %v8435 = vunpack.c.h.b16 %v7558
        %v8436 = vunpack.c.l.b16 %v7559
        %v8437 = vunpack.c.h.b16 %v7559
        %v8438 = vunpack.c.l.b16 %v7560
        %v8439 = vunpack.c.h.b16 %v7560
        %v8440 = vunpack.c.l.b16 %v7561
        %v8441 = vunpack.c.h.b16 %v7561
        %v8442 = vunpack.c.l.b16 %v7562
        %v8443 = vunpack.c.h.b16 %v7562
        %v8444 = vunpack.c.l.b16 %v7563
        %v8445 = vunpack.c.h.b16 %v7563
        %v8446 = vunpack.c.l.b16 %v7564
        %v8447 = vunpack.c.h.b16 %v7564
        %v8448 = vunpack.c.l.b16 %v7565
        %v8449 = vunpack.c.h.b16 %v7565
        %v8450 = vunpack.c.l.b16 %v7566
        %v8451 = vunpack.c.h.b16 %v7566
        %v8452 = vunpack.c.l.b16 %v7567
        %v8453 = vunpack.c.h.b16 %v7567
        %v8454 = vunpack.c.l.b16 %v7568
        %v8455 = vunpack.c.h.b16 %v7568
        %v8456 = vunpack.c.l.b16 %v7569
        %v8457 = vunpack.c.h.b16 %v7569
        %v8458 = vunpack.c.l.b16 %v7570
        %v8459 = vunpack.c.h.b16 %v7570
        %v8460 = vunpack.c.l.b16 %v7571
        %v8461 = vunpack.c.h.b16 %v7571
        %v8462 = vunpack.c.l.b16 %v7572
        %v8463 = vunpack.c.h.b16 %v7572
        %v8464 = vunpack.c.l.b16 %v7573
        %v8465 = vunpack.c.h.b16 %v7573
        %v8466 = vunpack.c.l.b16 %v7574
        %v8467 = vunpack.c.h.b16 %v7574
        %v8468 = vunpack.c.l.b16 %v7575
        %v8469 = vunpack.c.h.b16 %v7575
        %v8470 = vpack.c.b16 %v7896, %v7894
        %v8471 = vpack.c.b16 %v7897, %v7895
        %v8472 = vpack.c.b16 %v7900, %v7898
        %v8473 = vpack.c.b16 %v7901, %v7899
        %v8474 = vpack.c.b16 %v7904, %v7902
        %v8475 = vpack.c.b16 %v7905, %v7903
        %v8476 = vpack.c.b16 %v7908, %v7906
        %v8477 = vpack.c.b16 %v7909, %v7907
        %v8478 = vpack.c.b16 %v7912, %v7910
        %v8479 = vpack.c.b16 %v7913, %v7911
        %v8480 = vpack.c.b16 %v7916, %v7914
        %v8481 = vpack.c.b16 %v7917, %v7915
        %v8482 = vpack.c.b16 %v7920, %v7918
        %v8483 = vpack.c.b16 %v7921, %v7919
        %v8484 = vpack.c.b16 %v7924, %v7922
        %v8485 = vpack.c.b16 %v7925, %v7923
        %v8486 = vpack.c.b16 %v7928, %v7926
        %v8487 = vpack.c.b16 %v7929, %v7927
        %v8488 = vpack.c.b16 %v7932, %v7930
        %v8489 = vpack.c.b16 %v7933, %v7931
        %v8490 = vpack.c.b16 %v7936, %v7934
        %v8491 = vpack.c.b16 %v7937, %v7935
        %v8492 = vpack.c.b16 %v7940, %v7938
        %v8493 = vpack.c.b16 %v7941, %v7939
        %v8494 = vpack.c.b16 %v7944, %v7942
        %v8495 = vpack.c.b16 %v7945, %v7943
        %v8496 = vpack.c.b16 %v7948, %v7946
        %v8497 = vpack.c.b16 %v7949, %v7947
        %v8498 = vpack.c.b16 %v7952, %v7950
        %v8499 = vpack.c.b16 %v7953, %v7951
        %v8500 = vpack.c.b16 %v7956, %v7954
        %v8501 = vpack.c.b16 %v7957, %v7955
        %v8502 = vpack.c.b16 %v7960, %v7958
        %v8503 = vpack.c.b16 %v7961, %v7959
        %v8504 = vpack.c.b16 %v7964, %v7962
        %v8505 = vpack.c.b16 %v7965, %v7963
        %v8506 = vpack.c.b16 %v7968, %v7966
        %v8507 = vpack.c.b16 %v7969, %v7967
        %v8508 = vpack.c.b16 %v7972, %v7970
        %v8509 = vpack.c.b16 %v7973, %v7971
        %v8510 = vpack.c.b16 %v7976, %v7974
        %v8511 = vpack.c.b16 %v7977, %v7975
        %v8512 = vpack.c.b16 %v7980, %v7978
        %v8513 = vpack.c.b16 %v7981, %v7979
        %v8514 = vpack.c.b16 %v7984, %v7982
        %v8515 = vpack.c.b16 %v7985, %v7983
        %v8516 = vpack.c.b16 %v7988, %v7986
        %v8517 = vpack.c.b16 %v7989, %v7987
        %v8518 = vpack.c.b16 %v7992, %v7990
        %v8519 = vpack.c.b16 %v7993, %v7991
        %v8520 = vpack.c.b16 %v7996, %v7994
        %v8521 = vpack.c.b16 %v7997, %v7995
        %v8522 = vpack.c.b16 %v8000, %v7998
        %v8523 = vpack.c.b16 %v8001, %v7999
        %v8524 = vpack.c.b16 %v8004, %v8002
        %v8525 = vpack.c.b16 %v8005, %v8003
        %v8526 = vpack.c.b16 %v8008, %v8006
        %v8527 = vpack.c.b16 %v8009, %v8007
        %v8528 = vpack.c.b16 %v8012, %v8010
        %v8529 = vpack.c.b16 %v8013, %v8011
        %v8530 = vpack.c.b16 %v8016, %v8014
        %v8531 = vpack.c.b16 %v8017, %v8015
        %v8532 = vpack.c.b16 %v8020, %v8018
        %v8533 = vpack.c.b16 %v8021, %v8019
        %v8534 = vpack.c.b16 %v8024, %v8022
        %v8535 = vpack.c.b16 %v8025, %v8023
        %v8536 = vpack.c.b16 %v8028, %v8026
        %v8537 = vpack.c.b16 %v8029, %v8027
        %v8538 = vpack.c.b16 %v8032, %v8030
        %v8539 = vpack.c.b16 %v8033, %v8031
        %v8540 = vpack.c.b16 %v8036, %v8034
        %v8541 = vpack.c.b16 %v8037, %v8035
        %v8542 = vpack.c.b16 %v8040, %v8038
        %v8543 = vpack.c.b16 %v8041, %v8039
        %v8544 = vpack.c.b16 %v8044, %v8042
        %v8545 = vpack.c.b16 %v8045, %v8043
        %v8546 = vpack.c.b16 %v8048, %v8046
        %v8547 = vpack.c.b16 %v8049, %v8047
        %v8548 = vpack.c.b16 %v8052, %v8050
        %v8549 = vpack.c.b16 %v8053, %v8051
        %v8550 = vpack.c.b16 %v8056, %v8054
        %v8551 = vpack.c.b16 %v8057, %v8055
        %v8552 = vpack.c.b16 %v8060, %v8058
        %v8553 = vpack.c.b16 %v8061, %v8059
        %v8554 = vpack.c.b16 %v8064, %v8062
        %v8555 = vpack.c.b16 %v8065, %v8063
        %v8556 = vpack.c.b16 %v8068, %v8066
        %v8557 = vpack.c.b16 %v8069, %v8067
        %v8558 = vpack.c.b16 %v8072, %v8070
        %v8559 = vpack.c.b16 %v8073, %v8071
        %v8560 = vpack.c.b16 %v8076, %v8074
        %v8561 = vpack.c.b16 %v8077, %v8075
        %v8562 = vpack.c.b16 %v8080, %v8078
        %v8563 = vpack.c.b16 %v8081, %v8079
        %v8564 = vpack.c.b16 %v8084, %v8082
        %v8565 = vpack.c.b16 %v8085, %v8083
        %v8566 = vpack.c.b16 %v8088, %v8086
        %v8567 = vpack.c.b16 %v8089, %v8087
        %v8568 = vpack.c.b16 %v8092, %v8090
        %v8569 = vpack.c.b16 %v8093, %v8091
        %v8570 = vpack.c.b16 %v8096, %v8094
        %v8571 = vpack.c.b16 %v8097, %v8095
        %v8572 = vpack.c.b16 %v8100, %v8098
        %v8573 = vpack.c.b16 %v8101, %v8099
        %v8574 = vpack.c.b16 %v8104, %v8102
        %v8575 = vpack.c.b16 %v8105, %v8103
        %v8576 = vpack.c.b16 %v8108, %v8106
        %v8577 = vpack.c.b16 %v8109, %v8107
        %v8578 = vpack.c.b16 %v8112, %v8110
        %v8579 = vpack.c.b16 %v8113, %v8111
        %v8580 = vpack.c.b16 %v8116, %v8114
        %v8581 = vpack.c.b16 %v8117, %v8115
        %v8582 = vpack.c.b16 %v8120, %v8118
        %v8583 = vpack.c.b16 %v8121, %v8119
        %v8584 = vpack.c.b16 %v8124, %v8122
        %v8585 = vpack.c.b16 %v8125, %v8123
        %v8586 = vpack.c.b16 %v8128, %v8126
        %v8587 = vpack.c.b16 %v8129, %v8127
        %v8588 = vpack.c.b16 %v8132, %v8130
        %v8589 = vpack.c.b16 %v8133, %v8131
        %v8590 = vpack.c.b16 %v8136, %v8134
        %v8591 = vpack.c.b16 %v8137, %v8135
        %v8592 = vpack.c.b16 %v8140, %v8138
        %v8593 = vpack.c.b16 %v8141, %v8139
        %v8594 = vpack.c.b16 %v8144, %v8142
        %v8595 = vpack.c.b16 %v8145, %v8143
        %v8596 = vpack.c.b16 %v8148, %v8146
        %v8597 = vpack.c.b16 %v8149, %v8147
        %v8598 = vpack.c.b16 %v8152, %v8150
        %v8599 = vpack.c.b16 %v8153, %v8151
        %v8600 = vpack.c.b16 %v8156, %v8154
        %v8601 = vpack.c.b16 %v8157, %v8155
        %v8602 = vpack.c.b16 %v8160, %v8158
        %v8603 = vpack.c.b16 %v8161, %v8159
        %v8604 = vpack.c.b16 %v8164, %v8162
        %v8605 = vpack.c.b16 %v8165, %v8163
        %v8606 = vpack.c.b16 %v8168, %v8166
        %v8607 = vpack.c.b16 %v8169, %v8167
        %v8608 = vpack.c.b16 %v8172, %v8170
        %v8609 = vpack.c.b16 %v8173, %v8171
        %v8610 = vpack.c.b16 %v8176, %v8174
        %v8611 = vpack.c.b16 %v8177, %v8175
        %v8612 = vpack.c.b16 %v8180, %v8178
        %v8613 = vpack.c.b16 %v8181, %v8179
        %v8614 = vpack.c.b16 %v8184, %v8182
        %v8615 = vpack.c.b16 %v8185, %v8183
        %v8616 = vpack.c.b16 %v8188, %v8186
        %v8617 = vpack.c.b16 %v8189, %v8187
        %v8618 = vpack.c.b16 %v8192, %v8190
        %v8619 = vpack.c.b16 %v8193, %v8191
        %v8620 = vpack.c.b16 %v8196, %v8194
        %v8621 = vpack.c.b16 %v8197, %v8195
        %v8622 = vpack.c.b16 %v8200, %v8198
        %v8623 = vpack.c.b16 %v8201, %v8199
        %v8624 = vpack.c.b16 %v8204, %v8202
        %v8625 = vpack.c.b16 %v8205, %v8203
        %v8626 = vpack.c.b16 %v8208, %v8206
        %v8627 = vpack.c.b16 %v8209, %v8207
        %v8628 = vpack.c.b16 %v8212, %v8210
        %v8629 = vpack.c.b16 %v8213, %v8211
        %v8630 = vpack.c.b16 %v8216, %v8214
        %v8631 = vpack.c.b16 %v8217, %v8215
        %v8632 = vpack.c.b16 %v8220, %v8218
        %v8633 = vpack.c.b16 %v8221, %v8219
        %v8634 = vpack.c.b16 %v8224, %v8222
        %v8635 = vpack.c.b16 %v8225, %v8223
        %v8636 = vpack.c.b16 %v8228, %v8226
        %v8637 = vpack.c.b16 %v8229, %v8227
        %v8638 = vpack.c.b16 %v8232, %v8230
        %v8639 = vpack.c.b16 %v8233, %v8231
        %v8640 = vpack.c.b16 %v8236, %v8234
        %v8641 = vpack.c.b16 %v8237, %v8235
        %v8642 = vpack.c.b16 %v8240, %v8238
        %v8643 = vpack.c.b16 %v8241, %v8239
        %v8644 = vpack.c.b16 %v8244, %v8242
        %v8645 = vpack.c.b16 %v8245, %v8243
        %v8646 = vpack.c.b16 %v8248, %v8246
        %v8647 = vpack.c.b16 %v8249, %v8247
        %v8648 = vpack.c.b16 %v8252, %v8250
        %v8649 = vpack.c.b16 %v8253, %v8251
        %v8650 = vpack.c.b16 %v8256, %v8254
        %v8651 = vpack.c.b16 %v8257, %v8255
        %v8652 = vpack.c.b16 %v8260, %v8258
        %v8653 = vpack.c.b16 %v8261, %v8259
        %v8654 = vpack.c.b16 %v8264, %v8262
        %v8655 = vpack.c.b16 %v8265, %v8263
        %v8656 = vpack.c.b16 %v8268, %v8266
        %v8657 = vpack.c.b16 %v8269, %v8267
        %v8658 = vpack.c.b16 %v8272, %v8270
        %v8659 = vpack.c.b16 %v8273, %v8271
        %v8660 = vpack.c.b16 %v8276, %v8274
        %v8661 = vpack.c.b16 %v8277, %v8275
        %v8662 = vpack.c.b16 %v8280, %v8278
        %v8663 = vpack.c.b16 %v8281, %v8279
        %v8664 = vpack.c.b16 %v8284, %v8282
        %v8665 = vpack.c.b16 %v8285, %v8283
        %v8666 = vpack.c.b16 %v8288, %v8286
        %v8667 = vpack.c.b16 %v8289, %v8287
        %v8668 = vpack.c.b16 %v8292, %v8290
        %v8669 = vpack.c.b16 %v8293, %v8291
        %v8670 = vpack.c.b16 %v8296, %v8294
        %v8671 = vpack.c.b16 %v8297, %v8295
        %v8672 = vpack.c.b16 %v8300, %v8298
        %v8673 = vpack.c.b16 %v8301, %v8299
        %v8674 = vpack.c.b16 %v8304, %v8302
        %v8675 = vpack.c.b16 %v8305, %v8303
        %v8676 = vpack.c.b16 %v8308, %v8306
        %v8677 = vpack.c.b16 %v8309, %v8307
        %v8678 = vpack.c.b16 %v8312, %v8310
        %v8679 = vpack.c.b16 %v8313, %v8311
        %v8680 = vpack.c.b16 %v8316, %v8314
        %v8681 = vpack.c.b16 %v8317, %v8315
        %v8682 = vpack.c.b16 %v8320, %v8318
        %v8683 = vpack.c.b16 %v8321, %v8319
        %v8684 = vpack.c.b16 %v8324, %v8322
        %v8685 = vpack.c.b16 %v8325, %v8323
        %v8686 = vpack.c.b16 %v8328, %v8326
        %v8687 = vpack.c.b16 %v8329, %v8327
        %v8688 = vpack.c.b16 %v8332, %v8330
        %v8689 = vpack.c.b16 %v8333, %v8331
        %v8690 = vpack.c.b16 %v8336, %v8334
        %v8691 = vpack.c.b16 %v8337, %v8335
        %v8692 = vpack.c.b16 %v8340, %v8338
        %v8693 = vpack.c.b16 %v8341, %v8339
        %v8694 = vpack.c.b16 %v8344, %v8342
        %v8695 = vpack.c.b16 %v8345, %v8343
        %v8696 = vpack.c.b16 %v8348, %v8346
        %v8697 = vpack.c.b16 %v8349, %v8347
        %v8698 = vpack.c.b16 %v8352, %v8350
        %v8699 = vpack.c.b16 %v8353, %v8351
        %v8700 = vpack.c.b16 %v8356, %v8354
        %v8701 = vpack.c.b16 %v8357, %v8355
        %v8702 = vpack.c.b16 %v8360, %v8358
        %v8703 = vpack.c.b16 %v8361, %v8359
        %v8704 = vpack.c.b16 %v8364, %v8362
        %v8705 = vpack.c.b16 %v8365, %v8363
        %v8706 = vpack.c.b16 %v8368, %v8366
        %v8707 = vpack.c.b16 %v8369, %v8367
        %v8708 = vpack.c.b16 %v8372, %v8370
        %v8709 = vpack.c.b16 %v8373, %v8371
        %v8710 = vpack.c.b16 %v8376, %v8374
        %v8711 = vpack.c.b16 %v8377, %v8375
        %v8712 = vpack.c.b16 %v8380, %v8378
        %v8713 = vpack.c.b16 %v8381, %v8379
        %v8714 = vpack.c.b16 %v8384, %v8382
        %v8715 = vpack.c.b16 %v8385, %v8383
        %v8716 = vpack.c.b16 %v8388, %v8386
        %v8717 = vpack.c.b16 %v8389, %v8387
        %v8718 = vpack.c.b16 %v8392, %v8390
        %v8719 = vpack.c.b16 %v8393, %v8391
        %v8720 = vpack.c.b16 %v8396, %v8394
        %v8721 = vpack.c.b16 %v8397, %v8395
        %v8722 = vpack.c.b16 %v8400, %v8398
        %v8723 = vpack.c.b16 %v8401, %v8399
        %v8724 = vpack.c.b16 %v8404, %v8402
        %v8725 = vpack.c.b16 %v8405, %v8403
        %v8726 = vpack.c.b16 %v8408, %v8406
        %v8727 = vpack.c.b16 %v8409, %v8407
        %v8728 = vpack.c.b16 %v8412, %v8410
        %v8729 = vpack.c.b16 %v8413, %v8411
        %v8730 = vpack.c.b16 %v8416, %v8414
        %v8731 = vpack.c.b16 %v8417, %v8415
        %v8732 = vpack.c.b16 %v8420, %v8418
        %v8733 = vpack.c.b16 %v8421, %v8419
        %v8734 = vpack.c.b16 %v8424, %v8422
        %v8735 = vpack.c.b16 %v8425, %v8423
        %v8736 = vpack.c.b16 %v8428, %v8426
        %v8737 = vpack.c.b16 %v8429, %v8427
        %v8738 = vpack.c.b16 %v8432, %v8430
        %v8739 = vpack.c.b16 %v8433, %v8431
        %v8740 = vpack.c.b16 %v8436, %v8434
        %v8741 = vpack.c.b16 %v8437, %v8435
        %v8742 = vpack.c.b16 %v8440, %v8438
        %v8743 = vpack.c.b16 %v8441, %v8439
        %v8744 = vpack.c.b16 %v8444, %v8442
        %v8745 = vpack.c.b16 %v8445, %v8443
        %v8746 = vpack.c.b16 %v8448, %v8446
        %v8747 = vpack.c.b16 %v8449, %v8447
        %v8748 = vpack.c.b16 %v8452, %v8450
        %v8749 = vpack.c.b16 %v8453, %v8451
        %v8750 = vpack.c.b16 %v8456, %v8454
        %v8751 = vpack.c.b16 %v8457, %v8455
        %v8752 = vpack.c.b16 %v8460, %v8458
        %v8753 = vpack.c.b16 %v8461, %v8459
        %v8754 = vpack.c.b16 %v8464, %v8462
        %v8755 = vpack.c.b16 %v8465, %v8463
        %v8756 = vpack.c.b16 %v8468, %v8466
        %v8757 = vpack.c.b16 %v8469, %v8467
        %9046 = vmatprep.subr.bf16.mxu0 %v8485
        %9047 = vmatpush1.bf16.msra.mxu0 %v8484
        %9048 = vmatprep.subr.bf16.mxu0 %v8483
        %9049 = vmatpush1.bf16.msra.mxu0 %v8482
        %9050 = vmatprep.subr.bf16.mxu0 %v8481
        %9051 = vmatpush1.bf16.msra.mxu0 %v8480
        %9052 = vmatprep.subr.bf16.mxu0 %v8479
        %9053 = vmatpush1.bf16.msra.mxu0 %v8478
        %9054 = vmatprep.subr.bf16.mxu0 %v8477
        %9055 = vmatpush1.bf16.msra.mxu0 %v8476
        %9056 = vmatprep.subr.bf16.mxu0 %v8475
        %9057 = vmatpush1.bf16.msra.mxu0 %v8474
        %9058 = vmatprep.subr.bf16.mxu0 %v8473
        %9059 = vmatpush1.bf16.msra.mxu0 %v8472
        %9060 = vmatprep.subr.bf16.mxu0 %v8471
        %9061 = vmatpush1.bf16.msra.mxu0 %v8470
        %9062 = vmatprep.subr.bf16.mxu0 %v8501
        %9063 = vmatpush2.bf16.msra.mxu0 %v8500
        %9064 = vmatprep.subr.bf16.mxu0 %v8499
        %9065 = vmatpush2.bf16.msra.mxu0 %v8498
        %9066 = vmatprep.subr.bf16.mxu0 %v8497
        %9067 = vmatpush2.bf16.msra.mxu0 %v8496
        %9068 = vmatprep.subr.bf16.mxu0 %v8495
        %9069 = vmatpush2.bf16.msra.mxu0 %v8494
        %9070 = vmatprep.subr.bf16.mxu0 %v8493
        %9071 = vmatpush2.bf16.msra.mxu0 %v8492
        %9072 = vmatprep.subr.bf16.mxu0 %v8491
        %9073 = vmatpush2.bf16.msra.mxu0 %v8490
        %9074 = vmatprep.subr.bf16.mxu0 %v8489
        %9075 = vmatpush2.bf16.msra.mxu0 %v8488
        %9076 = vmatprep.subr.bf16.mxu0 %v8487
        %9077 = vmatpush2.bf16.msra.mxu0 %v8486
        %9078 = vmatprep.mubr.bf16.mxu0 %v7577
        %9079 = vmatmul.mubr.bf16.gmra.mxu0 %v7576
        %v9080 = vpop.f32.mrf.mxu0
        %v9081 = vadd.f32 %v7599, %v9080
        %v9082 = vpop.f32.mrf.mxu0
        %v9083 = vadd.f32 %v7603, %v9082
        %v9084 = vpop.f32.mrf.mxu0
        %v9085 = vpop.f32.mrf.mxu0
        %9086 = vdwg.mxu0
        %9087 = vmatprep.subr.bf16.mxu0 %v8517
        %9088 = vmatpush1.bf16.msra.mxu0 %v8516
        %9089 = vmatprep.subr.bf16.mxu0 %v8515
        %9090 = vmatpush1.bf16.msra.mxu0 %v8514
        %9091 = vmatprep.subr.bf16.mxu0 %v8513
        %9092 = vmatpush1.bf16.msra.mxu0 %v8512
        %9093 = vmatprep.subr.bf16.mxu0 %v8511
        %9094 = vmatpush1.bf16.msra.mxu0 %v8510
        %9095 = vmatprep.subr.bf16.mxu0 %v8509
        %9096 = vmatpush1.bf16.msra.mxu0 %v8508
        %9097 = vmatprep.subr.bf16.mxu0 %v8507
        %9098 = vmatpush1.bf16.msra.mxu0 %v8506
        %9099 = vmatprep.subr.bf16.mxu0 %v8505
        %9100 = vmatpush1.bf16.msra.mxu0 %v8504
        %9101 = vmatprep.subr.bf16.mxu0 %v8503
        %9102 = vmatpush1.bf16.msra.mxu0 %v8502
        %9103 = vmatprep.subr.bf16.mxu0 %v8533
        %9104 = vmatpush2.bf16.msra.mxu0 %v8532
        %9105 = vmatprep.subr.bf16.mxu0 %v8531
        %9106 = vmatpush2.bf16.msra.mxu0 %v8530
        %9107 = vmatprep.subr.bf16.mxu0 %v8529
        %9108 = vmatpush2.bf16.msra.mxu0 %v8528
        %9109 = vmatprep.subr.bf16.mxu0 %v8527
        %9110 = vmatpush2.bf16.msra.mxu0 %v8526
        %9111 = vmatprep.subr.bf16.mxu0 %v8525
        %9112 = vmatpush2.bf16.msra.mxu0 %v8524
        %9113 = vmatprep.subr.bf16.mxu0 %v8523
        %9114 = vmatpush2.bf16.msra.mxu0 %v8522
        %9115 = vmatprep.subr.bf16.mxu0 %v8521
        %9116 = vmatpush2.bf16.msra.mxu0 %v8520
        %9117 = vmatprep.subr.bf16.mxu0 %v8519
        %9118 = vmatpush2.bf16.msra.mxu0 %v8518
        %9119 = vmatprep.mubr.bf16.mxu0 %v7579
        %9120 = vmatmul.mubr.bf16.gmra.mxu0 %v7578
        %v9121 = vpop.f32.mrf.mxu0
        %v9122 = vadd.f32 %v9081, %v9121
        %v9123 = vpop.f32.mrf.mxu0
        %v9124 = vadd.f32 %v9083, %v9123
        %v9125 = vpop.f32.mrf.mxu0
        %v9126 = vpop.f32.mrf.mxu0
        %9127 = vdwg.mxu0
        %9128 = vmatprep.subr.bf16.mxu0 %v8549
        %9129 = vmatpush1.bf16.msra.mxu0 %v8548
        %9130 = vmatprep.subr.bf16.mxu0 %v8547
        %9131 = vmatpush1.bf16.msra.mxu0 %v8546
        %9132 = vmatprep.subr.bf16.mxu0 %v8545
        %9133 = vmatpush1.bf16.msra.mxu0 %v8544
        %9134 = vmatprep.subr.bf16.mxu0 %v8543
        %9135 = vmatpush1.bf16.msra.mxu0 %v8542
        %9136 = vmatprep.subr.bf16.mxu0 %v8541
        %9137 = vmatpush1.bf16.msra.mxu0 %v8540
        %9138 = vmatprep.subr.bf16.mxu0 %v8539
        %9139 = vmatpush1.bf16.msra.mxu0 %v8538
        %9140 = vmatprep.subr.bf16.mxu0 %v8537
        %9141 = vmatpush1.bf16.msra.mxu0 %v8536
        %9142 = vmatprep.subr.bf16.mxu0 %v8535
        %9143 = vmatpush1.bf16.msra.mxu0 %v8534
        %9144 = vmatprep.subr.bf16.mxu0 %v8565
        %9145 = vmatpush2.bf16.msra.mxu0 %v8564
        %9146 = vmatprep.subr.bf16.mxu0 %v8563
        %9147 = vmatpush2.bf16.msra.mxu0 %v8562
        %9148 = vmatprep.subr.bf16.mxu0 %v8561
        %9149 = vmatpush2.bf16.msra.mxu0 %v8560
        %9150 = vmatprep.subr.bf16.mxu0 %v8559
        %9151 = vmatpush2.bf16.msra.mxu0 %v8558
        %9152 = vmatprep.subr.bf16.mxu0 %v8557
        %9153 = vmatpush2.bf16.msra.mxu0 %v8556
        %9154 = vmatprep.subr.bf16.mxu0 %v8555
        %9155 = vmatpush2.bf16.msra.mxu0 %v8554
        %9156 = vmatprep.subr.bf16.mxu0 %v8553
        %9157 = vmatpush2.bf16.msra.mxu0 %v8552
        %9158 = vmatprep.subr.bf16.mxu0 %v8551
        %9159 = vmatpush2.bf16.msra.mxu0 %v8550
        %9160 = vmatprep.mubr.bf16.mxu0 %v7581
        %9161 = vmatmul.mubr.bf16.gmra.mxu0 %v7580
        %v9162 = vpop.f32.mrf.mxu0
        %v9163 = vadd.f32 %v9122, %v9162
        %v9164 = vpop.f32.mrf.mxu0
        %v9165 = vadd.f32 %v9124, %v9164
        %v9166 = vpop.f32.mrf.mxu0
        %v9167 = vpop.f32.mrf.mxu0
        %9168 = vdwg.mxu0
        %9169 = vmatprep.subr.bf16.mxu0 %v8581
        %9170 = vmatpush1.bf16.msra.mxu0 %v8580
        %9171 = vmatprep.subr.bf16.mxu0 %v8579
        %9172 = vmatpush1.bf16.msra.mxu0 %v8578
        %9173 = vmatprep.subr.bf16.mxu0 %v8577
        %9174 = vmatpush1.bf16.msra.mxu0 %v8576
        %9175 = vmatprep.subr.bf16.mxu0 %v8575
        %9176 = vmatpush1.bf16.msra.mxu0 %v8574
        %9177 = vmatprep.subr.bf16.mxu0 %v8573
        %9178 = vmatpush1.bf16.msra.mxu0 %v8572
        %9179 = vmatprep.subr.bf16.mxu0 %v8571
        %9180 = vmatpush1.bf16.msra.mxu0 %v8570
        %9181 = vmatprep.subr.bf16.mxu0 %v8569
        %9182 = vmatpush1.bf16.msra.mxu0 %v8568
        %9183 = vmatprep.subr.bf16.mxu0 %v8567
        %9184 = vmatpush1.bf16.msra.mxu0 %v8566
        %9185 = vmatprep.subr.bf16.mxu0 %v8597
        %9186 = vmatpush2.bf16.msra.mxu0 %v8596
        %9187 = vmatprep.subr.bf16.mxu0 %v8595
        %9188 = vmatpush2.bf16.msra.mxu0 %v8594
        %9189 = vmatprep.subr.bf16.mxu0 %v8593
        %9190 = vmatpush2.bf16.msra.mxu0 %v8592
        %9191 = vmatprep.subr.bf16.mxu0 %v8591
        %9192 = vmatpush2.bf16.msra.mxu0 %v8590
        %9193 = vmatprep.subr.bf16.mxu0 %v8589
        %9194 = vmatpush2.bf16.msra.mxu0 %v8588
        %9195 = vmatprep.subr.bf16.mxu0 %v8587
        %9196 = vmatpush2.bf16.msra.mxu0 %v8586
        %9197 = vmatprep.subr.bf16.mxu0 %v8585
        %9198 = vmatpush2.bf16.msra.mxu0 %v8584
        %9199 = vmatprep.subr.bf16.mxu0 %v8583
        %9200 = vmatpush2.bf16.msra.mxu0 %v8582
        %9201 = vmatprep.mubr.bf16.mxu0 %v7583
        %9202 = vmatmul.mubr.bf16.gmra.mxu0 %v7582
        %v9203 = vpop.f32.mrf.mxu0
        %v9204 = vadd.f32 %v9163, %v9203
        %v9205 = vpop.f32.mrf.mxu0
        %v9206 = vadd.f32 %v9165, %v9205
        %v9207 = vpop.f32.mrf.mxu0
        %v9208 = vpop.f32.mrf.mxu0
        %9209 = vdwg.mxu0
        %9210 = vmatprep.subr.bf16.mxu0 %v8613
        %9211 = vmatpush1.bf16.msra.mxu0 %v8612
        %9212 = vmatprep.subr.bf16.mxu0 %v8611
        %9213 = vmatpush1.bf16.msra.mxu0 %v8610
        %9214 = vmatprep.subr.bf16.mxu0 %v8609
        %9215 = vmatpush1.bf16.msra.mxu0 %v8608
        %9216 = vmatprep.subr.bf16.mxu0 %v8607
        %9217 = vmatpush1.bf16.msra.mxu0 %v8606
        %9218 = vmatprep.subr.bf16.mxu0 %v8605
        %9219 = vmatpush1.bf16.msra.mxu0 %v8604
        %9220 = vmatprep.subr.bf16.mxu0 %v8603
        %9221 = vmatpush1.bf16.msra.mxu0 %v8602
        %9222 = vmatprep.subr.bf16.mxu0 %v8601
        %9223 = vmatpush1.bf16.msra.mxu0 %v8600
        %9224 = vmatprep.subr.bf16.mxu0 %v8599
        %9225 = vmatpush1.bf16.msra.mxu0 %v8598
        %9226 = vmatprep.subr.bf16.mxu0 %v8629
        %9227 = vmatpush2.bf16.msra.mxu0 %v8628
        %9228 = vmatprep.subr.bf16.mxu0 %v8627
        %9229 = vmatpush2.bf16.msra.mxu0 %v8626
        %9230 = vmatprep.subr.bf16.mxu0 %v8625
        %9231 = vmatpush2.bf16.msra.mxu0 %v8624
        %9232 = vmatprep.subr.bf16.mxu0 %v8623
        %9233 = vmatpush2.bf16.msra.mxu0 %v8622
        %9234 = vmatprep.subr.bf16.mxu0 %v8621
        %9235 = vmatpush2.bf16.msra.mxu0 %v8620
        %9236 = vmatprep.subr.bf16.mxu0 %v8619
        %9237 = vmatpush2.bf16.msra.mxu0 %v8618
        %9238 = vmatprep.subr.bf16.mxu0 %v8617
        %9239 = vmatpush2.bf16.msra.mxu0 %v8616
        %9240 = vmatprep.subr.bf16.mxu0 %v8615
        %9241 = vmatpush2.bf16.msra.mxu0 %v8614
        %9242 = vmatprep.mubr.bf16.mxu0 %v7585
        %9243 = vmatmul.mubr.bf16.gmra.mxu0 %v7584
        %v9244 = vpop.f32.mrf.mxu0
        %v9245 = vadd.f32 %v9204, %v9244
        %v9246 = vpop.f32.mrf.mxu0
        %v9247 = vadd.f32 %v9206, %v9246
        %v9248 = vpop.f32.mrf.mxu0
        %v9249 = vpop.f32.mrf.mxu0
        %9250 = vdwg.mxu0
        %9251 = vmatprep.subr.bf16.mxu0 %v8645
        %9252 = vmatpush1.bf16.msra.mxu0 %v8644
        %9253 = vmatprep.subr.bf16.mxu0 %v8643
        %9254 = vmatpush1.bf16.msra.mxu0 %v8642
        %9255 = vmatprep.subr.bf16.mxu0 %v8641
        %9256 = vmatpush1.bf16.msra.mxu0 %v8640
        %9257 = vmatprep.subr.bf16.mxu0 %v8639
        %9258 = vmatpush1.bf16.msra.mxu0 %v8638
        %9259 = vmatprep.subr.bf16.mxu0 %v8637
        %9260 = vmatpush1.bf16.msra.mxu0 %v8636
        %9261 = vmatprep.subr.bf16.mxu0 %v8635
        %9262 = vmatpush1.bf16.msra.mxu0 %v8634
        %9263 = vmatprep.subr.bf16.mxu0 %v8633
        %9264 = vmatpush1.bf16.msra.mxu0 %v8632
        %9265 = vmatprep.subr.bf16.mxu0 %v8631
        %9266 = vmatpush1.bf16.msra.mxu0 %v8630
        %9267 = vmatprep.subr.bf16.mxu0 %v8661
        %9268 = vmatpush2.bf16.msra.mxu0 %v8660
        %9269 = vmatprep.subr.bf16.mxu0 %v8659
        %9270 = vmatpush2.bf16.msra.mxu0 %v8658
        %9271 = vmatprep.subr.bf16.mxu0 %v8657
        %9272 = vmatpush2.bf16.msra.mxu0 %v8656
        %9273 = vmatprep.subr.bf16.mxu0 %v8655
        %9274 = vmatpush2.bf16.msra.mxu0 %v8654
        %9275 = vmatprep.subr.bf16.mxu0 %v8653
        %9276 = vmatpush2.bf16.msra.mxu0 %v8652
        %9277 = vmatprep.subr.bf16.mxu0 %v8651
        %9278 = vmatpush2.bf16.msra.mxu0 %v8650
        %9279 = vmatprep.subr.bf16.mxu0 %v8649
        %9280 = vmatpush2.bf16.msra.mxu0 %v8648
        %9281 = vmatprep.subr.bf16.mxu0 %v8647
        %9282 = vmatpush2.bf16.msra.mxu0 %v8646
        %9283 = vmatprep.mubr.bf16.mxu0 %v7587
        %9284 = vmatmul.mubr.bf16.gmra.mxu0 %v7586
        %v9285 = vpop.f32.mrf.mxu0
        %v9286 = vadd.f32 %v9245, %v9285
        %v9287 = vpop.f32.mrf.mxu0
        %v9288 = vadd.f32 %v9247, %v9287
        %v9289 = vpop.f32.mrf.mxu0
        %v9290 = vpop.f32.mrf.mxu0
        %9291 = vdwg.mxu0
        %9292 = vmatprep.subr.bf16.mxu0 %v8677
        %9293 = vmatpush1.bf16.msra.mxu0 %v8676
        %9294 = vmatprep.subr.bf16.mxu0 %v8675
        %9295 = vmatpush1.bf16.msra.mxu0 %v8674
        %9296 = vmatprep.subr.bf16.mxu0 %v8673
        %9297 = vmatpush1.bf16.msra.mxu0 %v8672
        %9298 = vmatprep.subr.bf16.mxu0 %v8671
        %9299 = vmatpush1.bf16.msra.mxu0 %v8670
        %9300 = vmatprep.subr.bf16.mxu0 %v8669
        %9301 = vmatpush1.bf16.msra.mxu0 %v8668
        %9302 = vmatprep.subr.bf16.mxu0 %v8667
        %9303 = vmatpush1.bf16.msra.mxu0 %v8666
        %9304 = vmatprep.subr.bf16.mxu0 %v8665
        %9305 = vmatpush1.bf16.msra.mxu0 %v8664
        %9306 = vmatprep.subr.bf16.mxu0 %v8663
        %9307 = vmatpush1.bf16.msra.mxu0 %v8662
        %9308 = vmatprep.subr.bf16.mxu0 %v8693
        %9309 = vmatpush2.bf16.msra.mxu0 %v8692
        %9310 = vmatprep.subr.bf16.mxu0 %v8691
        %9311 = vmatpush2.bf16.msra.mxu0 %v8690
        %9312 = vmatprep.subr.bf16.mxu0 %v8689
        %9313 = vmatpush2.bf16.msra.mxu0 %v8688
        %9314 = vmatprep.subr.bf16.mxu0 %v8687
        %9315 = vmatpush2.bf16.msra.mxu0 %v8686
        %9316 = vmatprep.subr.bf16.mxu0 %v8685
        %9317 = vmatpush2.bf16.msra.mxu0 %v8684
        %9318 = vmatprep.subr.bf16.mxu0 %v8683
        %9319 = vmatpush2.bf16.msra.mxu0 %v8682
        %9320 = vmatprep.subr.bf16.mxu0 %v8681
        %9321 = vmatpush2.bf16.msra.mxu0 %v8680
        %9322 = vmatprep.subr.bf16.mxu0 %v8679
        %9323 = vmatpush2.bf16.msra.mxu0 %v8678
        %9324 = vmatprep.mubr.bf16.mxu0 %v7589
        %9325 = vmatmul.mubr.bf16.gmra.mxu0 %v7588
        %v9326 = vpop.f32.mrf.mxu0
        %v9327 = vadd.f32 %v9286, %v9326
        %v9328 = vpop.f32.mrf.mxu0
        %v9329 = vadd.f32 %v9288, %v9328
        %v9330 = vpop.f32.mrf.mxu0
        %v9331 = vpop.f32.mrf.mxu0
        %9332 = vdwg.mxu0
        %9333 = vmatprep.subr.bf16.mxu0 %v8709
        %9334 = vmatpush1.bf16.msra.mxu0 %v8708
        %9335 = vmatprep.subr.bf16.mxu0 %v8707
        %9336 = vmatpush1.bf16.msra.mxu0 %v8706
        %9337 = vmatprep.subr.bf16.mxu0 %v8705
        %9338 = vmatpush1.bf16.msra.mxu0 %v8704
        %9339 = vmatprep.subr.bf16.mxu0 %v8703
        %9340 = vmatpush1.bf16.msra.mxu0 %v8702
        %9341 = vmatprep.subr.bf16.mxu0 %v8701
        %9342 = vmatpush1.bf16.msra.mxu0 %v8700
        %9343 = vmatprep.subr.bf16.mxu0 %v8699
        %9344 = vmatpush1.bf16.msra.mxu0 %v8698
        %9345 = vmatprep.subr.bf16.mxu0 %v8697
        %9346 = vmatpush1.bf16.msra.mxu0 %v8696
        %9347 = vmatprep.subr.bf16.mxu0 %v8695
        %9348 = vmatpush1.bf16.msra.mxu0 %v8694
        %9349 = vmatprep.subr.bf16.mxu0 %v8725
        %9350 = vmatpush2.bf16.msra.mxu0 %v8724
        %9351 = vmatprep.subr.bf16.mxu0 %v8723
        %9352 = vmatpush2.bf16.msra.mxu0 %v8722
        %9353 = vmatprep.subr.bf16.mxu0 %v8721
        %9354 = vmatpush2.bf16.msra.mxu0 %v8720
        %9355 = vmatprep.subr.bf16.mxu0 %v8719
        %9356 = vmatpush2.bf16.msra.mxu0 %v8718
        %9357 = vmatprep.subr.bf16.mxu0 %v8717
        %9358 = vmatpush2.bf16.msra.mxu0 %v8716
        %9359 = vmatprep.subr.bf16.mxu0 %v8715
        %9360 = vmatpush2.bf16.msra.mxu0 %v8714
        %9361 = vmatprep.subr.bf16.mxu0 %v8713
        %9362 = vmatpush2.bf16.msra.mxu0 %v8712
        %9363 = vmatprep.subr.bf16.mxu0 %v8711
        %9364 = vmatpush2.bf16.msra.mxu0 %v8710
        %9365 = vmatprep.mubr.bf16.mxu0 %v7591
        %9366 = vmatmul.mubr.bf16.gmra.mxu0 %v7590
        %v9367 = vpop.f32.mrf.mxu0
        %v9368 = vadd.f32 %v9327, %v9367
        %v9369 = vpop.f32.mrf.mxu0
        %v9370 = vadd.f32 %v9329, %v9369
        %v9371 = vpop.f32.mrf.mxu0
        %v9372 = vpop.f32.mrf.mxu0
        %9373 = vdwg.mxu0
        %9374 = vmatprep.subr.bf16.mxu0 %v8741
        %9375 = vmatpush1.bf16.msra.mxu0 %v8740
        %9376 = vmatprep.subr.bf16.mxu0 %v8739
        %9377 = vmatpush1.bf16.msra.mxu0 %v8738
        %9378 = vmatprep.subr.bf16.mxu0 %v8737
        %9379 = vmatpush1.bf16.msra.mxu0 %v8736
        %9380 = vmatprep.subr.bf16.mxu0 %v8735
        %9381 = vmatpush1.bf16.msra.mxu0 %v8734
        %9382 = vmatprep.subr.bf16.mxu0 %v8733
        %9383 = vmatpush1.bf16.msra.mxu0 %v8732
        %9384 = vmatprep.subr.bf16.mxu0 %v8731
        %9385 = vmatpush1.bf16.msra.mxu0 %v8730
        %9386 = vmatprep.subr.bf16.mxu0 %v8729
        %9387 = vmatpush1.bf16.msra.mxu0 %v8728
        %9388 = vmatprep.subr.bf16.mxu0 %v8727
        %9389 = vmatpush1.bf16.msra.mxu0 %v8726
        %9390 = vmatprep.subr.bf16.mxu0 %v8757
        %9391 = vmatpush2.bf16.msra.mxu0 %v8756
        %9392 = vmatprep.subr.bf16.mxu0 %v8755
        %9393 = vmatpush2.bf16.msra.mxu0 %v8754
        %9394 = vmatprep.subr.bf16.mxu0 %v8753
        %9395 = vmatpush2.bf16.msra.mxu0 %v8752
        %9396 = vmatprep.subr.bf16.mxu0 %v8751
        %9397 = vmatpush2.bf16.msra.mxu0 %v8750
        %9398 = vmatprep.subr.bf16.mxu0 %v8749
        %9399 = vmatpush2.bf16.msra.mxu0 %v8748
        %9400 = vmatprep.subr.bf16.mxu0 %v8747
        %9401 = vmatpush2.bf16.msra.mxu0 %v8746
        %9402 = vmatprep.subr.bf16.mxu0 %v8745
        %9403 = vmatpush2.bf16.msra.mxu0 %v8744
        %9404 = vmatprep.subr.bf16.mxu0 %v8743
        %9405 = vmatpush2.bf16.msra.mxu0 %v8742
        %9406 = vmatprep.mubr.bf16.mxu0 %v7593
        %9407 = vmatmul.mubr.bf16.gmra.mxu0 %v7592
        %v9408 = vpop.f32.mrf.mxu0
        %v9409 = vadd.f32 %v9368, %v9408
        %v9410 = vpop.f32.mrf.mxu0
        %v9411 = vadd.f32 %v9370, %v9410
        %v9412 = vpop.f32.mrf.mxu0
        %v9413 = vpop.f32.mrf.mxu0
        %9414 = vdwg.mxu0
        %v9415 = vmax.f32 %v9409, 0.0
        %v9416 = vmax.f32 %v9411, 0.0
        %v9417 = vld [vmem:[#allocation13] sm:$0xff]
        %v9418 = vld [vmem:[#allocation13 + $0x8] sm:$0xff]
        %v9419 = vld [vmem:[#allocation13 + $0x10] sm:$0xff]
        %v9420 = vld [vmem:[#allocation13 + $0x18] sm:$0xff]
        %v9421 = vld [vmem:[#allocation13 + $0x20] sm:$0xff]
        %v9422 = vld [vmem:[#allocation13 + $0x28] sm:$0xff]
        %v9423 = vld [vmem:[#allocation13 + $0x30] sm:$0xff]
        %v9424 = vld [vmem:[#allocation13 + $0x38] sm:$0xff]
        %v9425 = vld [vmem:[#allocation13 + $0x40] sm:$0xff]
        %v9426 = vld [vmem:[#allocation13 + $0x48] sm:$0xff]
        %v9427 = vld [vmem:[#allocation13 + $0x50] sm:$0xff]
        %v9428 = vld [vmem:[#allocation13 + $0x58] sm:$0xff]
        %v9429 = vld [vmem:[#allocation13 + $0x60] sm:$0xff]
        %v9430 = vld [vmem:[#allocation13 + $0x68] sm:$0xff]
        %v9431 = vld [vmem:[#allocation13 + $0x70] sm:$0xff]
        %v9432 = vld [vmem:[#allocation13 + $0x78] sm:$0xff]
        %v9433 = vld [vmem:[#allocation13 + $0x80] sm:$0xff]
        %v9434 = vld [vmem:[#allocation13 + $0x88] sm:$0xff]
        %v9435 = vld [vmem:[#allocation13 + $0x90] sm:$0xff]
        %v9436 = vld [vmem:[#allocation13 + $0x98] sm:$0xff]
        %v9437 = vld [vmem:[#allocation13 + $0xa0] sm:$0xff]
        %v9438 = vld [vmem:[#allocation13 + $0xa8] sm:$0xff]
        %v9439 = vld [vmem:[#allocation13 + $0xb0] sm:$0xff]
        %v9440 = vld [vmem:[#allocation13 + $0xb8] sm:$0xff]
        %v9441 = vld [vmem:[#allocation13 + $0xc0] sm:$0xff]
        %v9442 = vld [vmem:[#allocation13 + $0xc8] sm:$0xff]
        %v9443 = vld [vmem:[#allocation13 + $0xd0] sm:$0xff]
        %v9444 = vld [vmem:[#allocation13 + $0xd8] sm:$0xff]
        %v9445 = vld [vmem:[#allocation13 + $0xe0] sm:$0xff]
        %v9446 = vld [vmem:[#allocation13 + $0xe8] sm:$0xff]
        %v9447 = vld [vmem:[#allocation13 + $0xf0] sm:$0xff]
        %v9448 = vld [vmem:[#allocation13 + $0xf8] sm:$0xff]
        %v9449 = vpack.c.bf16 %v9415, %v9415
        %v9450 = vpack.c.bf16 %v9416, %v9416
        %v9451 = vld [vmem:[%s37] sm:$0x3]
        %v9453 = vlaneseq
        %v9454 = vshrl.u32 %v9453, 7
        %v9455 = vsub.s32 0, %v9454
        %v9456 = vrot.slane %v9451, %v9455
        %v9457 = vlaneseq
        %v9458 = vshrl.u32 %v9457, 7
        %v9459 = vsub.s32 1, %v9458
        %v9460 = vrot.slane %v9451, %v9459
        %v9495 = vunpack.c.l.b16 %v9417
        %v9496 = vunpack.c.h.b16 %v9417
        %v9497 = vunpack.c.l.b16 %v9418
        %v9498 = vunpack.c.h.b16 %v9418
        %v9499 = vunpack.c.l.b16 %v9419
        %v9500 = vunpack.c.h.b16 %v9419
        %v9501 = vunpack.c.l.b16 %v9420
        %v9502 = vunpack.c.h.b16 %v9420
        %v9503 = vunpack.c.l.b16 %v9421
        %v9504 = vunpack.c.h.b16 %v9421
        %v9505 = vunpack.c.l.b16 %v9422
        %v9506 = vunpack.c.h.b16 %v9422
        %v9507 = vunpack.c.l.b16 %v9423
        %v9508 = vunpack.c.h.b16 %v9423
        %v9509 = vunpack.c.l.b16 %v9424
        %v9510 = vunpack.c.h.b16 %v9424
        %v9511 = vunpack.c.l.b16 %v9425
        %v9512 = vunpack.c.h.b16 %v9425
        %v9513 = vunpack.c.l.b16 %v9426
        %v9514 = vunpack.c.h.b16 %v9426
        %v9515 = vunpack.c.l.b16 %v9427
        %v9516 = vunpack.c.h.b16 %v9427
        %v9517 = vunpack.c.l.b16 %v9428
        %v9518 = vunpack.c.h.b16 %v9428
        %v9519 = vunpack.c.l.b16 %v9429
        %v9520 = vunpack.c.h.b16 %v9429
        %v9521 = vunpack.c.l.b16 %v9430
        %v9522 = vunpack.c.h.b16 %v9430
        %v9523 = vunpack.c.l.b16 %v9431
        %v9524 = vunpack.c.h.b16 %v9431
        %v9525 = vunpack.c.l.b16 %v9432
        %v9526 = vunpack.c.h.b16 %v9432
        %v9527 = vunpack.c.l.b16 %v9433
        %v9528 = vunpack.c.h.b16 %v9433
        %v9529 = vunpack.c.l.b16 %v9434
        %v9530 = vunpack.c.h.b16 %v9434
        %v9531 = vunpack.c.l.b16 %v9435
        %v9532 = vunpack.c.h.b16 %v9435
        %v9533 = vunpack.c.l.b16 %v9436
        %v9534 = vunpack.c.h.b16 %v9436
        %v9535 = vunpack.c.l.b16 %v9437
        %v9536 = vunpack.c.h.b16 %v9437
        %v9537 = vunpack.c.l.b16 %v9438
        %v9538 = vunpack.c.h.b16 %v9438
        %v9539 = vunpack.c.l.b16 %v9439
        %v9540 = vunpack.c.h.b16 %v9439
        %v9541 = vunpack.c.l.b16 %v9440
        %v9542 = vunpack.c.h.b16 %v9440
        %v9543 = vunpack.c.l.b16 %v9441
        %v9544 = vunpack.c.h.b16 %v9441
        %v9545 = vunpack.c.l.b16 %v9442
        %v9546 = vunpack.c.h.b16 %v9442
        %v9547 = vunpack.c.l.b16 %v9443
        %v9548 = vunpack.c.h.b16 %v9443
        %v9549 = vunpack.c.l.b16 %v9444
        %v9550 = vunpack.c.h.b16 %v9444
        %v9551 = vunpack.c.l.b16 %v9445
        %v9552 = vunpack.c.h.b16 %v9445
        %v9553 = vunpack.c.l.b16 %v9446
        %v9554 = vunpack.c.h.b16 %v9446
        %v9555 = vunpack.c.l.b16 %v9447
        %v9556 = vunpack.c.h.b16 %v9447
        %v9557 = vunpack.c.l.b16 %v9448
        %v9558 = vunpack.c.h.b16 %v9448
        %v9559 = vpack.c.b16 %v9497, %v9495
        %v9560 = vpack.c.b16 %v9498, %v9496
        %v9561 = vpack.c.b16 %v9501, %v9499
        %v9562 = vpack.c.b16 %v9502, %v9500
        %v9563 = vpack.c.b16 %v9505, %v9503
        %v9564 = vpack.c.b16 %v9506, %v9504
        %v9565 = vpack.c.b16 %v9509, %v9507
        %v9566 = vpack.c.b16 %v9510, %v9508
        %v9567 = vpack.c.b16 %v9513, %v9511
        %v9568 = vpack.c.b16 %v9514, %v9512
        %v9569 = vpack.c.b16 %v9517, %v9515
        %v9570 = vpack.c.b16 %v9518, %v9516
        %v9571 = vpack.c.b16 %v9521, %v9519
        %v9572 = vpack.c.b16 %v9522, %v9520
        %v9573 = vpack.c.b16 %v9525, %v9523
        %v9574 = vpack.c.b16 %v9526, %v9524
        %v9575 = vpack.c.b16 %v9529, %v9527
        %v9576 = vpack.c.b16 %v9530, %v9528
        %v9577 = vpack.c.b16 %v9533, %v9531
        %v9578 = vpack.c.b16 %v9534, %v9532
        %v9579 = vpack.c.b16 %v9537, %v9535
        %v9580 = vpack.c.b16 %v9538, %v9536
        %v9581 = vpack.c.b16 %v9541, %v9539
        %v9582 = vpack.c.b16 %v9542, %v9540
        %v9583 = vpack.c.b16 %v9545, %v9543
        %v9584 = vpack.c.b16 %v9546, %v9544
        %v9585 = vpack.c.b16 %v9549, %v9547
        %v9586 = vpack.c.b16 %v9550, %v9548
        %v9587 = vpack.c.b16 %v9553, %v9551
        %v9588 = vpack.c.b16 %v9554, %v9552
        %v9589 = vpack.c.b16 %v9557, %v9555
        %v9590 = vpack.c.b16 %v9558, %v9556
        %9623 = vmatprep.subr.bf16.mxu0 %v9574
        %9624 = vmatpush1.bf16.msra.mxu0 %v9573
        %9625 = vmatprep.subr.bf16.mxu0 %v9572
        %9626 = vmatpush1.bf16.msra.mxu0 %v9571
        %9627 = vmatprep.subr.bf16.mxu0 %v9570
        %9628 = vmatpush1.bf16.msra.mxu0 %v9569
        %9629 = vmatprep.subr.bf16.mxu0 %v9568
        %9630 = vmatpush1.bf16.msra.mxu0 %v9567
        %9631 = vmatprep.subr.bf16.mxu0 %v9566
        %9632 = vmatpush1.bf16.msra.mxu0 %v9565
        %9633 = vmatprep.subr.bf16.mxu0 %v9564
        %9634 = vmatpush1.bf16.msra.mxu0 %v9563
        %9635 = vmatprep.subr.bf16.mxu0 %v9562
        %9636 = vmatpush1.bf16.msra.mxu0 %v9561
        %9637 = vmatprep.subr.bf16.mxu0 %v9560
        %9638 = vmatpush1.bf16.msra.mxu0 %v9559
        %9639 = vmatprep.subr.bf16.mxu0 %v9590
        %9640 = vmatpush2.bf16.msra.mxu0 %v9589
        %9641 = vmatprep.subr.bf16.mxu0 %v9588
        %9642 = vmatpush2.bf16.msra.mxu0 %v9587
        %9643 = vmatprep.subr.bf16.mxu0 %v9586
        %9644 = vmatpush2.bf16.msra.mxu0 %v9585
        %9645 = vmatprep.subr.bf16.mxu0 %v9584
        %9646 = vmatpush2.bf16.msra.mxu0 %v9583
        %9647 = vmatprep.subr.bf16.mxu0 %v9582
        %9648 = vmatpush2.bf16.msra.mxu0 %v9581
        %9649 = vmatprep.subr.bf16.mxu0 %v9580
        %9650 = vmatpush2.bf16.msra.mxu0 %v9579
        %9651 = vmatprep.subr.bf16.mxu0 %v9578
        %9652 = vmatpush2.bf16.msra.mxu0 %v9577
        %9653 = vmatprep.subr.bf16.mxu0 %v9576
        %9654 = vmatpush2.bf16.msra.mxu0 %v9575
        %9655 = vmatprep.mubr.bf16.mxu0 %v9450
        %9656 = vmatmul.mubr.bf16.gmra.mxu0 %v9449
        %v9657 = vpop.f32.mrf.mxu0
        %v9658 = vadd.f32 %v9456, %v9657
        %v9659 = vpop.f32.mrf.mxu0
        %v9660 = vadd.f32 %v9460, %v9659
        %v9661 = vpop.f32.mrf.mxu0
        %v9662 = vpop.f32.mrf.mxu0
        %9663 = vdwg.mxu0
        %v9664 = vmax.f32 %v9658, 0.0
        %v9665 = vmax.f32 %v9660, 0.0
        %v9666 = vmax.f32 %v5030, %v5031
        %v9667 = vrot.slane %v9666, 4
        %v9668 = vmax.f32 %v9666, %v9667
        %v9669 = vrot.slane %v9668, 2
        %v9670 = vmax.f32 %v9668, %v9669
        %v9671 = vrot.slane %v9670, 1
        %v9672 = vmax.f32 %v9670, %v9671
        %vm9673 = vcmask 1043456
        %v9674 = vsel %vm9673, %v6712, -inf
        %v9675 = vrot.slane %v9674, 4
        %v9676 = vmax.f32 %v9674, %v9675
        %v9677 = vrot.slane %v9676, 2
        %v9678 = vmax.f32 %v9676, %v9677
        %v9679 = vrot.slane %v9678, 1
        %v9680 = vmax.f32 %v9678, %v9679
        %v9681 = vsel %vm9673, %v9664, -inf
        %v9682 = vrot.slane %v9681, 4
        %v9683 = vmax.f32 %v9681, %v9682
        %v9684 = vrot.slane %v9683, 2
        %v9685 = vmax.f32 %v9683, %v9684
        %v9686 = vrot.slane %v9685, 1
        %v9687 = vmax.f32 %v9685, %v9686
        %v9688 = vsel %vm9673, %v9665, -inf
        %v9689 = vrot.slane %v9688, 4
        %v9690 = vmax.f32 %v9688, %v9689
        %v9691 = vrot.slane %v9690, 2
        %v9692 = vmax.f32 %v9690, %v9691
        %v9693 = vrot.slane %v9692, 1
        %v9694 = vmax.f32 %v9692, %v9693
        %v9695 = vlaneseq
        %v9696 = vshrl.u32 %v9695, 7
        %vm9697 = vcmp.eq.s32.totalorder %v9696, 0
        %v9698 = vlaneseq
        %v9699 = vshrl.u32 %v9698, 7
        %v9700 = vsub.s32 0, %v9699
        %v9701 = vrot.slane %v9672, %v9700
        %v9702 = vlaneseq
        %v9703 = vshrl.u32 %v9702, 7
        %v9704 = vsub.s32 0, %v9703
        %v9705 = vrot.slane %v9680, %v9704
        %v9706 = vlaneseq
        %v9707 = vshrl.u32 %v9706, 7
        %v9708 = vsub.s32 0, %v9707
        %v9709 = vrot.slane %v9687, %v9708
        %v9710 = vlaneseq
        %v9711 = vshrl.u32 %v9710, 7
        %v9712 = vsub.s32 0, %v9711
        %v9713 = vrot.slane %v9694, %v9712
        %v9714 = vsel %vm9697, 1, 0
        %vm9715 = vcmp.eq.s32.totalorder %v9714, 1
        %v9716 = vsel %vm9715, %v9701, 0.0
        %v9717 = vsel %vm9715, %v9705, 0.0
        %v9718 = vsel %vm9715, %v9709, 0.0
        %v9719 = vsel %vm9715, %v9713, 0.0
        %v9720 = vld [vmem:[#allocation15] sm:$0xff]
        %v9721 = vld [vmem:[#allocation15 + $0x8] sm:$0xff]
        %v9722 = vld [vmem:[#allocation15 + $0x10] sm:$0xff]
        %v9723 = vld [vmem:[#allocation15 + $0x18] sm:$0xff]
        %v9724 = vld [vmem:[#allocation15 + $0x20] sm:$0xff]
        %v9725 = vld [vmem:[#allocation15 + $0x28] sm:$0xff]
        %v9726 = vld [vmem:[#allocation15 + $0x30] sm:$0xff]
        %v9727 = vld [vmem:[#allocation15 + $0x38] sm:$0xff]
        %v9728 = vld [vmem:[#allocation15 + $0x40] sm:$0xff]
        %v9729 = vld [vmem:[#allocation15 + $0x48] sm:$0xff]
        %v9730 = vld [vmem:[#allocation15 + $0x50] sm:$0xff]
        %v9731 = vld [vmem:[#allocation15 + $0x58] sm:$0xff]
        %v9732 = vld [vmem:[#allocation15 + $0x60] sm:$0xff]
        %v9733 = vld [vmem:[#allocation15 + $0x68] sm:$0xff]
        %v9734 = vld [vmem:[#allocation15 + $0x70] sm:$0xff]
        %v9735 = vld [vmem:[#allocation15 + $0x78] sm:$0xff]
        %v9736 = vld [vmem:[#allocation15 + $0x80] sm:$0xff]
        %v9737 = vld [vmem:[#allocation15 + $0x88] sm:$0xff]
        %v9738 = vld [vmem:[#allocation15 + $0x90] sm:$0xff]
        %v9739 = vld [vmem:[#allocation15 + $0x98] sm:$0xff]
        %v9740 = vld [vmem:[#allocation15 + $0xa0] sm:$0xff]
        %v9741 = vld [vmem:[#allocation15 + $0xa8] sm:$0xff]
        %v9742 = vld [vmem:[#allocation15 + $0xb0] sm:$0xff]
        %v9743 = vld [vmem:[#allocation15 + $0xb8] sm:$0xff]
        %v9744 = vld [vmem:[#allocation15 + $0xc0] sm:$0xff]
        %v9745 = vld [vmem:[#allocation15 + $0xc8] sm:$0xff]
        %v9746 = vld [vmem:[#allocation15 + $0xd0] sm:$0xff]
        %v9747 = vld [vmem:[#allocation15 + $0xd8] sm:$0xff]
        %v9748 = vld [vmem:[#allocation15 + $0xe0] sm:$0xff]
        %v9749 = vld [vmem:[#allocation15 + $0xe8] sm:$0xff]
        %v9750 = vld [vmem:[#allocation15 + $0xf0] sm:$0xff]
        %v9751 = vld [vmem:[#allocation15 + $0xf8] sm:$0xff]
        %v9752 = vld [vmem:[#allocation15 + $0x100] sm:$0xff]
        %v9753 = vld [vmem:[#allocation15 + $0x108] sm:$0xff]
        %v9754 = vld [vmem:[#allocation15 + $0x110] sm:$0xff]
        %v9755 = vld [vmem:[#allocation15 + $0x118] sm:$0xff]
        %v9756 = vld [vmem:[#allocation15 + $0x120] sm:$0xff]
        %v9757 = vld [vmem:[#allocation15 + $0x128] sm:$0xff]
        %v9758 = vld [vmem:[#allocation15 + $0x130] sm:$0xff]
        %v9759 = vld [vmem:[#allocation15 + $0x138] sm:$0xff]
        %v9760 = vld [vmem:[#allocation15 + $0x140] sm:$0xff]
        %v9761 = vld [vmem:[#allocation15 + $0x148] sm:$0xff]
        %v9762 = vld [vmem:[#allocation15 + $0x150] sm:$0xff]
        %v9763 = vld [vmem:[#allocation15 + $0x158] sm:$0xff]
        %v9764 = vld [vmem:[#allocation15 + $0x160] sm:$0xff]
        %v9765 = vld [vmem:[#allocation15 + $0x168] sm:$0xff]
        %v9766 = vld [vmem:[#allocation15 + $0x170] sm:$0xff]
        %v9767 = vld [vmem:[#allocation15 + $0x178] sm:$0xff]
        %v9768 = vld [vmem:[#allocation15 + $0x180] sm:$0xff]
        %v9769 = vld [vmem:[#allocation15 + $0x188] sm:$0xff]
        %v9770 = vld [vmem:[#allocation15 + $0x190] sm:$0xff]
        %v9771 = vld [vmem:[#allocation15 + $0x198] sm:$0xff]
        %v9772 = vld [vmem:[#allocation15 + $0x1a0] sm:$0xff]
        %v9773 = vld [vmem:[#allocation15 + $0x1a8] sm:$0xff]
        %v9774 = vld [vmem:[#allocation15 + $0x1b0] sm:$0xff]
        %v9775 = vld [vmem:[#allocation15 + $0x1b8] sm:$0xff]
        %v9776 = vld [vmem:[#allocation15 + $0x1c0] sm:$0xff]
        %v9777 = vld [vmem:[#allocation15 + $0x1c8] sm:$0xff]
        %v9778 = vld [vmem:[#allocation15 + $0x1d0] sm:$0xff]
        %v9779 = vld [vmem:[#allocation15 + $0x1d8] sm:$0xff]
        %v9780 = vld [vmem:[#allocation15 + $0x1e0] sm:$0xff]
        %v9781 = vld [vmem:[#allocation15 + $0x1e8] sm:$0xff]
        %v9782 = vld [vmem:[#allocation15 + $0x1f0] sm:$0xff]
        %v9783 = vld [vmem:[#allocation15 + $0x1f8] sm:$0xff]
        %v9784 = vld [vmem:[#allocation15 + $0x200] sm:$0xff]
        %v9785 = vld [vmem:[#allocation15 + $0x208] sm:$0xff]
        %v9786 = vld [vmem:[#allocation15 + $0x210] sm:$0xff]
        %v9787 = vld [vmem:[#allocation15 + $0x218] sm:$0xff]
        %v9788 = vld [vmem:[#allocation15 + $0x220] sm:$0xff]
        %v9789 = vld [vmem:[#allocation15 + $0x228] sm:$0xff]
        %v9790 = vld [vmem:[#allocation15 + $0x230] sm:$0xff]
        %v9791 = vld [vmem:[#allocation15 + $0x238] sm:$0xff]
        %v9792 = vld [vmem:[#allocation15 + $0x240] sm:$0xff]
        %v9793 = vld [vmem:[#allocation15 + $0x248] sm:$0xff]
        %v9794 = vld [vmem:[#allocation15 + $0x250] sm:$0xff]
        %v9795 = vld [vmem:[#allocation15 + $0x258] sm:$0xff]
        %v9796 = vld [vmem:[#allocation15 + $0x260] sm:$0xff]
        %v9797 = vld [vmem:[#allocation15 + $0x268] sm:$0xff]
        %v9798 = vld [vmem:[#allocation15 + $0x270] sm:$0xff]
        %v9799 = vld [vmem:[#allocation15 + $0x278] sm:$0xff]
        %v9800 = vld [vmem:[#allocation15 + $0x280] sm:$0xff]
        %v9801 = vld [vmem:[#allocation15 + $0x288] sm:$0xff]
        %v9802 = vld [vmem:[#allocation15 + $0x290] sm:$0xff]
        %v9803 = vld [vmem:[#allocation15 + $0x298] sm:$0xff]
        %v9804 = vld [vmem:[#allocation15 + $0x2a0] sm:$0xff]
        %v9805 = vld [vmem:[#allocation15 + $0x2a8] sm:$0xff]
        %v9806 = vld [vmem:[#allocation15 + $0x2b0] sm:$0xff]
        %v9807 = vld [vmem:[#allocation15 + $0x2b8] sm:$0xff]
        %v9808 = vld [vmem:[#allocation15 + $0x2c0] sm:$0xff]
        %v9809 = vld [vmem:[#allocation15 + $0x2c8] sm:$0xff]
        %v9810 = vld [vmem:[#allocation15 + $0x2d0] sm:$0xff]
        %v9811 = vld [vmem:[#allocation15 + $0x2d8] sm:$0xff]
        %v9812 = vld [vmem:[#allocation15 + $0x2e0] sm:$0xff]
        %v9813 = vld [vmem:[#allocation15 + $0x2e8] sm:$0xff]
        %v9814 = vld [vmem:[#allocation15 + $0x2f0] sm:$0xff]
        %v9815 = vld [vmem:[#allocation15 + $0x2f8] sm:$0xff]
        %v9816 = vld [vmem:[#allocation15 + $0x300] sm:$0xff]
        %v9817 = vld [vmem:[#allocation15 + $0x308] sm:$0xff]
        %v9818 = vld [vmem:[#allocation15 + $0x310] sm:$0xff]
        %v9819 = vld [vmem:[#allocation15 + $0x318] sm:$0xff]
        %v9820 = vld [vmem:[#allocation15 + $0x320] sm:$0xff]
        %v9821 = vld [vmem:[#allocation15 + $0x328] sm:$0xff]
        %v9822 = vld [vmem:[#allocation15 + $0x330] sm:$0xff]
        %v9823 = vld [vmem:[#allocation15 + $0x338] sm:$0xff]
        %v9824 = vld [vmem:[#allocation15 + $0x340] sm:$0xff]
        %v9825 = vld [vmem:[#allocation15 + $0x348] sm:$0xff]
        %v9826 = vld [vmem:[#allocation15 + $0x350] sm:$0xff]
        %v9827 = vld [vmem:[#allocation15 + $0x358] sm:$0xff]
        %v9828 = vld [vmem:[#allocation15 + $0x360] sm:$0xff]
        %v9829 = vld [vmem:[#allocation15 + $0x368] sm:$0xff]
        %v9830 = vld [vmem:[#allocation15 + $0x370] sm:$0xff]
        %v9831 = vld [vmem:[#allocation15 + $0x378] sm:$0xff]
        %v9832 = vld [vmem:[#allocation15 + $0x380] sm:$0xff]
        %v9833 = vld [vmem:[#allocation15 + $0x388] sm:$0xff]
        %v9834 = vld [vmem:[#allocation15 + $0x390] sm:$0xff]
        %v9835 = vld [vmem:[#allocation15 + $0x398] sm:$0xff]
        %v9836 = vld [vmem:[#allocation15 + $0x3a0] sm:$0xff]
        %v9837 = vld [vmem:[#allocation15 + $0x3a8] sm:$0xff]
        %v9838 = vld [vmem:[#allocation15 + $0x3b0] sm:$0xff]
        %v9839 = vld [vmem:[#allocation15 + $0x3b8] sm:$0xff]
        %v9840 = vld [vmem:[#allocation15 + $0x3c0] sm:$0xff]
        %v9841 = vld [vmem:[#allocation15 + $0x3c8] sm:$0xff]
        %v9842 = vld [vmem:[#allocation15 + $0x3d0] sm:$0xff]
        %v9843 = vld [vmem:[#allocation15 + $0x3d8] sm:$0xff]
        %v9844 = vld [vmem:[#allocation15 + $0x3e0] sm:$0xff]
        %v9845 = vld [vmem:[#allocation15 + $0x3e8] sm:$0xff]
        %v9846 = vld [vmem:[#allocation15 + $0x3f0] sm:$0xff]
        %v9847 = vld [vmem:[#allocation15 + $0x3f8] sm:$0xff]
        %v9848 = vpack.c.bf16 %v9716, %v9716
        %v9849 = vpack.c.bf16 %v9717, %v9717
        %v9850 = vpack.c.bf16 %v9718, %v9718
        %v9851 = vpack.c.bf16 %v9719, %v9719
        %v9852 = vld [vmem:[#allocation16] sm:$0xf]
        %v9854 = vlaneseq
        %v9855 = vshrl.u32 %v9854, 7
        %v9856 = vsub.s32 0, %v9855
        %v9857 = vrot.slane %v9852, %v9856
        %v9858 = vlaneseq
        %v9859 = vshrl.u32 %v9858, 7
        %v9860 = vsub.s32 1, %v9859
        %v9861 = vrot.slane %v9852, %v9860
        %v9862 = vlaneseq
        %v9863 = vshrl.u32 %v9862, 7
        %v9864 = vsub.s32 2, %v9863
        %v9865 = vrot.slane %v9852, %v9864
        %v9866 = vlaneseq
        %v9867 = vshrl.u32 %v9866, 7
        %v9868 = vsub.s32 3, %v9867
        %v9869 = vrot.slane %v9852, %v9868
        %v10002 = vunpack.c.l.b16 %v9720
        %v10003 = vunpack.c.h.b16 %v9720
        %v10004 = vunpack.c.l.b16 %v9721
        %v10005 = vunpack.c.h.b16 %v9721
        %v10006 = vunpack.c.l.b16 %v9722
        %v10007 = vunpack.c.h.b16 %v9722
        %v10008 = vunpack.c.l.b16 %v9723
        %v10009 = vunpack.c.h.b16 %v9723
        %v10010 = vunpack.c.l.b16 %v9724
        %v10011 = vunpack.c.h.b16 %v9724
        %v10012 = vunpack.c.l.b16 %v9725
        %v10013 = vunpack.c.h.b16 %v9725
        %v10014 = vunpack.c.l.b16 %v9726
        %v10015 = vunpack.c.h.b16 %v9726
        %v10016 = vunpack.c.l.b16 %v9727
        %v10017 = vunpack.c.h.b16 %v9727
        %v10018 = vunpack.c.l.b16 %v9728
        %v10019 = vunpack.c.h.b16 %v9728
        %v10020 = vunpack.c.l.b16 %v9729
        %v10021 = vunpack.c.h.b16 %v9729
        %v10022 = vunpack.c.l.b16 %v9730
        %v10023 = vunpack.c.h.b16 %v9730
        %v10024 = vunpack.c.l.b16 %v9731
        %v10025 = vunpack.c.h.b16 %v9731
        %v10026 = vunpack.c.l.b16 %v9732
        %v10027 = vunpack.c.h.b16 %v9732
        %v10028 = vunpack.c.l.b16 %v9733
        %v10029 = vunpack.c.h.b16 %v9733
        %v10030 = vunpack.c.l.b16 %v9734
        %v10031 = vunpack.c.h.b16 %v9734
        %v10032 = vunpack.c.l.b16 %v9735
        %v10033 = vunpack.c.h.b16 %v9735
        %v10034 = vunpack.c.l.b16 %v9736
        %v10035 = vunpack.c.h.b16 %v9736
        %v10036 = vunpack.c.l.b16 %v9737
        %v10037 = vunpack.c.h.b16 %v9737
        %v10038 = vunpack.c.l.b16 %v9738
        %v10039 = vunpack.c.h.b16 %v9738
        %v10040 = vunpack.c.l.b16 %v9739
        %v10041 = vunpack.c.h.b16 %v9739
        %v10042 = vunpack.c.l.b16 %v9740
        %v10043 = vunpack.c.h.b16 %v9740
        %v10044 = vunpack.c.l.b16 %v9741
        %v10045 = vunpack.c.h.b16 %v9741
        %v10046 = vunpack.c.l.b16 %v9742
        %v10047 = vunpack.c.h.b16 %v9742
        %v10048 = vunpack.c.l.b16 %v9743
        %v10049 = vunpack.c.h.b16 %v9743
        %v10050 = vunpack.c.l.b16 %v9744
        %v10051 = vunpack.c.h.b16 %v9744
        %v10052 = vunpack.c.l.b16 %v9745
        %v10053 = vunpack.c.h.b16 %v9745
        %v10054 = vunpack.c.l.b16 %v9746
        %v10055 = vunpack.c.h.b16 %v9746
        %v10056 = vunpack.c.l.b16 %v9747
        %v10057 = vunpack.c.h.b16 %v9747
        %v10058 = vunpack.c.l.b16 %v9748
        %v10059 = vunpack.c.h.b16 %v9748
        %v10060 = vunpack.c.l.b16 %v9749
        %v10061 = vunpack.c.h.b16 %v9749
        %v10062 = vunpack.c.l.b16 %v9750
        %v10063 = vunpack.c.h.b16 %v9750
        %v10064 = vunpack.c.l.b16 %v9751
        %v10065 = vunpack.c.h.b16 %v9751
        %v10066 = vunpack.c.l.b16 %v9752
        %v10067 = vunpack.c.h.b16 %v9752
        %v10068 = vunpack.c.l.b16 %v9753
        %v10069 = vunpack.c.h.b16 %v9753
        %v10070 = vunpack.c.l.b16 %v9754
        %v10071 = vunpack.c.h.b16 %v9754
        %v10072 = vunpack.c.l.b16 %v9755
        %v10073 = vunpack.c.h.b16 %v9755
        %v10074 = vunpack.c.l.b16 %v9756
        %v10075 = vunpack.c.h.b16 %v9756
        %v10076 = vunpack.c.l.b16 %v9757
        %v10077 = vunpack.c.h.b16 %v9757
        %v10078 = vunpack.c.l.b16 %v9758
        %v10079 = vunpack.c.h.b16 %v9758
        %v10080 = vunpack.c.l.b16 %v9759
        %v10081 = vunpack.c.h.b16 %v9759
        %v10082 = vunpack.c.l.b16 %v9760
        %v10083 = vunpack.c.h.b16 %v9760
        %v10084 = vunpack.c.l.b16 %v9761
        %v10085 = vunpack.c.h.b16 %v9761
        %v10086 = vunpack.c.l.b16 %v9762
        %v10087 = vunpack.c.h.b16 %v9762
        %v10088 = vunpack.c.l.b16 %v9763
        %v10089 = vunpack.c.h.b16 %v9763
        %v10090 = vunpack.c.l.b16 %v9764
        %v10091 = vunpack.c.h.b16 %v9764
        %v10092 = vunpack.c.l.b16 %v9765
        %v10093 = vunpack.c.h.b16 %v9765
        %v10094 = vunpack.c.l.b16 %v9766
        %v10095 = vunpack.c.h.b16 %v9766
        %v10096 = vunpack.c.l.b16 %v9767
        %v10097 = vunpack.c.h.b16 %v9767
        %v10098 = vunpack.c.l.b16 %v9768
        %v10099 = vunpack.c.h.b16 %v9768
        %v10100 = vunpack.c.l.b16 %v9769
        %v10101 = vunpack.c.h.b16 %v9769
        %v10102 = vunpack.c.l.b16 %v9770
        %v10103 = vunpack.c.h.b16 %v9770
        %v10104 = vunpack.c.l.b16 %v9771
        %v10105 = vunpack.c.h.b16 %v9771
        %v10106 = vunpack.c.l.b16 %v9772
        %v10107 = vunpack.c.h.b16 %v9772
        %v10108 = vunpack.c.l.b16 %v9773
        %v10109 = vunpack.c.h.b16 %v9773
        %v10110 = vunpack.c.l.b16 %v9774
        %v10111 = vunpack.c.h.b16 %v9774
        %v10112 = vunpack.c.l.b16 %v9775
        %v10113 = vunpack.c.h.b16 %v9775
        %v10114 = vunpack.c.l.b16 %v9776
        %v10115 = vunpack.c.h.b16 %v9776
        %v10116 = vunpack.c.l.b16 %v9777
        %v10117 = vunpack.c.h.b16 %v9777
        %v10118 = vunpack.c.l.b16 %v9778
        %v10119 = vunpack.c.h.b16 %v9778
        %v10120 = vunpack.c.l.b16 %v9779
        %v10121 = vunpack.c.h.b16 %v9779
        %v10122 = vunpack.c.l.b16 %v9780
        %v10123 = vunpack.c.h.b16 %v9780
        %v10124 = vunpack.c.l.b16 %v9781
        %v10125 = vunpack.c.h.b16 %v9781
        %v10126 = vunpack.c.l.b16 %v9782
        %v10127 = vunpack.c.h.b16 %v9782
        %v10128 = vunpack.c.l.b16 %v9783
        %v10129 = vunpack.c.h.b16 %v9783
        %v10130 = vunpack.c.l.b16 %v9784
        %v10131 = vunpack.c.h.b16 %v9784
        %v10132 = vunpack.c.l.b16 %v9785
        %v10133 = vunpack.c.h.b16 %v9785
        %v10134 = vunpack.c.l.b16 %v9786
        %v10135 = vunpack.c.h.b16 %v9786
        %v10136 = vunpack.c.l.b16 %v9787
        %v10137 = vunpack.c.h.b16 %v9787
        %v10138 = vunpack.c.l.b16 %v9788
        %v10139 = vunpack.c.h.b16 %v9788
        %v10140 = vunpack.c.l.b16 %v9789
        %v10141 = vunpack.c.h.b16 %v9789
        %v10142 = vunpack.c.l.b16 %v9790
        %v10143 = vunpack.c.h.b16 %v9790
        %v10144 = vunpack.c.l.b16 %v9791
        %v10145 = vunpack.c.h.b16 %v9791
        %v10146 = vunpack.c.l.b16 %v9792
        %v10147 = vunpack.c.h.b16 %v9792
        %v10148 = vunpack.c.l.b16 %v9793
        %v10149 = vunpack.c.h.b16 %v9793
        %v10150 = vunpack.c.l.b16 %v9794
        %v10151 = vunpack.c.h.b16 %v9794
        %v10152 = vunpack.c.l.b16 %v9795
        %v10153 = vunpack.c.h.b16 %v9795
        %v10154 = vunpack.c.l.b16 %v9796
        %v10155 = vunpack.c.h.b16 %v9796
        %v10156 = vunpack.c.l.b16 %v9797
        %v10157 = vunpack.c.h.b16 %v9797
        %v10158 = vunpack.c.l.b16 %v9798
        %v10159 = vunpack.c.h.b16 %v9798
        %v10160 = vunpack.c.l.b16 %v9799
        %v10161 = vunpack.c.h.b16 %v9799
        %v10162 = vunpack.c.l.b16 %v9800
        %v10163 = vunpack.c.h.b16 %v9800
        %v10164 = vunpack.c.l.b16 %v9801
        %v10165 = vunpack.c.h.b16 %v9801
        %v10166 = vunpack.c.l.b16 %v9802
        %v10167 = vunpack.c.h.b16 %v9802
        %v10168 = vunpack.c.l.b16 %v9803
        %v10169 = vunpack.c.h.b16 %v9803
        %v10170 = vunpack.c.l.b16 %v9804
        %v10171 = vunpack.c.h.b16 %v9804
        %v10172 = vunpack.c.l.b16 %v9805
        %v10173 = vunpack.c.h.b16 %v9805
        %v10174 = vunpack.c.l.b16 %v9806
        %v10175 = vunpack.c.h.b16 %v9806
        %v10176 = vunpack.c.l.b16 %v9807
        %v10177 = vunpack.c.h.b16 %v9807
        %v10178 = vunpack.c.l.b16 %v9808
        %v10179 = vunpack.c.h.b16 %v9808
        %v10180 = vunpack.c.l.b16 %v9809
        %v10181 = vunpack.c.h.b16 %v9809
        %v10182 = vunpack.c.l.b16 %v9810
        %v10183 = vunpack.c.h.b16 %v9810
        %v10184 = vunpack.c.l.b16 %v9811
        %v10185 = vunpack.c.h.b16 %v9811
        %v10186 = vunpack.c.l.b16 %v9812
        %v10187 = vunpack.c.h.b16 %v9812
        %v10188 = vunpack.c.l.b16 %v9813
        %v10189 = vunpack.c.h.b16 %v9813
        %v10190 = vunpack.c.l.b16 %v9814
        %v10191 = vunpack.c.h.b16 %v9814
        %v10192 = vunpack.c.l.b16 %v9815
        %v10193 = vunpack.c.h.b16 %v9815
        %v10194 = vunpack.c.l.b16 %v9816
        %v10195 = vunpack.c.h.b16 %v9816
        %v10196 = vunpack.c.l.b16 %v9817
        %v10197 = vunpack.c.h.b16 %v9817
        %v10198 = vunpack.c.l.b16 %v9818
        %v10199 = vunpack.c.h.b16 %v9818
        %v10200 = vunpack.c.l.b16 %v9819
        %v10201 = vunpack.c.h.b16 %v9819
        %v10202 = vunpack.c.l.b16 %v9820
        %v10203 = vunpack.c.h.b16 %v9820
        %v10204 = vunpack.c.l.b16 %v9821
        %v10205 = vunpack.c.h.b16 %v9821
        %v10206 = vunpack.c.l.b16 %v9822
        %v10207 = vunpack.c.h.b16 %v9822
        %v10208 = vunpack.c.l.b16 %v9823
        %v10209 = vunpack.c.h.b16 %v9823
        %v10210 = vunpack.c.l.b16 %v9824
        %v10211 = vunpack.c.h.b16 %v9824
        %v10212 = vunpack.c.l.b16 %v9825
        %v10213 = vunpack.c.h.b16 %v9825
        %v10214 = vunpack.c.l.b16 %v9826
        %v10215 = vunpack.c.h.b16 %v9826
        %v10216 = vunpack.c.l.b16 %v9827
        %v10217 = vunpack.c.h.b16 %v9827
        %v10218 = vunpack.c.l.b16 %v9828
        %v10219 = vunpack.c.h.b16 %v9828
        %v10220 = vunpack.c.l.b16 %v9829
        %v10221 = vunpack.c.h.b16 %v9829
        %v10222 = vunpack.c.l.b16 %v9830
        %v10223 = vunpack.c.h.b16 %v9830
        %v10224 = vunpack.c.l.b16 %v9831
        %v10225 = vunpack.c.h.b16 %v9831
        %v10226 = vunpack.c.l.b16 %v9832
        %v10227 = vunpack.c.h.b16 %v9832
        %v10228 = vunpack.c.l.b16 %v9833
        %v10229 = vunpack.c.h.b16 %v9833
        %v10230 = vunpack.c.l.b16 %v9834
        %v10231 = vunpack.c.h.b16 %v9834
        %v10232 = vunpack.c.l.b16 %v9835
        %v10233 = vunpack.c.h.b16 %v9835
        %v10234 = vunpack.c.l.b16 %v9836
        %v10235 = vunpack.c.h.b16 %v9836
        %v10236 = vunpack.c.l.b16 %v9837
        %v10237 = vunpack.c.h.b16 %v9837
        %v10238 = vunpack.c.l.b16 %v9838
        %v10239 = vunpack.c.h.b16 %v9838
        %v10240 = vunpack.c.l.b16 %v9839
        %v10241 = vunpack.c.h.b16 %v9839
        %v10242 = vunpack.c.l.b16 %v9840
        %v10243 = vunpack.c.h.b16 %v9840
        %v10244 = vunpack.c.l.b16 %v9841
        %v10245 = vunpack.c.h.b16 %v9841
        %v10246 = vunpack.c.l.b16 %v9842
        %v10247 = vunpack.c.h.b16 %v9842
        %v10248 = vunpack.c.l.b16 %v9843
        %v10249 = vunpack.c.h.b16 %v9843
        %v10250 = vunpack.c.l.b16 %v9844
        %v10251 = vunpack.c.h.b16 %v9844
        %v10252 = vunpack.c.l.b16 %v9845
        %v10253 = vunpack.c.h.b16 %v9845
        %v10254 = vunpack.c.l.b16 %v9846
        %v10255 = vunpack.c.h.b16 %v9846
        %v10256 = vunpack.c.l.b16 %v9847
        %v10257 = vunpack.c.h.b16 %v9847
        %v10258 = vpack.c.b16 %v10006, %v10002
        %v10259 = vpack.c.b16 %v10007, %v10003
        %v10260 = vpack.c.b16 %v10008, %v10004
        %v10261 = vpack.c.b16 %v10009, %v10005
        %v10262 = vpack.c.b16 %v10014, %v10010
        %v10263 = vpack.c.b16 %v10015, %v10011
        %v10264 = vpack.c.b16 %v10016, %v10012
        %v10265 = vpack.c.b16 %v10017, %v10013
        %v10266 = vpack.c.b16 %v10022, %v10018
        %v10267 = vpack.c.b16 %v10023, %v10019
        %v10268 = vpack.c.b16 %v10024, %v10020
        %v10269 = vpack.c.b16 %v10025, %v10021
        %v10270 = vpack.c.b16 %v10030, %v10026
        %v10271 = vpack.c.b16 %v10031, %v10027
        %v10272 = vpack.c.b16 %v10032, %v10028
        %v10273 = vpack.c.b16 %v10033, %v10029
        %v10274 = vpack.c.b16 %v10038, %v10034
        %v10275 = vpack.c.b16 %v10039, %v10035
        %v10276 = vpack.c.b16 %v10040, %v10036
        %v10277 = vpack.c.b16 %v10041, %v10037
        %v10278 = vpack.c.b16 %v10046, %v10042
        %v10279 = vpack.c.b16 %v10047, %v10043
        %v10280 = vpack.c.b16 %v10048, %v10044
        %v10281 = vpack.c.b16 %v10049, %v10045
        %v10282 = vpack.c.b16 %v10054, %v10050
        %v10283 = vpack.c.b16 %v10055, %v10051
        %v10284 = vpack.c.b16 %v10056, %v10052
        %v10285 = vpack.c.b16 %v10057, %v10053
        %v10286 = vpack.c.b16 %v10062, %v10058
        %v10287 = vpack.c.b16 %v10063, %v10059
        %v10288 = vpack.c.b16 %v10064, %v10060
        %v10289 = vpack.c.b16 %v10065, %v10061
        %v10290 = vpack.c.b16 %v10070, %v10066
        %v10291 = vpack.c.b16 %v10071, %v10067
        %v10292 = vpack.c.b16 %v10072, %v10068
        %v10293 = vpack.c.b16 %v10073, %v10069
        %v10294 = vpack.c.b16 %v10078, %v10074
        %v10295 = vpack.c.b16 %v10079, %v10075
        %v10296 = vpack.c.b16 %v10080, %v10076
        %v10297 = vpack.c.b16 %v10081, %v10077
        %v10298 = vpack.c.b16 %v10086, %v10082
        %v10299 = vpack.c.b16 %v10087, %v10083
        %v10300 = vpack.c.b16 %v10088, %v10084
        %v10301 = vpack.c.b16 %v10089, %v10085
        %v10302 = vpack.c.b16 %v10094, %v10090
        %v10303 = vpack.c.b16 %v10095, %v10091
        %v10304 = vpack.c.b16 %v10096, %v10092
        %v10305 = vpack.c.b16 %v10097, %v10093
        %v10306 = vpack.c.b16 %v10102, %v10098
        %v10307 = vpack.c.b16 %v10103, %v10099
        %v10308 = vpack.c.b16 %v10104, %v10100
        %v10309 = vpack.c.b16 %v10105, %v10101
        %v10310 = vpack.c.b16 %v10110, %v10106
        %v10311 = vpack.c.b16 %v10111, %v10107
        %v10312 = vpack.c.b16 %v10112, %v10108
        %v10313 = vpack.c.b16 %v10113, %v10109
        %v10314 = vpack.c.b16 %v10118, %v10114
        %v10315 = vpack.c.b16 %v10119, %v10115
        %v10316 = vpack.c.b16 %v10120, %v10116
        %v10317 = vpack.c.b16 %v10121, %v10117
        %v10318 = vpack.c.b16 %v10126, %v10122
        %v10319 = vpack.c.b16 %v10127, %v10123
        %v10320 = vpack.c.b16 %v10128, %v10124
        %v10321 = vpack.c.b16 %v10129, %v10125
        %v10322 = vpack.c.b16 %v10134, %v10130
        %v10323 = vpack.c.b16 %v10135, %v10131
        %v10324 = vpack.c.b16 %v10136, %v10132
        %v10325 = vpack.c.b16 %v10137, %v10133
        %v10326 = vpack.c.b16 %v10142, %v10138
        %v10327 = vpack.c.b16 %v10143, %v10139
        %v10328 = vpack.c.b16 %v10144, %v10140
        %v10329 = vpack.c.b16 %v10145, %v10141
        %v10330 = vpack.c.b16 %v10150, %v10146
        %v10331 = vpack.c.b16 %v10151, %v10147
        %v10332 = vpack.c.b16 %v10152, %v10148
        %v10333 = vpack.c.b16 %v10153, %v10149
        %v10334 = vpack.c.b16 %v10158, %v10154
        %v10335 = vpack.c.b16 %v10159, %v10155
        %v10336 = vpack.c.b16 %v10160, %v10156
        %v10337 = vpack.c.b16 %v10161, %v10157
        %v10338 = vpack.c.b16 %v10166, %v10162
        %v10339 = vpack.c.b16 %v10167, %v10163
        %v10340 = vpack.c.b16 %v10168, %v10164
        %v10341 = vpack.c.b16 %v10169, %v10165
        %v10342 = vpack.c.b16 %v10174, %v10170
        %v10343 = vpack.c.b16 %v10175, %v10171
        %v10344 = vpack.c.b16 %v10176, %v10172
        %v10345 = vpack.c.b16 %v10177, %v10173
        %v10346 = vpack.c.b16 %v10182, %v10178
        %v10347 = vpack.c.b16 %v10183, %v10179
        %v10348 = vpack.c.b16 %v10184, %v10180
        %v10349 = vpack.c.b16 %v10185, %v10181
        %v10350 = vpack.c.b16 %v10190, %v10186
        %v10351 = vpack.c.b16 %v10191, %v10187
        %v10352 = vpack.c.b16 %v10192, %v10188
        %v10353 = vpack.c.b16 %v10193, %v10189
        %v10354 = vpack.c.b16 %v10198, %v10194
        %v10355 = vpack.c.b16 %v10199, %v10195
        %v10356 = vpack.c.b16 %v10200, %v10196
        %v10357 = vpack.c.b16 %v10201, %v10197
        %v10358 = vpack.c.b16 %v10206, %v10202
        %v10359 = vpack.c.b16 %v10207, %v10203
        %v10360 = vpack.c.b16 %v10208, %v10204
        %v10361 = vpack.c.b16 %v10209, %v10205
        %v10362 = vpack.c.b16 %v10214, %v10210
        %v10363 = vpack.c.b16 %v10215, %v10211
        %v10364 = vpack.c.b16 %v10216, %v10212
        %v10365 = vpack.c.b16 %v10217, %v10213
        %v10366 = vpack.c.b16 %v10222, %v10218
        %v10367 = vpack.c.b16 %v10223, %v10219
        %v10368 = vpack.c.b16 %v10224, %v10220
        %v10369 = vpack.c.b16 %v10225, %v10221
        %v10370 = vpack.c.b16 %v10230, %v10226
        %v10371 = vpack.c.b16 %v10231, %v10227
        %v10372 = vpack.c.b16 %v10232, %v10228
        %v10373 = vpack.c.b16 %v10233, %v10229
        %v10374 = vpack.c.b16 %v10238, %v10234
        %v10375 = vpack.c.b16 %v10239, %v10235
        %v10376 = vpack.c.b16 %v10240, %v10236
        %v10377 = vpack.c.b16 %v10241, %v10237
        %v10378 = vpack.c.b16 %v10246, %v10242
        %v10379 = vpack.c.b16 %v10247, %v10243
        %v10380 = vpack.c.b16 %v10248, %v10244
        %v10381 = vpack.c.b16 %v10249, %v10245
        %v10382 = vpack.c.b16 %v10254, %v10250
        %v10383 = vpack.c.b16 %v10255, %v10251
        %v10384 = vpack.c.b16 %v10256, %v10252
        %v10385 = vpack.c.b16 %v10257, %v10253
        %10514 = vmatprep.subr.bf16.mxu0 %v10287
        %10515 = vmatpush1.bf16.msra.mxu0 %v10286
        %10516 = vmatprep.subr.bf16.mxu0 %v10283
        %10517 = vmatpush1.bf16.msra.mxu0 %v10282
        %10518 = vmatprep.subr.bf16.mxu0 %v10279
        %10519 = vmatpush1.bf16.msra.mxu0 %v10278
        %10520 = vmatprep.subr.bf16.mxu0 %v10275
        %10521 = vmatpush1.bf16.msra.mxu0 %v10274
        %10522 = vmatprep.subr.bf16.mxu0 %v10271
        %10523 = vmatpush1.bf16.msra.mxu0 %v10270
        %10524 = vmatprep.subr.bf16.mxu0 %v10267
        %10525 = vmatpush1.bf16.msra.mxu0 %v10266
        %10526 = vmatprep.subr.bf16.mxu0 %v10263
        %10527 = vmatpush1.bf16.msra.mxu0 %v10262
        %10528 = vmatprep.subr.bf16.mxu0 %v10259
        %10529 = vmatpush1.bf16.msra.mxu0 %v10258
        %10530 = vmatprep.subr.bf16.mxu0 %v10319
        %10531 = vmatpush2.bf16.msra.mxu0 %v10318
        %10532 = vmatprep.subr.bf16.mxu0 %v10315
        %10533 = vmatpush2.bf16.msra.mxu0 %v10314
        %10534 = vmatprep.subr.bf16.mxu0 %v10311
        %10535 = vmatpush2.bf16.msra.mxu0 %v10310
        %10536 = vmatprep.subr.bf16.mxu0 %v10307
        %10537 = vmatpush2.bf16.msra.mxu0 %v10306
        %10538 = vmatprep.subr.bf16.mxu0 %v10303
        %10539 = vmatpush2.bf16.msra.mxu0 %v10302
        %10540 = vmatprep.subr.bf16.mxu0 %v10299
        %10541 = vmatpush2.bf16.msra.mxu0 %v10298
        %10542 = vmatprep.subr.bf16.mxu0 %v10295
        %10543 = vmatpush2.bf16.msra.mxu0 %v10294
        %10544 = vmatprep.subr.bf16.mxu0 %v10291
        %10545 = vmatpush2.bf16.msra.mxu0 %v10290
        %10546 = vmatprep.mubr.bf16.mxu0 %v9849
        %10547 = vmatmul.mubr.bf16.gmra.mxu0 %v9848
        %v10548 = vpop.f32.mrf.mxu0
        %v10549 = vadd.f32 %v9857, %v10548
        %v10550 = vpop.f32.mrf.mxu0
        %v10551 = vadd.f32 %v9861, %v10550
        %v10552 = vpop.f32.mrf.mxu0
        %v10553 = vpop.f32.mrf.mxu0
        %10554 = vdwg.mxu0
        %10555 = vmatprep.subr.bf16.mxu0 %v10351
        %10556 = vmatpush1.bf16.msra.mxu0 %v10350
        %10557 = vmatprep.subr.bf16.mxu0 %v10347
        %10558 = vmatpush1.bf16.msra.mxu0 %v10346
        %10559 = vmatprep.subr.bf16.mxu0 %v10343
        %10560 = vmatpush1.bf16.msra.mxu0 %v10342
        %10561 = vmatprep.subr.bf16.mxu0 %v10339
        %10562 = vmatpush1.bf16.msra.mxu0 %v10338
        %10563 = vmatprep.subr.bf16.mxu0 %v10335
        %10564 = vmatpush1.bf16.msra.mxu0 %v10334
        %10565 = vmatprep.subr.bf16.mxu0 %v10331
        %10566 = vmatpush1.bf16.msra.mxu0 %v10330
        %10567 = vmatprep.subr.bf16.mxu0 %v10327
        %10568 = vmatpush1.bf16.msra.mxu0 %v10326
        %10569 = vmatprep.subr.bf16.mxu0 %v10323
        %10570 = vmatpush1.bf16.msra.mxu0 %v10322
        %10571 = vmatprep.subr.bf16.mxu0 %v10383
        %10572 = vmatpush2.bf16.msra.mxu0 %v10382
        %10573 = vmatprep.subr.bf16.mxu0 %v10379
        %10574 = vmatpush2.bf16.msra.mxu0 %v10378
        %10575 = vmatprep.subr.bf16.mxu0 %v10375
        %10576 = vmatpush2.bf16.msra.mxu0 %v10374
        %10577 = vmatprep.subr.bf16.mxu0 %v10371
        %10578 = vmatpush2.bf16.msra.mxu0 %v10370
        %10579 = vmatprep.subr.bf16.mxu0 %v10367
        %10580 = vmatpush2.bf16.msra.mxu0 %v10366
        %10581 = vmatprep.subr.bf16.mxu0 %v10363
        %10582 = vmatpush2.bf16.msra.mxu0 %v10362
        %10583 = vmatprep.subr.bf16.mxu0 %v10359
        %10584 = vmatpush2.bf16.msra.mxu0 %v10358
        %10585 = vmatprep.subr.bf16.mxu0 %v10355
        %10586 = vmatpush2.bf16.msra.mxu0 %v10354
        %10587 = vmatprep.mubr.bf16.mxu0 %v9851
        %10588 = vmatmul.mubr.bf16.gmra.mxu0 %v9850
        %v10589 = vpop.f32.mrf.mxu0
        %v10590 = vadd.f32 %v10549, %v10589
        %v10591 = vpop.f32.mrf.mxu0
        %v10592 = vadd.f32 %v10551, %v10591
        %v10593 = vpop.f32.mrf.mxu0
        %v10594 = vpop.f32.mrf.mxu0
        %10595 = vdwg.mxu0
        %10596 = vmatprep.subr.bf16.mxu0 %v10289
        %10597 = vmatpush1.bf16.msra.mxu0 %v10288
        %10598 = vmatprep.subr.bf16.mxu0 %v10285
        %10599 = vmatpush1.bf16.msra.mxu0 %v10284
        %10600 = vmatprep.subr.bf16.mxu0 %v10281
        %10601 = vmatpush1.bf16.msra.mxu0 %v10280
        %10602 = vmatprep.subr.bf16.mxu0 %v10277
        %10603 = vmatpush1.bf16.msra.mxu0 %v10276
        %10604 = vmatprep.subr.bf16.mxu0 %v10273
        %10605 = vmatpush1.bf16.msra.mxu0 %v10272
        %10606 = vmatprep.subr.bf16.mxu0 %v10269
        %10607 = vmatpush1.bf16.msra.mxu0 %v10268
        %10608 = vmatprep.subr.bf16.mxu0 %v10265
        %10609 = vmatpush1.bf16.msra.mxu0 %v10264
        %10610 = vmatprep.subr.bf16.mxu0 %v10261
        %10611 = vmatpush1.bf16.msra.mxu0 %v10260
        %10612 = vmatprep.subr.bf16.mxu0 %v10321
        %10613 = vmatpush2.bf16.msra.mxu0 %v10320
        %10614 = vmatprep.subr.bf16.mxu0 %v10317
        %10615 = vmatpush2.bf16.msra.mxu0 %v10316
        %10616 = vmatprep.subr.bf16.mxu0 %v10313
        %10617 = vmatpush2.bf16.msra.mxu0 %v10312
        %10618 = vmatprep.subr.bf16.mxu0 %v10309
        %10619 = vmatpush2.bf16.msra.mxu0 %v10308
        %10620 = vmatprep.subr.bf16.mxu0 %v10305
        %10621 = vmatpush2.bf16.msra.mxu0 %v10304
        %10622 = vmatprep.subr.bf16.mxu0 %v10301
        %10623 = vmatpush2.bf16.msra.mxu0 %v10300
        %10624 = vmatprep.subr.bf16.mxu0 %v10297
        %10625 = vmatpush2.bf16.msra.mxu0 %v10296
        %10626 = vmatprep.subr.bf16.mxu0 %v10293
        %10627 = vmatpush2.bf16.msra.mxu0 %v10292
        %10628 = vmatprep.mubr.bf16.mxu0 %v9849
        %10629 = vmatmul.mubr.bf16.gmra.mxu0 %v9848
        %v10630 = vpop.f32.mrf.mxu0
        %v10631 = vadd.f32 %v9865, %v10630
        %v10632 = vpop.f32.mrf.mxu0
        %v10633 = vadd.f32 %v9869, %v10632
        %v10634 = vpop.f32.mrf.mxu0
        %v10635 = vpop.f32.mrf.mxu0
        %10636 = vdwg.mxu0
        %10637 = vmatprep.subr.bf16.mxu0 %v10353
        %10638 = vmatpush1.bf16.msra.mxu0 %v10352
        %10639 = vmatprep.subr.bf16.mxu0 %v10349
        %10640 = vmatpush1.bf16.msra.mxu0 %v10348
        %10641 = vmatprep.subr.bf16.mxu0 %v10345
        %10642 = vmatpush1.bf16.msra.mxu0 %v10344
        %10643 = vmatprep.subr.bf16.mxu0 %v10341
        %10644 = vmatpush1.bf16.msra.mxu0 %v10340
        %10645 = vmatprep.subr.bf16.mxu0 %v10337
        %10646 = vmatpush1.bf16.msra.mxu0 %v10336
        %10647 = vmatprep.subr.bf16.mxu0 %v10333
        %10648 = vmatpush1.bf16.msra.mxu0 %v10332
        %10649 = vmatprep.subr.bf16.mxu0 %v10329
        %10650 = vmatpush1.bf16.msra.mxu0 %v10328
        %10651 = vmatprep.subr.bf16.mxu0 %v10325
        %10652 = vmatpush1.bf16.msra.mxu0 %v10324
        %10653 = vmatprep.subr.bf16.mxu0 %v10385
        %10654 = vmatpush2.bf16.msra.mxu0 %v10384
        %10655 = vmatprep.subr.bf16.mxu0 %v10381
        %10656 = vmatpush2.bf16.msra.mxu0 %v10380
        %10657 = vmatprep.subr.bf16.mxu0 %v10377
        %10658 = vmatpush2.bf16.msra.mxu0 %v10376
        %10659 = vmatprep.subr.bf16.mxu0 %v10373
        %10660 = vmatpush2.bf16.msra.mxu0 %v10372
        %10661 = vmatprep.subr.bf16.mxu0 %v10369
        %10662 = vmatpush2.bf16.msra.mxu0 %v10368
        %10663 = vmatprep.subr.bf16.mxu0 %v10365
        %10664 = vmatpush2.bf16.msra.mxu0 %v10364
        %10665 = vmatprep.subr.bf16.mxu0 %v10361
        %10666 = vmatpush2.bf16.msra.mxu0 %v10360
        %10667 = vmatprep.subr.bf16.mxu0 %v10357
        %10668 = vmatpush2.bf16.msra.mxu0 %v10356
        %10669 = vmatprep.mubr.bf16.mxu0 %v9851
        %10670 = vmatmul.mubr.bf16.gmra.mxu0 %v9850
        %v10671 = vpop.f32.mrf.mxu0
        %v10672 = vadd.f32 %v10631, %v10671
        %v10673 = vpop.f32.mrf.mxu0
        %v10674 = vadd.f32 %v10633, %v10673
        %v10675 = vpop.f32.mrf.mxu0
        %v10676 = vpop.f32.mrf.mxu0
        %10677 = vdwg.mxu0
        %v10678 = vmax.f32 %v10590, 0.0
        %v10679 = vmax.f32 %v10592, 0.0
        %v10680 = vmax.f32 %v10672, 0.0
        %v10681 = vmax.f32 %v10674, 0.0
        %v10682 = vld [vmem:[#allocation18] sm:$0xf]
        %v10683 = vld [vmem:[#allocation18 + $0x4] sm:$0xf]
        %v10684 = vld [vmem:[#allocation18 + $0x8] sm:$0xf]
        %v10685 = vld [vmem:[#allocation18 + $0xc] sm:$0xf]
        %v10686 = vld [vmem:[#allocation18 + $0x10] sm:$0xf]
        %v10687 = vld [vmem:[#allocation18 + $0x14] sm:$0xf]
        %v10688 = vld [vmem:[#allocation18 + $0x18] sm:$0xf]
        %v10689 = vld [vmem:[#allocation18 + $0x1c] sm:$0xf]
        %v10690 = vld [vmem:[#allocation18 + $0x20] sm:$0xf]
        %v10691 = vld [vmem:[#allocation18 + $0x24] sm:$0xf]
        %v10692 = vld [vmem:[#allocation18 + $0x28] sm:$0xf]
        %v10693 = vld [vmem:[#allocation18 + $0x2c] sm:$0xf]
        %v10694 = vld [vmem:[#allocation18 + $0x30] sm:$0xf]
        %v10695 = vld [vmem:[#allocation18 + $0x34] sm:$0xf]
        %v10696 = vld [vmem:[#allocation18 + $0x38] sm:$0xf]
        %v10697 = vld [vmem:[#allocation18 + $0x3c] sm:$0xf]
        %v10698 = vld [vmem:[#allocation18 + $0x40] sm:$0xf]
        %v10699 = vld [vmem:[#allocation18 + $0x44] sm:$0xf]
        %v10700 = vld [vmem:[#allocation18 + $0x48] sm:$0xf]
        %v10701 = vld [vmem:[#allocation18 + $0x4c] sm:$0xf]
        %v10702 = vld [vmem:[#allocation18 + $0x50] sm:$0xf]
        %v10703 = vld [vmem:[#allocation18 + $0x54] sm:$0xf]
        %v10704 = vld [vmem:[#allocation18 + $0x58] sm:$0xf]
        %v10705 = vld [vmem:[#allocation18 + $0x5c] sm:$0xf]
        %v10706 = vld [vmem:[#allocation18 + $0x60] sm:$0xf]
        %v10707 = vld [vmem:[#allocation18 + $0x64] sm:$0xf]
        %v10708 = vld [vmem:[#allocation18 + $0x68] sm:$0xf]
        %v10709 = vld [vmem:[#allocation18 + $0x6c] sm:$0xf]
        %v10710 = vld [vmem:[#allocation18 + $0x70] sm:$0xf]
        %v10711 = vld [vmem:[#allocation18 + $0x74] sm:$0xf]
        %v10712 = vld [vmem:[#allocation18 + $0x78] sm:$0xf]
        %v10713 = vld [vmem:[#allocation18 + $0x7c] sm:$0xf]
        %v10714 = vld [vmem:[#allocation18 + $0x80] sm:$0xf]
        %v10715 = vld [vmem:[#allocation18 + $0x84] sm:$0xf]
        %v10716 = vld [vmem:[#allocation18 + $0x88] sm:$0xf]
        %v10717 = vld [vmem:[#allocation18 + $0x8c] sm:$0xf]
        %v10718 = vld [vmem:[#allocation18 + $0x90] sm:$0xf]
        %v10719 = vld [vmem:[#allocation18 + $0x94] sm:$0xf]
        %v10720 = vld [vmem:[#allocation18 + $0x98] sm:$0xf]
        %v10721 = vld [vmem:[#allocation18 + $0x9c] sm:$0xf]
        %v10722 = vld [vmem:[#allocation18 + $0xa0] sm:$0xf]
        %v10723 = vld [vmem:[#allocation18 + $0xa4] sm:$0xf]
        %v10724 = vld [vmem:[#allocation18 + $0xa8] sm:$0xf]
        %v10725 = vld [vmem:[#allocation18 + $0xac] sm:$0xf]
        %v10726 = vld [vmem:[#allocation18 + $0xb0] sm:$0xf]
        %v10727 = vld [vmem:[#allocation18 + $0xb4] sm:$0xf]
        %v10728 = vld [vmem:[#allocation18 + $0xb8] sm:$0xf]
        %v10729 = vld [vmem:[#allocation18 + $0xbc] sm:$0xf]
        %v10730 = vld [vmem:[#allocation18 + $0xc0] sm:$0xf]
        %v10731 = vld [vmem:[#allocation18 + $0xc4] sm:$0xf]
        %v10732 = vld [vmem:[#allocation18 + $0xc8] sm:$0xf]
        %v10733 = vld [vmem:[#allocation18 + $0xcc] sm:$0xf]
        %v10734 = vld [vmem:[#allocation18 + $0xd0] sm:$0xf]
        %v10735 = vld [vmem:[#allocation18 + $0xd4] sm:$0xf]
        %v10736 = vld [vmem:[#allocation18 + $0xd8] sm:$0xf]
        %v10737 = vld [vmem:[#allocation18 + $0xdc] sm:$0xf]
        %v10738 = vld [vmem:[#allocation18 + $0xe0] sm:$0xf]
        %v10739 = vld [vmem:[#allocation18 + $0xe4] sm:$0xf]
        %v10740 = vld [vmem:[#allocation18 + $0xe8] sm:$0xf]
        %v10741 = vld [vmem:[#allocation18 + $0xec] sm:$0xf]
        %v10742 = vld [vmem:[#allocation18 + $0xf0] sm:$0xf]
        %v10743 = vld [vmem:[#allocation18 + $0xf4] sm:$0xf]
        %v10744 = vld [vmem:[#allocation18 + $0xf8] sm:$0xf]
        %v10745 = vld [vmem:[#allocation18 + $0xfc] sm:$0xf]
        %v10746 = vpack.c.bf16 %v10678, %v10678
        %v10747 = vpack.c.bf16 %v10679, %v10679
        %v10748 = vpack.c.bf16 %v10680, %v10680
        %v10749 = vpack.c.bf16 %v10681, %v10681
        %v10750 = vld [vmem:[#allocation19] sm:$0x1]
        %v10752 = vlaneseq
        %v10753 = vshrl.u32 %v10752, 7
        %v10754 = vsub.s32 0, %v10753
        %v10755 = vrot.slane %v10750, %v10754
        %v10821 = vunpack.c.l.b16 %v10682
        %v10822 = vunpack.c.l.b16 %v10683
        %v10823 = vunpack.c.l.b16 %v10684
        %v10824 = vunpack.c.l.b16 %v10685
        %v10825 = vunpack.c.l.b16 %v10686
        %v10826 = vunpack.c.l.b16 %v10687
        %v10827 = vunpack.c.l.b16 %v10688
        %v10828 = vunpack.c.l.b16 %v10689
        %v10829 = vunpack.c.l.b16 %v10690
        %v10830 = vunpack.c.l.b16 %v10691
        %v10831 = vunpack.c.l.b16 %v10692
        %v10832 = vunpack.c.l.b16 %v10693
        %v10833 = vunpack.c.l.b16 %v10694
        %v10834 = vunpack.c.l.b16 %v10695
        %v10835 = vunpack.c.l.b16 %v10696
        %v10836 = vunpack.c.l.b16 %v10697
        %v10837 = vunpack.c.l.b16 %v10698
        %v10838 = vunpack.c.l.b16 %v10699
        %v10839 = vunpack.c.l.b16 %v10700
        %v10840 = vunpack.c.l.b16 %v10701
        %v10841 = vunpack.c.l.b16 %v10702
        %v10842 = vunpack.c.l.b16 %v10703
        %v10843 = vunpack.c.l.b16 %v10704
        %v10844 = vunpack.c.l.b16 %v10705
        %v10845 = vunpack.c.l.b16 %v10706
        %v10846 = vunpack.c.l.b16 %v10707
        %v10847 = vunpack.c.l.b16 %v10708
        %v10848 = vunpack.c.l.b16 %v10709
        %v10849 = vunpack.c.l.b16 %v10710
        %v10850 = vunpack.c.l.b16 %v10711
        %v10851 = vunpack.c.l.b16 %v10712
        %v10852 = vunpack.c.l.b16 %v10713
        %v10853 = vunpack.c.l.b16 %v10714
        %v10854 = vunpack.c.l.b16 %v10715
        %v10855 = vunpack.c.l.b16 %v10716
        %v10856 = vunpack.c.l.b16 %v10717
        %v10857 = vunpack.c.l.b16 %v10718
        %v10858 = vunpack.c.l.b16 %v10719
        %v10859 = vunpack.c.l.b16 %v10720
        %v10860 = vunpack.c.l.b16 %v10721
        %v10861 = vunpack.c.l.b16 %v10722
        %v10862 = vunpack.c.l.b16 %v10723
        %v10863 = vunpack.c.l.b16 %v10724
        %v10864 = vunpack.c.l.b16 %v10725
        %v10865 = vunpack.c.l.b16 %v10726
        %v10866 = vunpack.c.l.b16 %v10727
        %v10867 = vunpack.c.l.b16 %v10728
        %v10868 = vunpack.c.l.b16 %v10729
        %v10869 = vunpack.c.l.b16 %v10730
        %v10870 = vunpack.c.l.b16 %v10731
        %v10871 = vunpack.c.l.b16 %v10732
        %v10872 = vunpack.c.l.b16 %v10733
        %v10873 = vunpack.c.l.b16 %v10734
        %v10874 = vunpack.c.l.b16 %v10735
        %v10875 = vunpack.c.l.b16 %v10736
        %v10876 = vunpack.c.l.b16 %v10737
        %v10877 = vunpack.c.l.b16 %v10738
        %v10878 = vunpack.c.l.b16 %v10739
        %v10879 = vunpack.c.l.b16 %v10740
        %v10880 = vunpack.c.l.b16 %v10741
        %v10881 = vunpack.c.l.b16 %v10742
        %v10882 = vunpack.c.l.b16 %v10743
        %v10883 = vunpack.c.l.b16 %v10744
        %v10884 = vunpack.c.l.b16 %v10745
        %v10885 = vpack.c.b16 %v10822, %v10821
        %v10886 = vpack.c.b16 %v10824, %v10823
        %v10887 = vpack.c.b16 %v10826, %v10825
        %v10888 = vpack.c.b16 %v10828, %v10827
        %v10889 = vpack.c.b16 %v10830, %v10829
        %v10890 = vpack.c.b16 %v10832, %v10831
        %v10891 = vpack.c.b16 %v10834, %v10833
        %v10892 = vpack.c.b16 %v10836, %v10835
        %v10893 = vpack.c.b16 %v10838, %v10837
        %v10894 = vpack.c.b16 %v10840, %v10839
        %v10895 = vpack.c.b16 %v10842, %v10841
        %v10896 = vpack.c.b16 %v10844, %v10843
        %v10897 = vpack.c.b16 %v10846, %v10845
        %v10898 = vpack.c.b16 %v10848, %v10847
        %v10899 = vpack.c.b16 %v10850, %v10849
        %v10900 = vpack.c.b16 %v10852, %v10851
        %v10901 = vpack.c.b16 %v10854, %v10853
        %v10902 = vpack.c.b16 %v10856, %v10855
        %v10903 = vpack.c.b16 %v10858, %v10857
        %v10904 = vpack.c.b16 %v10860, %v10859
        %v10905 = vpack.c.b16 %v10862, %v10861
        %v10906 = vpack.c.b16 %v10864, %v10863
        %v10907 = vpack.c.b16 %v10866, %v10865
        %v10908 = vpack.c.b16 %v10868, %v10867
        %v10909 = vpack.c.b16 %v10870, %v10869
        %v10910 = vpack.c.b16 %v10872, %v10871
        %v10911 = vpack.c.b16 %v10874, %v10873
        %v10912 = vpack.c.b16 %v10876, %v10875
        %v10913 = vpack.c.b16 %v10878, %v10877
        %v10914 = vpack.c.b16 %v10880, %v10879
        %v10915 = vpack.c.b16 %v10882, %v10881
        %v10916 = vpack.c.b16 %v10884, %v10883
        %10949 = vmatprep.subr.bf16.mxu0 0
        %10950 = vmatpush1.bf16.msra.mxu0 %v10892
        %10951 = vmatprep.subr.bf16.mxu0 0
        %10952 = vmatpush1.bf16.msra.mxu0 %v10891
        %10953 = vmatprep.subr.bf16.mxu0 0
        %10954 = vmatpush1.bf16.msra.mxu0 %v10890
        %10955 = vmatprep.subr.bf16.mxu0 0
        %10956 = vmatpush1.bf16.msra.mxu0 %v10889
        %10957 = vmatprep.subr.bf16.mxu0 0
        %10958 = vmatpush1.bf16.msra.mxu0 %v10888
        %10959 = vmatprep.subr.bf16.mxu0 0
        %10960 = vmatpush1.bf16.msra.mxu0 %v10887
        %10961 = vmatprep.subr.bf16.mxu0 0
        %10962 = vmatpush1.bf16.msra.mxu0 %v10886
        %10963 = vmatprep.subr.bf16.mxu0 0
        %10964 = vmatpush1.bf16.msra.mxu0 %v10885
        %10965 = vmatprep.subr.bf16.mxu0 0
        %10966 = vmatpush2.bf16.msra.mxu0 %v10900
        %10967 = vmatprep.subr.bf16.mxu0 0
        %10968 = vmatpush2.bf16.msra.mxu0 %v10899
        %10969 = vmatprep.subr.bf16.mxu0 0
        %10970 = vmatpush2.bf16.msra.mxu0 %v10898
        %10971 = vmatprep.subr.bf16.mxu0 0
        %10972 = vmatpush2.bf16.msra.mxu0 %v10897
        %10973 = vmatprep.subr.bf16.mxu0 0
        %10974 = vmatpush2.bf16.msra.mxu0 %v10896
        %10975 = vmatprep.subr.bf16.mxu0 0
        %10976 = vmatpush2.bf16.msra.mxu0 %v10895
        %10977 = vmatprep.subr.bf16.mxu0 0
        %10978 = vmatpush2.bf16.msra.mxu0 %v10894
        %10979 = vmatprep.subr.bf16.mxu0 0
        %10980 = vmatpush2.bf16.msra.mxu0 %v10893
        %10981 = vmatprep.mubr.bf16.mxu0 %v10747
        %10982 = vmatmul.mubr.bf16.gmra.mxu0 %v10746
        %v10983 = vpop.f32.mrf.mxu0
        %v10984 = vadd.f32 %v10755, %v10983
        %v10985 = vpop.f32.mrf.mxu0
        %v10986 = vpop.f32.mrf.mxu0
        %v10987 = vpop.f32.mrf.mxu0
        %10988 = vdwg.mxu0
        %10989 = vmatprep.subr.bf16.mxu0 0
        %10990 = vmatpush1.bf16.msra.mxu0 %v10908
        %10991 = vmatprep.subr.bf16.mxu0 0
        %10992 = vmatpush1.bf16.msra.mxu0 %v10907
        %10993 = vmatprep.subr.bf16.mxu0 0
        %10994 = vmatpush1.bf16.msra.mxu0 %v10906
        %10995 = vmatprep.subr.bf16.mxu0 0
        %10996 = vmatpush1.bf16.msra.mxu0 %v10905
        %10997 = vmatprep.subr.bf16.mxu0 0
        %10998 = vmatpush1.bf16.msra.mxu0 %v10904
        %10999 = vmatprep.subr.bf16.mxu0 0
        %11000 = vmatpush1.bf16.msra.mxu0 %v10903
        %11001 = vmatprep.subr.bf16.mxu0 0
        %11002 = vmatpush1.bf16.msra.mxu0 %v10902
        %11003 = vmatprep.subr.bf16.mxu0 0
        %11004 = vmatpush1.bf16.msra.mxu0 %v10901
        %11005 = vmatprep.subr.bf16.mxu0 0
        %11006 = vmatpush2.bf16.msra.mxu0 %v10916
        %11007 = vmatprep.subr.bf16.mxu0 0
        %11008 = vmatpush2.bf16.msra.mxu0 %v10915
        %11009 = vmatprep.subr.bf16.mxu0 0
        %11010 = vmatpush2.bf16.msra.mxu0 %v10914
        %11011 = vmatprep.subr.bf16.mxu0 0
        %11012 = vmatpush2.bf16.msra.mxu0 %v10913
        %11013 = vmatprep.subr.bf16.mxu0 0
        %11014 = vmatpush2.bf16.msra.mxu0 %v10912
        %11015 = vmatprep.subr.bf16.mxu0 0
        %11016 = vmatpush2.bf16.msra.mxu0 %v10911
        %11017 = vmatprep.subr.bf16.mxu0 0
        %11018 = vmatpush2.bf16.msra.mxu0 %v10910
        %11019 = vmatprep.subr.bf16.mxu0 0
        %11020 = vmatpush2.bf16.msra.mxu0 %v10909
        %11021 = vmatprep.mubr.bf16.mxu0 %v10749
        %11022 = vmatmul.mubr.bf16.gmra.mxu0 %v10748
        %v11023 = vpop.f32.mrf.mxu0
        %v11024 = vadd.f32 %v10984, %v11023
        %v11025 = vpop.f32.mrf.mxu0
        %v11026 = vpop.f32.mrf.mxu0
        %v11027 = vpop.f32.mrf.mxu0
        %11028 = vdwg.mxu0
        %v11029 = vmax.f32 %v11024, 0.0
        %v11030 = vld [vmem:[#allocation21] sm:$0xf]
        %v11031 = vld [vmem:[#allocation21 + $0x4] sm:$0xf]
        %v11032 = vld [vmem:[#allocation21 + $0x8] sm:$0xf]
        %v11033 = vld [vmem:[#allocation21 + $0xc] sm:$0xf]
        %v11034 = vld [vmem:[#allocation21 + $0x10] sm:$0xf]
        %v11035 = vld [vmem:[#allocation21 + $0x14] sm:$0xf]
        %v11036 = vld [vmem:[#allocation21 + $0x18] sm:$0xf]
        %v11037 = vld [vmem:[#allocation21 + $0x1c] sm:$0xf]
        %v11038 = vld [vmem:[#allocation21 + $0x20] sm:$0xf]
        %v11039 = vld [vmem:[#allocation21 + $0x24] sm:$0xf]
        %v11040 = vld [vmem:[#allocation21 + $0x28] sm:$0xf]
        %v11041 = vld [vmem:[#allocation21 + $0x2c] sm:$0xf]
        %v11042 = vld [vmem:[#allocation21 + $0x30] sm:$0xf]
        %v11043 = vld [vmem:[#allocation21 + $0x34] sm:$0xf]
        %v11044 = vld [vmem:[#allocation21 + $0x38] sm:$0xf]
        %v11045 = vld [vmem:[#allocation21 + $0x3c] sm:$0xf]
        %v11046 = vpack.c.bf16 %v11029, %v11029
        %v11047 = vld [vmem:[#allocation22] sm:$0x1]
        %v11049 = vlaneseq
        %v11050 = vshrl.u32 %v11049, 7
        %v11051 = vsub.s32 0, %v11050
        %v11052 = vrot.slane %v11047, %v11051
        %v11070 = vunpack.c.l.b16 %v11030
        %v11071 = vunpack.c.l.b16 %v11031
        %v11072 = vunpack.c.l.b16 %v11032
        %v11073 = vunpack.c.l.b16 %v11033
        %v11074 = vunpack.c.l.b16 %v11034
        %v11075 = vunpack.c.l.b16 %v11035
        %v11076 = vunpack.c.l.b16 %v11036
        %v11077 = vunpack.c.l.b16 %v11037
        %v11078 = vunpack.c.l.b16 %v11038
        %v11079 = vunpack.c.l.b16 %v11039
        %v11080 = vunpack.c.l.b16 %v11040
        %v11081 = vunpack.c.l.b16 %v11041
        %v11082 = vunpack.c.l.b16 %v11042
        %v11083 = vunpack.c.l.b16 %v11043
        %v11084 = vunpack.c.l.b16 %v11044
        %v11085 = vunpack.c.l.b16 %v11045
        %v11086 = vpack.c.b16 %v11071, %v11070
        %v11087 = vpack.c.b16 %v11073, %v11072
        %v11088 = vpack.c.b16 %v11075, %v11074
        %v11089 = vpack.c.b16 %v11077, %v11076
        %v11090 = vpack.c.b16 %v11079, %v11078
        %v11091 = vpack.c.b16 %v11081, %v11080
        %v11092 = vpack.c.b16 %v11083, %v11082
        %v11093 = vpack.c.b16 %v11085, %v11084
        %11102 = vmatprep.subr.bf16.mxu0 0
        %11103 = vmatpush1.bf16.msra.mxu0 %v11093
        %11104 = vmatprep.subr.bf16.mxu0 0
        %11105 = vmatpush1.bf16.msra.mxu0 %v11092
        %11106 = vmatprep.subr.bf16.mxu0 0
        %11107 = vmatpush1.bf16.msra.mxu0 %v11091
        %11108 = vmatprep.subr.bf16.mxu0 0
        %11109 = vmatpush1.bf16.msra.mxu0 %v11090
        %11110 = vmatprep.subr.bf16.mxu0 0
        %11111 = vmatpush1.bf16.msra.mxu0 %v11089
        %11112 = vmatprep.subr.bf16.mxu0 0
        %11113 = vmatpush1.bf16.msra.mxu0 %v11088
        %11114 = vmatprep.subr.bf16.mxu0 0
        %11115 = vmatpush1.bf16.msra.mxu0 %v11087
        %11116 = vmatprep.subr.bf16.mxu0 0
        %11117 = vmatpush1.bf16.msra.mxu0 %v11086
        %11118 = vmatprep.subr.bf16.mxu0 0
        %11119 = vmatpush2.bf16.msra.mxu0 0
        %11120 = vmatprep.subr.bf16.mxu0 0
        %11121 = vmatpush2.bf16.msra.mxu0 0
        %11122 = vmatprep.subr.bf16.mxu0 0
        %11123 = vmatpush2.bf16.msra.mxu0 0
        %11124 = vmatprep.subr.bf16.mxu0 0
        %11125 = vmatpush2.bf16.msra.mxu0 0
        %11126 = vmatprep.subr.bf16.mxu0 0
        %11127 = vmatpush2.bf16.msra.mxu0 0
        %11128 = vmatprep.subr.bf16.mxu0 0
        %11129 = vmatpush2.bf16.msra.mxu0 0
        %11130 = vmatprep.subr.bf16.mxu0 0
        %11131 = vmatpush2.bf16.msra.mxu0 0
        %11132 = vmatprep.subr.bf16.mxu0 0
        %11133 = vmatpush2.bf16.msra.mxu0 0
        %11134 = vmatprep.mubr.bf16.mxu0 0
        %11135 = vmatmul.mubr.bf16.gmra.mxu0 %v11046
        %v11136 = vpop.f32.mrf.mxu0
        %v11137 = vadd.f32 %v11052, %v11136
        %v11138 = vpop.f32.mrf.mxu0
        %v11139 = vpop.f32.mrf.mxu0
        %v11140 = vpop.f32.mrf.mxu0
        %11141 = vdwg.mxu0
        %11142 = vst [vmem:[%s1186] sm:$0xff] %v11137
        %p11143 = scmp.lt.s32.totalorder %s82, 1
        %s11144 = scalar_select %p11143, %s82, 1
        %s11145 = smul.addr %s11144, 8
        %s11146 = scalar_lea.vmem %s61, %s11145
        // Predicated region
        $region213: #{forward.1} parent=139 // pred_check
          %p11147 = pneg %p735
        $region214: #{forward.1} parent=139 // pred_check_branch
          %11149 = sbr.rel (%p11147) target = $region216
        $region215: #{forward.1} parent=139 // pred_region
          _
        $region216: #{forward.1} parent=139 // pred_fallthru
          _
      $region140: #{forward.1} parent=5 // pred_fallthru
        _
      %p11150 = scmp.le.s32.totalorder 2, %s77
      // Predicated region
      $region217: #{forward.1} parent=5 // pred_check
        %p11151 = pneg %p11150
      $region218: #{forward.1} parent=5 // pred_check_branch
        %11153 = sbr.rel (%p11151) target = $region220
      $region219: #{forward.1} parent=5 // pred_region
        %s11154 = ssub.s32 %s77, 2
        // Predicated region
        $region221: #{forward.1} parent=219 // pred_check
          %p11155 = pneg %p741
        $region222: #{forward.1} parent=219 // pred_check_branch
          %11157 = sbr.rel (%p11155) target = $region224
        $region223: #{forward.1} parent=219 // pred_region
          %p11158 = scmp.lt.s32.totalorder %s83, 1
          %s11159 = scalar_select %p11158, %s83, 1
          %s11160 = smul.addr %s11159, 8
          %s11161 = scalar_lea.vmem %s61, %s11160
        $region224: #{forward.1} parent=219 // pred_fallthru
          _
      $region220: #{forward.1} parent=5 // pred_fallthru
        _
    $region6: #{forward.1} parent=1 // loop_footer
      %s81 = sadd.s32 1, %s77
    $region7: #{forward.1} parent=1 // loop_footer_branch
      %76 = sbr.rel target = $region3
    $region8: #{forward.1} parent=1 // loop_exit
      _
    %11162 = vsyncpa [#allocation3], 1
    %s11163 = scalar_lea.sflag [#allocation3], 1
    %11164 = vsyncpa %s11163, 1
    %11165 = vsyncpa [#allocation5], 1
    %11166 = vsyncpa [#allocation8], 1
    %11167 = vsyncpa [#allocation11], 1
    %11168 = vsyncpa [#allocation14], 1
    %11169 = vsyncpa [#allocation17], 1
    %11170 = vsyncpa [#allocation20], 1
    %11171 = vsyncpa [#allocation23], 1
    %11172 = vsyncpa [#allocation26], 1
    %11173 = vsyncpa [#allocation29], 1

</llo_original>
